<compile_context>
chip_gen: v7x
topology: tpu7x:2x2x1
jax: 0.10.0
libtpu: 0.0.40
codegen_flags: <defaults>
</compile_context>

<pallas_src>
import jax
import jax.numpy as jnp
from jax.experimental import pallas as pl
from jax.experimental.pallas import tpu as pltpu

# TODO(synk): pretrained MobileNetV2 conv backbone (torchvision weights) is not
# reproduced; the kernel starts from backbone.features output.

_LANE = 128
_EPS = 1e-5


def _round_up(x, m):
    return ((x + m - 1) // m) * m


def _make_head_kernel(hw: int, k: int):
    """Fused: global-avg-pool (folded into w1) + [Linear+BN+ReLU] x2 + padded Linear."""

    def head_kernel(feat_ref, w1_ref, b1_ref, w2_ref, b2_ref, w3_ref, b3_ref, out_ref):
        # feat_ref: (tb, C//k, k*hw) bf16 — lane-dense when k*hw == 128.
        x = feat_ref[...]
        h = b1_ref[...]                                            # (1, 256) f32
        for i in range(k):                                         # static unroll, k in {1, 2}
            # Pool: f32-accumulating sum over the spatial lanes of segment i
            # (original channel c2*k + i); 1/hw and BN1 are folded into w1.
            s = jnp.sum(x[..., i * hw:(i + 1) * hw], axis=-1, dtype=jnp.float32)  # (tb, C//k)
            h = h + jnp.dot(s.astype(jnp.bfloat16), w1_ref[i],
                            preferred_element_type=jnp.float32)    # (tb, 256)
        h = jnp.maximum(h, 0.0)                                    # Dropout(0.2)=id, BN folded, ReLU

        # Dropout(0.5)=id. Linear(256,128) with BN2 folded, then ReLU.
        h = jnp.dot(h.astype(jnp.bfloat16), w2_ref[...],
                    preferred_element_type=jnp.float32) + b2_ref[...]
        h = jnp.maximum(h, 0.0)

        # Dropout(0.5)=id. Linear(128, num_classes) zero-padded to 128 output lanes.
        out_ref[...] = jnp.dot(h.astype(jnp.bfloat16), w3_ref[...],
                               preferred_element_type=jnp.float32) + b3_ref[...]

    return head_kernel


def prepare_params(params, spatial):
    """One-time fold: eval BN -> dense weights, 1/HW -> w1, lane-packing split of w1,
    bf16 weight storage, lane-padded final Linear."""
    hw = int(spatial)
    C = params["w1"].shape[0]
    k = _LANE // hw if (_LANE % hw == 0 and C % max(_LANE // hw, 1) == 0) else 1
    k = max(k, 1)

    s1 = params["bn1_gamma"] / jnp.sqrt(params["bn1_var"] + _EPS)
    t1 = params["bn1_beta"] - params["bn1_mean"] * s1
    s2 = params["bn2_gamma"] / jnp.sqrt(params["bn2_var"] + _EPS)
    t2 = params["bn2_beta"] - params["bn2_mean"] * s2

    w1f = params["w1"] * s1[None, :] * (1.0 / hw)                  # (C, 256), pool+BN folded
    # Segment i of the free (B, C//k, k*hw) view holds channels i, i+k, i+2k, ...
    w1p = jnp.stack([w1f[i::k] for i in range(k)], axis=0).astype(jnp.bfloat16)  # (k, C//k, 256)
    b1p = (params["b1"] * s1 + t1)[None, :].astype(jnp.float32)    # (1, 256)

    w2p = (params["w2"] * s2[None, :]).astype(jnp.bfloat16)        # (256, 128)
    b2p = (params["b2"] * s2 + t2)[None, :].astype(jnp.float32)    # (1, 128)

    num_classes = params["w3"].shape[1]
    nc_pad = _round_up(num_classes, _LANE)
    w3p = jnp.zeros((params["w3"].shape[0], nc_pad), jnp.float32)
    w3p = w3p.at[:, :num_classes].set(params["w3"]).astype(jnp.bfloat16)   # (128, nc_pad)
    b3p = jnp.zeros((1, nc_pad), jnp.float32).at[0, :num_classes].set(params["b3"])

    return {"w1": w1p, "b1": b1p, "w2": w2p, "b2": b2p, "w3": w3p, "b3": b3p,
            "hw": hw, "k": k, "in_features": C, "num_classes": num_classes}


def transfer_learning_head(feat_nchw, prep, *, max_batch_tile=32):
    """feat_nchw: (B, C, H, W) = output of backbone.features (ideally bf16)."""
    B, C, H, W = feat_nchw.shape
    hw, k = prep["hw"], prep["k"]
    assert H * W == hw and C == prep["in_features"]
    nc_pad = prep["w3"].shape[1]

    # Free view of the contiguous NCHW feature map (no transpose, no copy).
    feat = feat_nchw.reshape(B, C // k, k * hw)
    if feat.dtype != jnp.bfloat16:
        # TODO(synk): ideally the backbone emits bf16 directly so this cast pass disappears.
        feat = feat.astype(jnp.bfloat16)

    # Batch tile: single block for tiny B; otherwise multiple-of-8 tiles, capped at
    # max_batch_tile, with >=2 grid steps so ("parallel",) shards across megacore TCs.
    if B <= 8:
        tb = B
    else:
        tb = min(max_batch_tile, max(8, _round_up(pl.cdiv(B, 2), 8)))
    grid = (pl.cdiv(B, tb),)      # no wrapper-side padding; partial last block is masked

    def whole(a):  # weights stay resident across grid steps (constant block index)
        return pl.BlockSpec(a.shape, lambda b, _n=a.ndim: (0,) * _n)

    out = pl.pallas_call(
        _make_head_kernel(hw, k),
        out_shape=jax.ShapeDtypeStruct((B, nc_pad), jnp.float32),
        grid=grid,
        in_specs=[
            pl.BlockSpec((tb, C // k, k * hw), lambda b: (b, 0, 0)),   # batch-tiled features
            whole(prep["w1"]), whole(prep["b1"]),
            whole(prep["w2"]), whole(prep["b2"]),
            whole(prep["w3"]), whole(prep["b3"]),
        ],
        out_specs=pl.BlockSpec((tb, nc_pad), lambda b: (b, 0)),
        compiler_params=pltpu.CompilerParams(
            dimension_semantics=("parallel",),
            vmem_limit_bytes=48 * 1024 * 1024),
    )(feat, prep["w1"], prep["b1"], prep["w2"], prep["b2"], prep["w3"], prep["b3"])

    return out[:, :prep["num_classes"]]


def reference_head(feat_nchw, params):
    """Pure-JAX reference mirroring the kernel's quantization points.

    Differs from exact f32 PyTorch eval semantics only by the bf16 casts of the
    feature map, pooled activations and weights (~1e-3 level)."""
    B, C, H, W = feat_nchw.shape
    hw = H * W
    s1 = params["bn1_gamma"] / jnp.sqrt(params["bn1_var"] + _EPS)
    t1 = params["bn1_beta"] - params["bn1_mean"] * s1
    s2 = params["bn2_gamma"] / jnp.sqrt(params["bn2_var"] + _EPS)
    t2 = params["bn2_beta"] - params["bn2_mean"] * s2

    feat = feat_nchw.astype(jnp.bfloat16).astype(jnp.float32)
    pooled_sum = jnp.sum(feat, axis=(2, 3))                        # (B, C)
    w1f = (params["w1"] * s1[None, :] * (1.0 / hw)).astype(jnp.bfloat16)
    h = jnp.dot(pooled_sum.astype(jnp.bfloat16), w1f,
                preferred_element_type=jnp.float32) + (params["b1"] * s1 + t1)
    h = jnp.maximum(h, 0.0)
    w2f = (params["w2"] * s2[None, :]).astype(jnp.bfloat16)
    h = jnp.dot(h.astype(jnp.bfloat16), w2f,
                preferred_element_type=jnp.float32) + (params["b2"] * s2 + t2)
    h = jnp.maximum(h, 0.0)
    return jnp.dot(h.astype(jnp.bfloat16), params["w3"].astype(jnp.bfloat16),
                   preferred_element_type=jnp.float32) + params["b3"]


def init_params(key, in_features=1280, num_classes=1):
    """Deterministic synthetic parameters with the module's shapes."""
    ks = jax.random.split(key, 11)

    def dense(k, fan_in, fan_out):
        lim = 1.0 / jnp.sqrt(fan_in)
        kw, kb = jax.random.split(k)
        w = jax.random.uniform(kw, (fan_in, fan_out), jnp.float32, -lim, lim)
        b = jax.random.uniform(kb, (fan_out,), jnp.float32, -lim, lim)
        return w, b

    w1, b1 = dense(ks[0], in_features, 256)
    w2, b2 = dense(ks[1], 256, 128)
    w3, b3 = dense(ks[2], 128, num_classes)
    return {
        "w1": w1, "b1": b1,
        "bn1_gamma": jax.random.uniform(ks[3], (256,), jnp.float32, 0.5, 1.5),
        "bn1_beta":  0.1 * jax.random.normal(ks[4], (256,), jnp.float32),
        "bn1_mean":  0.1 * jax.random.normal(ks[5], (256,), jnp.float32),
        "bn1_var":   jax.random.uniform(ks[6], (256,), jnp.float32, 0.5, 1.5),
        "w2": w2, "b2": b2,
        "bn2_gamma": jax.random.uniform(ks[7], (128,), jnp.float32, 0.5, 1.5),
        "bn2_beta":  0.1 * jax.random.normal(ks[8], (128,), jnp.float32),
        "bn2_mean":  0.1 * jax.random.normal(ks[9], (128,), jnp.float32),
        "bn2_var":   jax.random.uniform(ks[10], (128,), jnp.float32, 0.5, 1.5),
        "w3": w3, "b3": b3,
    }


if __name__ == "__main__":
    key = jax.random.PRNGKey(0)
    k_feat, k_par = jax.random.split(key)

    # MobileNetV2 backbone.features output for 256x256 inputs: (B, 1280, 8, 8).
    B, C, H, W = 4, 1280, 8, 8
    # Backbone emits bf16 activations directly (no extra wrapper-side cast pass).
    feat = jax.random.normal(k_feat, (B, C, H, W), jnp.float32).astype(jnp.bfloat16)
    params = init_params(k_par, in_features=C, num_classes=1)

    # Parameter prep (BN + pool fold, w1 lane-packing split, bf16 cast, lane pad) is
    # done once, off the hot path.
    prep = prepare_params(params, spatial=H * W)

    out = transfer_learning_head(feat, prep)
    out = jax.block_until_ready(out)

    ref = reference_head(feat, params)
    assert out.shape == (B, 1), out.shape
    max_err = float(jnp.max(jnp.abs(out - ref)))
    assert jnp.allclose(out, ref, atol=5e-3, rtol=5e-3), max_err
    print("KERNEL_OK")
</pallas_src>

<mosaic_0001>
module attributes {stable_mosaic.version = 11 : i64} {
  func.func @head_kernel(%arg0: i32, %arg1: memref<4x640x128xbf16, #tpu.memory_space<vmem>>, %arg2: memref<2x640x256xbf16, #tpu.memory_space<vmem>>, %arg3: memref<1x256xf32, #tpu.memory_space<vmem>>, %arg4: memref<256x128xbf16, #tpu.memory_space<vmem>>, %arg5: memref<1x128xf32, #tpu.memory_space<vmem>>, %arg6: memref<128x128xbf16, #tpu.memory_space<vmem>>, %arg7: memref<1x128xf32, #tpu.memory_space<vmem>>, %arg8: memref<4x128xf32, #tpu.memory_space<vmem>>) attributes {dimension_semantics = [#tpu.dimension_semantics<parallel>], iteration_bounds = array<i64: 1>, scalar_prefetch = 0 : i64, scratch_operands = 0 : i64, tpu.core_type = #tpu.core_type<tc>, window_params = [{transform_indices = @transform_0, window_bounds = array<i64: 4, 640, 128>}, {pipeline_mode = #tpu.pipeline_mode<synchronous>, transform_indices = @transform_1, window_bounds = array<i64: 2, 640, 256>}, {pipeline_mode = #tpu.pipeline_mode<synchronous>, transform_indices = @transform_2, window_bounds = array<i64: 1, 256>}, {pipeline_mode = #tpu.pipeline_mode<synchronous>, transform_indices = @transform_3, window_bounds = array<i64: 256, 128>}, {pipeline_mode = #tpu.pipeline_mode<synchronous>, transform_indices = @transform_4, window_bounds = array<i64: 1, 128>}, {pipeline_mode = #tpu.pipeline_mode<synchronous>, transform_indices = @transform_5, window_bounds = array<i64: 128, 128>}, {pipeline_mode = #tpu.pipeline_mode<synchronous>, transform_indices = @transform_6, window_bounds = array<i64: 1, 128>}, {transform_indices = @transform_7, window_bounds = array<i64: 4, 128>}]} {
    %c0 = arith.constant 0 : index
    %c0_0 = arith.constant 0 : index
    %c0_1 = arith.constant 0 : index
    %0 = vector.load %arg1[%c0, %c0_0, %c0_1] : memref<4x640x128xbf16, #tpu.memory_space<vmem>>, vector<4x640x128xbf16>
    %c0_2 = arith.constant 0 : index
    %c0_3 = arith.constant 0 : index
    %1 = vector.load %arg3[%c0_2, %c0_3] : memref<1x256xf32, #tpu.memory_space<vmem>>, vector<1x256xf32>
    %2 = vector.extract_strided_slice %0 {offsets = [0, 0, 0], sizes = [4, 640, 64], strides = [1, 1, 1]} : vector<4x640x128xbf16> to vector<4x640x64xbf16>
    %3 = arith.extf %2 : vector<4x640x64xbf16> to vector<4x640x64xf32>
    %cst = arith.constant dense<0.000000e+00> : vector<4x640xf32>
    %4 = vector.multi_reduction <add>, %3, %cst [2] : vector<4x640x64xf32> to vector<4x640xf32>
    %5 = arith.truncf %4 : vector<4x640xf32> to vector<4x640xbf16>
    %c0_4 = arith.constant 0 : index
    %c0_5 = arith.constant 0 : index
    %c0_6 = arith.constant 0 : index
    %6 = vector.load %arg2[%c0_4, %c0_5, %c0_6] : memref<2x640x256xbf16, #tpu.memory_space<vmem>>, vector<1x640x256xbf16>
    %7 = vector.shape_cast %6 : vector<1x640x256xbf16> to vector<640x256xbf16>
    %cst_7 = arith.constant dense<0.000000e+00> : vector<4x256xf32>
    %8 = tpu.matmul %5, %7, %cst_7 {dimension_numbers = #tpu.dot_dimension_numbers<[1], [0], [0], [1], [0, 0, 1, 1], [], []>} : vector<4x640xbf16>, vector<640x256xbf16>, vector<4x256xf32> -> vector<4x256xf32>
    %9 = vector.broadcast %1 : vector<1x256xf32> to vector<4x256xf32>
    %10 = arith.addf %9, %8 : vector<4x256xf32>
    %11 = vector.extract_strided_slice %0 {offsets = [0, 0, 64], sizes = [4, 640, 64], strides = [1, 1, 1]} : vector<4x640x128xbf16> to vector<4x640x64xbf16>
    %12 = arith.extf %11 : vector<4x640x64xbf16> to vector<4x640x64xf32>
    %cst_8 = arith.constant dense<0.000000e+00> : vector<4x640xf32>
    %13 = vector.multi_reduction <add>, %12, %cst_8 [2] : vector<4x640x64xf32> to vector<4x640xf32>
    %14 = arith.truncf %13 : vector<4x640xf32> to vector<4x640xbf16>
    %c1 = arith.constant 1 : index
    %c0_9 = arith.constant 0 : index
    %c0_10 = arith.constant 0 : index
    %15 = vector.load %arg2[%c1, %c0_9, %c0_10] : memref<2x640x256xbf16, #tpu.memory_space<vmem>>, vector<1x640x256xbf16>
    %16 = vector.shape_cast %15 : vector<1x640x256xbf16> to vector<640x256xbf16>
    %cst_11 = arith.constant dense<0.000000e+00> : vector<4x256xf32>
    %17 = tpu.matmul %14, %16, %cst_11 {dimension_numbers = #tpu.dot_dimension_numbers<[1], [0], [0], [1], [0, 0, 1, 1], [], []>} : vector<4x640xbf16>, vector<640x256xbf16>, vector<4x256xf32> -> vector<4x256xf32>
    %18 = arith.addf %10, %17 : vector<4x256xf32>
    %cst_12 = arith.constant 0.000000e+00 : f32
    %19 = vector.broadcast %cst_12 : f32 to vector<4x256xf32>
    %20 = arith.maximumf %18, %19 : vector<4x256xf32>
    %21 = arith.truncf %20 : vector<4x256xf32> to vector<4x256xbf16>
    %c0_13 = arith.constant 0 : index
    %c0_14 = arith.constant 0 : index
    %22 = vector.load %arg4[%c0_13, %c0_14] : memref<256x128xbf16, #tpu.memory_space<vmem>>, vector<256x128xbf16>
    %cst_15 = arith.constant dense<0.000000e+00> : vector<4x128xf32>
    %23 = tpu.matmul %21, %22, %cst_15 {dimension_numbers = #tpu.dot_dimension_numbers<[1], [0], [0], [1], [0, 0, 1, 1], [], []>} : vector<4x256xbf16>, vector<256x128xbf16>, vector<4x128xf32> -> vector<4x128xf32>
    %c0_16 = arith.constant 0 : index
    %c0_17 = arith.constant 0 : index
    %24 = vector.load %arg5[%c0_16, %c0_17] : memref<1x128xf32, #tpu.memory_space<vmem>>, vector<1x128xf32>
    %25 = vector.broadcast %24 : vector<1x128xf32> to vector<4x128xf32>
    %26 = arith.addf %23, %25 : vector<4x128xf32>
    %cst_18 = arith.constant 0.000000e+00 : f32
    %27 = vector.broadcast %cst_18 : f32 to vector<4x128xf32>
    %28 = arith.maximumf %26, %27 : vector<4x128xf32>
    %29 = arith.truncf %28 : vector<4x128xf32> to vector<4x128xbf16>
    %c0_19 = arith.constant 0 : index
    %c0_20 = arith.constant 0 : index
    %30 = vector.load %arg6[%c0_19, %c0_20] : memref<128x128xbf16, #tpu.memory_space<vmem>>, vector<128x128xbf16>
    %cst_21 = arith.constant dense<0.000000e+00> : vector<4x128xf32>
    %31 = tpu.matmul %29, %30, %cst_21 {dimension_numbers = #tpu.dot_dimension_numbers<[1], [0], [0], [1], [0, 0, 1, 1], [], []>} : vector<4x128xbf16>, vector<128x128xbf16>, vector<4x128xf32> -> vector<4x128xf32>
    %c0_22 = arith.constant 0 : index
    %c0_23 = arith.constant 0 : index
    %32 = vector.load %arg7[%c0_22, %c0_23] : memref<1x128xf32, #tpu.memory_space<vmem>>, vector<1x128xf32>
    %33 = vector.broadcast %32 : vector<1x128xf32> to vector<4x128xf32>
    %34 = arith.addf %31, %33 : vector<4x128xf32>
    %c0_24 = arith.constant 0 : index
    %c0_25 = arith.constant 0 : index
    %35 = vector.load %arg8[%c0_24, %c0_25] : memref<4x128xf32, #tpu.memory_space<vmem>>, vector<4x128xf32>
    tpu.vector_store %arg8[%c0_24, %c0_25], %34 {strides = array<i32>} : memref<4x128xf32, #tpu.memory_space<vmem>>, vector<4x128xf32>,
    return
  }
  func.func @transform_0(%arg0: i32) -> (i32, i32, i32) {
    %c0_i32 = arith.constant 0 : i32
    %c0_i32_0 = arith.constant 0 : i32
    %c0_i32_1 = arith.constant 0 : i32
    return %arg0, %c0_i32, %c0_i32_0 : i32, i32, i32
  }
  func.func @transform_1(%arg0: i32) -> (i32, i32, i32) {
    %c0_i32 = arith.constant 0 : i32
    %c0_i32_0 = arith.constant 0 : i32
    %c0_i32_1 = arith.constant 0 : i32
    %c0_i32_2 = arith.constant 0 : i32
    return %c0_i32, %c0_i32_0, %c0_i32_1 : i32, i32, i32
  }
  func.func @transform_2(%arg0: i32) -> (i32, i32) {
    %c0_i32 = arith.constant 0 : i32
    %c0_i32_0 = arith.constant 0 : i32
    %c0_i32_1 = arith.constant 0 : i32
    return %c0_i32, %c0_i32_0 : i32, i32
  }
  func.func @transform_3(%arg0: i32) -> (i32, i32) {
    %c0_i32 = arith.constant 0 : i32
    %c0_i32_0 = arith.constant 0 : i32
    %c0_i32_1 = arith.constant 0 : i32
    return %c0_i32, %c0_i32_0 : i32, i32
  }
  func.func @transform_4(%arg0: i32) -> (i32, i32) {
    %c0_i32 = arith.constant 0 : i32
    %c0_i32_0 = arith.constant 0 : i32
    %c0_i32_1 = arith.constant 0 : i32
    return %c0_i32, %c0_i32_0 : i32, i32
  }
  func.func @transform_5(%arg0: i32) -> (i32, i32) {
    %c0_i32 = arith.constant 0 : i32
    %c0_i32_0 = arith.constant 0 : i32
    %c0_i32_1 = arith.constant 0 : i32
    return %c0_i32, %c0_i32_0 : i32, i32
  }
  func.func @transform_6(%arg0: i32) -> (i32, i32) {
    %c0_i32 = arith.constant 0 : i32
    %c0_i32_0 = arith.constant 0 : i32
    %c0_i32_1 = arith.constant 0 : i32
    return %c0_i32, %c0_i32_0 : i32, i32
  }
  func.func @transform_7(%arg0: i32) -> (i32, i32) {
    %c0_i32 = arith.constant 0 : i32
    %c0_i32_0 = arith.constant 0 : i32
    return %arg0, %c0_i32 : i32, i32
  }
}

</mosaic_0001>

<llo_original>
// kernel: tpu_custom_call.1
$region0: #{tpu_custom_call.1}
  #allocation0 [shape = 'u32[]', space=smem, size = 0x4, offset = 0x4, fixed_abs, tag = 'smem constant byte address 0x4 - core index']
  #allocation1 [shape = 'u32[144,128]{1,0:T(1,128)}', space=vmem, size = 0x12000, scoped, tag = 'internal scratch']
  %s0 = inlined_call_operand.hbm [shape: bf16[4,640,128], index: 0, kind: input, shape index: {}]
  %s1 = inlined_call_operand.hbm [shape: bf16[2,640,256], index: 1, kind: input, shape index: {}]
  %s2 = inlined_call_operand.vmem [shape: f32[1,256], index: 2, kind: input, shape index: {}]
  %s3 = inlined_call_operand.hbm [shape: bf16[256,128], index: 3, kind: input, shape index: {}]
  %s4 = inlined_call_operand.vmem [shape: f32[1,128], index: 4, kind: input, shape index: {}]
  %s5 = inlined_call_operand.hbm [shape: bf16[128,128], index: 5, kind: input, shape index: {}]
  %s6 = inlined_call_operand.vmem [shape: f32[1,128], index: 6, kind: input, shape index: {}]
  %s7 = inlined_call_operand.hbm [shape: f32[4,128], index: 7, kind: output, shape index: {}]
  %s8 = sld [smem:[#allocation0]]
  $region54: #{tpu_custom_call.1} parent=0
    _
  %s10 = ssub.s32 1, %s8
  %s11 = scalar_select 0, %s10, %s8
  $region1: #{tpu_custom_call.1} parent=0
    #allocation2 [shape = 'u8[655360]{0}', space=vmem, size = 0xa0000, scoped, tag = 'input window, operand 0, single buffered']
    #allocation3 [shape = 's32[1]{0}', space=sflag, size = 0x4, scoped, tag = 'scoped memory for tpu_custom_call.1']
    #allocation4 [shape = 's32[1]{0}', space=sflag, size = 0x4, scoped, tag = 'scoped memory for tpu_custom_call.1']
    #allocation5 [shape = 'u8[655360]{0}', space=vmem, size = 0xa0000, scoped, tag = 'input window, operand 1, single buffered']
    #allocation6 [shape = 's32[1]{0}', space=sflag, size = 0x4, scoped, tag = 'scoped memory for tpu_custom_call.1']
    #allocation7 [shape = 'u8[65536]{0}', space=vmem, size = 0x10000, scoped, tag = 'input window, operand 3, single buffered']
    #allocation8 [shape = 'u8[32768]{0}', space=vmem, size = 0x8000, scoped, tag = 'input window, operand 5, single buffered']
    #allocation9 [shape = 's32[1]{0}', space=sflag, size = 0x4, scoped, tag = 'scoped memory for tpu_custom_call.1']
    #allocation10 [shape = 'u8[2048]{0}', space=vmem, size = 0x800, scoped, tag = 'output window, operand 0, single buffered']
    %12 = vsyncpa [#allocation3], 0
    %13 = vsyncpa [#allocation6], 0
    %14 = vsyncpa [#allocation9], 0
    %15 = vsyncpa [#allocation4], 0
    // Predicated region
    $region2: #{tpu_custom_call.1} parent=1 // pred_check
      _
    $region3: #{tpu_custom_call.1} parent=1 // pred_check_branch
      %17 = sbr.rel (0) target = $region5
    $region4: #{tpu_custom_call.1} parent=1 // pred_region
      %s19 = ssub.s32 20480, 20480
      %20 = vsyncadd [#allocation3], %s19
      %s21 = sshll.u32 [#allocation2], 4
      %s22 = int_to_ptr.vmem [resolvable:$true] %s21
      %27 = dma.hbm_to_vmem [thread:$0]  %s0, 20480, %s22, [#allocation3], 64, 64, 4
    $region5: #{tpu_custom_call.1} parent=1 // pred_fallthru
      _
    // Predicated region
    $region6: #{tpu_custom_call.1} parent=1 // pred_check
      _
    $region7: #{tpu_custom_call.1} parent=1 // pred_check_branch
      %29 = sbr.rel (0) target = $region9
    $region8: #{tpu_custom_call.1} parent=1 // pred_region
      %s31 = ssub.s32 20480, 20480
      %32 = vsyncadd [#allocation6], %s31
      %s33 = sshll.u32 [#allocation5], 4
      %s34 = int_to_ptr.vmem [resolvable:$true] %s33
      %39 = dma.hbm_to_vmem [thread:$0]  %s1, 20480, %s34, [#allocation6], 128, 128, 8
    $region9: #{tpu_custom_call.1} parent=1 // pred_fallthru
      _
    // Predicated region
    $region10: #{tpu_custom_call.1} parent=1 // pred_check
      _
    $region11: #{tpu_custom_call.1} parent=1 // pred_check_branch
      %41 = sbr.rel (0) target = $region13
    $region12: #{tpu_custom_call.1} parent=1 // pred_region
      _
    $region13: #{tpu_custom_call.1} parent=1 // pred_fallthru
      _
    // Predicated region
    $region14: #{tpu_custom_call.1} parent=1 // pred_check
      _
    $region15: #{tpu_custom_call.1} parent=1 // pred_check_branch
      %43 = sbr.rel (0) target = $region17
    $region16: #{tpu_custom_call.1} parent=1 // pred_region
      %s45 = ssub.s32 2048, 2048
      %46 = vsyncadd [#allocation6], %s45
      %s47 = sshll.u32 [#allocation7], 4
      %s48 = int_to_ptr.vmem [resolvable:$true] %s47
      %53 = dma.hbm_to_vmem [thread:$0]  %s3, 2048, %s48, [#allocation6], 64, 64, 4
    $region17: #{tpu_custom_call.1} parent=1 // pred_fallthru
      _
    // Predicated region
    $region18: #{tpu_custom_call.1} parent=1 // pred_check
      _
    $region19: #{tpu_custom_call.1} parent=1 // pred_check_branch
      %55 = sbr.rel (0) target = $region21
    $region20: #{tpu_custom_call.1} parent=1 // pred_region
      _
    $region21: #{tpu_custom_call.1} parent=1 // pred_fallthru
      _
    // Predicated region
    $region22: #{tpu_custom_call.1} parent=1 // pred_check
      _
    $region23: #{tpu_custom_call.1} parent=1 // pred_check_branch
      %57 = sbr.rel (0) target = $region25
    $region24: #{tpu_custom_call.1} parent=1 // pred_region
      %s59 = ssub.s32 1024, 1024
      %60 = vsyncadd [#allocation9], %s59
      %s61 = sshll.u32 [#allocation8], 4
      %s62 = int_to_ptr.vmem [resolvable:$true] %s61
      %67 = dma.hbm_to_vmem [thread:$0]  %s5, 1024, %s62, [#allocation9], 64, 64, 4
    $region25: #{tpu_custom_call.1} parent=1 // pred_fallthru
      _
    // Predicated region
    $region26: #{tpu_custom_call.1} parent=1 // pred_check
      _
    $region27: #{tpu_custom_call.1} parent=1 // pred_check_branch
      %69 = sbr.rel (0) target = $region29
    $region28: #{tpu_custom_call.1} parent=1 // pred_region
      _
    $region29: #{tpu_custom_call.1} parent=1 // pred_fallthru
      _
    // Predicated region
    $region30: #{tpu_custom_call.1} parent=1 // pred_check
      _
    $region31: #{tpu_custom_call.1} parent=1 // pred_check_branch
      %71 = sbr.rel (0) target = $region33
    $region32: #{tpu_custom_call.1} parent=1 // pred_region
      %72 = dma.done [#allocation3], 20480
    $region33: #{tpu_custom_call.1} parent=1 // pred_fallthru
      _
    // Predicated region
    $region34: #{tpu_custom_call.1} parent=1 // pred_check
      _
    $region35: #{tpu_custom_call.1} parent=1 // pred_check_branch
      %74 = sbr.rel (0) target = $region37
    $region36: #{tpu_custom_call.1} parent=1 // pred_region
      %75 = dma.done [#allocation6], 20480
    $region37: #{tpu_custom_call.1} parent=1 // pred_fallthru
      _
    // Predicated region
    $region38: #{tpu_custom_call.1} parent=1 // pred_check
      _
    $region39: #{tpu_custom_call.1} parent=1 // pred_check_branch
      %77 = sbr.rel (0) target = $region41
    $region40: #{tpu_custom_call.1} parent=1 // pred_region
      %78 = dma.done [#allocation6], 2048
    $region41: #{tpu_custom_call.1} parent=1 // pred_fallthru
      _
    // Predicated region
    $region42: #{tpu_custom_call.1} parent=1 // pred_check
      _
    $region43: #{tpu_custom_call.1} parent=1 // pred_check_branch
      %80 = sbr.rel (0) target = $region45
    $region44: #{tpu_custom_call.1} parent=1 // pred_region
      %81 = dma.done [#allocation9], 1024
    $region45: #{tpu_custom_call.1} parent=1 // pred_fallthru
      _
    %v83 = vld [vmem:[#allocation2] sm:$0xf]
    %v84 = vld [vmem:[#allocation2 + $0x4] sm:$0xf]
    %v85 = vld [vmem:[#allocation2 + $0x8] sm:$0xf]
    %v86 = vld [vmem:[#allocation2 + $0xc] sm:$0xf]
    %v87 = vld [vmem:[#allocation2 + $0x10] sm:$0xf]
    %v88 = vld [vmem:[#allocation2 + $0x14] sm:$0xf]
    %v89 = vld [vmem:[#allocation2 + $0x18] sm:$0xf]
    %v90 = vld [vmem:[#allocation2 + $0x1c] sm:$0xf]
    %v91 = vld [vmem:[#allocation2 + $0x20] sm:$0xf]
    %v92 = vld [vmem:[#allocation2 + $0x24] sm:$0xf]
    %v93 = vld [vmem:[#allocation2 + $0x28] sm:$0xf]
    %v94 = vld [vmem:[#allocation2 + $0x2c] sm:$0xf]
    %v95 = vld [vmem:[#allocation2 + $0x30] sm:$0xf]
    %v96 = vld [vmem:[#allocation2 + $0x34] sm:$0xf]
    %v97 = vld [vmem:[#allocation2 + $0x38] sm:$0xf]
    %v98 = vld [vmem:[#allocation2 + $0x3c] sm:$0xf]
    %v99 = vld [vmem:[#allocation2 + $0x40] sm:$0xf]
    %v100 = vld [vmem:[#allocation2 + $0x44] sm:$0xf]
    %v101 = vld [vmem:[#allocation2 + $0x48] sm:$0xf]
    %v102 = vld [vmem:[#allocation2 + $0x4c] sm:$0xf]
    %v103 = vld [vmem:[#allocation2 + $0x50] sm:$0xf]
    %v104 = vld [vmem:[#allocation2 + $0x54] sm:$0xf]
    %v105 = vld [vmem:[#allocation2 + $0x58] sm:$0xf]
    %v106 = vld [vmem:[#allocation2 + $0x5c] sm:$0xf]
    %v107 = vld [vmem:[#allocation2 + $0x60] sm:$0xf]
    %v108 = vld [vmem:[#allocation2 + $0x64] sm:$0xf]
    %v109 = vld [vmem:[#allocation2 + $0x68] sm:$0xf]
    %v110 = vld [vmem:[#allocation2 + $0x6c] sm:$0xf]
    %v111 = vld [vmem:[#allocation2 + $0x70] sm:$0xf]
    %v112 = vld [vmem:[#allocation2 + $0x74] sm:$0xf]
    %v113 = vld [vmem:[#allocation2 + $0x78] sm:$0xf]
    %v114 = vld [vmem:[#allocation2 + $0x7c] sm:$0xf]
    %v115 = vld [vmem:[#allocation2 + $0x80] sm:$0xf]
    %v116 = vld [vmem:[#allocation2 + $0x84] sm:$0xf]
    %v117 = vld [vmem:[#allocation2 + $0x88] sm:$0xf]
    %v118 = vld [vmem:[#allocation2 + $0x8c] sm:$0xf]
    %v119 = vld [vmem:[#allocation2 + $0x90] sm:$0xf]
    %v120 = vld [vmem:[#allocation2 + $0x94] sm:$0xf]
    %v121 = vld [vmem:[#allocation2 + $0x98] sm:$0xf]
    %v122 = vld [vmem:[#allocation2 + $0x9c] sm:$0xf]
    %v123 = vld [vmem:[#allocation2 + $0xa0] sm:$0xf]
    %v124 = vld [vmem:[#allocation2 + $0xa4] sm:$0xf]
    %v125 = vld [vmem:[#allocation2 + $0xa8] sm:$0xf]
    %v126 = vld [vmem:[#allocation2 + $0xac] sm:$0xf]
    %v127 = vld [vmem:[#allocation2 + $0xb0] sm:$0xf]
    %v128 = vld [vmem:[#allocation2 + $0xb4] sm:$0xf]
    %v129 = vld [vmem:[#allocation2 + $0xb8] sm:$0xf]
    %v130 = vld [vmem:[#allocation2 + $0xbc] sm:$0xf]
    %v131 = vld [vmem:[#allocation2 + $0xc0] sm:$0xf]
    %v132 = vld [vmem:[#allocation2 + $0xc4] sm:$0xf]
    %v133 = vld [vmem:[#allocation2 + $0xc8] sm:$0xf]
    %v134 = vld [vmem:[#allocation2 + $0xcc] sm:$0xf]
    %v135 = vld [vmem:[#allocation2 + $0xd0] sm:$0xf]
    %v136 = vld [vmem:[#allocation2 + $0xd4] sm:$0xf]
    %v137 = vld [vmem:[#allocation2 + $0xd8] sm:$0xf]
    %v138 = vld [vmem:[#allocation2 + $0xdc] sm:$0xf]
    %v139 = vld [vmem:[#allocation2 + $0xe0] sm:$0xf]
    %v140 = vld [vmem:[#allocation2 + $0xe4] sm:$0xf]
    %v141 = vld [vmem:[#allocation2 + $0xe8] sm:$0xf]
    %v142 = vld [vmem:[#allocation2 + $0xec] sm:$0xf]
    %v143 = vld [vmem:[#allocation2 + $0xf0] sm:$0xf]
    %v144 = vld [vmem:[#allocation2 + $0xf4] sm:$0xf]
    %v145 = vld [vmem:[#allocation2 + $0xf8] sm:$0xf]
    %v146 = vld [vmem:[#allocation2 + $0xfc] sm:$0xf]
    %v147 = vld [vmem:[#allocation2 + $0x100] sm:$0xf]
    %v148 = vld [vmem:[#allocation2 + $0x104] sm:$0xf]
    %v149 = vld [vmem:[#allocation2 + $0x108] sm:$0xf]
    %v150 = vld [vmem:[#allocation2 + $0x10c] sm:$0xf]
    %v151 = vld [vmem:[#allocation2 + $0x110] sm:$0xf]
    %v152 = vld [vmem:[#allocation2 + $0x114] sm:$0xf]
    %v153 = vld [vmem:[#allocation2 + $0x118] sm:$0xf]
    %v154 = vld [vmem:[#allocation2 + $0x11c] sm:$0xf]
    %v155 = vld [vmem:[#allocation2 + $0x120] sm:$0xf]
    %v156 = vld [vmem:[#allocation2 + $0x124] sm:$0xf]
    %v157 = vld [vmem:[#allocation2 + $0x128] sm:$0xf]
    %v158 = vld [vmem:[#allocation2 + $0x12c] sm:$0xf]
    %v159 = vld [vmem:[#allocation2 + $0x130] sm:$0xf]
    %v160 = vld [vmem:[#allocation2 + $0x134] sm:$0xf]
    %v161 = vld [vmem:[#allocation2 + $0x138] sm:$0xf]
    %v162 = vld [vmem:[#allocation2 + $0x13c] sm:$0xf]
    %v163 = vld [vmem:[#allocation2 + $0x140] sm:$0xf]
    %v164 = vld [vmem:[#allocation2 + $0x144] sm:$0xf]
    %v165 = vld [vmem:[#allocation2 + $0x148] sm:$0xf]
    %v166 = vld [vmem:[#allocation2 + $0x14c] sm:$0xf]
    %v167 = vld [vmem:[#allocation2 + $0x150] sm:$0xf]
    %v168 = vld [vmem:[#allocation2 + $0x154] sm:$0xf]
    %v169 = vld [vmem:[#allocation2 + $0x158] sm:$0xf]
    %v170 = vld [vmem:[#allocation2 + $0x15c] sm:$0xf]
    %v171 = vld [vmem:[#allocation2 + $0x160] sm:$0xf]
    %v172 = vld [vmem:[#allocation2 + $0x164] sm:$0xf]
    %v173 = vld [vmem:[#allocation2 + $0x168] sm:$0xf]
    %v174 = vld [vmem:[#allocation2 + $0x16c] sm:$0xf]
    %v175 = vld [vmem:[#allocation2 + $0x170] sm:$0xf]
    %v176 = vld [vmem:[#allocation2 + $0x174] sm:$0xf]
    %v177 = vld [vmem:[#allocation2 + $0x178] sm:$0xf]
    %v178 = vld [vmem:[#allocation2 + $0x17c] sm:$0xf]
    %v179 = vld [vmem:[#allocation2 + $0x180] sm:$0xf]
    %v180 = vld [vmem:[#allocation2 + $0x184] sm:$0xf]
    %v181 = vld [vmem:[#allocation2 + $0x188] sm:$0xf]
    %v182 = vld [vmem:[#allocation2 + $0x18c] sm:$0xf]
    %v183 = vld [vmem:[#allocation2 + $0x190] sm:$0xf]
    %v184 = vld [vmem:[#allocation2 + $0x194] sm:$0xf]
    %v185 = vld [vmem:[#allocation2 + $0x198] sm:$0xf]
    %v186 = vld [vmem:[#allocation2 + $0x19c] sm:$0xf]
    %v187 = vld [vmem:[#allocation2 + $0x1a0] sm:$0xf]
    %v188 = vld [vmem:[#allocation2 + $0x1a4] sm:$0xf]
    %v189 = vld [vmem:[#allocation2 + $0x1a8] sm:$0xf]
    %v190 = vld [vmem:[#allocation2 + $0x1ac] sm:$0xf]
    %v191 = vld [vmem:[#allocation2 + $0x1b0] sm:$0xf]
    %v192 = vld [vmem:[#allocation2 + $0x1b4] sm:$0xf]
    %v193 = vld [vmem:[#allocation2 + $0x1b8] sm:$0xf]
    %v194 = vld [vmem:[#allocation2 + $0x1bc] sm:$0xf]
    %v195 = vld [vmem:[#allocation2 + $0x1c0] sm:$0xf]
    %v196 = vld [vmem:[#allocation2 + $0x1c4] sm:$0xf]
    %v197 = vld [vmem:[#allocation2 + $0x1c8] sm:$0xf]
    %v198 = vld [vmem:[#allocation2 + $0x1cc] sm:$0xf]
    %v199 = vld [vmem:[#allocation2 + $0x1d0] sm:$0xf]
    %v200 = vld [vmem:[#allocation2 + $0x1d4] sm:$0xf]
    %v201 = vld [vmem:[#allocation2 + $0x1d8] sm:$0xf]
    %v202 = vld [vmem:[#allocation2 + $0x1dc] sm:$0xf]
    %v203 = vld [vmem:[#allocation2 + $0x1e0] sm:$0xf]
    %v204 = vld [vmem:[#allocation2 + $0x1e4] sm:$0xf]
    %v205 = vld [vmem:[#allocation2 + $0x1e8] sm:$0xf]
    %v206 = vld [vmem:[#allocation2 + $0x1ec] sm:$0xf]
    %v207 = vld [vmem:[#allocation2 + $0x1f0] sm:$0xf]
    %v208 = vld [vmem:[#allocation2 + $0x1f4] sm:$0xf]
    %v209 = vld [vmem:[#allocation2 + $0x1f8] sm:$0xf]
    %v210 = vld [vmem:[#allocation2 + $0x1fc] sm:$0xf]
    %v211 = vld [vmem:[#allocation2 + $0x200] sm:$0xf]
    %v212 = vld [vmem:[#allocation2 + $0x204] sm:$0xf]
    %v213 = vld [vmem:[#allocation2 + $0x208] sm:$0xf]
    %v214 = vld [vmem:[#allocation2 + $0x20c] sm:$0xf]
    %v215 = vld [vmem:[#allocation2 + $0x210] sm:$0xf]
    %v216 = vld [vmem:[#allocation2 + $0x214] sm:$0xf]
    %v217 = vld [vmem:[#allocation2 + $0x218] sm:$0xf]
    %v218 = vld [vmem:[#allocation2 + $0x21c] sm:$0xf]
    %v219 = vld [vmem:[#allocation2 + $0x220] sm:$0xf]
    %v220 = vld [vmem:[#allocation2 + $0x224] sm:$0xf]
    %v221 = vld [vmem:[#allocation2 + $0x228] sm:$0xf]
    %v222 = vld [vmem:[#allocation2 + $0x22c] sm:$0xf]
    %v223 = vld [vmem:[#allocation2 + $0x230] sm:$0xf]
    %v224 = vld [vmem:[#allocation2 + $0x234] sm:$0xf]
    %v225 = vld [vmem:[#allocation2 + $0x238] sm:$0xf]
    %v226 = vld [vmem:[#allocation2 + $0x23c] sm:$0xf]
    %v227 = vld [vmem:[#allocation2 + $0x240] sm:$0xf]
    %v228 = vld [vmem:[#allocation2 + $0x244] sm:$0xf]
    %v229 = vld [vmem:[#allocation2 + $0x248] sm:$0xf]
    %v230 = vld [vmem:[#allocation2 + $0x24c] sm:$0xf]
    %v231 = vld [vmem:[#allocation2 + $0x250] sm:$0xf]
    %v232 = vld [vmem:[#allocation2 + $0x254] sm:$0xf]
    %v233 = vld [vmem:[#allocation2 + $0x258] sm:$0xf]
    %v234 = vld [vmem:[#allocation2 + $0x25c] sm:$0xf]
    %v235 = vld [vmem:[#allocation2 + $0x260] sm:$0xf]
    %v236 = vld [vmem:[#allocation2 + $0x264] sm:$0xf]
    %v237 = vld [vmem:[#allocation2 + $0x268] sm:$0xf]
    %v238 = vld [vmem:[#allocation2 + $0x26c] sm:$0xf]
    %v239 = vld [vmem:[#allocation2 + $0x270] sm:$0xf]
    %v240 = vld [vmem:[#allocation2 + $0x274] sm:$0xf]
    %v241 = vld [vmem:[#allocation2 + $0x278] sm:$0xf]
    %v242 = vld [vmem:[#allocation2 + $0x27c] sm:$0xf]
    %v243 = vld [vmem:[#allocation2 + $0x280] sm:$0xf]
    %v244 = vld [vmem:[#allocation2 + $0x284] sm:$0xf]
    %v245 = vld [vmem:[#allocation2 + $0x288] sm:$0xf]
    %v246 = vld [vmem:[#allocation2 + $0x28c] sm:$0xf]
    %v247 = vld [vmem:[#allocation2 + $0x290] sm:$0xf]
    %v248 = vld [vmem:[#allocation2 + $0x294] sm:$0xf]
    %v249 = vld [vmem:[#allocation2 + $0x298] sm:$0xf]
    %v250 = vld [vmem:[#allocation2 + $0x29c] sm:$0xf]
    %v251 = vld [vmem:[#allocation2 + $0x2a0] sm:$0xf]
    %v252 = vld [vmem:[#allocation2 + $0x2a4] sm:$0xf]
    %v253 = vld [vmem:[#allocation2 + $0x2a8] sm:$0xf]
    %v254 = vld [vmem:[#allocation2 + $0x2ac] sm:$0xf]
    %v255 = vld [vmem:[#allocation2 + $0x2b0] sm:$0xf]
    %v256 = vld [vmem:[#allocation2 + $0x2b4] sm:$0xf]
    %v257 = vld [vmem:[#allocation2 + $0x2b8] sm:$0xf]
    %v258 = vld [vmem:[#allocation2 + $0x2bc] sm:$0xf]
    %v259 = vld [vmem:[#allocation2 + $0x2c0] sm:$0xf]
    %v260 = vld [vmem:[#allocation2 + $0x2c4] sm:$0xf]
    %v261 = vld [vmem:[#allocation2 + $0x2c8] sm:$0xf]
    %v262 = vld [vmem:[#allocation2 + $0x2cc] sm:$0xf]
    %v263 = vld [vmem:[#allocation2 + $0x2d0] sm:$0xf]
    %v264 = vld [vmem:[#allocation2 + $0x2d4] sm:$0xf]
    %v265 = vld [vmem:[#allocation2 + $0x2d8] sm:$0xf]
    %v266 = vld [vmem:[#allocation2 + $0x2dc] sm:$0xf]
    %v267 = vld [vmem:[#allocation2 + $0x2e0] sm:$0xf]
    %v268 = vld [vmem:[#allocation2 + $0x2e4] sm:$0xf]
    %v269 = vld [vmem:[#allocation2 + $0x2e8] sm:$0xf]
    %v270 = vld [vmem:[#allocation2 + $0x2ec] sm:$0xf]
    %v271 = vld [vmem:[#allocation2 + $0x2f0] sm:$0xf]
    %v272 = vld [vmem:[#allocation2 + $0x2f4] sm:$0xf]
    %v273 = vld [vmem:[#allocation2 + $0x2f8] sm:$0xf]
    %v274 = vld [vmem:[#allocation2 + $0x2fc] sm:$0xf]
    %v275 = vld [vmem:[#allocation2 + $0x300] sm:$0xf]
    %v276 = vld [vmem:[#allocation2 + $0x304] sm:$0xf]
    %v277 = vld [vmem:[#allocation2 + $0x308] sm:$0xf]
    %v278 = vld [vmem:[#allocation2 + $0x30c] sm:$0xf]
    %v279 = vld [vmem:[#allocation2 + $0x310] sm:$0xf]
    %v280 = vld [vmem:[#allocation2 + $0x314] sm:$0xf]
    %v281 = vld [vmem:[#allocation2 + $0x318] sm:$0xf]
    %v282 = vld [vmem:[#allocation2 + $0x31c] sm:$0xf]
    %v283 = vld [vmem:[#allocation2 + $0x320] sm:$0xf]
    %v284 = vld [vmem:[#allocation2 + $0x324] sm:$0xf]
    %v285 = vld [vmem:[#allocation2 + $0x328] sm:$0xf]
    %v286 = vld [vmem:[#allocation2 + $0x32c] sm:$0xf]
    %v287 = vld [vmem:[#allocation2 + $0x330] sm:$0xf]
    %v288 = vld [vmem:[#allocation2 + $0x334] sm:$0xf]
    %v289 = vld [vmem:[#allocation2 + $0x338] sm:$0xf]
    %v290 = vld [vmem:[#allocation2 + $0x33c] sm:$0xf]
    %v291 = vld [vmem:[#allocation2 + $0x340] sm:$0xf]
    %v292 = vld [vmem:[#allocation2 + $0x344] sm:$0xf]
    %v293 = vld [vmem:[#allocation2 + $0x348] sm:$0xf]
    %v294 = vld [vmem:[#allocation2 + $0x34c] sm:$0xf]
    %v295 = vld [vmem:[#allocation2 + $0x350] sm:$0xf]
    %v296 = vld [vmem:[#allocation2 + $0x354] sm:$0xf]
    %v297 = vld [vmem:[#allocation2 + $0x358] sm:$0xf]
    %v298 = vld [vmem:[#allocation2 + $0x35c] sm:$0xf]
    %v299 = vld [vmem:[#allocation2 + $0x360] sm:$0xf]
    %v300 = vld [vmem:[#allocation2 + $0x364] sm:$0xf]
    %v301 = vld [vmem:[#allocation2 + $0x368] sm:$0xf]
    %v302 = vld [vmem:[#allocation2 + $0x36c] sm:$0xf]
    %v303 = vld [vmem:[#allocation2 + $0x370] sm:$0xf]
    %v304 = vld [vmem:[#allocation2 + $0x374] sm:$0xf]
    %v305 = vld [vmem:[#allocation2 + $0x378] sm:$0xf]
    %v306 = vld [vmem:[#allocation2 + $0x37c] sm:$0xf]
    %v307 = vld [vmem:[#allocation2 + $0x380] sm:$0xf]
    %v308 = vld [vmem:[#allocation2 + $0x384] sm:$0xf]
    %v309 = vld [vmem:[#allocation2 + $0x388] sm:$0xf]
    %v310 = vld [vmem:[#allocation2 + $0x38c] sm:$0xf]
    %v311 = vld [vmem:[#allocation2 + $0x390] sm:$0xf]
    %v312 = vld [vmem:[#allocation2 + $0x394] sm:$0xf]
    %v313 = vld [vmem:[#allocation2 + $0x398] sm:$0xf]
    %v314 = vld [vmem:[#allocation2 + $0x39c] sm:$0xf]
    %v315 = vld [vmem:[#allocation2 + $0x3a0] sm:$0xf]
    %v316 = vld [vmem:[#allocation2 + $0x3a4] sm:$0xf]
    %v317 = vld [vmem:[#allocation2 + $0x3a8] sm:$0xf]
    %v318 = vld [vmem:[#allocation2 + $0x3ac] sm:$0xf]
    %v319 = vld [vmem:[#allocation2 + $0x3b0] sm:$0xf]
    %v320 = vld [vmem:[#allocation2 + $0x3b4] sm:$0xf]
    %v321 = vld [vmem:[#allocation2 + $0x3b8] sm:$0xf]
    %v322 = vld [vmem:[#allocation2 + $0x3bc] sm:$0xf]
    %v323 = vld [vmem:[#allocation2 + $0x3c0] sm:$0xf]
    %v324 = vld [vmem:[#allocation2 + $0x3c4] sm:$0xf]
    %v325 = vld [vmem:[#allocation2 + $0x3c8] sm:$0xf]
    %v326 = vld [vmem:[#allocation2 + $0x3cc] sm:$0xf]
    %v327 = vld [vmem:[#allocation2 + $0x3d0] sm:$0xf]
    %v328 = vld [vmem:[#allocation2 + $0x3d4] sm:$0xf]
    %v329 = vld [vmem:[#allocation2 + $0x3d8] sm:$0xf]
    %v330 = vld [vmem:[#allocation2 + $0x3dc] sm:$0xf]
    %v331 = vld [vmem:[#allocation2 + $0x3e0] sm:$0xf]
    %v332 = vld [vmem:[#allocation2 + $0x3e4] sm:$0xf]
    %v333 = vld [vmem:[#allocation2 + $0x3e8] sm:$0xf]
    %v334 = vld [vmem:[#allocation2 + $0x3ec] sm:$0xf]
    %v335 = vld [vmem:[#allocation2 + $0x3f0] sm:$0xf]
    %v336 = vld [vmem:[#allocation2 + $0x3f4] sm:$0xf]
    %v337 = vld [vmem:[#allocation2 + $0x3f8] sm:$0xf]
    %v338 = vld [vmem:[#allocation2 + $0x3fc] sm:$0xf]
    %v339 = vld [vmem:[#allocation2 + $0x400] sm:$0xf]
    %v340 = vld [vmem:[#allocation2 + $0x404] sm:$0xf]
    %v341 = vld [vmem:[#allocation2 + $0x408] sm:$0xf]
    %v342 = vld [vmem:[#allocation2 + $0x40c] sm:$0xf]
    %v343 = vld [vmem:[#allocation2 + $0x410] sm:$0xf]
    %v344 = vld [vmem:[#allocation2 + $0x414] sm:$0xf]
    %v345 = vld [vmem:[#allocation2 + $0x418] sm:$0xf]
    %v346 = vld [vmem:[#allocation2 + $0x41c] sm:$0xf]
    %v347 = vld [vmem:[#allocation2 + $0x420] sm:$0xf]
    %v348 = vld [vmem:[#allocation2 + $0x424] sm:$0xf]
    %v349 = vld [vmem:[#allocation2 + $0x428] sm:$0xf]
    %v350 = vld [vmem:[#allocation2 + $0x42c] sm:$0xf]
    %v351 = vld [vmem:[#allocation2 + $0x430] sm:$0xf]
    %v352 = vld [vmem:[#allocation2 + $0x434] sm:$0xf]
    %v353 = vld [vmem:[#allocation2 + $0x438] sm:$0xf]
    %v354 = vld [vmem:[#allocation2 + $0x43c] sm:$0xf]
    %v355 = vld [vmem:[#allocation2 + $0x440] sm:$0xf]
    %v356 = vld [vmem:[#allocation2 + $0x444] sm:$0xf]
    %v357 = vld [vmem:[#allocation2 + $0x448] sm:$0xf]
    %v358 = vld [vmem:[#allocation2 + $0x44c] sm:$0xf]
    %v359 = vld [vmem:[#allocation2 + $0x450] sm:$0xf]
    %v360 = vld [vmem:[#allocation2 + $0x454] sm:$0xf]
    %v361 = vld [vmem:[#allocation2 + $0x458] sm:$0xf]
    %v362 = vld [vmem:[#allocation2 + $0x45c] sm:$0xf]
    %v363 = vld [vmem:[#allocation2 + $0x460] sm:$0xf]
    %v364 = vld [vmem:[#allocation2 + $0x464] sm:$0xf]
    %v365 = vld [vmem:[#allocation2 + $0x468] sm:$0xf]
    %v366 = vld [vmem:[#allocation2 + $0x46c] sm:$0xf]
    %v367 = vld [vmem:[#allocation2 + $0x470] sm:$0xf]
    %v368 = vld [vmem:[#allocation2 + $0x474] sm:$0xf]
    %v369 = vld [vmem:[#allocation2 + $0x478] sm:$0xf]
    %v370 = vld [vmem:[#allocation2 + $0x47c] sm:$0xf]
    %v371 = vld [vmem:[#allocation2 + $0x480] sm:$0xf]
    %v372 = vld [vmem:[#allocation2 + $0x484] sm:$0xf]
    %v373 = vld [vmem:[#allocation2 + $0x488] sm:$0xf]
    %v374 = vld [vmem:[#allocation2 + $0x48c] sm:$0xf]
    %v375 = vld [vmem:[#allocation2 + $0x490] sm:$0xf]
    %v376 = vld [vmem:[#allocation2 + $0x494] sm:$0xf]
    %v377 = vld [vmem:[#allocation2 + $0x498] sm:$0xf]
    %v378 = vld [vmem:[#allocation2 + $0x49c] sm:$0xf]
    %v379 = vld [vmem:[#allocation2 + $0x4a0] sm:$0xf]
    %v380 = vld [vmem:[#allocation2 + $0x4a4] sm:$0xf]
    %v381 = vld [vmem:[#allocation2 + $0x4a8] sm:$0xf]
    %v382 = vld [vmem:[#allocation2 + $0x4ac] sm:$0xf]
    %v383 = vld [vmem:[#allocation2 + $0x4b0] sm:$0xf]
    %v384 = vld [vmem:[#allocation2 + $0x4b4] sm:$0xf]
    %v385 = vld [vmem:[#allocation2 + $0x4b8] sm:$0xf]
    %v386 = vld [vmem:[#allocation2 + $0x4bc] sm:$0xf]
    %v387 = vld [vmem:[#allocation2 + $0x4c0] sm:$0xf]
    %v388 = vld [vmem:[#allocation2 + $0x4c4] sm:$0xf]
    %v389 = vld [vmem:[#allocation2 + $0x4c8] sm:$0xf]
    %v390 = vld [vmem:[#allocation2 + $0x4cc] sm:$0xf]
    %v391 = vld [vmem:[#allocation2 + $0x4d0] sm:$0xf]
    %v392 = vld [vmem:[#allocation2 + $0x4d4] sm:$0xf]
    %v393 = vld [vmem:[#allocation2 + $0x4d8] sm:$0xf]
    %v394 = vld [vmem:[#allocation2 + $0x4dc] sm:$0xf]
    %v395 = vld [vmem:[#allocation2 + $0x4e0] sm:$0xf]
    %v396 = vld [vmem:[#allocation2 + $0x4e4] sm:$0xf]
    %v397 = vld [vmem:[#allocation2 + $0x4e8] sm:$0xf]
    %v398 = vld [vmem:[#allocation2 + $0x4ec] sm:$0xf]
    %v399 = vld [vmem:[#allocation2 + $0x4f0] sm:$0xf]
    %v400 = vld [vmem:[#allocation2 + $0x4f4] sm:$0xf]
    %v401 = vld [vmem:[#allocation2 + $0x4f8] sm:$0xf]
    %v402 = vld [vmem:[#allocation2 + $0x4fc] sm:$0xf]
    %v403 = vld [vmem:[%s2] sm:$0x3]
    %v404 = vunpack.c.l.bf16 %v83
    %v405 = vunpack.c.l.bf16 %v84
    %v406 = vunpack.c.l.bf16 %v85
    %v407 = vunpack.c.l.bf16 %v86
    %v408 = vunpack.c.l.bf16 %v87
    %v409 = vunpack.c.l.bf16 %v88
    %v410 = vunpack.c.l.bf16 %v89
    %v411 = vunpack.c.l.bf16 %v90
    %v412 = vunpack.c.l.bf16 %v91
    %v413 = vunpack.c.l.bf16 %v92
    %v414 = vunpack.c.l.bf16 %v93
    %v415 = vunpack.c.l.bf16 %v94
    %v416 = vunpack.c.l.bf16 %v95
    %v417 = vunpack.c.l.bf16 %v96
    %v418 = vunpack.c.l.bf16 %v97
    %v419 = vunpack.c.l.bf16 %v98
    %v420 = vunpack.c.l.bf16 %v99
    %v421 = vunpack.c.l.bf16 %v100
    %v422 = vunpack.c.l.bf16 %v101
    %v423 = vunpack.c.l.bf16 %v102
    %v424 = vunpack.c.l.bf16 %v103
    %v425 = vunpack.c.l.bf16 %v104
    %v426 = vunpack.c.l.bf16 %v105
    %v427 = vunpack.c.l.bf16 %v106
    %v428 = vunpack.c.l.bf16 %v107
    %v429 = vunpack.c.l.bf16 %v108
    %v430 = vunpack.c.l.bf16 %v109
    %v431 = vunpack.c.l.bf16 %v110
    %v432 = vunpack.c.l.bf16 %v111
    %v433 = vunpack.c.l.bf16 %v112
    %v434 = vunpack.c.l.bf16 %v113
    %v435 = vunpack.c.l.bf16 %v114
    %v436 = vunpack.c.l.bf16 %v115
    %v437 = vunpack.c.l.bf16 %v116
    %v438 = vunpack.c.l.bf16 %v117
    %v439 = vunpack.c.l.bf16 %v118
    %v440 = vunpack.c.l.bf16 %v119
    %v441 = vunpack.c.l.bf16 %v120
    %v442 = vunpack.c.l.bf16 %v121
    %v443 = vunpack.c.l.bf16 %v122
    %v444 = vunpack.c.l.bf16 %v123
    %v445 = vunpack.c.l.bf16 %v124
    %v446 = vunpack.c.l.bf16 %v125
    %v447 = vunpack.c.l.bf16 %v126
    %v448 = vunpack.c.l.bf16 %v127
    %v449 = vunpack.c.l.bf16 %v128
    %v450 = vunpack.c.l.bf16 %v129
    %v451 = vunpack.c.l.bf16 %v130
    %v452 = vunpack.c.l.bf16 %v131
    %v453 = vunpack.c.l.bf16 %v132
    %v454 = vunpack.c.l.bf16 %v133
    %v455 = vunpack.c.l.bf16 %v134
    %v456 = vunpack.c.l.bf16 %v135
    %v457 = vunpack.c.l.bf16 %v136
    %v458 = vunpack.c.l.bf16 %v137
    %v459 = vunpack.c.l.bf16 %v138
    %v460 = vunpack.c.l.bf16 %v139
    %v461 = vunpack.c.l.bf16 %v140
    %v462 = vunpack.c.l.bf16 %v141
    %v463 = vunpack.c.l.bf16 %v142
    %v464 = vunpack.c.l.bf16 %v143
    %v465 = vunpack.c.l.bf16 %v144
    %v466 = vunpack.c.l.bf16 %v145
    %v467 = vunpack.c.l.bf16 %v146
    %v468 = vunpack.c.l.bf16 %v147
    %v469 = vunpack.c.l.bf16 %v148
    %v470 = vunpack.c.l.bf16 %v149
    %v471 = vunpack.c.l.bf16 %v150
    %v472 = vunpack.c.l.bf16 %v151
    %v473 = vunpack.c.l.bf16 %v152
    %v474 = vunpack.c.l.bf16 %v153
    %v475 = vunpack.c.l.bf16 %v154
    %v476 = vunpack.c.l.bf16 %v155
    %v477 = vunpack.c.l.bf16 %v156
    %v478 = vunpack.c.l.bf16 %v157
    %v479 = vunpack.c.l.bf16 %v158
    %v480 = vunpack.c.l.bf16 %v159
    %v481 = vunpack.c.l.bf16 %v160
    %v482 = vunpack.c.l.bf16 %v161
    %v483 = vunpack.c.l.bf16 %v162
    %v484 = vunpack.c.l.bf16 %v163
    %v485 = vunpack.c.l.bf16 %v164
    %v486 = vunpack.c.l.bf16 %v165
    %v487 = vunpack.c.l.bf16 %v166
    %v488 = vunpack.c.l.bf16 %v167
    %v489 = vunpack.c.l.bf16 %v168
    %v490 = vunpack.c.l.bf16 %v169
    %v491 = vunpack.c.l.bf16 %v170
    %v492 = vunpack.c.l.bf16 %v171
    %v493 = vunpack.c.l.bf16 %v172
    %v494 = vunpack.c.l.bf16 %v173
    %v495 = vunpack.c.l.bf16 %v174
    %v496 = vunpack.c.l.bf16 %v175
    %v497 = vunpack.c.l.bf16 %v176
    %v498 = vunpack.c.l.bf16 %v177
    %v499 = vunpack.c.l.bf16 %v178
    %v500 = vunpack.c.l.bf16 %v179
    %v501 = vunpack.c.l.bf16 %v180
    %v502 = vunpack.c.l.bf16 %v181
    %v503 = vunpack.c.l.bf16 %v182
    %v504 = vunpack.c.l.bf16 %v183
    %v505 = vunpack.c.l.bf16 %v184
    %v506 = vunpack.c.l.bf16 %v185
    %v507 = vunpack.c.l.bf16 %v186
    %v508 = vunpack.c.l.bf16 %v187
    %v509 = vunpack.c.l.bf16 %v188
    %v510 = vunpack.c.l.bf16 %v189
    %v511 = vunpack.c.l.bf16 %v190
    %v512 = vunpack.c.l.bf16 %v191
    %v513 = vunpack.c.l.bf16 %v192
    %v514 = vunpack.c.l.bf16 %v193
    %v515 = vunpack.c.l.bf16 %v194
    %v516 = vunpack.c.l.bf16 %v195
    %v517 = vunpack.c.l.bf16 %v196
    %v518 = vunpack.c.l.bf16 %v197
    %v519 = vunpack.c.l.bf16 %v198
    %v520 = vunpack.c.l.bf16 %v199
    %v521 = vunpack.c.l.bf16 %v200
    %v522 = vunpack.c.l.bf16 %v201
    %v523 = vunpack.c.l.bf16 %v202
    %v524 = vunpack.c.l.bf16 %v203
    %v525 = vunpack.c.l.bf16 %v204
    %v526 = vunpack.c.l.bf16 %v205
    %v527 = vunpack.c.l.bf16 %v206
    %v528 = vunpack.c.l.bf16 %v207
    %v529 = vunpack.c.l.bf16 %v208
    %v530 = vunpack.c.l.bf16 %v209
    %v531 = vunpack.c.l.bf16 %v210
    %v532 = vunpack.c.l.bf16 %v211
    %v533 = vunpack.c.l.bf16 %v212
    %v534 = vunpack.c.l.bf16 %v213
    %v535 = vunpack.c.l.bf16 %v214
    %v536 = vunpack.c.l.bf16 %v215
    %v537 = vunpack.c.l.bf16 %v216
    %v538 = vunpack.c.l.bf16 %v217
    %v539 = vunpack.c.l.bf16 %v218
    %v540 = vunpack.c.l.bf16 %v219
    %v541 = vunpack.c.l.bf16 %v220
    %v542 = vunpack.c.l.bf16 %v221
    %v543 = vunpack.c.l.bf16 %v222
    %v544 = vunpack.c.l.bf16 %v223
    %v545 = vunpack.c.l.bf16 %v224
    %v546 = vunpack.c.l.bf16 %v225
    %v547 = vunpack.c.l.bf16 %v226
    %v548 = vunpack.c.l.bf16 %v227
    %v549 = vunpack.c.l.bf16 %v228
    %v550 = vunpack.c.l.bf16 %v229
    %v551 = vunpack.c.l.bf16 %v230
    %v552 = vunpack.c.l.bf16 %v231
    %v553 = vunpack.c.l.bf16 %v232
    %v554 = vunpack.c.l.bf16 %v233
    %v555 = vunpack.c.l.bf16 %v234
    %v556 = vunpack.c.l.bf16 %v235
    %v557 = vunpack.c.l.bf16 %v236
    %v558 = vunpack.c.l.bf16 %v237
    %v559 = vunpack.c.l.bf16 %v238
    %v560 = vunpack.c.l.bf16 %v239
    %v561 = vunpack.c.l.bf16 %v240
    %v562 = vunpack.c.l.bf16 %v241
    %v563 = vunpack.c.l.bf16 %v242
    %v564 = vunpack.c.l.bf16 %v243
    %v565 = vunpack.c.l.bf16 %v244
    %v566 = vunpack.c.l.bf16 %v245
    %v567 = vunpack.c.l.bf16 %v246
    %v568 = vunpack.c.l.bf16 %v247
    %v569 = vunpack.c.l.bf16 %v248
    %v570 = vunpack.c.l.bf16 %v249
    %v571 = vunpack.c.l.bf16 %v250
    %v572 = vunpack.c.l.bf16 %v251
    %v573 = vunpack.c.l.bf16 %v252
    %v574 = vunpack.c.l.bf16 %v253
    %v575 = vunpack.c.l.bf16 %v254
    %v576 = vunpack.c.l.bf16 %v255
    %v577 = vunpack.c.l.bf16 %v256
    %v578 = vunpack.c.l.bf16 %v257
    %v579 = vunpack.c.l.bf16 %v258
    %v580 = vunpack.c.l.bf16 %v259
    %v581 = vunpack.c.l.bf16 %v260
    %v582 = vunpack.c.l.bf16 %v261
    %v583 = vunpack.c.l.bf16 %v262
    %v584 = vunpack.c.l.bf16 %v263
    %v585 = vunpack.c.l.bf16 %v264
    %v586 = vunpack.c.l.bf16 %v265
    %v587 = vunpack.c.l.bf16 %v266
    %v588 = vunpack.c.l.bf16 %v267
    %v589 = vunpack.c.l.bf16 %v268
    %v590 = vunpack.c.l.bf16 %v269
    %v591 = vunpack.c.l.bf16 %v270
    %v592 = vunpack.c.l.bf16 %v271
    %v593 = vunpack.c.l.bf16 %v272
    %v594 = vunpack.c.l.bf16 %v273
    %v595 = vunpack.c.l.bf16 %v274
    %v596 = vunpack.c.l.bf16 %v275
    %v597 = vunpack.c.l.bf16 %v276
    %v598 = vunpack.c.l.bf16 %v277
    %v599 = vunpack.c.l.bf16 %v278
    %v600 = vunpack.c.l.bf16 %v279
    %v601 = vunpack.c.l.bf16 %v280
    %v602 = vunpack.c.l.bf16 %v281
    %v603 = vunpack.c.l.bf16 %v282
    %v604 = vunpack.c.l.bf16 %v283
    %v605 = vunpack.c.l.bf16 %v284
    %v606 = vunpack.c.l.bf16 %v285
    %v607 = vunpack.c.l.bf16 %v286
    %v608 = vunpack.c.l.bf16 %v287
    %v609 = vunpack.c.l.bf16 %v288
    %v610 = vunpack.c.l.bf16 %v289
    %v611 = vunpack.c.l.bf16 %v290
    %v612 = vunpack.c.l.bf16 %v291
    %v613 = vunpack.c.l.bf16 %v292
    %v614 = vunpack.c.l.bf16 %v293
    %v615 = vunpack.c.l.bf16 %v294
    %v616 = vunpack.c.l.bf16 %v295
    %v617 = vunpack.c.l.bf16 %v296
    %v618 = vunpack.c.l.bf16 %v297
    %v619 = vunpack.c.l.bf16 %v298
    %v620 = vunpack.c.l.bf16 %v299
    %v621 = vunpack.c.l.bf16 %v300
    %v622 = vunpack.c.l.bf16 %v301
    %v623 = vunpack.c.l.bf16 %v302
    %v624 = vunpack.c.l.bf16 %v303
    %v625 = vunpack.c.l.bf16 %v304
    %v626 = vunpack.c.l.bf16 %v305
    %v627 = vunpack.c.l.bf16 %v306
    %v628 = vunpack.c.l.bf16 %v307
    %v629 = vunpack.c.l.bf16 %v308
    %v630 = vunpack.c.l.bf16 %v309
    %v631 = vunpack.c.l.bf16 %v310
    %v632 = vunpack.c.l.bf16 %v311
    %v633 = vunpack.c.l.bf16 %v312
    %v634 = vunpack.c.l.bf16 %v313
    %v635 = vunpack.c.l.bf16 %v314
    %v636 = vunpack.c.l.bf16 %v315
    %v637 = vunpack.c.l.bf16 %v316
    %v638 = vunpack.c.l.bf16 %v317
    %v639 = vunpack.c.l.bf16 %v318
    %v640 = vunpack.c.l.bf16 %v319
    %v641 = vunpack.c.l.bf16 %v320
    %v642 = vunpack.c.l.bf16 %v321
    %v643 = vunpack.c.l.bf16 %v322
    %v644 = vunpack.c.l.bf16 %v323
    %v645 = vunpack.c.l.bf16 %v324
    %v646 = vunpack.c.l.bf16 %v325
    %v647 = vunpack.c.l.bf16 %v326
    %v648 = vunpack.c.l.bf16 %v327
    %v649 = vunpack.c.l.bf16 %v328
    %v650 = vunpack.c.l.bf16 %v329
    %v651 = vunpack.c.l.bf16 %v330
    %v652 = vunpack.c.l.bf16 %v331
    %v653 = vunpack.c.l.bf16 %v332
    %v654 = vunpack.c.l.bf16 %v333
    %v655 = vunpack.c.l.bf16 %v334
    %v656 = vunpack.c.l.bf16 %v335
    %v657 = vunpack.c.l.bf16 %v336
    %v658 = vunpack.c.l.bf16 %v337
    %v659 = vunpack.c.l.bf16 %v338
    %v660 = vunpack.c.l.bf16 %v339
    %v661 = vunpack.c.l.bf16 %v340
    %v662 = vunpack.c.l.bf16 %v341
    %v663 = vunpack.c.l.bf16 %v342
    %v664 = vunpack.c.l.bf16 %v343
    %v665 = vunpack.c.l.bf16 %v344
    %v666 = vunpack.c.l.bf16 %v345
    %v667 = vunpack.c.l.bf16 %v346
    %v668 = vunpack.c.l.bf16 %v347
    %v669 = vunpack.c.l.bf16 %v348
    %v670 = vunpack.c.l.bf16 %v349
    %v671 = vunpack.c.l.bf16 %v350
    %v672 = vunpack.c.l.bf16 %v351
    %v673 = vunpack.c.l.bf16 %v352
    %v674 = vunpack.c.l.bf16 %v353
    %v675 = vunpack.c.l.bf16 %v354
    %v676 = vunpack.c.l.bf16 %v355
    %v677 = vunpack.c.l.bf16 %v356
    %v678 = vunpack.c.l.bf16 %v357
    %v679 = vunpack.c.l.bf16 %v358
    %v680 = vunpack.c.l.bf16 %v359
    %v681 = vunpack.c.l.bf16 %v360
    %v682 = vunpack.c.l.bf16 %v361
    %v683 = vunpack.c.l.bf16 %v362
    %v684 = vunpack.c.l.bf16 %v363
    %v685 = vunpack.c.l.bf16 %v364
    %v686 = vunpack.c.l.bf16 %v365
    %v687 = vunpack.c.l.bf16 %v366
    %v688 = vunpack.c.l.bf16 %v367
    %v689 = vunpack.c.l.bf16 %v368
    %v690 = vunpack.c.l.bf16 %v369
    %v691 = vunpack.c.l.bf16 %v370
    %v692 = vunpack.c.l.bf16 %v371
    %v693 = vunpack.c.l.bf16 %v372
    %v694 = vunpack.c.l.bf16 %v373
    %v695 = vunpack.c.l.bf16 %v374
    %v696 = vunpack.c.l.bf16 %v375
    %v697 = vunpack.c.l.bf16 %v376
    %v698 = vunpack.c.l.bf16 %v377
    %v699 = vunpack.c.l.bf16 %v378
    %v700 = vunpack.c.l.bf16 %v379
    %v701 = vunpack.c.l.bf16 %v380
    %v702 = vunpack.c.l.bf16 %v381
    %v703 = vunpack.c.l.bf16 %v382
    %v704 = vunpack.c.l.bf16 %v383
    %v705 = vunpack.c.l.bf16 %v384
    %v706 = vunpack.c.l.bf16 %v385
    %v707 = vunpack.c.l.bf16 %v386
    %v708 = vunpack.c.l.bf16 %v387
    %v709 = vunpack.c.l.bf16 %v388
    %v710 = vunpack.c.l.bf16 %v389
    %v711 = vunpack.c.l.bf16 %v390
    %v712 = vunpack.c.l.bf16 %v391
    %v713 = vunpack.c.l.bf16 %v392
    %v714 = vunpack.c.l.bf16 %v393
    %v715 = vunpack.c.l.bf16 %v394
    %v716 = vunpack.c.l.bf16 %v395
    %v717 = vunpack.c.l.bf16 %v396
    %v718 = vunpack.c.l.bf16 %v397
    %v719 = vunpack.c.l.bf16 %v398
    %v720 = vunpack.c.l.bf16 %v399
    %v721 = vunpack.c.l.bf16 %v400
    %v722 = vunpack.c.l.bf16 %v401
    %v723 = vunpack.c.l.bf16 %v402
    %vm724 = vcmask 523264
    %v725 = vsel %vm724, %v404, 0.0
    %726 = vadd.xlane.f32.xlu0 %v725
    %v727 = vpop.xlane.xlu0 %726
    %v728 = vsel %vm724, %v405, 0.0
    %729 = vadd.xlane.f32.xlu0 %v728
    %v730 = vpop.xlane.xlu0 %729
    %v731 = vsel %vm724, %v406, 0.0
    %732 = vadd.xlane.f32.xlu0 %v731
    %v733 = vpop.xlane.xlu0 %732
    %v734 = vsel %vm724, %v407, 0.0
    %735 = vadd.xlane.f32.xlu0 %v734
    %v736 = vpop.xlane.xlu0 %735
    %v737 = vsel %vm724, %v408, 0.0
    %738 = vadd.xlane.f32.xlu0 %v737
    %v739 = vpop.xlane.xlu0 %738
    %v740 = vsel %vm724, %v409, 0.0
    %741 = vadd.xlane.f32.xlu0 %v740
    %v742 = vpop.xlane.xlu0 %741
    %v743 = vsel %vm724, %v410, 0.0
    %744 = vadd.xlane.f32.xlu0 %v743
    %v745 = vpop.xlane.xlu0 %744
    %v746 = vsel %vm724, %v411, 0.0
    %747 = vadd.xlane.f32.xlu0 %v746
    %v748 = vpop.xlane.xlu0 %747
    %v749 = vsel %vm724, %v412, 0.0
    %750 = vadd.xlane.f32.xlu0 %v749
    %v751 = vpop.xlane.xlu0 %750
    %v752 = vsel %vm724, %v413, 0.0
    %753 = vadd.xlane.f32.xlu0 %v752
    %v754 = vpop.xlane.xlu0 %753
    %v755 = vsel %vm724, %v414, 0.0
    %756 = vadd.xlane.f32.xlu0 %v755
    %v757 = vpop.xlane.xlu0 %756
    %v758 = vsel %vm724, %v415, 0.0
    %759 = vadd.xlane.f32.xlu0 %v758
    %v760 = vpop.xlane.xlu0 %759
    %v761 = vsel %vm724, %v416, 0.0
    %762 = vadd.xlane.f32.xlu0 %v761
    %v763 = vpop.xlane.xlu0 %762
    %v764 = vsel %vm724, %v417, 0.0
    %765 = vadd.xlane.f32.xlu0 %v764
    %v766 = vpop.xlane.xlu0 %765
    %v767 = vsel %vm724, %v418, 0.0
    %768 = vadd.xlane.f32.xlu0 %v767
    %v769 = vpop.xlane.xlu0 %768
    %v770 = vsel %vm724, %v419, 0.0
    %771 = vadd.xlane.f32.xlu0 %v770
    %v772 = vpop.xlane.xlu0 %771
    %v773 = vsel %vm724, %v420, 0.0
    %774 = vadd.xlane.f32.xlu0 %v773
    %v775 = vpop.xlane.xlu0 %774
    %v776 = vsel %vm724, %v421, 0.0
    %777 = vadd.xlane.f32.xlu0 %v776
    %v778 = vpop.xlane.xlu0 %777
    %v779 = vsel %vm724, %v422, 0.0
    %780 = vadd.xlane.f32.xlu0 %v779
    %v781 = vpop.xlane.xlu0 %780
    %v782 = vsel %vm724, %v423, 0.0
    %783 = vadd.xlane.f32.xlu0 %v782
    %v784 = vpop.xlane.xlu0 %783
    %v785 = vsel %vm724, %v424, 0.0
    %786 = vadd.xlane.f32.xlu0 %v785
    %v787 = vpop.xlane.xlu0 %786
    %v788 = vsel %vm724, %v425, 0.0
    %789 = vadd.xlane.f32.xlu0 %v788
    %v790 = vpop.xlane.xlu0 %789
    %v791 = vsel %vm724, %v426, 0.0
    %792 = vadd.xlane.f32.xlu0 %v791
    %v793 = vpop.xlane.xlu0 %792
    %v794 = vsel %vm724, %v427, 0.0
    %795 = vadd.xlane.f32.xlu0 %v794
    %v796 = vpop.xlane.xlu0 %795
    %v797 = vsel %vm724, %v428, 0.0
    %798 = vadd.xlane.f32.xlu0 %v797
    %v799 = vpop.xlane.xlu0 %798
    %v800 = vsel %vm724, %v429, 0.0
    %801 = vadd.xlane.f32.xlu0 %v800
    %v802 = vpop.xlane.xlu0 %801
    %v803 = vsel %vm724, %v430, 0.0
    %804 = vadd.xlane.f32.xlu0 %v803
    %v805 = vpop.xlane.xlu0 %804
    %v806 = vsel %vm724, %v431, 0.0
    %807 = vadd.xlane.f32.xlu0 %v806
    %v808 = vpop.xlane.xlu0 %807
    %v809 = vsel %vm724, %v432, 0.0
    %810 = vadd.xlane.f32.xlu0 %v809
    %v811 = vpop.xlane.xlu0 %810
    %v812 = vsel %vm724, %v433, 0.0
    %813 = vadd.xlane.f32.xlu0 %v812
    %v814 = vpop.xlane.xlu0 %813
    %v815 = vsel %vm724, %v434, 0.0
    %816 = vadd.xlane.f32.xlu0 %v815
    %v817 = vpop.xlane.xlu0 %816
    %v818 = vsel %vm724, %v435, 0.0
    %819 = vadd.xlane.f32.xlu0 %v818
    %v820 = vpop.xlane.xlu0 %819
    %v821 = vsel %vm724, %v436, 0.0
    %822 = vadd.xlane.f32.xlu0 %v821
    %v823 = vpop.xlane.xlu0 %822
    %v824 = vsel %vm724, %v437, 0.0
    %825 = vadd.xlane.f32.xlu0 %v824
    %v826 = vpop.xlane.xlu0 %825
    %v827 = vsel %vm724, %v438, 0.0
    %828 = vadd.xlane.f32.xlu0 %v827
    %v829 = vpop.xlane.xlu0 %828
    %v830 = vsel %vm724, %v439, 0.0
    %831 = vadd.xlane.f32.xlu0 %v830
    %v832 = vpop.xlane.xlu0 %831
    %v833 = vsel %vm724, %v440, 0.0
    %834 = vadd.xlane.f32.xlu0 %v833
    %v835 = vpop.xlane.xlu0 %834
    %v836 = vsel %vm724, %v441, 0.0
    %837 = vadd.xlane.f32.xlu0 %v836
    %v838 = vpop.xlane.xlu0 %837
    %v839 = vsel %vm724, %v442, 0.0
    %840 = vadd.xlane.f32.xlu0 %v839
    %v841 = vpop.xlane.xlu0 %840
    %v842 = vsel %vm724, %v443, 0.0
    %843 = vadd.xlane.f32.xlu0 %v842
    %v844 = vpop.xlane.xlu0 %843
    %v845 = vsel %vm724, %v444, 0.0
    %846 = vadd.xlane.f32.xlu0 %v845
    %v847 = vpop.xlane.xlu0 %846
    %v848 = vsel %vm724, %v445, 0.0
    %849 = vadd.xlane.f32.xlu0 %v848
    %v850 = vpop.xlane.xlu0 %849
    %v851 = vsel %vm724, %v446, 0.0
    %852 = vadd.xlane.f32.xlu0 %v851
    %v853 = vpop.xlane.xlu0 %852
    %v854 = vsel %vm724, %v447, 0.0
    %855 = vadd.xlane.f32.xlu0 %v854
    %v856 = vpop.xlane.xlu0 %855
    %v857 = vsel %vm724, %v448, 0.0
    %858 = vadd.xlane.f32.xlu0 %v857
    %v859 = vpop.xlane.xlu0 %858
    %v860 = vsel %vm724, %v449, 0.0
    %861 = vadd.xlane.f32.xlu0 %v860
    %v862 = vpop.xlane.xlu0 %861
    %v863 = vsel %vm724, %v450, 0.0
    %864 = vadd.xlane.f32.xlu0 %v863
    %v865 = vpop.xlane.xlu0 %864
    %v866 = vsel %vm724, %v451, 0.0
    %867 = vadd.xlane.f32.xlu0 %v866
    %v868 = vpop.xlane.xlu0 %867
    %v869 = vsel %vm724, %v452, 0.0
    %870 = vadd.xlane.f32.xlu0 %v869
    %v871 = vpop.xlane.xlu0 %870
    %v872 = vsel %vm724, %v453, 0.0
    %873 = vadd.xlane.f32.xlu0 %v872
    %v874 = vpop.xlane.xlu0 %873
    %v875 = vsel %vm724, %v454, 0.0
    %876 = vadd.xlane.f32.xlu0 %v875
    %v877 = vpop.xlane.xlu0 %876
    %v878 = vsel %vm724, %v455, 0.0
    %879 = vadd.xlane.f32.xlu0 %v878
    %v880 = vpop.xlane.xlu0 %879
    %v881 = vsel %vm724, %v456, 0.0
    %882 = vadd.xlane.f32.xlu0 %v881
    %v883 = vpop.xlane.xlu0 %882
    %v884 = vsel %vm724, %v457, 0.0
    %885 = vadd.xlane.f32.xlu0 %v884
    %v886 = vpop.xlane.xlu0 %885
    %v887 = vsel %vm724, %v458, 0.0
    %888 = vadd.xlane.f32.xlu0 %v887
    %v889 = vpop.xlane.xlu0 %888
    %v890 = vsel %vm724, %v459, 0.0
    %891 = vadd.xlane.f32.xlu0 %v890
    %v892 = vpop.xlane.xlu0 %891
    %v893 = vsel %vm724, %v460, 0.0
    %894 = vadd.xlane.f32.xlu0 %v893
    %v895 = vpop.xlane.xlu0 %894
    %v896 = vsel %vm724, %v461, 0.0
    %897 = vadd.xlane.f32.xlu0 %v896
    %v898 = vpop.xlane.xlu0 %897
    %v899 = vsel %vm724, %v462, 0.0
    %900 = vadd.xlane.f32.xlu0 %v899
    %v901 = vpop.xlane.xlu0 %900
    %v902 = vsel %vm724, %v463, 0.0
    %903 = vadd.xlane.f32.xlu0 %v902
    %v904 = vpop.xlane.xlu0 %903
    %v905 = vsel %vm724, %v464, 0.0
    %906 = vadd.xlane.f32.xlu0 %v905
    %v907 = vpop.xlane.xlu0 %906
    %v908 = vsel %vm724, %v465, 0.0
    %909 = vadd.xlane.f32.xlu0 %v908
    %v910 = vpop.xlane.xlu0 %909
    %v911 = vsel %vm724, %v466, 0.0
    %912 = vadd.xlane.f32.xlu0 %v911
    %v913 = vpop.xlane.xlu0 %912
    %v914 = vsel %vm724, %v467, 0.0
    %915 = vadd.xlane.f32.xlu0 %v914
    %v916 = vpop.xlane.xlu0 %915
    %v917 = vsel %vm724, %v468, 0.0
    %918 = vadd.xlane.f32.xlu0 %v917
    %v919 = vpop.xlane.xlu0 %918
    %v920 = vsel %vm724, %v469, 0.0
    %921 = vadd.xlane.f32.xlu0 %v920
    %v922 = vpop.xlane.xlu0 %921
    %v923 = vsel %vm724, %v470, 0.0
    %924 = vadd.xlane.f32.xlu0 %v923
    %v925 = vpop.xlane.xlu0 %924
    %v926 = vsel %vm724, %v471, 0.0
    %927 = vadd.xlane.f32.xlu0 %v926
    %v928 = vpop.xlane.xlu0 %927
    %v929 = vsel %vm724, %v472, 0.0
    %930 = vadd.xlane.f32.xlu0 %v929
    %v931 = vpop.xlane.xlu0 %930
    %v932 = vsel %vm724, %v473, 0.0
    %933 = vadd.xlane.f32.xlu0 %v932
    %v934 = vpop.xlane.xlu0 %933
    %v935 = vsel %vm724, %v474, 0.0
    %936 = vadd.xlane.f32.xlu0 %v935
    %v937 = vpop.xlane.xlu0 %936
    %v938 = vsel %vm724, %v475, 0.0
    %939 = vadd.xlane.f32.xlu0 %v938
    %v940 = vpop.xlane.xlu0 %939
    %v941 = vsel %vm724, %v476, 0.0
    %942 = vadd.xlane.f32.xlu0 %v941
    %v943 = vpop.xlane.xlu0 %942
    %v944 = vsel %vm724, %v477, 0.0
    %945 = vadd.xlane.f32.xlu0 %v944
    %v946 = vpop.xlane.xlu0 %945
    %v947 = vsel %vm724, %v478, 0.0
    %948 = vadd.xlane.f32.xlu0 %v947
    %v949 = vpop.xlane.xlu0 %948
    %v950 = vsel %vm724, %v479, 0.0
    %951 = vadd.xlane.f32.xlu0 %v950
    %v952 = vpop.xlane.xlu0 %951
    %v953 = vsel %vm724, %v480, 0.0
    %954 = vadd.xlane.f32.xlu0 %v953
    %v955 = vpop.xlane.xlu0 %954
    %v956 = vsel %vm724, %v481, 0.0
    %957 = vadd.xlane.f32.xlu0 %v956
    %v958 = vpop.xlane.xlu0 %957
    %v959 = vsel %vm724, %v482, 0.0
    %960 = vadd.xlane.f32.xlu0 %v959
    %v961 = vpop.xlane.xlu0 %960
    %v962 = vsel %vm724, %v483, 0.0
    %963 = vadd.xlane.f32.xlu0 %v962
    %v964 = vpop.xlane.xlu0 %963
    %v965 = vsel %vm724, %v484, 0.0
    %966 = vadd.xlane.f32.xlu0 %v965
    %v967 = vpop.xlane.xlu0 %966
    %v968 = vsel %vm724, %v485, 0.0
    %969 = vadd.xlane.f32.xlu0 %v968
    %v970 = vpop.xlane.xlu0 %969
    %v971 = vsel %vm724, %v486, 0.0
    %972 = vadd.xlane.f32.xlu0 %v971
    %v973 = vpop.xlane.xlu0 %972
    %v974 = vsel %vm724, %v487, 0.0
    %975 = vadd.xlane.f32.xlu0 %v974
    %v976 = vpop.xlane.xlu0 %975
    %v977 = vsel %vm724, %v488, 0.0
    %978 = vadd.xlane.f32.xlu0 %v977
    %v979 = vpop.xlane.xlu0 %978
    %v980 = vsel %vm724, %v489, 0.0
    %981 = vadd.xlane.f32.xlu0 %v980
    %v982 = vpop.xlane.xlu0 %981
    %v983 = vsel %vm724, %v490, 0.0
    %984 = vadd.xlane.f32.xlu0 %v983
    %v985 = vpop.xlane.xlu0 %984
    %v986 = vsel %vm724, %v491, 0.0
    %987 = vadd.xlane.f32.xlu0 %v986
    %v988 = vpop.xlane.xlu0 %987
    %v989 = vsel %vm724, %v492, 0.0
    %990 = vadd.xlane.f32.xlu0 %v989
    %v991 = vpop.xlane.xlu0 %990
    %v992 = vsel %vm724, %v493, 0.0
    %993 = vadd.xlane.f32.xlu0 %v992
    %v994 = vpop.xlane.xlu0 %993
    %v995 = vsel %vm724, %v494, 0.0
    %996 = vadd.xlane.f32.xlu0 %v995
    %v997 = vpop.xlane.xlu0 %996
    %v998 = vsel %vm724, %v495, 0.0
    %999 = vadd.xlane.f32.xlu0 %v998
    %v1000 = vpop.xlane.xlu0 %999
    %v1001 = vsel %vm724, %v496, 0.0
    %1002 = vadd.xlane.f32.xlu0 %v1001
    %v1003 = vpop.xlane.xlu0 %1002
    %v1004 = vsel %vm724, %v497, 0.0
    %1005 = vadd.xlane.f32.xlu0 %v1004
    %v1006 = vpop.xlane.xlu0 %1005
    %v1007 = vsel %vm724, %v498, 0.0
    %1008 = vadd.xlane.f32.xlu0 %v1007
    %v1009 = vpop.xlane.xlu0 %1008
    %v1010 = vsel %vm724, %v499, 0.0
    %1011 = vadd.xlane.f32.xlu0 %v1010
    %v1012 = vpop.xlane.xlu0 %1011
    %v1013 = vsel %vm724, %v500, 0.0
    %1014 = vadd.xlane.f32.xlu0 %v1013
    %v1015 = vpop.xlane.xlu0 %1014
    %v1016 = vsel %vm724, %v501, 0.0
    %1017 = vadd.xlane.f32.xlu0 %v1016
    %v1018 = vpop.xlane.xlu0 %1017
    %v1019 = vsel %vm724, %v502, 0.0
    %1020 = vadd.xlane.f32.xlu0 %v1019
    %v1021 = vpop.xlane.xlu0 %1020
    %v1022 = vsel %vm724, %v503, 0.0
    %1023 = vadd.xlane.f32.xlu0 %v1022
    %v1024 = vpop.xlane.xlu0 %1023
    %v1025 = vsel %vm724, %v504, 0.0
    %1026 = vadd.xlane.f32.xlu0 %v1025
    %v1027 = vpop.xlane.xlu0 %1026
    %v1028 = vsel %vm724, %v505, 0.0
    %1029 = vadd.xlane.f32.xlu0 %v1028
    %v1030 = vpop.xlane.xlu0 %1029
    %v1031 = vsel %vm724, %v506, 0.0
    %1032 = vadd.xlane.f32.xlu0 %v1031
    %v1033 = vpop.xlane.xlu0 %1032
    %v1034 = vsel %vm724, %v507, 0.0
    %1035 = vadd.xlane.f32.xlu0 %v1034
    %v1036 = vpop.xlane.xlu0 %1035
    %v1037 = vsel %vm724, %v508, 0.0
    %1038 = vadd.xlane.f32.xlu0 %v1037
    %v1039 = vpop.xlane.xlu0 %1038
    %v1040 = vsel %vm724, %v509, 0.0
    %1041 = vadd.xlane.f32.xlu0 %v1040
    %v1042 = vpop.xlane.xlu0 %1041
    %v1043 = vsel %vm724, %v510, 0.0
    %1044 = vadd.xlane.f32.xlu0 %v1043
    %v1045 = vpop.xlane.xlu0 %1044
    %v1046 = vsel %vm724, %v511, 0.0
    %1047 = vadd.xlane.f32.xlu0 %v1046
    %v1048 = vpop.xlane.xlu0 %1047
    %v1049 = vsel %vm724, %v512, 0.0
    %1050 = vadd.xlane.f32.xlu0 %v1049
    %v1051 = vpop.xlane.xlu0 %1050
    %v1052 = vsel %vm724, %v513, 0.0
    %1053 = vadd.xlane.f32.xlu0 %v1052
    %v1054 = vpop.xlane.xlu0 %1053
    %v1055 = vsel %vm724, %v514, 0.0
    %1056 = vadd.xlane.f32.xlu0 %v1055
    %v1057 = vpop.xlane.xlu0 %1056
    %v1058 = vsel %vm724, %v515, 0.0
    %1059 = vadd.xlane.f32.xlu0 %v1058
    %v1060 = vpop.xlane.xlu0 %1059
    %v1061 = vsel %vm724, %v516, 0.0
    %1062 = vadd.xlane.f32.xlu0 %v1061
    %v1063 = vpop.xlane.xlu0 %1062
    %v1064 = vsel %vm724, %v517, 0.0
    %1065 = vadd.xlane.f32.xlu0 %v1064
    %v1066 = vpop.xlane.xlu0 %1065
    %v1067 = vsel %vm724, %v518, 0.0
    %1068 = vadd.xlane.f32.xlu0 %v1067
    %v1069 = vpop.xlane.xlu0 %1068
    %v1070 = vsel %vm724, %v519, 0.0
    %1071 = vadd.xlane.f32.xlu0 %v1070
    %v1072 = vpop.xlane.xlu0 %1071
    %v1073 = vsel %vm724, %v520, 0.0
    %1074 = vadd.xlane.f32.xlu0 %v1073
    %v1075 = vpop.xlane.xlu0 %1074
    %v1076 = vsel %vm724, %v521, 0.0
    %1077 = vadd.xlane.f32.xlu0 %v1076
    %v1078 = vpop.xlane.xlu0 %1077
    %v1079 = vsel %vm724, %v522, 0.0
    %1080 = vadd.xlane.f32.xlu0 %v1079
    %v1081 = vpop.xlane.xlu0 %1080
    %v1082 = vsel %vm724, %v523, 0.0
    %1083 = vadd.xlane.f32.xlu0 %v1082
    %v1084 = vpop.xlane.xlu0 %1083
    %v1085 = vsel %vm724, %v524, 0.0
    %1086 = vadd.xlane.f32.xlu0 %v1085
    %v1087 = vpop.xlane.xlu0 %1086
    %v1088 = vsel %vm724, %v525, 0.0
    %1089 = vadd.xlane.f32.xlu0 %v1088
    %v1090 = vpop.xlane.xlu0 %1089
    %v1091 = vsel %vm724, %v526, 0.0
    %1092 = vadd.xlane.f32.xlu0 %v1091
    %v1093 = vpop.xlane.xlu0 %1092
    %v1094 = vsel %vm724, %v527, 0.0
    %1095 = vadd.xlane.f32.xlu0 %v1094
    %v1096 = vpop.xlane.xlu0 %1095
    %v1097 = vsel %vm724, %v528, 0.0
    %1098 = vadd.xlane.f32.xlu0 %v1097
    %v1099 = vpop.xlane.xlu0 %1098
    %v1100 = vsel %vm724, %v529, 0.0
    %1101 = vadd.xlane.f32.xlu0 %v1100
    %v1102 = vpop.xlane.xlu0 %1101
    %v1103 = vsel %vm724, %v530, 0.0
    %1104 = vadd.xlane.f32.xlu0 %v1103
    %v1105 = vpop.xlane.xlu0 %1104
    %v1106 = vsel %vm724, %v531, 0.0
    %1107 = vadd.xlane.f32.xlu0 %v1106
    %v1108 = vpop.xlane.xlu0 %1107
    %v1109 = vsel %vm724, %v532, 0.0
    %1110 = vadd.xlane.f32.xlu0 %v1109
    %v1111 = vpop.xlane.xlu0 %1110
    %v1112 = vsel %vm724, %v533, 0.0
    %1113 = vadd.xlane.f32.xlu0 %v1112
    %v1114 = vpop.xlane.xlu0 %1113
    %v1115 = vsel %vm724, %v534, 0.0
    %1116 = vadd.xlane.f32.xlu0 %v1115
    %v1117 = vpop.xlane.xlu0 %1116
    %v1118 = vsel %vm724, %v535, 0.0
    %1119 = vadd.xlane.f32.xlu0 %v1118
    %v1120 = vpop.xlane.xlu0 %1119
    %v1121 = vsel %vm724, %v536, 0.0
    %1122 = vadd.xlane.f32.xlu0 %v1121
    %v1123 = vpop.xlane.xlu0 %1122
    %v1124 = vsel %vm724, %v537, 0.0
    %1125 = vadd.xlane.f32.xlu0 %v1124
    %v1126 = vpop.xlane.xlu0 %1125
    %v1127 = vsel %vm724, %v538, 0.0
    %1128 = vadd.xlane.f32.xlu0 %v1127
    %v1129 = vpop.xlane.xlu0 %1128
    %v1130 = vsel %vm724, %v539, 0.0
    %1131 = vadd.xlane.f32.xlu0 %v1130
    %v1132 = vpop.xlane.xlu0 %1131
    %v1133 = vsel %vm724, %v540, 0.0
    %1134 = vadd.xlane.f32.xlu0 %v1133
    %v1135 = vpop.xlane.xlu0 %1134
    %v1136 = vsel %vm724, %v541, 0.0
    %1137 = vadd.xlane.f32.xlu0 %v1136
    %v1138 = vpop.xlane.xlu0 %1137
    %v1139 = vsel %vm724, %v542, 0.0
    %1140 = vadd.xlane.f32.xlu0 %v1139
    %v1141 = vpop.xlane.xlu0 %1140
    %v1142 = vsel %vm724, %v543, 0.0
    %1143 = vadd.xlane.f32.xlu0 %v1142
    %v1144 = vpop.xlane.xlu0 %1143
    %v1145 = vsel %vm724, %v544, 0.0
    %1146 = vadd.xlane.f32.xlu0 %v1145
    %v1147 = vpop.xlane.xlu0 %1146
    %v1148 = vsel %vm724, %v545, 0.0
    %1149 = vadd.xlane.f32.xlu0 %v1148
    %v1150 = vpop.xlane.xlu0 %1149
    %v1151 = vsel %vm724, %v546, 0.0
    %1152 = vadd.xlane.f32.xlu0 %v1151
    %v1153 = vpop.xlane.xlu0 %1152
    %v1154 = vsel %vm724, %v547, 0.0
    %1155 = vadd.xlane.f32.xlu0 %v1154
    %v1156 = vpop.xlane.xlu0 %1155
    %v1157 = vsel %vm724, %v548, 0.0
    %1158 = vadd.xlane.f32.xlu0 %v1157
    %v1159 = vpop.xlane.xlu0 %1158
    %v1160 = vsel %vm724, %v549, 0.0
    %1161 = vadd.xlane.f32.xlu0 %v1160
    %v1162 = vpop.xlane.xlu0 %1161
    %v1163 = vsel %vm724, %v550, 0.0
    %1164 = vadd.xlane.f32.xlu0 %v1163
    %v1165 = vpop.xlane.xlu0 %1164
    %v1166 = vsel %vm724, %v551, 0.0
    %1167 = vadd.xlane.f32.xlu0 %v1166
    %v1168 = vpop.xlane.xlu0 %1167
    %v1169 = vsel %vm724, %v552, 0.0
    %1170 = vadd.xlane.f32.xlu0 %v1169
    %v1171 = vpop.xlane.xlu0 %1170
    %v1172 = vsel %vm724, %v553, 0.0
    %1173 = vadd.xlane.f32.xlu0 %v1172
    %v1174 = vpop.xlane.xlu0 %1173
    %v1175 = vsel %vm724, %v554, 0.0
    %1176 = vadd.xlane.f32.xlu0 %v1175
    %v1177 = vpop.xlane.xlu0 %1176
    %v1178 = vsel %vm724, %v555, 0.0
    %1179 = vadd.xlane.f32.xlu0 %v1178
    %v1180 = vpop.xlane.xlu0 %1179
    %v1181 = vsel %vm724, %v556, 0.0
    %1182 = vadd.xlane.f32.xlu0 %v1181
    %v1183 = vpop.xlane.xlu0 %1182
    %v1184 = vsel %vm724, %v557, 0.0
    %1185 = vadd.xlane.f32.xlu0 %v1184
    %v1186 = vpop.xlane.xlu0 %1185
    %v1187 = vsel %vm724, %v558, 0.0
    %1188 = vadd.xlane.f32.xlu0 %v1187
    %v1189 = vpop.xlane.xlu0 %1188
    %v1190 = vsel %vm724, %v559, 0.0
    %1191 = vadd.xlane.f32.xlu0 %v1190
    %v1192 = vpop.xlane.xlu0 %1191
    %v1193 = vsel %vm724, %v560, 0.0
    %1194 = vadd.xlane.f32.xlu0 %v1193
    %v1195 = vpop.xlane.xlu0 %1194
    %v1196 = vsel %vm724, %v561, 0.0
    %1197 = vadd.xlane.f32.xlu0 %v1196
    %v1198 = vpop.xlane.xlu0 %1197
    %v1199 = vsel %vm724, %v562, 0.0
    %1200 = vadd.xlane.f32.xlu0 %v1199
    %v1201 = vpop.xlane.xlu0 %1200
    %v1202 = vsel %vm724, %v563, 0.0
    %1203 = vadd.xlane.f32.xlu0 %v1202
    %v1204 = vpop.xlane.xlu0 %1203
    %v1205 = vsel %vm724, %v564, 0.0
    %1206 = vadd.xlane.f32.xlu0 %v1205
    %v1207 = vpop.xlane.xlu0 %1206
    %v1208 = vsel %vm724, %v565, 0.0
    %1209 = vadd.xlane.f32.xlu0 %v1208
    %v1210 = vpop.xlane.xlu0 %1209
    %v1211 = vsel %vm724, %v566, 0.0
    %1212 = vadd.xlane.f32.xlu0 %v1211
    %v1213 = vpop.xlane.xlu0 %1212
    %v1214 = vsel %vm724, %v567, 0.0
    %1215 = vadd.xlane.f32.xlu0 %v1214
    %v1216 = vpop.xlane.xlu0 %1215
    %v1217 = vsel %vm724, %v568, 0.0
    %1218 = vadd.xlane.f32.xlu0 %v1217
    %v1219 = vpop.xlane.xlu0 %1218
    %v1220 = vsel %vm724, %v569, 0.0
    %1221 = vadd.xlane.f32.xlu0 %v1220
    %v1222 = vpop.xlane.xlu0 %1221
    %v1223 = vsel %vm724, %v570, 0.0
    %1224 = vadd.xlane.f32.xlu0 %v1223
    %v1225 = vpop.xlane.xlu0 %1224
    %v1226 = vsel %vm724, %v571, 0.0
    %1227 = vadd.xlane.f32.xlu0 %v1226
    %v1228 = vpop.xlane.xlu0 %1227
    %v1229 = vsel %vm724, %v572, 0.0
    %1230 = vadd.xlane.f32.xlu0 %v1229
    %v1231 = vpop.xlane.xlu0 %1230
    %v1232 = vsel %vm724, %v573, 0.0
    %1233 = vadd.xlane.f32.xlu0 %v1232
    %v1234 = vpop.xlane.xlu0 %1233
    %v1235 = vsel %vm724, %v574, 0.0
    %1236 = vadd.xlane.f32.xlu0 %v1235
    %v1237 = vpop.xlane.xlu0 %1236
    %v1238 = vsel %vm724, %v575, 0.0
    %1239 = vadd.xlane.f32.xlu0 %v1238
    %v1240 = vpop.xlane.xlu0 %1239
    %v1241 = vsel %vm724, %v576, 0.0
    %1242 = vadd.xlane.f32.xlu0 %v1241
    %v1243 = vpop.xlane.xlu0 %1242
    %v1244 = vsel %vm724, %v577, 0.0
    %1245 = vadd.xlane.f32.xlu0 %v1244
    %v1246 = vpop.xlane.xlu0 %1245
    %v1247 = vsel %vm724, %v578, 0.0
    %1248 = vadd.xlane.f32.xlu0 %v1247
    %v1249 = vpop.xlane.xlu0 %1248
    %v1250 = vsel %vm724, %v579, 0.0
    %1251 = vadd.xlane.f32.xlu0 %v1250
    %v1252 = vpop.xlane.xlu0 %1251
    %v1253 = vsel %vm724, %v580, 0.0
    %1254 = vadd.xlane.f32.xlu0 %v1253
    %v1255 = vpop.xlane.xlu0 %1254
    %v1256 = vsel %vm724, %v581, 0.0
    %1257 = vadd.xlane.f32.xlu0 %v1256
    %v1258 = vpop.xlane.xlu0 %1257
    %v1259 = vsel %vm724, %v582, 0.0
    %1260 = vadd.xlane.f32.xlu0 %v1259
    %v1261 = vpop.xlane.xlu0 %1260
    %v1262 = vsel %vm724, %v583, 0.0
    %1263 = vadd.xlane.f32.xlu0 %v1262
    %v1264 = vpop.xlane.xlu0 %1263
    %v1265 = vsel %vm724, %v584, 0.0
    %1266 = vadd.xlane.f32.xlu0 %v1265
    %v1267 = vpop.xlane.xlu0 %1266
    %v1268 = vsel %vm724, %v585, 0.0
    %1269 = vadd.xlane.f32.xlu0 %v1268
    %v1270 = vpop.xlane.xlu0 %1269
    %v1271 = vsel %vm724, %v586, 0.0
    %1272 = vadd.xlane.f32.xlu0 %v1271
    %v1273 = vpop.xlane.xlu0 %1272
    %v1274 = vsel %vm724, %v587, 0.0
    %1275 = vadd.xlane.f32.xlu0 %v1274
    %v1276 = vpop.xlane.xlu0 %1275
    %v1277 = vsel %vm724, %v588, 0.0
    %1278 = vadd.xlane.f32.xlu0 %v1277
    %v1279 = vpop.xlane.xlu0 %1278
    %v1280 = vsel %vm724, %v589, 0.0
    %1281 = vadd.xlane.f32.xlu0 %v1280
    %v1282 = vpop.xlane.xlu0 %1281
    %v1283 = vsel %vm724, %v590, 0.0
    %1284 = vadd.xlane.f32.xlu0 %v1283
    %v1285 = vpop.xlane.xlu0 %1284
    %v1286 = vsel %vm724, %v591, 0.0
    %1287 = vadd.xlane.f32.xlu0 %v1286
    %v1288 = vpop.xlane.xlu0 %1287
    %v1289 = vsel %vm724, %v592, 0.0
    %1290 = vadd.xlane.f32.xlu0 %v1289
    %v1291 = vpop.xlane.xlu0 %1290
    %v1292 = vsel %vm724, %v593, 0.0
    %1293 = vadd.xlane.f32.xlu0 %v1292
    %v1294 = vpop.xlane.xlu0 %1293
    %v1295 = vsel %vm724, %v594, 0.0
    %1296 = vadd.xlane.f32.xlu0 %v1295
    %v1297 = vpop.xlane.xlu0 %1296
    %v1298 = vsel %vm724, %v595, 0.0
    %1299 = vadd.xlane.f32.xlu0 %v1298
    %v1300 = vpop.xlane.xlu0 %1299
    %v1301 = vsel %vm724, %v596, 0.0
    %1302 = vadd.xlane.f32.xlu0 %v1301
    %v1303 = vpop.xlane.xlu0 %1302
    %v1304 = vsel %vm724, %v597, 0.0
    %1305 = vadd.xlane.f32.xlu0 %v1304
    %v1306 = vpop.xlane.xlu0 %1305
    %v1307 = vsel %vm724, %v598, 0.0
    %1308 = vadd.xlane.f32.xlu0 %v1307
    %v1309 = vpop.xlane.xlu0 %1308
    %v1310 = vsel %vm724, %v599, 0.0
    %1311 = vadd.xlane.f32.xlu0 %v1310
    %v1312 = vpop.xlane.xlu0 %1311
    %v1313 = vsel %vm724, %v600, 0.0
    %1314 = vadd.xlane.f32.xlu0 %v1313
    %v1315 = vpop.xlane.xlu0 %1314
    %v1316 = vsel %vm724, %v601, 0.0
    %1317 = vadd.xlane.f32.xlu0 %v1316
    %v1318 = vpop.xlane.xlu0 %1317
    %v1319 = vsel %vm724, %v602, 0.0
    %1320 = vadd.xlane.f32.xlu0 %v1319
    %v1321 = vpop.xlane.xlu0 %1320
    %v1322 = vsel %vm724, %v603, 0.0
    %1323 = vadd.xlane.f32.xlu0 %v1322
    %v1324 = vpop.xlane.xlu0 %1323
    %v1325 = vsel %vm724, %v604, 0.0
    %1326 = vadd.xlane.f32.xlu0 %v1325
    %v1327 = vpop.xlane.xlu0 %1326
    %v1328 = vsel %vm724, %v605, 0.0
    %1329 = vadd.xlane.f32.xlu0 %v1328
    %v1330 = vpop.xlane.xlu0 %1329
    %v1331 = vsel %vm724, %v606, 0.0
    %1332 = vadd.xlane.f32.xlu0 %v1331
    %v1333 = vpop.xlane.xlu0 %1332
    %v1334 = vsel %vm724, %v607, 0.0
    %1335 = vadd.xlane.f32.xlu0 %v1334
    %v1336 = vpop.xlane.xlu0 %1335
    %v1337 = vsel %vm724, %v608, 0.0
    %1338 = vadd.xlane.f32.xlu0 %v1337
    %v1339 = vpop.xlane.xlu0 %1338
    %v1340 = vsel %vm724, %v609, 0.0
    %1341 = vadd.xlane.f32.xlu0 %v1340
    %v1342 = vpop.xlane.xlu0 %1341
    %v1343 = vsel %vm724, %v610, 0.0
    %1344 = vadd.xlane.f32.xlu0 %v1343
    %v1345 = vpop.xlane.xlu0 %1344
    %v1346 = vsel %vm724, %v611, 0.0
    %1347 = vadd.xlane.f32.xlu0 %v1346
    %v1348 = vpop.xlane.xlu0 %1347
    %v1349 = vsel %vm724, %v612, 0.0
    %1350 = vadd.xlane.f32.xlu0 %v1349
    %v1351 = vpop.xlane.xlu0 %1350
    %v1352 = vsel %vm724, %v613, 0.0
    %1353 = vadd.xlane.f32.xlu0 %v1352
    %v1354 = vpop.xlane.xlu0 %1353
    %v1355 = vsel %vm724, %v614, 0.0
    %1356 = vadd.xlane.f32.xlu0 %v1355
    %v1357 = vpop.xlane.xlu0 %1356
    %v1358 = vsel %vm724, %v615, 0.0
    %1359 = vadd.xlane.f32.xlu0 %v1358
    %v1360 = vpop.xlane.xlu0 %1359
    %v1361 = vsel %vm724, %v616, 0.0
    %1362 = vadd.xlane.f32.xlu0 %v1361
    %v1363 = vpop.xlane.xlu0 %1362
    %v1364 = vsel %vm724, %v617, 0.0
    %1365 = vadd.xlane.f32.xlu0 %v1364
    %v1366 = vpop.xlane.xlu0 %1365
    %v1367 = vsel %vm724, %v618, 0.0
    %1368 = vadd.xlane.f32.xlu0 %v1367
    %v1369 = vpop.xlane.xlu0 %1368
    %v1370 = vsel %vm724, %v619, 0.0
    %1371 = vadd.xlane.f32.xlu0 %v1370
    %v1372 = vpop.xlane.xlu0 %1371
    %v1373 = vsel %vm724, %v620, 0.0
    %1374 = vadd.xlane.f32.xlu0 %v1373
    %v1375 = vpop.xlane.xlu0 %1374
    %v1376 = vsel %vm724, %v621, 0.0
    %1377 = vadd.xlane.f32.xlu0 %v1376
    %v1378 = vpop.xlane.xlu0 %1377
    %v1379 = vsel %vm724, %v622, 0.0
    %1380 = vadd.xlane.f32.xlu0 %v1379
    %v1381 = vpop.xlane.xlu0 %1380
    %v1382 = vsel %vm724, %v623, 0.0
    %1383 = vadd.xlane.f32.xlu0 %v1382
    %v1384 = vpop.xlane.xlu0 %1383
    %v1385 = vsel %vm724, %v624, 0.0
    %1386 = vadd.xlane.f32.xlu0 %v1385
    %v1387 = vpop.xlane.xlu0 %1386
    %v1388 = vsel %vm724, %v625, 0.0
    %1389 = vadd.xlane.f32.xlu0 %v1388
    %v1390 = vpop.xlane.xlu0 %1389
    %v1391 = vsel %vm724, %v626, 0.0
    %1392 = vadd.xlane.f32.xlu0 %v1391
    %v1393 = vpop.xlane.xlu0 %1392
    %v1394 = vsel %vm724, %v627, 0.0
    %1395 = vadd.xlane.f32.xlu0 %v1394
    %v1396 = vpop.xlane.xlu0 %1395
    %v1397 = vsel %vm724, %v628, 0.0
    %1398 = vadd.xlane.f32.xlu0 %v1397
    %v1399 = vpop.xlane.xlu0 %1398
    %v1400 = vsel %vm724, %v629, 0.0
    %1401 = vadd.xlane.f32.xlu0 %v1400
    %v1402 = vpop.xlane.xlu0 %1401
    %v1403 = vsel %vm724, %v630, 0.0
    %1404 = vadd.xlane.f32.xlu0 %v1403
    %v1405 = vpop.xlane.xlu0 %1404
    %v1406 = vsel %vm724, %v631, 0.0
    %1407 = vadd.xlane.f32.xlu0 %v1406
    %v1408 = vpop.xlane.xlu0 %1407
    %v1409 = vsel %vm724, %v632, 0.0
    %1410 = vadd.xlane.f32.xlu0 %v1409
    %v1411 = vpop.xlane.xlu0 %1410
    %v1412 = vsel %vm724, %v633, 0.0
    %1413 = vadd.xlane.f32.xlu0 %v1412
    %v1414 = vpop.xlane.xlu0 %1413
    %v1415 = vsel %vm724, %v634, 0.0
    %1416 = vadd.xlane.f32.xlu0 %v1415
    %v1417 = vpop.xlane.xlu0 %1416
    %v1418 = vsel %vm724, %v635, 0.0
    %1419 = vadd.xlane.f32.xlu0 %v1418
    %v1420 = vpop.xlane.xlu0 %1419
    %v1421 = vsel %vm724, %v636, 0.0
    %1422 = vadd.xlane.f32.xlu0 %v1421
    %v1423 = vpop.xlane.xlu0 %1422
    %v1424 = vsel %vm724, %v637, 0.0
    %1425 = vadd.xlane.f32.xlu0 %v1424
    %v1426 = vpop.xlane.xlu0 %1425
    %v1427 = vsel %vm724, %v638, 0.0
    %1428 = vadd.xlane.f32.xlu0 %v1427
    %v1429 = vpop.xlane.xlu0 %1428
    %v1430 = vsel %vm724, %v639, 0.0
    %1431 = vadd.xlane.f32.xlu0 %v1430
    %v1432 = vpop.xlane.xlu0 %1431
    %v1433 = vsel %vm724, %v640, 0.0
    %1434 = vadd.xlane.f32.xlu0 %v1433
    %v1435 = vpop.xlane.xlu0 %1434
    %v1436 = vsel %vm724, %v641, 0.0
    %1437 = vadd.xlane.f32.xlu0 %v1436
    %v1438 = vpop.xlane.xlu0 %1437
    %v1439 = vsel %vm724, %v642, 0.0
    %1440 = vadd.xlane.f32.xlu0 %v1439
    %v1441 = vpop.xlane.xlu0 %1440
    %v1442 = vsel %vm724, %v643, 0.0
    %1443 = vadd.xlane.f32.xlu0 %v1442
    %v1444 = vpop.xlane.xlu0 %1443
    %v1445 = vsel %vm724, %v644, 0.0
    %1446 = vadd.xlane.f32.xlu0 %v1445
    %v1447 = vpop.xlane.xlu0 %1446
    %v1448 = vsel %vm724, %v645, 0.0
    %1449 = vadd.xlane.f32.xlu0 %v1448
    %v1450 = vpop.xlane.xlu0 %1449
    %v1451 = vsel %vm724, %v646, 0.0
    %1452 = vadd.xlane.f32.xlu0 %v1451
    %v1453 = vpop.xlane.xlu0 %1452
    %v1454 = vsel %vm724, %v647, 0.0
    %1455 = vadd.xlane.f32.xlu0 %v1454
    %v1456 = vpop.xlane.xlu0 %1455
    %v1457 = vsel %vm724, %v648, 0.0
    %1458 = vadd.xlane.f32.xlu0 %v1457
    %v1459 = vpop.xlane.xlu0 %1458
    %v1460 = vsel %vm724, %v649, 0.0
    %1461 = vadd.xlane.f32.xlu0 %v1460
    %v1462 = vpop.xlane.xlu0 %1461
    %v1463 = vsel %vm724, %v650, 0.0
    %1464 = vadd.xlane.f32.xlu0 %v1463
    %v1465 = vpop.xlane.xlu0 %1464
    %v1466 = vsel %vm724, %v651, 0.0
    %1467 = vadd.xlane.f32.xlu0 %v1466
    %v1468 = vpop.xlane.xlu0 %1467
    %v1469 = vsel %vm724, %v652, 0.0
    %1470 = vadd.xlane.f32.xlu0 %v1469
    %v1471 = vpop.xlane.xlu0 %1470
    %v1472 = vsel %vm724, %v653, 0.0
    %1473 = vadd.xlane.f32.xlu0 %v1472
    %v1474 = vpop.xlane.xlu0 %1473
    %v1475 = vsel %vm724, %v654, 0.0
    %1476 = vadd.xlane.f32.xlu0 %v1475
    %v1477 = vpop.xlane.xlu0 %1476
    %v1478 = vsel %vm724, %v655, 0.0
    %1479 = vadd.xlane.f32.xlu0 %v1478
    %v1480 = vpop.xlane.xlu0 %1479
    %v1481 = vsel %vm724, %v656, 0.0
    %1482 = vadd.xlane.f32.xlu0 %v1481
    %v1483 = vpop.xlane.xlu0 %1482
    %v1484 = vsel %vm724, %v657, 0.0
    %1485 = vadd.xlane.f32.xlu0 %v1484
    %v1486 = vpop.xlane.xlu0 %1485
    %v1487 = vsel %vm724, %v658, 0.0
    %1488 = vadd.xlane.f32.xlu0 %v1487
    %v1489 = vpop.xlane.xlu0 %1488
    %v1490 = vsel %vm724, %v659, 0.0
    %1491 = vadd.xlane.f32.xlu0 %v1490
    %v1492 = vpop.xlane.xlu0 %1491
    %v1493 = vsel %vm724, %v660, 0.0
    %1494 = vadd.xlane.f32.xlu0 %v1493
    %v1495 = vpop.xlane.xlu0 %1494
    %v1496 = vsel %vm724, %v661, 0.0
    %1497 = vadd.xlane.f32.xlu0 %v1496
    %v1498 = vpop.xlane.xlu0 %1497
    %v1499 = vsel %vm724, %v662, 0.0
    %1500 = vadd.xlane.f32.xlu0 %v1499
    %v1501 = vpop.xlane.xlu0 %1500
    %v1502 = vsel %vm724, %v663, 0.0
    %1503 = vadd.xlane.f32.xlu0 %v1502
    %v1504 = vpop.xlane.xlu0 %1503
    %v1505 = vsel %vm724, %v664, 0.0
    %1506 = vadd.xlane.f32.xlu0 %v1505
    %v1507 = vpop.xlane.xlu0 %1506
    %v1508 = vsel %vm724, %v665, 0.0
    %1509 = vadd.xlane.f32.xlu0 %v1508
    %v1510 = vpop.xlane.xlu0 %1509
    %v1511 = vsel %vm724, %v666, 0.0
    %1512 = vadd.xlane.f32.xlu0 %v1511
    %v1513 = vpop.xlane.xlu0 %1512
    %v1514 = vsel %vm724, %v667, 0.0
    %1515 = vadd.xlane.f32.xlu0 %v1514
    %v1516 = vpop.xlane.xlu0 %1515
    %v1517 = vsel %vm724, %v668, 0.0
    %1518 = vadd.xlane.f32.xlu0 %v1517
    %v1519 = vpop.xlane.xlu0 %1518
    %v1520 = vsel %vm724, %v669, 0.0
    %1521 = vadd.xlane.f32.xlu0 %v1520
    %v1522 = vpop.xlane.xlu0 %1521
    %v1523 = vsel %vm724, %v670, 0.0
    %1524 = vadd.xlane.f32.xlu0 %v1523
    %v1525 = vpop.xlane.xlu0 %1524
    %v1526 = vsel %vm724, %v671, 0.0
    %1527 = vadd.xlane.f32.xlu0 %v1526
    %v1528 = vpop.xlane.xlu0 %1527
    %v1529 = vsel %vm724, %v672, 0.0
    %1530 = vadd.xlane.f32.xlu0 %v1529
    %v1531 = vpop.xlane.xlu0 %1530
    %v1532 = vsel %vm724, %v673, 0.0
    %1533 = vadd.xlane.f32.xlu0 %v1532
    %v1534 = vpop.xlane.xlu0 %1533
    %v1535 = vsel %vm724, %v674, 0.0
    %1536 = vadd.xlane.f32.xlu0 %v1535
    %v1537 = vpop.xlane.xlu0 %1536
    %v1538 = vsel %vm724, %v675, 0.0
    %1539 = vadd.xlane.f32.xlu0 %v1538
    %v1540 = vpop.xlane.xlu0 %1539
    %v1541 = vsel %vm724, %v676, 0.0
    %1542 = vadd.xlane.f32.xlu0 %v1541
    %v1543 = vpop.xlane.xlu0 %1542
    %v1544 = vsel %vm724, %v677, 0.0
    %1545 = vadd.xlane.f32.xlu0 %v1544
    %v1546 = vpop.xlane.xlu0 %1545
    %v1547 = vsel %vm724, %v678, 0.0
    %1548 = vadd.xlane.f32.xlu0 %v1547
    %v1549 = vpop.xlane.xlu0 %1548
    %v1550 = vsel %vm724, %v679, 0.0
    %1551 = vadd.xlane.f32.xlu0 %v1550
    %v1552 = vpop.xlane.xlu0 %1551
    %v1553 = vsel %vm724, %v680, 0.0
    %1554 = vadd.xlane.f32.xlu0 %v1553
    %v1555 = vpop.xlane.xlu0 %1554
    %v1556 = vsel %vm724, %v681, 0.0
    %1557 = vadd.xlane.f32.xlu0 %v1556
    %v1558 = vpop.xlane.xlu0 %1557
    %v1559 = vsel %vm724, %v682, 0.0
    %1560 = vadd.xlane.f32.xlu0 %v1559
    %v1561 = vpop.xlane.xlu0 %1560
    %v1562 = vsel %vm724, %v683, 0.0
    %1563 = vadd.xlane.f32.xlu0 %v1562
    %v1564 = vpop.xlane.xlu0 %1563
    %v1565 = vsel %vm724, %v684, 0.0
    %1566 = vadd.xlane.f32.xlu0 %v1565
    %v1567 = vpop.xlane.xlu0 %1566
    %v1568 = vsel %vm724, %v685, 0.0
    %1569 = vadd.xlane.f32.xlu0 %v1568
    %v1570 = vpop.xlane.xlu0 %1569
    %v1571 = vsel %vm724, %v686, 0.0
    %1572 = vadd.xlane.f32.xlu0 %v1571
    %v1573 = vpop.xlane.xlu0 %1572
    %v1574 = vsel %vm724, %v687, 0.0
    %1575 = vadd.xlane.f32.xlu0 %v1574
    %v1576 = vpop.xlane.xlu0 %1575
    %v1577 = vsel %vm724, %v688, 0.0
    %1578 = vadd.xlane.f32.xlu0 %v1577
    %v1579 = vpop.xlane.xlu0 %1578
    %v1580 = vsel %vm724, %v689, 0.0
    %1581 = vadd.xlane.f32.xlu0 %v1580
    %v1582 = vpop.xlane.xlu0 %1581
    %v1583 = vsel %vm724, %v690, 0.0
    %1584 = vadd.xlane.f32.xlu0 %v1583
    %v1585 = vpop.xlane.xlu0 %1584
    %v1586 = vsel %vm724, %v691, 0.0
    %1587 = vadd.xlane.f32.xlu0 %v1586
    %v1588 = vpop.xlane.xlu0 %1587
    %v1589 = vsel %vm724, %v692, 0.0
    %1590 = vadd.xlane.f32.xlu0 %v1589
    %v1591 = vpop.xlane.xlu0 %1590
    %v1592 = vsel %vm724, %v693, 0.0
    %1593 = vadd.xlane.f32.xlu0 %v1592
    %v1594 = vpop.xlane.xlu0 %1593
    %v1595 = vsel %vm724, %v694, 0.0
    %1596 = vadd.xlane.f32.xlu0 %v1595
    %v1597 = vpop.xlane.xlu0 %1596
    %v1598 = vsel %vm724, %v695, 0.0
    %1599 = vadd.xlane.f32.xlu0 %v1598
    %v1600 = vpop.xlane.xlu0 %1599
    %v1601 = vsel %vm724, %v696, 0.0
    %1602 = vadd.xlane.f32.xlu0 %v1601
    %v1603 = vpop.xlane.xlu0 %1602
    %v1604 = vsel %vm724, %v697, 0.0
    %1605 = vadd.xlane.f32.xlu0 %v1604
    %v1606 = vpop.xlane.xlu0 %1605
    %v1607 = vsel %vm724, %v698, 0.0
    %1608 = vadd.xlane.f32.xlu0 %v1607
    %v1609 = vpop.xlane.xlu0 %1608
    %v1610 = vsel %vm724, %v699, 0.0
    %1611 = vadd.xlane.f32.xlu0 %v1610
    %v1612 = vpop.xlane.xlu0 %1611
    %v1613 = vsel %vm724, %v700, 0.0
    %1614 = vadd.xlane.f32.xlu0 %v1613
    %v1615 = vpop.xlane.xlu0 %1614
    %v1616 = vsel %vm724, %v701, 0.0
    %1617 = vadd.xlane.f32.xlu0 %v1616
    %v1618 = vpop.xlane.xlu0 %1617
    %v1619 = vsel %vm724, %v702, 0.0
    %1620 = vadd.xlane.f32.xlu0 %v1619
    %v1621 = vpop.xlane.xlu0 %1620
    %v1622 = vsel %vm724, %v703, 0.0
    %1623 = vadd.xlane.f32.xlu0 %v1622
    %v1624 = vpop.xlane.xlu0 %1623
    %v1625 = vsel %vm724, %v704, 0.0
    %1626 = vadd.xlane.f32.xlu0 %v1625
    %v1627 = vpop.xlane.xlu0 %1626
    %v1628 = vsel %vm724, %v705, 0.0
    %1629 = vadd.xlane.f32.xlu0 %v1628
    %v1630 = vpop.xlane.xlu0 %1629
    %v1631 = vsel %vm724, %v706, 0.0
    %1632 = vadd.xlane.f32.xlu0 %v1631
    %v1633 = vpop.xlane.xlu0 %1632
    %v1634 = vsel %vm724, %v707, 0.0
    %1635 = vadd.xlane.f32.xlu0 %v1634
    %v1636 = vpop.xlane.xlu0 %1635
    %v1637 = vsel %vm724, %v708, 0.0
    %1638 = vadd.xlane.f32.xlu0 %v1637
    %v1639 = vpop.xlane.xlu0 %1638
    %v1640 = vsel %vm724, %v709, 0.0
    %1641 = vadd.xlane.f32.xlu0 %v1640
    %v1642 = vpop.xlane.xlu0 %1641
    %v1643 = vsel %vm724, %v710, 0.0
    %1644 = vadd.xlane.f32.xlu0 %v1643
    %v1645 = vpop.xlane.xlu0 %1644
    %v1646 = vsel %vm724, %v711, 0.0
    %1647 = vadd.xlane.f32.xlu0 %v1646
    %v1648 = vpop.xlane.xlu0 %1647
    %v1649 = vsel %vm724, %v712, 0.0
    %1650 = vadd.xlane.f32.xlu0 %v1649
    %v1651 = vpop.xlane.xlu0 %1650
    %v1652 = vsel %vm724, %v713, 0.0
    %1653 = vadd.xlane.f32.xlu0 %v1652
    %v1654 = vpop.xlane.xlu0 %1653
    %v1655 = vsel %vm724, %v714, 0.0
    %1656 = vadd.xlane.f32.xlu0 %v1655
    %v1657 = vpop.xlane.xlu0 %1656
    %v1658 = vsel %vm724, %v715, 0.0
    %1659 = vadd.xlane.f32.xlu0 %v1658
    %v1660 = vpop.xlane.xlu0 %1659
    %v1661 = vsel %vm724, %v716, 0.0
    %1662 = vadd.xlane.f32.xlu0 %v1661
    %v1663 = vpop.xlane.xlu0 %1662
    %v1664 = vsel %vm724, %v717, 0.0
    %1665 = vadd.xlane.f32.xlu0 %v1664
    %v1666 = vpop.xlane.xlu0 %1665
    %v1667 = vsel %vm724, %v718, 0.0
    %1668 = vadd.xlane.f32.xlu0 %v1667
    %v1669 = vpop.xlane.xlu0 %1668
    %v1670 = vsel %vm724, %v719, 0.0
    %1671 = vadd.xlane.f32.xlu0 %v1670
    %v1672 = vpop.xlane.xlu0 %1671
    %v1673 = vsel %vm724, %v720, 0.0
    %1674 = vadd.xlane.f32.xlu0 %v1673
    %v1675 = vpop.xlane.xlu0 %1674
    %v1676 = vsel %vm724, %v721, 0.0
    %1677 = vadd.xlane.f32.xlu0 %v1676
    %v1678 = vpop.xlane.xlu0 %1677
    %v1679 = vsel %vm724, %v722, 0.0
    %1680 = vadd.xlane.f32.xlu0 %v1679
    %v1681 = vpop.xlane.xlu0 %1680
    %v1682 = vsel %vm724, %v723, 0.0
    %1683 = vadd.xlane.f32.xlu0 %v1682
    %v1684 = vpop.xlane.xlu0 %1683
    %v1685 = vpack.c.bf16 %v730, %v727
    %v1686 = vpack.c.bf16 %v736, %v733
    %v1687 = vpack.c.bf16 %v742, %v739
    %v1688 = vpack.c.bf16 %v748, %v745
    %v1689 = vpack.c.bf16 %v754, %v751
    %v1690 = vpack.c.bf16 %v760, %v757
    %v1691 = vpack.c.bf16 %v766, %v763
    %v1692 = vpack.c.bf16 %v772, %v769
    %v1693 = vpack.c.bf16 %v778, %v775
    %v1694 = vpack.c.bf16 %v784, %v781
    %v1695 = vpack.c.bf16 %v790, %v787
    %v1696 = vpack.c.bf16 %v796, %v793
    %v1697 = vpack.c.bf16 %v802, %v799
    %v1698 = vpack.c.bf16 %v808, %v805
    %v1699 = vpack.c.bf16 %v814, %v811
    %v1700 = vpack.c.bf16 %v820, %v817
    %v1701 = vpack.c.bf16 %v826, %v823
    %v1702 = vpack.c.bf16 %v832, %v829
    %v1703 = vpack.c.bf16 %v838, %v835
    %v1704 = vpack.c.bf16 %v844, %v841
    %v1705 = vpack.c.bf16 %v850, %v847
    %v1706 = vpack.c.bf16 %v856, %v853
    %v1707 = vpack.c.bf16 %v862, %v859
    %v1708 = vpack.c.bf16 %v868, %v865
    %v1709 = vpack.c.bf16 %v874, %v871
    %v1710 = vpack.c.bf16 %v880, %v877
    %v1711 = vpack.c.bf16 %v886, %v883
    %v1712 = vpack.c.bf16 %v892, %v889
    %v1713 = vpack.c.bf16 %v898, %v895
    %v1714 = vpack.c.bf16 %v904, %v901
    %v1715 = vpack.c.bf16 %v910, %v907
    %v1716 = vpack.c.bf16 %v916, %v913
    %v1717 = vpack.c.bf16 %v922, %v919
    %v1718 = vpack.c.bf16 %v928, %v925
    %v1719 = vpack.c.bf16 %v934, %v931
    %v1720 = vpack.c.bf16 %v940, %v937
    %v1721 = vpack.c.bf16 %v946, %v943
    %v1722 = vpack.c.bf16 %v952, %v949
    %v1723 = vpack.c.bf16 %v958, %v955
    %v1724 = vpack.c.bf16 %v964, %v961
    %v1725 = vpack.c.bf16 %v970, %v967
    %v1726 = vpack.c.bf16 %v976, %v973
    %v1727 = vpack.c.bf16 %v982, %v979
    %v1728 = vpack.c.bf16 %v988, %v985
    %v1729 = vpack.c.bf16 %v994, %v991
    %v1730 = vpack.c.bf16 %v1000, %v997
    %v1731 = vpack.c.bf16 %v1006, %v1003
    %v1732 = vpack.c.bf16 %v1012, %v1009
    %v1733 = vpack.c.bf16 %v1018, %v1015
    %v1734 = vpack.c.bf16 %v1024, %v1021
    %v1735 = vpack.c.bf16 %v1030, %v1027
    %v1736 = vpack.c.bf16 %v1036, %v1033
    %v1737 = vpack.c.bf16 %v1042, %v1039
    %v1738 = vpack.c.bf16 %v1048, %v1045
    %v1739 = vpack.c.bf16 %v1054, %v1051
    %v1740 = vpack.c.bf16 %v1060, %v1057
    %v1741 = vpack.c.bf16 %v1066, %v1063
    %v1742 = vpack.c.bf16 %v1072, %v1069
    %v1743 = vpack.c.bf16 %v1078, %v1075
    %v1744 = vpack.c.bf16 %v1084, %v1081
    %v1745 = vpack.c.bf16 %v1090, %v1087
    %v1746 = vpack.c.bf16 %v1096, %v1093
    %v1747 = vpack.c.bf16 %v1102, %v1099
    %v1748 = vpack.c.bf16 %v1108, %v1105
    %v1749 = vpack.c.bf16 %v1114, %v1111
    %v1750 = vpack.c.bf16 %v1120, %v1117
    %v1751 = vpack.c.bf16 %v1126, %v1123
    %v1752 = vpack.c.bf16 %v1132, %v1129
    %v1753 = vpack.c.bf16 %v1138, %v1135
    %v1754 = vpack.c.bf16 %v1144, %v1141
    %v1755 = vpack.c.bf16 %v1150, %v1147
    %v1756 = vpack.c.bf16 %v1156, %v1153
    %v1757 = vpack.c.bf16 %v1162, %v1159
    %v1758 = vpack.c.bf16 %v1168, %v1165
    %v1759 = vpack.c.bf16 %v1174, %v1171
    %v1760 = vpack.c.bf16 %v1180, %v1177
    %v1761 = vpack.c.bf16 %v1186, %v1183
    %v1762 = vpack.c.bf16 %v1192, %v1189
    %v1763 = vpack.c.bf16 %v1198, %v1195
    %v1764 = vpack.c.bf16 %v1204, %v1201
    %v1765 = vpack.c.bf16 %v1210, %v1207
    %v1766 = vpack.c.bf16 %v1216, %v1213
    %v1767 = vpack.c.bf16 %v1222, %v1219
    %v1768 = vpack.c.bf16 %v1228, %v1225
    %v1769 = vpack.c.bf16 %v1234, %v1231
    %v1770 = vpack.c.bf16 %v1240, %v1237
    %v1771 = vpack.c.bf16 %v1246, %v1243
    %v1772 = vpack.c.bf16 %v1252, %v1249
    %v1773 = vpack.c.bf16 %v1258, %v1255
    %v1774 = vpack.c.bf16 %v1264, %v1261
    %v1775 = vpack.c.bf16 %v1270, %v1267
    %v1776 = vpack.c.bf16 %v1276, %v1273
    %v1777 = vpack.c.bf16 %v1282, %v1279
    %v1778 = vpack.c.bf16 %v1288, %v1285
    %v1779 = vpack.c.bf16 %v1294, %v1291
    %v1780 = vpack.c.bf16 %v1300, %v1297
    %v1781 = vpack.c.bf16 %v1306, %v1303
    %v1782 = vpack.c.bf16 %v1312, %v1309
    %v1783 = vpack.c.bf16 %v1318, %v1315
    %v1784 = vpack.c.bf16 %v1324, %v1321
    %v1785 = vpack.c.bf16 %v1330, %v1327
    %v1786 = vpack.c.bf16 %v1336, %v1333
    %v1787 = vpack.c.bf16 %v1342, %v1339
    %v1788 = vpack.c.bf16 %v1348, %v1345
    %v1789 = vpack.c.bf16 %v1354, %v1351
    %v1790 = vpack.c.bf16 %v1360, %v1357
    %v1791 = vpack.c.bf16 %v1366, %v1363
    %v1792 = vpack.c.bf16 %v1372, %v1369
    %v1793 = vpack.c.bf16 %v1378, %v1375
    %v1794 = vpack.c.bf16 %v1384, %v1381
    %v1795 = vpack.c.bf16 %v1390, %v1387
    %v1796 = vpack.c.bf16 %v1396, %v1393
    %v1797 = vpack.c.bf16 %v1402, %v1399
    %v1798 = vpack.c.bf16 %v1408, %v1405
    %v1799 = vpack.c.bf16 %v1414, %v1411
    %v1800 = vpack.c.bf16 %v1420, %v1417
    %v1801 = vpack.c.bf16 %v1426, %v1423
    %v1802 = vpack.c.bf16 %v1432, %v1429
    %v1803 = vpack.c.bf16 %v1438, %v1435
    %v1804 = vpack.c.bf16 %v1444, %v1441
    %v1805 = vpack.c.bf16 %v1450, %v1447
    %v1806 = vpack.c.bf16 %v1456, %v1453
    %v1807 = vpack.c.bf16 %v1462, %v1459
    %v1808 = vpack.c.bf16 %v1468, %v1465
    %v1809 = vpack.c.bf16 %v1474, %v1471
    %v1810 = vpack.c.bf16 %v1480, %v1477
    %v1811 = vpack.c.bf16 %v1486, %v1483
    %v1812 = vpack.c.bf16 %v1492, %v1489
    %v1813 = vpack.c.bf16 %v1498, %v1495
    %v1814 = vpack.c.bf16 %v1504, %v1501
    %v1815 = vpack.c.bf16 %v1510, %v1507
    %v1816 = vpack.c.bf16 %v1516, %v1513
    %v1817 = vpack.c.bf16 %v1522, %v1519
    %v1818 = vpack.c.bf16 %v1528, %v1525
    %v1819 = vpack.c.bf16 %v1534, %v1531
    %v1820 = vpack.c.bf16 %v1540, %v1537
    %v1821 = vpack.c.bf16 %v1546, %v1543
    %v1822 = vpack.c.bf16 %v1552, %v1549
    %v1823 = vpack.c.bf16 %v1558, %v1555
    %v1824 = vpack.c.bf16 %v1564, %v1561
    %v1825 = vpack.c.bf16 %v1570, %v1567
    %v1826 = vpack.c.bf16 %v1576, %v1573
    %v1827 = vpack.c.bf16 %v1582, %v1579
    %v1828 = vpack.c.bf16 %v1588, %v1585
    %v1829 = vpack.c.bf16 %v1594, %v1591
    %v1830 = vpack.c.bf16 %v1600, %v1597
    %v1831 = vpack.c.bf16 %v1606, %v1603
    %v1832 = vpack.c.bf16 %v1612, %v1609
    %v1833 = vpack.c.bf16 %v1618, %v1615
    %v1834 = vpack.c.bf16 %v1624, %v1621
    %v1835 = vpack.c.bf16 %v1630, %v1627
    %v1836 = vpack.c.bf16 %v1636, %v1633
    %v1837 = vpack.c.bf16 %v1642, %v1639
    %v1838 = vpack.c.bf16 %v1648, %v1645
    %v1839 = vpack.c.bf16 %v1654, %v1651
    %v1840 = vpack.c.bf16 %v1660, %v1657
    %v1841 = vpack.c.bf16 %v1666, %v1663
    %v1842 = vpack.c.bf16 %v1672, %v1669
    %v1843 = vpack.c.bf16 %v1678, %v1675
    %v1844 = vpack.c.bf16 %v1684, %v1681
    %v1845 = vld [vmem:[#allocation5] sm:$0xff]
    %v1846 = vld [vmem:[#allocation5 + $0x8] sm:$0xff]
    %v1847 = vld [vmem:[#allocation5 + $0x10] sm:$0xff]
    %v1848 = vld [vmem:[#allocation5 + $0x18] sm:$0xff]
    %v1849 = vld [vmem:[#allocation5 + $0x20] sm:$0xff]
    %v1850 = vld [vmem:[#allocation5 + $0x28] sm:$0xff]
    %v1851 = vld [vmem:[#allocation5 + $0x30] sm:$0xff]
    %v1852 = vld [vmem:[#allocation5 + $0x38] sm:$0xff]
    %v1853 = vld [vmem:[#allocation5 + $0x40] sm:$0xff]
    %v1854 = vld [vmem:[#allocation5 + $0x48] sm:$0xff]
    %v1855 = vld [vmem:[#allocation5 + $0x50] sm:$0xff]
    %v1856 = vld [vmem:[#allocation5 + $0x58] sm:$0xff]
    %v1857 = vld [vmem:[#allocation5 + $0x60] sm:$0xff]
    %v1858 = vld [vmem:[#allocation5 + $0x68] sm:$0xff]
    %v1859 = vld [vmem:[#allocation5 + $0x70] sm:$0xff]
    %v1860 = vld [vmem:[#allocation5 + $0x78] sm:$0xff]
    %v1861 = vld [vmem:[#allocation5 + $0x80] sm:$0xff]
    %v1862 = vld [vmem:[#allocation5 + $0x88] sm:$0xff]
    %v1863 = vld [vmem:[#allocation5 + $0x90] sm:$0xff]
    %v1864 = vld [vmem:[#allocation5 + $0x98] sm:$0xff]
    %v1865 = vld [vmem:[#allocation5 + $0xa0] sm:$0xff]
    %v1866 = vld [vmem:[#allocation5 + $0xa8] sm:$0xff]
    %v1867 = vld [vmem:[#allocation5 + $0xb0] sm:$0xff]
    %v1868 = vld [vmem:[#allocation5 + $0xb8] sm:$0xff]
    %v1869 = vld [vmem:[#allocation5 + $0xc0] sm:$0xff]
    %v1870 = vld [vmem:[#allocation5 + $0xc8] sm:$0xff]
    %v1871 = vld [vmem:[#allocation5 + $0xd0] sm:$0xff]
    %v1872 = vld [vmem:[#allocation5 + $0xd8] sm:$0xff]
    %v1873 = vld [vmem:[#allocation5 + $0xe0] sm:$0xff]
    %v1874 = vld [vmem:[#allocation5 + $0xe8] sm:$0xff]
    %v1875 = vld [vmem:[#allocation5 + $0xf0] sm:$0xff]
    %v1876 = vld [vmem:[#allocation5 + $0xf8] sm:$0xff]
    %v1877 = vld [vmem:[#allocation5 + $0x100] sm:$0xff]
    %v1878 = vld [vmem:[#allocation5 + $0x108] sm:$0xff]
    %v1879 = vld [vmem:[#allocation5 + $0x110] sm:$0xff]
    %v1880 = vld [vmem:[#allocation5 + $0x118] sm:$0xff]
    %v1881 = vld [vmem:[#allocation5 + $0x120] sm:$0xff]
    %v1882 = vld [vmem:[#allocation5 + $0x128] sm:$0xff]
    %v1883 = vld [vmem:[#allocation5 + $0x130] sm:$0xff]
    %v1884 = vld [vmem:[#allocation5 + $0x138] sm:$0xff]
    %v1885 = vld [vmem:[#allocation5 + $0x140] sm:$0xff]
    %v1886 = vld [vmem:[#allocation5 + $0x148] sm:$0xff]
    %v1887 = vld [vmem:[#allocation5 + $0x150] sm:$0xff]
    %v1888 = vld [vmem:[#allocation5 + $0x158] sm:$0xff]
    %v1889 = vld [vmem:[#allocation5 + $0x160] sm:$0xff]
    %v1890 = vld [vmem:[#allocation5 + $0x168] sm:$0xff]
    %v1891 = vld [vmem:[#allocation5 + $0x170] sm:$0xff]
    %v1892 = vld [vmem:[#allocation5 + $0x178] sm:$0xff]
    %v1893 = vld [vmem:[#allocation5 + $0x180] sm:$0xff]
    %v1894 = vld [vmem:[#allocation5 + $0x188] sm:$0xff]
    %v1895 = vld [vmem:[#allocation5 + $0x190] sm:$0xff]
    %v1896 = vld [vmem:[#allocation5 + $0x198] sm:$0xff]
    %v1897 = vld [vmem:[#allocation5 + $0x1a0] sm:$0xff]
    %v1898 = vld [vmem:[#allocation5 + $0x1a8] sm:$0xff]
    %v1899 = vld [vmem:[#allocation5 + $0x1b0] sm:$0xff]
    %v1900 = vld [vmem:[#allocation5 + $0x1b8] sm:$0xff]
    %v1901 = vld [vmem:[#allocation5 + $0x1c0] sm:$0xff]
    %v1902 = vld [vmem:[#allocation5 + $0x1c8] sm:$0xff]
    %v1903 = vld [vmem:[#allocation5 + $0x1d0] sm:$0xff]
    %v1904 = vld [vmem:[#allocation5 + $0x1d8] sm:$0xff]
    %v1905 = vld [vmem:[#allocation5 + $0x1e0] sm:$0xff]
    %v1906 = vld [vmem:[#allocation5 + $0x1e8] sm:$0xff]
    %v1907 = vld [vmem:[#allocation5 + $0x1f0] sm:$0xff]
    %v1908 = vld [vmem:[#allocation5 + $0x1f8] sm:$0xff]
    %v1909 = vld [vmem:[#allocation5 + $0x200] sm:$0xff]
    %v1910 = vld [vmem:[#allocation5 + $0x208] sm:$0xff]
    %v1911 = vld [vmem:[#allocation5 + $0x210] sm:$0xff]
    %v1912 = vld [vmem:[#allocation5 + $0x218] sm:$0xff]
    %v1913 = vld [vmem:[#allocation5 + $0x220] sm:$0xff]
    %v1914 = vld [vmem:[#allocation5 + $0x228] sm:$0xff]
    %v1915 = vld [vmem:[#allocation5 + $0x230] sm:$0xff]
    %v1916 = vld [vmem:[#allocation5 + $0x238] sm:$0xff]
    %v1917 = vld [vmem:[#allocation5 + $0x240] sm:$0xff]
    %v1918 = vld [vmem:[#allocation5 + $0x248] sm:$0xff]
    %v1919 = vld [vmem:[#allocation5 + $0x250] sm:$0xff]
    %v1920 = vld [vmem:[#allocation5 + $0x258] sm:$0xff]
    %v1921 = vld [vmem:[#allocation5 + $0x260] sm:$0xff]
    %v1922 = vld [vmem:[#allocation5 + $0x268] sm:$0xff]
    %v1923 = vld [vmem:[#allocation5 + $0x270] sm:$0xff]
    %v1924 = vld [vmem:[#allocation5 + $0x278] sm:$0xff]
    %v2085 = vunpack.c.l.b16 %v1685
    %v2086 = vunpack.c.h.b16 %v1685
    %v2087 = vunpack.c.l.b16 %v1686
    %v2088 = vunpack.c.h.b16 %v1686
    %v2089 = vunpack.c.l.b16 %v1687
    %v2090 = vunpack.c.h.b16 %v1687
    %v2091 = vunpack.c.l.b16 %v1688
    %v2092 = vunpack.c.h.b16 %v1688
    %v2093 = vunpack.c.l.b16 %v1689
    %v2094 = vunpack.c.h.b16 %v1689
    %v2095 = vunpack.c.l.b16 %v1690
    %v2096 = vunpack.c.h.b16 %v1690
    %v2097 = vunpack.c.l.b16 %v1691
    %v2098 = vunpack.c.h.b16 %v1691
    %v2099 = vunpack.c.l.b16 %v1692
    %v2100 = vunpack.c.h.b16 %v1692
    %v2101 = vunpack.c.l.b16 %v1693
    %v2102 = vunpack.c.h.b16 %v1693
    %v2103 = vunpack.c.l.b16 %v1694
    %v2104 = vunpack.c.h.b16 %v1694
    %v2105 = vunpack.c.l.b16 %v1695
    %v2106 = vunpack.c.h.b16 %v1695
    %v2107 = vunpack.c.l.b16 %v1696
    %v2108 = vunpack.c.h.b16 %v1696
    %v2109 = vunpack.c.l.b16 %v1697
    %v2110 = vunpack.c.h.b16 %v1697
    %v2111 = vunpack.c.l.b16 %v1698
    %v2112 = vunpack.c.h.b16 %v1698
    %v2113 = vunpack.c.l.b16 %v1699
    %v2114 = vunpack.c.h.b16 %v1699
    %v2115 = vunpack.c.l.b16 %v1700
    %v2116 = vunpack.c.h.b16 %v1700
    %v2117 = vunpack.c.l.b16 %v1701
    %v2118 = vunpack.c.h.b16 %v1701
    %v2119 = vunpack.c.l.b16 %v1702
    %v2120 = vunpack.c.h.b16 %v1702
    %v2121 = vunpack.c.l.b16 %v1703
    %v2122 = vunpack.c.h.b16 %v1703
    %v2123 = vunpack.c.l.b16 %v1704
    %v2124 = vunpack.c.h.b16 %v1704
    %v2125 = vunpack.c.l.b16 %v1705
    %v2126 = vunpack.c.h.b16 %v1705
    %v2127 = vunpack.c.l.b16 %v1706
    %v2128 = vunpack.c.h.b16 %v1706
    %v2129 = vunpack.c.l.b16 %v1707
    %v2130 = vunpack.c.h.b16 %v1707
    %v2131 = vunpack.c.l.b16 %v1708
    %v2132 = vunpack.c.h.b16 %v1708
    %v2133 = vunpack.c.l.b16 %v1709
    %v2134 = vunpack.c.h.b16 %v1709
    %v2135 = vunpack.c.l.b16 %v1710
    %v2136 = vunpack.c.h.b16 %v1710
    %v2137 = vunpack.c.l.b16 %v1711
    %v2138 = vunpack.c.h.b16 %v1711
    %v2139 = vunpack.c.l.b16 %v1712
    %v2140 = vunpack.c.h.b16 %v1712
    %v2141 = vunpack.c.l.b16 %v1713
    %v2142 = vunpack.c.h.b16 %v1713
    %v2143 = vunpack.c.l.b16 %v1714
    %v2144 = vunpack.c.h.b16 %v1714
    %v2145 = vunpack.c.l.b16 %v1715
    %v2146 = vunpack.c.h.b16 %v1715
    %v2147 = vunpack.c.l.b16 %v1716
    %v2148 = vunpack.c.h.b16 %v1716
    %v2149 = vunpack.c.l.b16 %v1717
    %v2150 = vunpack.c.h.b16 %v1717
    %v2151 = vunpack.c.l.b16 %v1718
    %v2152 = vunpack.c.h.b16 %v1718
    %v2153 = vunpack.c.l.b16 %v1719
    %v2154 = vunpack.c.h.b16 %v1719
    %v2155 = vunpack.c.l.b16 %v1720
    %v2156 = vunpack.c.h.b16 %v1720
    %v2157 = vunpack.c.l.b16 %v1721
    %v2158 = vunpack.c.h.b16 %v1721
    %v2159 = vunpack.c.l.b16 %v1722
    %v2160 = vunpack.c.h.b16 %v1722
    %v2161 = vunpack.c.l.b16 %v1723
    %v2162 = vunpack.c.h.b16 %v1723
    %v2163 = vunpack.c.l.b16 %v1724
    %v2164 = vunpack.c.h.b16 %v1724
    %v2165 = vunpack.c.l.b16 %v1725
    %v2166 = vunpack.c.h.b16 %v1725
    %v2167 = vunpack.c.l.b16 %v1726
    %v2168 = vunpack.c.h.b16 %v1726
    %v2169 = vunpack.c.l.b16 %v1727
    %v2170 = vunpack.c.h.b16 %v1727
    %v2171 = vunpack.c.l.b16 %v1728
    %v2172 = vunpack.c.h.b16 %v1728
    %v2173 = vunpack.c.l.b16 %v1729
    %v2174 = vunpack.c.h.b16 %v1729
    %v2175 = vunpack.c.l.b16 %v1730
    %v2176 = vunpack.c.h.b16 %v1730
    %v2177 = vunpack.c.l.b16 %v1731
    %v2178 = vunpack.c.h.b16 %v1731
    %v2179 = vunpack.c.l.b16 %v1732
    %v2180 = vunpack.c.h.b16 %v1732
    %v2181 = vunpack.c.l.b16 %v1733
    %v2182 = vunpack.c.h.b16 %v1733
    %v2183 = vunpack.c.l.b16 %v1734
    %v2184 = vunpack.c.h.b16 %v1734
    %v2185 = vunpack.c.l.b16 %v1735
    %v2186 = vunpack.c.h.b16 %v1735
    %v2187 = vunpack.c.l.b16 %v1736
    %v2188 = vunpack.c.h.b16 %v1736
    %v2189 = vunpack.c.l.b16 %v1737
    %v2190 = vunpack.c.h.b16 %v1737
    %v2191 = vunpack.c.l.b16 %v1738
    %v2192 = vunpack.c.h.b16 %v1738
    %v2193 = vunpack.c.l.b16 %v1739
    %v2194 = vunpack.c.h.b16 %v1739
    %v2195 = vunpack.c.l.b16 %v1740
    %v2196 = vunpack.c.h.b16 %v1740
    %v2197 = vunpack.c.l.b16 %v1741
    %v2198 = vunpack.c.h.b16 %v1741
    %v2199 = vunpack.c.l.b16 %v1742
    %v2200 = vunpack.c.h.b16 %v1742
    %v2201 = vunpack.c.l.b16 %v1743
    %v2202 = vunpack.c.h.b16 %v1743
    %v2203 = vunpack.c.l.b16 %v1744
    %v2204 = vunpack.c.h.b16 %v1744
    %v2205 = vunpack.c.l.b16 %v1745
    %v2206 = vunpack.c.h.b16 %v1745
    %v2207 = vunpack.c.l.b16 %v1746
    %v2208 = vunpack.c.h.b16 %v1746
    %v2209 = vunpack.c.l.b16 %v1747
    %v2210 = vunpack.c.h.b16 %v1747
    %v2211 = vunpack.c.l.b16 %v1748
    %v2212 = vunpack.c.h.b16 %v1748
    %v2213 = vunpack.c.l.b16 %v1749
    %v2214 = vunpack.c.h.b16 %v1749
    %v2215 = vunpack.c.l.b16 %v1750
    %v2216 = vunpack.c.h.b16 %v1750
    %v2217 = vunpack.c.l.b16 %v1751
    %v2218 = vunpack.c.h.b16 %v1751
    %v2219 = vunpack.c.l.b16 %v1752
    %v2220 = vunpack.c.h.b16 %v1752
    %v2221 = vunpack.c.l.b16 %v1753
    %v2222 = vunpack.c.h.b16 %v1753
    %v2223 = vunpack.c.l.b16 %v1754
    %v2224 = vunpack.c.h.b16 %v1754
    %v2225 = vunpack.c.l.b16 %v1755
    %v2226 = vunpack.c.h.b16 %v1755
    %v2227 = vunpack.c.l.b16 %v1756
    %v2228 = vunpack.c.h.b16 %v1756
    %v2229 = vunpack.c.l.b16 %v1757
    %v2230 = vunpack.c.h.b16 %v1757
    %v2231 = vunpack.c.l.b16 %v1758
    %v2232 = vunpack.c.h.b16 %v1758
    %v2233 = vunpack.c.l.b16 %v1759
    %v2234 = vunpack.c.h.b16 %v1759
    %v2235 = vunpack.c.l.b16 %v1760
    %v2236 = vunpack.c.h.b16 %v1760
    %v2237 = vunpack.c.l.b16 %v1761
    %v2238 = vunpack.c.h.b16 %v1761
    %v2239 = vunpack.c.l.b16 %v1762
    %v2240 = vunpack.c.h.b16 %v1762
    %v2241 = vunpack.c.l.b16 %v1763
    %v2242 = vunpack.c.h.b16 %v1763
    %v2243 = vunpack.c.l.b16 %v1764
    %v2244 = vunpack.c.h.b16 %v1764
    %v2245 = vunpack.c.l.b16 %v1765
    %v2246 = vunpack.c.h.b16 %v1765
    %v2247 = vunpack.c.l.b16 %v1766
    %v2248 = vunpack.c.h.b16 %v1766
    %v2249 = vunpack.c.l.b16 %v1767
    %v2250 = vunpack.c.h.b16 %v1767
    %v2251 = vunpack.c.l.b16 %v1768
    %v2252 = vunpack.c.h.b16 %v1768
    %v2253 = vunpack.c.l.b16 %v1769
    %v2254 = vunpack.c.h.b16 %v1769
    %v2255 = vunpack.c.l.b16 %v1770
    %v2256 = vunpack.c.h.b16 %v1770
    %v2257 = vunpack.c.l.b16 %v1771
    %v2258 = vunpack.c.h.b16 %v1771
    %v2259 = vunpack.c.l.b16 %v1772
    %v2260 = vunpack.c.h.b16 %v1772
    %v2261 = vunpack.c.l.b16 %v1773
    %v2262 = vunpack.c.h.b16 %v1773
    %v2263 = vunpack.c.l.b16 %v1774
    %v2264 = vunpack.c.h.b16 %v1774
    %v2265 = vunpack.c.l.b16 %v1775
    %v2266 = vunpack.c.h.b16 %v1775
    %v2267 = vunpack.c.l.b16 %v1776
    %v2268 = vunpack.c.h.b16 %v1776
    %v2269 = vunpack.c.l.b16 %v1777
    %v2270 = vunpack.c.h.b16 %v1777
    %v2271 = vunpack.c.l.b16 %v1778
    %v2272 = vunpack.c.h.b16 %v1778
    %v2273 = vunpack.c.l.b16 %v1779
    %v2274 = vunpack.c.h.b16 %v1779
    %v2275 = vunpack.c.l.b16 %v1780
    %v2276 = vunpack.c.h.b16 %v1780
    %v2277 = vunpack.c.l.b16 %v1781
    %v2278 = vunpack.c.h.b16 %v1781
    %v2279 = vunpack.c.l.b16 %v1782
    %v2280 = vunpack.c.h.b16 %v1782
    %v2281 = vunpack.c.l.b16 %v1783
    %v2282 = vunpack.c.h.b16 %v1783
    %v2283 = vunpack.c.l.b16 %v1784
    %v2284 = vunpack.c.h.b16 %v1784
    %v2285 = vunpack.c.l.b16 %v1785
    %v2286 = vunpack.c.h.b16 %v1785
    %v2287 = vunpack.c.l.b16 %v1786
    %v2288 = vunpack.c.h.b16 %v1786
    %v2289 = vunpack.c.l.b16 %v1787
    %v2290 = vunpack.c.h.b16 %v1787
    %v2291 = vunpack.c.l.b16 %v1788
    %v2292 = vunpack.c.h.b16 %v1788
    %v2293 = vunpack.c.l.b16 %v1789
    %v2294 = vunpack.c.h.b16 %v1789
    %v2295 = vunpack.c.l.b16 %v1790
    %v2296 = vunpack.c.h.b16 %v1790
    %v2297 = vunpack.c.l.b16 %v1791
    %v2298 = vunpack.c.h.b16 %v1791
    %v2299 = vunpack.c.l.b16 %v1792
    %v2300 = vunpack.c.h.b16 %v1792
    %v2301 = vunpack.c.l.b16 %v1793
    %v2302 = vunpack.c.h.b16 %v1793
    %v2303 = vunpack.c.l.b16 %v1794
    %v2304 = vunpack.c.h.b16 %v1794
    %v2305 = vunpack.c.l.b16 %v1795
    %v2306 = vunpack.c.h.b16 %v1795
    %v2307 = vunpack.c.l.b16 %v1796
    %v2308 = vunpack.c.h.b16 %v1796
    %v2309 = vunpack.c.l.b16 %v1797
    %v2310 = vunpack.c.h.b16 %v1797
    %v2311 = vunpack.c.l.b16 %v1798
    %v2312 = vunpack.c.h.b16 %v1798
    %v2313 = vunpack.c.l.b16 %v1799
    %v2314 = vunpack.c.h.b16 %v1799
    %v2315 = vunpack.c.l.b16 %v1800
    %v2316 = vunpack.c.h.b16 %v1800
    %v2317 = vunpack.c.l.b16 %v1801
    %v2318 = vunpack.c.h.b16 %v1801
    %v2319 = vunpack.c.l.b16 %v1802
    %v2320 = vunpack.c.h.b16 %v1802
    %v2321 = vunpack.c.l.b16 %v1803
    %v2322 = vunpack.c.h.b16 %v1803
    %v2323 = vunpack.c.l.b16 %v1804
    %v2324 = vunpack.c.h.b16 %v1804
    %v2325 = vunpack.c.l.b16 %v1805
    %v2326 = vunpack.c.h.b16 %v1805
    %v2327 = vunpack.c.l.b16 %v1806
    %v2328 = vunpack.c.h.b16 %v1806
    %v2329 = vunpack.c.l.b16 %v1807
    %v2330 = vunpack.c.h.b16 %v1807
    %v2331 = vunpack.c.l.b16 %v1808
    %v2332 = vunpack.c.h.b16 %v1808
    %v2333 = vunpack.c.l.b16 %v1809
    %v2334 = vunpack.c.h.b16 %v1809
    %v2335 = vunpack.c.l.b16 %v1810
    %v2336 = vunpack.c.h.b16 %v1810
    %v2337 = vunpack.c.l.b16 %v1811
    %v2338 = vunpack.c.h.b16 %v1811
    %v2339 = vunpack.c.l.b16 %v1812
    %v2340 = vunpack.c.h.b16 %v1812
    %v2341 = vunpack.c.l.b16 %v1813
    %v2342 = vunpack.c.h.b16 %v1813
    %v2343 = vunpack.c.l.b16 %v1814
    %v2344 = vunpack.c.h.b16 %v1814
    %v2345 = vunpack.c.l.b16 %v1815
    %v2346 = vunpack.c.h.b16 %v1815
    %v2347 = vunpack.c.l.b16 %v1816
    %v2348 = vunpack.c.h.b16 %v1816
    %v2349 = vunpack.c.l.b16 %v1817
    %v2350 = vunpack.c.h.b16 %v1817
    %v2351 = vunpack.c.l.b16 %v1818
    %v2352 = vunpack.c.h.b16 %v1818
    %v2353 = vunpack.c.l.b16 %v1819
    %v2354 = vunpack.c.h.b16 %v1819
    %v2355 = vunpack.c.l.b16 %v1820
    %v2356 = vunpack.c.h.b16 %v1820
    %v2357 = vunpack.c.l.b16 %v1821
    %v2358 = vunpack.c.h.b16 %v1821
    %v2359 = vunpack.c.l.b16 %v1822
    %v2360 = vunpack.c.h.b16 %v1822
    %v2361 = vunpack.c.l.b16 %v1823
    %v2362 = vunpack.c.h.b16 %v1823
    %v2363 = vunpack.c.l.b16 %v1824
    %v2364 = vunpack.c.h.b16 %v1824
    %v2365 = vunpack.c.l.b16 %v1825
    %v2366 = vunpack.c.h.b16 %v1825
    %v2367 = vunpack.c.l.b16 %v1826
    %v2368 = vunpack.c.h.b16 %v1826
    %v2369 = vunpack.c.l.b16 %v1827
    %v2370 = vunpack.c.h.b16 %v1827
    %v2371 = vunpack.c.l.b16 %v1828
    %v2372 = vunpack.c.h.b16 %v1828
    %v2373 = vunpack.c.l.b16 %v1829
    %v2374 = vunpack.c.h.b16 %v1829
    %v2375 = vunpack.c.l.b16 %v1830
    %v2376 = vunpack.c.h.b16 %v1830
    %v2377 = vunpack.c.l.b16 %v1831
    %v2378 = vunpack.c.h.b16 %v1831
    %v2379 = vunpack.c.l.b16 %v1832
    %v2380 = vunpack.c.h.b16 %v1832
    %v2381 = vunpack.c.l.b16 %v1833
    %v2382 = vunpack.c.h.b16 %v1833
    %v2383 = vunpack.c.l.b16 %v1834
    %v2384 = vunpack.c.h.b16 %v1834
    %v2385 = vunpack.c.l.b16 %v1835
    %v2386 = vunpack.c.h.b16 %v1835
    %v2387 = vunpack.c.l.b16 %v1836
    %v2388 = vunpack.c.h.b16 %v1836
    %v2389 = vunpack.c.l.b16 %v1837
    %v2390 = vunpack.c.h.b16 %v1837
    %v2391 = vunpack.c.l.b16 %v1838
    %v2392 = vunpack.c.h.b16 %v1838
    %v2393 = vunpack.c.l.b16 %v1839
    %v2394 = vunpack.c.h.b16 %v1839
    %v2395 = vunpack.c.l.b16 %v1840
    %v2396 = vunpack.c.h.b16 %v1840
    %v2397 = vunpack.c.l.b16 %v1841
    %v2398 = vunpack.c.h.b16 %v1841
    %v2399 = vunpack.c.l.b16 %v1842
    %v2400 = vunpack.c.h.b16 %v1842
    %v2401 = vunpack.c.l.b16 %v1843
    %v2402 = vunpack.c.h.b16 %v1843
    %v2403 = vunpack.c.l.b16 %v1844
    %v2404 = vunpack.c.h.b16 %v1844
    %v2405 = vlaneseq
    %v2406 = vand.u32 %v2405, 127
    %v2407 = vlaneseq
    %v2408 = vshrl.u32 %v2407, 7
    %v2409 = vsub.s32 %v2406, %v2408
    %v2410 = vrot.slane %v2085, %v2409
    %v2411 = vadd.s32 %v2406, 4294967288
    %v2412 = vlaneseq
    %v2413 = vshrl.u32 %v2412, 7
    %v2414 = vsub.s32 %v2411, %v2413
    %v2415 = vrot.slane %v2086, %v2414
    %vm2416 = vcmask 130112
    %v2417 = vsel %vm2416, %v2415, %v2410
    %v2418 = vadd.s32 %v2406, 4294967280
    %v2419 = vlaneseq
    %v2420 = vshrl.u32 %v2419, 7
    %v2421 = vsub.s32 %v2418, %v2420
    %v2422 = vrot.slane %v2087, %v2421
    %vm2423 = vcmask 195712
    %v2424 = vsel %vm2423, %v2422, %v2417
    %v2425 = vadd.s32 %v2406, 4294967272
    %v2426 = vlaneseq
    %v2427 = vshrl.u32 %v2426, 7
    %v2428 = vsub.s32 %v2425, %v2427
    %v2429 = vrot.slane %v2088, %v2428
    %vm2430 = vcmask 261312
    %v2431 = vsel %vm2430, %v2429, %v2424
    %v2432 = vadd.s32 %v2406, 4294967264
    %v2433 = vlaneseq
    %v2434 = vshrl.u32 %v2433, 7
    %v2435 = vsub.s32 %v2432, %v2434
    %v2436 = vrot.slane %v2089, %v2435
    %vm2437 = vcmask 326912
    %v2438 = vsel %vm2437, %v2436, %v2431
    %v2439 = vadd.s32 %v2406, 4294967256
    %v2440 = vlaneseq
    %v2441 = vshrl.u32 %v2440, 7
    %v2442 = vsub.s32 %v2439, %v2441
    %v2443 = vrot.slane %v2090, %v2442
    %vm2444 = vcmask 392512
    %v2445 = vsel %vm2444, %v2443, %v2438
    %v2446 = vadd.s32 %v2406, 4294967248
    %v2447 = vlaneseq
    %v2448 = vshrl.u32 %v2447, 7
    %v2449 = vsub.s32 %v2446, %v2448
    %v2450 = vrot.slane %v2091, %v2449
    %vm2451 = vcmask 458112
    %v2452 = vsel %vm2451, %v2450, %v2445
    %v2453 = vadd.s32 %v2406, 4294967240
    %v2454 = vlaneseq
    %v2455 = vshrl.u32 %v2454, 7
    %v2456 = vsub.s32 %v2453, %v2455
    %v2457 = vrot.slane %v2092, %v2456
    %vm2458 = vcmask 523712
    %v2459 = vsel %vm2458, %v2457, %v2452
    %v2460 = vadd.s32 %v2406, 4294967232
    %v2461 = vlaneseq
    %v2462 = vshrl.u32 %v2461, 7
    %v2463 = vsub.s32 %v2460, %v2462
    %v2464 = vrot.slane %v2093, %v2463
    %vm2465 = vcmask 589312
    %v2466 = vsel %vm2465, %v2464, %v2459
    %v2467 = vadd.s32 %v2406, 4294967224
    %v2468 = vlaneseq
    %v2469 = vshrl.u32 %v2468, 7
    %v2470 = vsub.s32 %v2467, %v2469
    %v2471 = vrot.slane %v2094, %v2470
    %vm2472 = vcmask 654912
    %v2473 = vsel %vm2472, %v2471, %v2466
    %v2474 = vadd.s32 %v2406, 4294967216
    %v2475 = vlaneseq
    %v2476 = vshrl.u32 %v2475, 7
    %v2477 = vsub.s32 %v2474, %v2476
    %v2478 = vrot.slane %v2095, %v2477
    %vm2479 = vcmask 720512
    %v2480 = vsel %vm2479, %v2478, %v2473
    %v2481 = vadd.s32 %v2406, 4294967208
    %v2482 = vlaneseq
    %v2483 = vshrl.u32 %v2482, 7
    %v2484 = vsub.s32 %v2481, %v2483
    %v2485 = vrot.slane %v2096, %v2484
    %vm2486 = vcmask 786112
    %v2487 = vsel %vm2486, %v2485, %v2480
    %v2488 = vadd.s32 %v2406, 4294967200
    %v2489 = vlaneseq
    %v2490 = vshrl.u32 %v2489, 7
    %v2491 = vsub.s32 %v2488, %v2490
    %v2492 = vrot.slane %v2097, %v2491
    %vm2493 = vcmask 851712
    %v2494 = vsel %vm2493, %v2492, %v2487
    %v2495 = vadd.s32 %v2406, 4294967192
    %v2496 = vlaneseq
    %v2497 = vshrl.u32 %v2496, 7
    %v2498 = vsub.s32 %v2495, %v2497
    %v2499 = vrot.slane %v2098, %v2498
    %vm2500 = vcmask 917312
    %v2501 = vsel %vm2500, %v2499, %v2494
    %v2502 = vadd.s32 %v2406, 4294967184
    %v2503 = vlaneseq
    %v2504 = vshrl.u32 %v2503, 7
    %v2505 = vsub.s32 %v2502, %v2504
    %v2506 = vrot.slane %v2099, %v2505
    %vm2507 = vcmask 982912
    %v2508 = vsel %vm2507, %v2506, %v2501
    %v2509 = vadd.s32 %v2406, 4294967176
    %v2510 = vlaneseq
    %v2511 = vshrl.u32 %v2510, 7
    %v2512 = vsub.s32 %v2509, %v2511
    %v2513 = vrot.slane %v2100, %v2512
    %vm2514 = vcmask 1048512
    %v2515 = vsel %vm2514, %v2513, %v2508
    %v2516 = vlaneseq
    %v2517 = vshrl.u32 %v2516, 7
    %v2518 = vsub.s32 %v2406, %v2517
    %v2519 = vrot.slane %v2101, %v2518
    %v2520 = vlaneseq
    %v2521 = vshrl.u32 %v2520, 7
    %v2522 = vsub.s32 %v2411, %v2521
    %v2523 = vrot.slane %v2102, %v2522
    %v2524 = vsel %vm2416, %v2523, %v2519
    %v2525 = vlaneseq
    %v2526 = vshrl.u32 %v2525, 7
    %v2527 = vsub.s32 %v2418, %v2526
    %v2528 = vrot.slane %v2103, %v2527
    %v2529 = vsel %vm2423, %v2528, %v2524
    %v2530 = vlaneseq
    %v2531 = vshrl.u32 %v2530, 7
    %v2532 = vsub.s32 %v2425, %v2531
    %v2533 = vrot.slane %v2104, %v2532
    %v2534 = vsel %vm2430, %v2533, %v2529
    %v2535 = vlaneseq
    %v2536 = vshrl.u32 %v2535, 7
    %v2537 = vsub.s32 %v2432, %v2536
    %v2538 = vrot.slane %v2105, %v2537
    %v2539 = vsel %vm2437, %v2538, %v2534
    %v2540 = vlaneseq
    %v2541 = vshrl.u32 %v2540, 7
    %v2542 = vsub.s32 %v2439, %v2541
    %v2543 = vrot.slane %v2106, %v2542
    %v2544 = vsel %vm2444, %v2543, %v2539
    %v2545 = vlaneseq
    %v2546 = vshrl.u32 %v2545, 7
    %v2547 = vsub.s32 %v2446, %v2546
    %v2548 = vrot.slane %v2107, %v2547
    %v2549 = vsel %vm2451, %v2548, %v2544
    %v2550 = vlaneseq
    %v2551 = vshrl.u32 %v2550, 7
    %v2552 = vsub.s32 %v2453, %v2551
    %v2553 = vrot.slane %v2108, %v2552
    %v2554 = vsel %vm2458, %v2553, %v2549
    %v2555 = vlaneseq
    %v2556 = vshrl.u32 %v2555, 7
    %v2557 = vsub.s32 %v2460, %v2556
    %v2558 = vrot.slane %v2109, %v2557
    %v2559 = vsel %vm2465, %v2558, %v2554
    %v2560 = vlaneseq
    %v2561 = vshrl.u32 %v2560, 7
    %v2562 = vsub.s32 %v2467, %v2561
    %v2563 = vrot.slane %v2110, %v2562
    %v2564 = vsel %vm2472, %v2563, %v2559
    %v2565 = vlaneseq
    %v2566 = vshrl.u32 %v2565, 7
    %v2567 = vsub.s32 %v2474, %v2566
    %v2568 = vrot.slane %v2111, %v2567
    %v2569 = vsel %vm2479, %v2568, %v2564
    %v2570 = vlaneseq
    %v2571 = vshrl.u32 %v2570, 7
    %v2572 = vsub.s32 %v2481, %v2571
    %v2573 = vrot.slane %v2112, %v2572
    %v2574 = vsel %vm2486, %v2573, %v2569
    %v2575 = vlaneseq
    %v2576 = vshrl.u32 %v2575, 7
    %v2577 = vsub.s32 %v2488, %v2576
    %v2578 = vrot.slane %v2113, %v2577
    %v2579 = vsel %vm2493, %v2578, %v2574
    %v2580 = vlaneseq
    %v2581 = vshrl.u32 %v2580, 7
    %v2582 = vsub.s32 %v2495, %v2581
    %v2583 = vrot.slane %v2114, %v2582
    %v2584 = vsel %vm2500, %v2583, %v2579
    %v2585 = vlaneseq
    %v2586 = vshrl.u32 %v2585, 7
    %v2587 = vsub.s32 %v2502, %v2586
    %v2588 = vrot.slane %v2115, %v2587
    %v2589 = vsel %vm2507, %v2588, %v2584
    %v2590 = vlaneseq
    %v2591 = vshrl.u32 %v2590, 7
    %v2592 = vsub.s32 %v2509, %v2591
    %v2593 = vrot.slane %v2116, %v2592
    %v2594 = vsel %vm2514, %v2593, %v2589
    %v2595 = vlaneseq
    %v2596 = vshrl.u32 %v2595, 7
    %v2597 = vsub.s32 %v2406, %v2596
    %v2598 = vrot.slane %v2117, %v2597
    %v2599 = vlaneseq
    %v2600 = vshrl.u32 %v2599, 7
    %v2601 = vsub.s32 %v2411, %v2600
    %v2602 = vrot.slane %v2118, %v2601
    %v2603 = vsel %vm2416, %v2602, %v2598
    %v2604 = vlaneseq
    %v2605 = vshrl.u32 %v2604, 7
    %v2606 = vsub.s32 %v2418, %v2605
    %v2607 = vrot.slane %v2119, %v2606
    %v2608 = vsel %vm2423, %v2607, %v2603
    %v2609 = vlaneseq
    %v2610 = vshrl.u32 %v2609, 7
    %v2611 = vsub.s32 %v2425, %v2610
    %v2612 = vrot.slane %v2120, %v2611
    %v2613 = vsel %vm2430, %v2612, %v2608
    %v2614 = vlaneseq
    %v2615 = vshrl.u32 %v2614, 7
    %v2616 = vsub.s32 %v2432, %v2615
    %v2617 = vrot.slane %v2121, %v2616
    %v2618 = vsel %vm2437, %v2617, %v2613
    %v2619 = vlaneseq
    %v2620 = vshrl.u32 %v2619, 7
    %v2621 = vsub.s32 %v2439, %v2620
    %v2622 = vrot.slane %v2122, %v2621
    %v2623 = vsel %vm2444, %v2622, %v2618
    %v2624 = vlaneseq
    %v2625 = vshrl.u32 %v2624, 7
    %v2626 = vsub.s32 %v2446, %v2625
    %v2627 = vrot.slane %v2123, %v2626
    %v2628 = vsel %vm2451, %v2627, %v2623
    %v2629 = vlaneseq
    %v2630 = vshrl.u32 %v2629, 7
    %v2631 = vsub.s32 %v2453, %v2630
    %v2632 = vrot.slane %v2124, %v2631
    %v2633 = vsel %vm2458, %v2632, %v2628
    %v2634 = vlaneseq
    %v2635 = vshrl.u32 %v2634, 7
    %v2636 = vsub.s32 %v2460, %v2635
    %v2637 = vrot.slane %v2125, %v2636
    %v2638 = vsel %vm2465, %v2637, %v2633
    %v2639 = vlaneseq
    %v2640 = vshrl.u32 %v2639, 7
    %v2641 = vsub.s32 %v2467, %v2640
    %v2642 = vrot.slane %v2126, %v2641
    %v2643 = vsel %vm2472, %v2642, %v2638
    %v2644 = vlaneseq
    %v2645 = vshrl.u32 %v2644, 7
    %v2646 = vsub.s32 %v2474, %v2645
    %v2647 = vrot.slane %v2127, %v2646
    %v2648 = vsel %vm2479, %v2647, %v2643
    %v2649 = vlaneseq
    %v2650 = vshrl.u32 %v2649, 7
    %v2651 = vsub.s32 %v2481, %v2650
    %v2652 = vrot.slane %v2128, %v2651
    %v2653 = vsel %vm2486, %v2652, %v2648
    %v2654 = vlaneseq
    %v2655 = vshrl.u32 %v2654, 7
    %v2656 = vsub.s32 %v2488, %v2655
    %v2657 = vrot.slane %v2129, %v2656
    %v2658 = vsel %vm2493, %v2657, %v2653
    %v2659 = vlaneseq
    %v2660 = vshrl.u32 %v2659, 7
    %v2661 = vsub.s32 %v2495, %v2660
    %v2662 = vrot.slane %v2130, %v2661
    %v2663 = vsel %vm2500, %v2662, %v2658
    %v2664 = vlaneseq
    %v2665 = vshrl.u32 %v2664, 7
    %v2666 = vsub.s32 %v2502, %v2665
    %v2667 = vrot.slane %v2131, %v2666
    %v2668 = vsel %vm2507, %v2667, %v2663
    %v2669 = vlaneseq
    %v2670 = vshrl.u32 %v2669, 7
    %v2671 = vsub.s32 %v2509, %v2670
    %v2672 = vrot.slane %v2132, %v2671
    %v2673 = vsel %vm2514, %v2672, %v2668
    %v2674 = vlaneseq
    %v2675 = vshrl.u32 %v2674, 7
    %v2676 = vsub.s32 %v2406, %v2675
    %v2677 = vrot.slane %v2133, %v2676
    %v2678 = vlaneseq
    %v2679 = vshrl.u32 %v2678, 7
    %v2680 = vsub.s32 %v2411, %v2679
    %v2681 = vrot.slane %v2134, %v2680
    %v2682 = vsel %vm2416, %v2681, %v2677
    %v2683 = vlaneseq
    %v2684 = vshrl.u32 %v2683, 7
    %v2685 = vsub.s32 %v2418, %v2684
    %v2686 = vrot.slane %v2135, %v2685
    %v2687 = vsel %vm2423, %v2686, %v2682
    %v2688 = vlaneseq
    %v2689 = vshrl.u32 %v2688, 7
    %v2690 = vsub.s32 %v2425, %v2689
    %v2691 = vrot.slane %v2136, %v2690
    %v2692 = vsel %vm2430, %v2691, %v2687
    %v2693 = vlaneseq
    %v2694 = vshrl.u32 %v2693, 7
    %v2695 = vsub.s32 %v2432, %v2694
    %v2696 = vrot.slane %v2137, %v2695
    %v2697 = vsel %vm2437, %v2696, %v2692
    %v2698 = vlaneseq
    %v2699 = vshrl.u32 %v2698, 7
    %v2700 = vsub.s32 %v2439, %v2699
    %v2701 = vrot.slane %v2138, %v2700
    %v2702 = vsel %vm2444, %v2701, %v2697
    %v2703 = vlaneseq
    %v2704 = vshrl.u32 %v2703, 7
    %v2705 = vsub.s32 %v2446, %v2704
    %v2706 = vrot.slane %v2139, %v2705
    %v2707 = vsel %vm2451, %v2706, %v2702
    %v2708 = vlaneseq
    %v2709 = vshrl.u32 %v2708, 7
    %v2710 = vsub.s32 %v2453, %v2709
    %v2711 = vrot.slane %v2140, %v2710
    %v2712 = vsel %vm2458, %v2711, %v2707
    %v2713 = vlaneseq
    %v2714 = vshrl.u32 %v2713, 7
    %v2715 = vsub.s32 %v2460, %v2714
    %v2716 = vrot.slane %v2141, %v2715
    %v2717 = vsel %vm2465, %v2716, %v2712
    %v2718 = vlaneseq
    %v2719 = vshrl.u32 %v2718, 7
    %v2720 = vsub.s32 %v2467, %v2719
    %v2721 = vrot.slane %v2142, %v2720
    %v2722 = vsel %vm2472, %v2721, %v2717
    %v2723 = vlaneseq
    %v2724 = vshrl.u32 %v2723, 7
    %v2725 = vsub.s32 %v2474, %v2724
    %v2726 = vrot.slane %v2143, %v2725
    %v2727 = vsel %vm2479, %v2726, %v2722
    %v2728 = vlaneseq
    %v2729 = vshrl.u32 %v2728, 7
    %v2730 = vsub.s32 %v2481, %v2729
    %v2731 = vrot.slane %v2144, %v2730
    %v2732 = vsel %vm2486, %v2731, %v2727
    %v2733 = vlaneseq
    %v2734 = vshrl.u32 %v2733, 7
    %v2735 = vsub.s32 %v2488, %v2734
    %v2736 = vrot.slane %v2145, %v2735
    %v2737 = vsel %vm2493, %v2736, %v2732
    %v2738 = vlaneseq
    %v2739 = vshrl.u32 %v2738, 7
    %v2740 = vsub.s32 %v2495, %v2739
    %v2741 = vrot.slane %v2146, %v2740
    %v2742 = vsel %vm2500, %v2741, %v2737
    %v2743 = vlaneseq
    %v2744 = vshrl.u32 %v2743, 7
    %v2745 = vsub.s32 %v2502, %v2744
    %v2746 = vrot.slane %v2147, %v2745
    %v2747 = vsel %vm2507, %v2746, %v2742
    %v2748 = vlaneseq
    %v2749 = vshrl.u32 %v2748, 7
    %v2750 = vsub.s32 %v2509, %v2749
    %v2751 = vrot.slane %v2148, %v2750
    %v2752 = vsel %vm2514, %v2751, %v2747
    %v2753 = vlaneseq
    %v2754 = vshrl.u32 %v2753, 7
    %v2755 = vsub.s32 %v2406, %v2754
    %v2756 = vrot.slane %v2149, %v2755
    %v2757 = vlaneseq
    %v2758 = vshrl.u32 %v2757, 7
    %v2759 = vsub.s32 %v2411, %v2758
    %v2760 = vrot.slane %v2150, %v2759
    %v2761 = vsel %vm2416, %v2760, %v2756
    %v2762 = vlaneseq
    %v2763 = vshrl.u32 %v2762, 7
    %v2764 = vsub.s32 %v2418, %v2763
    %v2765 = vrot.slane %v2151, %v2764
    %v2766 = vsel %vm2423, %v2765, %v2761
    %v2767 = vlaneseq
    %v2768 = vshrl.u32 %v2767, 7
    %v2769 = vsub.s32 %v2425, %v2768
    %v2770 = vrot.slane %v2152, %v2769
    %v2771 = vsel %vm2430, %v2770, %v2766
    %v2772 = vlaneseq
    %v2773 = vshrl.u32 %v2772, 7
    %v2774 = vsub.s32 %v2432, %v2773
    %v2775 = vrot.slane %v2153, %v2774
    %v2776 = vsel %vm2437, %v2775, %v2771
    %v2777 = vlaneseq
    %v2778 = vshrl.u32 %v2777, 7
    %v2779 = vsub.s32 %v2439, %v2778
    %v2780 = vrot.slane %v2154, %v2779
    %v2781 = vsel %vm2444, %v2780, %v2776
    %v2782 = vlaneseq
    %v2783 = vshrl.u32 %v2782, 7
    %v2784 = vsub.s32 %v2446, %v2783
    %v2785 = vrot.slane %v2155, %v2784
    %v2786 = vsel %vm2451, %v2785, %v2781
    %v2787 = vlaneseq
    %v2788 = vshrl.u32 %v2787, 7
    %v2789 = vsub.s32 %v2453, %v2788
    %v2790 = vrot.slane %v2156, %v2789
    %v2791 = vsel %vm2458, %v2790, %v2786
    %v2792 = vlaneseq
    %v2793 = vshrl.u32 %v2792, 7
    %v2794 = vsub.s32 %v2460, %v2793
    %v2795 = vrot.slane %v2157, %v2794
    %v2796 = vsel %vm2465, %v2795, %v2791
    %v2797 = vlaneseq
    %v2798 = vshrl.u32 %v2797, 7
    %v2799 = vsub.s32 %v2467, %v2798
    %v2800 = vrot.slane %v2158, %v2799
    %v2801 = vsel %vm2472, %v2800, %v2796
    %v2802 = vlaneseq
    %v2803 = vshrl.u32 %v2802, 7
    %v2804 = vsub.s32 %v2474, %v2803
    %v2805 = vrot.slane %v2159, %v2804
    %v2806 = vsel %vm2479, %v2805, %v2801
    %v2807 = vlaneseq
    %v2808 = vshrl.u32 %v2807, 7
    %v2809 = vsub.s32 %v2481, %v2808
    %v2810 = vrot.slane %v2160, %v2809
    %v2811 = vsel %vm2486, %v2810, %v2806
    %v2812 = vlaneseq
    %v2813 = vshrl.u32 %v2812, 7
    %v2814 = vsub.s32 %v2488, %v2813
    %v2815 = vrot.slane %v2161, %v2814
    %v2816 = vsel %vm2493, %v2815, %v2811
    %v2817 = vlaneseq
    %v2818 = vshrl.u32 %v2817, 7
    %v2819 = vsub.s32 %v2495, %v2818
    %v2820 = vrot.slane %v2162, %v2819
    %v2821 = vsel %vm2500, %v2820, %v2816
    %v2822 = vlaneseq
    %v2823 = vshrl.u32 %v2822, 7
    %v2824 = vsub.s32 %v2502, %v2823
    %v2825 = vrot.slane %v2163, %v2824
    %v2826 = vsel %vm2507, %v2825, %v2821
    %v2827 = vlaneseq
    %v2828 = vshrl.u32 %v2827, 7
    %v2829 = vsub.s32 %v2509, %v2828
    %v2830 = vrot.slane %v2164, %v2829
    %v2831 = vsel %vm2514, %v2830, %v2826
    %v2832 = vlaneseq
    %v2833 = vshrl.u32 %v2832, 7
    %v2834 = vsub.s32 %v2406, %v2833
    %v2835 = vrot.slane %v2165, %v2834
    %v2836 = vlaneseq
    %v2837 = vshrl.u32 %v2836, 7
    %v2838 = vsub.s32 %v2411, %v2837
    %v2839 = vrot.slane %v2166, %v2838
    %v2840 = vsel %vm2416, %v2839, %v2835
    %v2841 = vlaneseq
    %v2842 = vshrl.u32 %v2841, 7
    %v2843 = vsub.s32 %v2418, %v2842
    %v2844 = vrot.slane %v2167, %v2843
    %v2845 = vsel %vm2423, %v2844, %v2840
    %v2846 = vlaneseq
    %v2847 = vshrl.u32 %v2846, 7
    %v2848 = vsub.s32 %v2425, %v2847
    %v2849 = vrot.slane %v2168, %v2848
    %v2850 = vsel %vm2430, %v2849, %v2845
    %v2851 = vlaneseq
    %v2852 = vshrl.u32 %v2851, 7
    %v2853 = vsub.s32 %v2432, %v2852
    %v2854 = vrot.slane %v2169, %v2853
    %v2855 = vsel %vm2437, %v2854, %v2850
    %v2856 = vlaneseq
    %v2857 = vshrl.u32 %v2856, 7
    %v2858 = vsub.s32 %v2439, %v2857
    %v2859 = vrot.slane %v2170, %v2858
    %v2860 = vsel %vm2444, %v2859, %v2855
    %v2861 = vlaneseq
    %v2862 = vshrl.u32 %v2861, 7
    %v2863 = vsub.s32 %v2446, %v2862
    %v2864 = vrot.slane %v2171, %v2863
    %v2865 = vsel %vm2451, %v2864, %v2860
    %v2866 = vlaneseq
    %v2867 = vshrl.u32 %v2866, 7
    %v2868 = vsub.s32 %v2453, %v2867
    %v2869 = vrot.slane %v2172, %v2868
    %v2870 = vsel %vm2458, %v2869, %v2865
    %v2871 = vlaneseq
    %v2872 = vshrl.u32 %v2871, 7
    %v2873 = vsub.s32 %v2460, %v2872
    %v2874 = vrot.slane %v2173, %v2873
    %v2875 = vsel %vm2465, %v2874, %v2870
    %v2876 = vlaneseq
    %v2877 = vshrl.u32 %v2876, 7
    %v2878 = vsub.s32 %v2467, %v2877
    %v2879 = vrot.slane %v2174, %v2878
    %v2880 = vsel %vm2472, %v2879, %v2875
    %v2881 = vlaneseq
    %v2882 = vshrl.u32 %v2881, 7
    %v2883 = vsub.s32 %v2474, %v2882
    %v2884 = vrot.slane %v2175, %v2883
    %v2885 = vsel %vm2479, %v2884, %v2880
    %v2886 = vlaneseq
    %v2887 = vshrl.u32 %v2886, 7
    %v2888 = vsub.s32 %v2481, %v2887
    %v2889 = vrot.slane %v2176, %v2888
    %v2890 = vsel %vm2486, %v2889, %v2885
    %v2891 = vlaneseq
    %v2892 = vshrl.u32 %v2891, 7
    %v2893 = vsub.s32 %v2488, %v2892
    %v2894 = vrot.slane %v2177, %v2893
    %v2895 = vsel %vm2493, %v2894, %v2890
    %v2896 = vlaneseq
    %v2897 = vshrl.u32 %v2896, 7
    %v2898 = vsub.s32 %v2495, %v2897
    %v2899 = vrot.slane %v2178, %v2898
    %v2900 = vsel %vm2500, %v2899, %v2895
    %v2901 = vlaneseq
    %v2902 = vshrl.u32 %v2901, 7
    %v2903 = vsub.s32 %v2502, %v2902
    %v2904 = vrot.slane %v2179, %v2903
    %v2905 = vsel %vm2507, %v2904, %v2900
    %v2906 = vlaneseq
    %v2907 = vshrl.u32 %v2906, 7
    %v2908 = vsub.s32 %v2509, %v2907
    %v2909 = vrot.slane %v2180, %v2908
    %v2910 = vsel %vm2514, %v2909, %v2905
    %v2911 = vlaneseq
    %v2912 = vshrl.u32 %v2911, 7
    %v2913 = vsub.s32 %v2406, %v2912
    %v2914 = vrot.slane %v2181, %v2913
    %v2915 = vlaneseq
    %v2916 = vshrl.u32 %v2915, 7
    %v2917 = vsub.s32 %v2411, %v2916
    %v2918 = vrot.slane %v2182, %v2917
    %v2919 = vsel %vm2416, %v2918, %v2914
    %v2920 = vlaneseq
    %v2921 = vshrl.u32 %v2920, 7
    %v2922 = vsub.s32 %v2418, %v2921
    %v2923 = vrot.slane %v2183, %v2922
    %v2924 = vsel %vm2423, %v2923, %v2919
    %v2925 = vlaneseq
    %v2926 = vshrl.u32 %v2925, 7
    %v2927 = vsub.s32 %v2425, %v2926
    %v2928 = vrot.slane %v2184, %v2927
    %v2929 = vsel %vm2430, %v2928, %v2924
    %v2930 = vlaneseq
    %v2931 = vshrl.u32 %v2930, 7
    %v2932 = vsub.s32 %v2432, %v2931
    %v2933 = vrot.slane %v2185, %v2932
    %v2934 = vsel %vm2437, %v2933, %v2929
    %v2935 = vlaneseq
    %v2936 = vshrl.u32 %v2935, 7
    %v2937 = vsub.s32 %v2439, %v2936
    %v2938 = vrot.slane %v2186, %v2937
    %v2939 = vsel %vm2444, %v2938, %v2934
    %v2940 = vlaneseq
    %v2941 = vshrl.u32 %v2940, 7
    %v2942 = vsub.s32 %v2446, %v2941
    %v2943 = vrot.slane %v2187, %v2942
    %v2944 = vsel %vm2451, %v2943, %v2939
    %v2945 = vlaneseq
    %v2946 = vshrl.u32 %v2945, 7
    %v2947 = vsub.s32 %v2453, %v2946
    %v2948 = vrot.slane %v2188, %v2947
    %v2949 = vsel %vm2458, %v2948, %v2944
    %v2950 = vlaneseq
    %v2951 = vshrl.u32 %v2950, 7
    %v2952 = vsub.s32 %v2460, %v2951
    %v2953 = vrot.slane %v2189, %v2952
    %v2954 = vsel %vm2465, %v2953, %v2949
    %v2955 = vlaneseq
    %v2956 = vshrl.u32 %v2955, 7
    %v2957 = vsub.s32 %v2467, %v2956
    %v2958 = vrot.slane %v2190, %v2957
    %v2959 = vsel %vm2472, %v2958, %v2954
    %v2960 = vlaneseq
    %v2961 = vshrl.u32 %v2960, 7
    %v2962 = vsub.s32 %v2474, %v2961
    %v2963 = vrot.slane %v2191, %v2962
    %v2964 = vsel %vm2479, %v2963, %v2959
    %v2965 = vlaneseq
    %v2966 = vshrl.u32 %v2965, 7
    %v2967 = vsub.s32 %v2481, %v2966
    %v2968 = vrot.slane %v2192, %v2967
    %v2969 = vsel %vm2486, %v2968, %v2964
    %v2970 = vlaneseq
    %v2971 = vshrl.u32 %v2970, 7
    %v2972 = vsub.s32 %v2488, %v2971
    %v2973 = vrot.slane %v2193, %v2972
    %v2974 = vsel %vm2493, %v2973, %v2969
    %v2975 = vlaneseq
    %v2976 = vshrl.u32 %v2975, 7
    %v2977 = vsub.s32 %v2495, %v2976
    %v2978 = vrot.slane %v2194, %v2977
    %v2979 = vsel %vm2500, %v2978, %v2974
    %v2980 = vlaneseq
    %v2981 = vshrl.u32 %v2980, 7
    %v2982 = vsub.s32 %v2502, %v2981
    %v2983 = vrot.slane %v2195, %v2982
    %v2984 = vsel %vm2507, %v2983, %v2979
    %v2985 = vlaneseq
    %v2986 = vshrl.u32 %v2985, 7
    %v2987 = vsub.s32 %v2509, %v2986
    %v2988 = vrot.slane %v2196, %v2987
    %v2989 = vsel %vm2514, %v2988, %v2984
    %v2990 = vlaneseq
    %v2991 = vshrl.u32 %v2990, 7
    %v2992 = vsub.s32 %v2406, %v2991
    %v2993 = vrot.slane %v2197, %v2992
    %v2994 = vlaneseq
    %v2995 = vshrl.u32 %v2994, 7
    %v2996 = vsub.s32 %v2411, %v2995
    %v2997 = vrot.slane %v2198, %v2996
    %v2998 = vsel %vm2416, %v2997, %v2993
    %v2999 = vlaneseq
    %v3000 = vshrl.u32 %v2999, 7
    %v3001 = vsub.s32 %v2418, %v3000
    %v3002 = vrot.slane %v2199, %v3001
    %v3003 = vsel %vm2423, %v3002, %v2998
    %v3004 = vlaneseq
    %v3005 = vshrl.u32 %v3004, 7
    %v3006 = vsub.s32 %v2425, %v3005
    %v3007 = vrot.slane %v2200, %v3006
    %v3008 = vsel %vm2430, %v3007, %v3003
    %v3009 = vlaneseq
    %v3010 = vshrl.u32 %v3009, 7
    %v3011 = vsub.s32 %v2432, %v3010
    %v3012 = vrot.slane %v2201, %v3011
    %v3013 = vsel %vm2437, %v3012, %v3008
    %v3014 = vlaneseq
    %v3015 = vshrl.u32 %v3014, 7
    %v3016 = vsub.s32 %v2439, %v3015
    %v3017 = vrot.slane %v2202, %v3016
    %v3018 = vsel %vm2444, %v3017, %v3013
    %v3019 = vlaneseq
    %v3020 = vshrl.u32 %v3019, 7
    %v3021 = vsub.s32 %v2446, %v3020
    %v3022 = vrot.slane %v2203, %v3021
    %v3023 = vsel %vm2451, %v3022, %v3018
    %v3024 = vlaneseq
    %v3025 = vshrl.u32 %v3024, 7
    %v3026 = vsub.s32 %v2453, %v3025
    %v3027 = vrot.slane %v2204, %v3026
    %v3028 = vsel %vm2458, %v3027, %v3023
    %v3029 = vlaneseq
    %v3030 = vshrl.u32 %v3029, 7
    %v3031 = vsub.s32 %v2460, %v3030
    %v3032 = vrot.slane %v2205, %v3031
    %v3033 = vsel %vm2465, %v3032, %v3028
    %v3034 = vlaneseq
    %v3035 = vshrl.u32 %v3034, 7
    %v3036 = vsub.s32 %v2467, %v3035
    %v3037 = vrot.slane %v2206, %v3036
    %v3038 = vsel %vm2472, %v3037, %v3033
    %v3039 = vlaneseq
    %v3040 = vshrl.u32 %v3039, 7
    %v3041 = vsub.s32 %v2474, %v3040
    %v3042 = vrot.slane %v2207, %v3041
    %v3043 = vsel %vm2479, %v3042, %v3038
    %v3044 = vlaneseq
    %v3045 = vshrl.u32 %v3044, 7
    %v3046 = vsub.s32 %v2481, %v3045
    %v3047 = vrot.slane %v2208, %v3046
    %v3048 = vsel %vm2486, %v3047, %v3043
    %v3049 = vlaneseq
    %v3050 = vshrl.u32 %v3049, 7
    %v3051 = vsub.s32 %v2488, %v3050
    %v3052 = vrot.slane %v2209, %v3051
    %v3053 = vsel %vm2493, %v3052, %v3048
    %v3054 = vlaneseq
    %v3055 = vshrl.u32 %v3054, 7
    %v3056 = vsub.s32 %v2495, %v3055
    %v3057 = vrot.slane %v2210, %v3056
    %v3058 = vsel %vm2500, %v3057, %v3053
    %v3059 = vlaneseq
    %v3060 = vshrl.u32 %v3059, 7
    %v3061 = vsub.s32 %v2502, %v3060
    %v3062 = vrot.slane %v2211, %v3061
    %v3063 = vsel %vm2507, %v3062, %v3058
    %v3064 = vlaneseq
    %v3065 = vshrl.u32 %v3064, 7
    %v3066 = vsub.s32 %v2509, %v3065
    %v3067 = vrot.slane %v2212, %v3066
    %v3068 = vsel %vm2514, %v3067, %v3063
    %v3069 = vlaneseq
    %v3070 = vshrl.u32 %v3069, 7
    %v3071 = vsub.s32 %v2406, %v3070
    %v3072 = vrot.slane %v2213, %v3071
    %v3073 = vlaneseq
    %v3074 = vshrl.u32 %v3073, 7
    %v3075 = vsub.s32 %v2411, %v3074
    %v3076 = vrot.slane %v2214, %v3075
    %v3077 = vsel %vm2416, %v3076, %v3072
    %v3078 = vlaneseq
    %v3079 = vshrl.u32 %v3078, 7
    %v3080 = vsub.s32 %v2418, %v3079
    %v3081 = vrot.slane %v2215, %v3080
    %v3082 = vsel %vm2423, %v3081, %v3077
    %v3083 = vlaneseq
    %v3084 = vshrl.u32 %v3083, 7
    %v3085 = vsub.s32 %v2425, %v3084
    %v3086 = vrot.slane %v2216, %v3085
    %v3087 = vsel %vm2430, %v3086, %v3082
    %v3088 = vlaneseq
    %v3089 = vshrl.u32 %v3088, 7
    %v3090 = vsub.s32 %v2432, %v3089
    %v3091 = vrot.slane %v2217, %v3090
    %v3092 = vsel %vm2437, %v3091, %v3087
    %v3093 = vlaneseq
    %v3094 = vshrl.u32 %v3093, 7
    %v3095 = vsub.s32 %v2439, %v3094
    %v3096 = vrot.slane %v2218, %v3095
    %v3097 = vsel %vm2444, %v3096, %v3092
    %v3098 = vlaneseq
    %v3099 = vshrl.u32 %v3098, 7
    %v3100 = vsub.s32 %v2446, %v3099
    %v3101 = vrot.slane %v2219, %v3100
    %v3102 = vsel %vm2451, %v3101, %v3097
    %v3103 = vlaneseq
    %v3104 = vshrl.u32 %v3103, 7
    %v3105 = vsub.s32 %v2453, %v3104
    %v3106 = vrot.slane %v2220, %v3105
    %v3107 = vsel %vm2458, %v3106, %v3102
    %v3108 = vlaneseq
    %v3109 = vshrl.u32 %v3108, 7
    %v3110 = vsub.s32 %v2460, %v3109
    %v3111 = vrot.slane %v2221, %v3110
    %v3112 = vsel %vm2465, %v3111, %v3107
    %v3113 = vlaneseq
    %v3114 = vshrl.u32 %v3113, 7
    %v3115 = vsub.s32 %v2467, %v3114
    %v3116 = vrot.slane %v2222, %v3115
    %v3117 = vsel %vm2472, %v3116, %v3112
    %v3118 = vlaneseq
    %v3119 = vshrl.u32 %v3118, 7
    %v3120 = vsub.s32 %v2474, %v3119
    %v3121 = vrot.slane %v2223, %v3120
    %v3122 = vsel %vm2479, %v3121, %v3117
    %v3123 = vlaneseq
    %v3124 = vshrl.u32 %v3123, 7
    %v3125 = vsub.s32 %v2481, %v3124
    %v3126 = vrot.slane %v2224, %v3125
    %v3127 = vsel %vm2486, %v3126, %v3122
    %v3128 = vlaneseq
    %v3129 = vshrl.u32 %v3128, 7
    %v3130 = vsub.s32 %v2488, %v3129
    %v3131 = vrot.slane %v2225, %v3130
    %v3132 = vsel %vm2493, %v3131, %v3127
    %v3133 = vlaneseq
    %v3134 = vshrl.u32 %v3133, 7
    %v3135 = vsub.s32 %v2495, %v3134
    %v3136 = vrot.slane %v2226, %v3135
    %v3137 = vsel %vm2500, %v3136, %v3132
    %v3138 = vlaneseq
    %v3139 = vshrl.u32 %v3138, 7
    %v3140 = vsub.s32 %v2502, %v3139
    %v3141 = vrot.slane %v2227, %v3140
    %v3142 = vsel %vm2507, %v3141, %v3137
    %v3143 = vlaneseq
    %v3144 = vshrl.u32 %v3143, 7
    %v3145 = vsub.s32 %v2509, %v3144
    %v3146 = vrot.slane %v2228, %v3145
    %v3147 = vsel %vm2514, %v3146, %v3142
    %v3148 = vlaneseq
    %v3149 = vshrl.u32 %v3148, 7
    %v3150 = vsub.s32 %v2406, %v3149
    %v3151 = vrot.slane %v2229, %v3150
    %v3152 = vlaneseq
    %v3153 = vshrl.u32 %v3152, 7
    %v3154 = vsub.s32 %v2411, %v3153
    %v3155 = vrot.slane %v2230, %v3154
    %v3156 = vsel %vm2416, %v3155, %v3151
    %v3157 = vlaneseq
    %v3158 = vshrl.u32 %v3157, 7
    %v3159 = vsub.s32 %v2418, %v3158
    %v3160 = vrot.slane %v2231, %v3159
    %v3161 = vsel %vm2423, %v3160, %v3156
    %v3162 = vlaneseq
    %v3163 = vshrl.u32 %v3162, 7
    %v3164 = vsub.s32 %v2425, %v3163
    %v3165 = vrot.slane %v2232, %v3164
    %v3166 = vsel %vm2430, %v3165, %v3161
    %v3167 = vlaneseq
    %v3168 = vshrl.u32 %v3167, 7
    %v3169 = vsub.s32 %v2432, %v3168
    %v3170 = vrot.slane %v2233, %v3169
    %v3171 = vsel %vm2437, %v3170, %v3166
    %v3172 = vlaneseq
    %v3173 = vshrl.u32 %v3172, 7
    %v3174 = vsub.s32 %v2439, %v3173
    %v3175 = vrot.slane %v2234, %v3174
    %v3176 = vsel %vm2444, %v3175, %v3171
    %v3177 = vlaneseq
    %v3178 = vshrl.u32 %v3177, 7
    %v3179 = vsub.s32 %v2446, %v3178
    %v3180 = vrot.slane %v2235, %v3179
    %v3181 = vsel %vm2451, %v3180, %v3176
    %v3182 = vlaneseq
    %v3183 = vshrl.u32 %v3182, 7
    %v3184 = vsub.s32 %v2453, %v3183
    %v3185 = vrot.slane %v2236, %v3184
    %v3186 = vsel %vm2458, %v3185, %v3181
    %v3187 = vlaneseq
    %v3188 = vshrl.u32 %v3187, 7
    %v3189 = vsub.s32 %v2460, %v3188
    %v3190 = vrot.slane %v2237, %v3189
    %v3191 = vsel %vm2465, %v3190, %v3186
    %v3192 = vlaneseq
    %v3193 = vshrl.u32 %v3192, 7
    %v3194 = vsub.s32 %v2467, %v3193
    %v3195 = vrot.slane %v2238, %v3194
    %v3196 = vsel %vm2472, %v3195, %v3191
    %v3197 = vlaneseq
    %v3198 = vshrl.u32 %v3197, 7
    %v3199 = vsub.s32 %v2474, %v3198
    %v3200 = vrot.slane %v2239, %v3199
    %v3201 = vsel %vm2479, %v3200, %v3196
    %v3202 = vlaneseq
    %v3203 = vshrl.u32 %v3202, 7
    %v3204 = vsub.s32 %v2481, %v3203
    %v3205 = vrot.slane %v2240, %v3204
    %v3206 = vsel %vm2486, %v3205, %v3201
    %v3207 = vlaneseq
    %v3208 = vshrl.u32 %v3207, 7
    %v3209 = vsub.s32 %v2488, %v3208
    %v3210 = vrot.slane %v2241, %v3209
    %v3211 = vsel %vm2493, %v3210, %v3206
    %v3212 = vlaneseq
    %v3213 = vshrl.u32 %v3212, 7
    %v3214 = vsub.s32 %v2495, %v3213
    %v3215 = vrot.slane %v2242, %v3214
    %v3216 = vsel %vm2500, %v3215, %v3211
    %v3217 = vlaneseq
    %v3218 = vshrl.u32 %v3217, 7
    %v3219 = vsub.s32 %v2502, %v3218
    %v3220 = vrot.slane %v2243, %v3219
    %v3221 = vsel %vm2507, %v3220, %v3216
    %v3222 = vlaneseq
    %v3223 = vshrl.u32 %v3222, 7
    %v3224 = vsub.s32 %v2509, %v3223
    %v3225 = vrot.slane %v2244, %v3224
    %v3226 = vsel %vm2514, %v3225, %v3221
    %v3227 = vlaneseq
    %v3228 = vshrl.u32 %v3227, 7
    %v3229 = vsub.s32 %v2406, %v3228
    %v3230 = vrot.slane %v2245, %v3229
    %v3231 = vlaneseq
    %v3232 = vshrl.u32 %v3231, 7
    %v3233 = vsub.s32 %v2411, %v3232
    %v3234 = vrot.slane %v2246, %v3233
    %v3235 = vsel %vm2416, %v3234, %v3230
    %v3236 = vlaneseq
    %v3237 = vshrl.u32 %v3236, 7
    %v3238 = vsub.s32 %v2418, %v3237
    %v3239 = vrot.slane %v2247, %v3238
    %v3240 = vsel %vm2423, %v3239, %v3235
    %v3241 = vlaneseq
    %v3242 = vshrl.u32 %v3241, 7
    %v3243 = vsub.s32 %v2425, %v3242
    %v3244 = vrot.slane %v2248, %v3243
    %v3245 = vsel %vm2430, %v3244, %v3240
    %v3246 = vlaneseq
    %v3247 = vshrl.u32 %v3246, 7
    %v3248 = vsub.s32 %v2432, %v3247
    %v3249 = vrot.slane %v2249, %v3248
    %v3250 = vsel %vm2437, %v3249, %v3245
    %v3251 = vlaneseq
    %v3252 = vshrl.u32 %v3251, 7
    %v3253 = vsub.s32 %v2439, %v3252
    %v3254 = vrot.slane %v2250, %v3253
    %v3255 = vsel %vm2444, %v3254, %v3250
    %v3256 = vlaneseq
    %v3257 = vshrl.u32 %v3256, 7
    %v3258 = vsub.s32 %v2446, %v3257
    %v3259 = vrot.slane %v2251, %v3258
    %v3260 = vsel %vm2451, %v3259, %v3255
    %v3261 = vlaneseq
    %v3262 = vshrl.u32 %v3261, 7
    %v3263 = vsub.s32 %v2453, %v3262
    %v3264 = vrot.slane %v2252, %v3263
    %v3265 = vsel %vm2458, %v3264, %v3260
    %v3266 = vlaneseq
    %v3267 = vshrl.u32 %v3266, 7
    %v3268 = vsub.s32 %v2460, %v3267
    %v3269 = vrot.slane %v2253, %v3268
    %v3270 = vsel %vm2465, %v3269, %v3265
    %v3271 = vlaneseq
    %v3272 = vshrl.u32 %v3271, 7
    %v3273 = vsub.s32 %v2467, %v3272
    %v3274 = vrot.slane %v2254, %v3273
    %v3275 = vsel %vm2472, %v3274, %v3270
    %v3276 = vlaneseq
    %v3277 = vshrl.u32 %v3276, 7
    %v3278 = vsub.s32 %v2474, %v3277
    %v3279 = vrot.slane %v2255, %v3278
    %v3280 = vsel %vm2479, %v3279, %v3275
    %v3281 = vlaneseq
    %v3282 = vshrl.u32 %v3281, 7
    %v3283 = vsub.s32 %v2481, %v3282
    %v3284 = vrot.slane %v2256, %v3283
    %v3285 = vsel %vm2486, %v3284, %v3280
    %v3286 = vlaneseq
    %v3287 = vshrl.u32 %v3286, 7
    %v3288 = vsub.s32 %v2488, %v3287
    %v3289 = vrot.slane %v2257, %v3288
    %v3290 = vsel %vm2493, %v3289, %v3285
    %v3291 = vlaneseq
    %v3292 = vshrl.u32 %v3291, 7
    %v3293 = vsub.s32 %v2495, %v3292
    %v3294 = vrot.slane %v2258, %v3293
    %v3295 = vsel %vm2500, %v3294, %v3290
    %v3296 = vlaneseq
    %v3297 = vshrl.u32 %v3296, 7
    %v3298 = vsub.s32 %v2502, %v3297
    %v3299 = vrot.slane %v2259, %v3298
    %v3300 = vsel %vm2507, %v3299, %v3295
    %v3301 = vlaneseq
    %v3302 = vshrl.u32 %v3301, 7
    %v3303 = vsub.s32 %v2509, %v3302
    %v3304 = vrot.slane %v2260, %v3303
    %v3305 = vsel %vm2514, %v3304, %v3300
    %v3306 = vlaneseq
    %v3307 = vshrl.u32 %v3306, 7
    %v3308 = vsub.s32 %v2406, %v3307
    %v3309 = vrot.slane %v2261, %v3308
    %v3310 = vlaneseq
    %v3311 = vshrl.u32 %v3310, 7
    %v3312 = vsub.s32 %v2411, %v3311
    %v3313 = vrot.slane %v2262, %v3312
    %v3314 = vsel %vm2416, %v3313, %v3309
    %v3315 = vlaneseq
    %v3316 = vshrl.u32 %v3315, 7
    %v3317 = vsub.s32 %v2418, %v3316
    %v3318 = vrot.slane %v2263, %v3317
    %v3319 = vsel %vm2423, %v3318, %v3314
    %v3320 = vlaneseq
    %v3321 = vshrl.u32 %v3320, 7
    %v3322 = vsub.s32 %v2425, %v3321
    %v3323 = vrot.slane %v2264, %v3322
    %v3324 = vsel %vm2430, %v3323, %v3319
    %v3325 = vlaneseq
    %v3326 = vshrl.u32 %v3325, 7
    %v3327 = vsub.s32 %v2432, %v3326
    %v3328 = vrot.slane %v2265, %v3327
    %v3329 = vsel %vm2437, %v3328, %v3324
    %v3330 = vlaneseq
    %v3331 = vshrl.u32 %v3330, 7
    %v3332 = vsub.s32 %v2439, %v3331
    %v3333 = vrot.slane %v2266, %v3332
    %v3334 = vsel %vm2444, %v3333, %v3329
    %v3335 = vlaneseq
    %v3336 = vshrl.u32 %v3335, 7
    %v3337 = vsub.s32 %v2446, %v3336
    %v3338 = vrot.slane %v2267, %v3337
    %v3339 = vsel %vm2451, %v3338, %v3334
    %v3340 = vlaneseq
    %v3341 = vshrl.u32 %v3340, 7
    %v3342 = vsub.s32 %v2453, %v3341
    %v3343 = vrot.slane %v2268, %v3342
    %v3344 = vsel %vm2458, %v3343, %v3339
    %v3345 = vlaneseq
    %v3346 = vshrl.u32 %v3345, 7
    %v3347 = vsub.s32 %v2460, %v3346
    %v3348 = vrot.slane %v2269, %v3347
    %v3349 = vsel %vm2465, %v3348, %v3344
    %v3350 = vlaneseq
    %v3351 = vshrl.u32 %v3350, 7
    %v3352 = vsub.s32 %v2467, %v3351
    %v3353 = vrot.slane %v2270, %v3352
    %v3354 = vsel %vm2472, %v3353, %v3349
    %v3355 = vlaneseq
    %v3356 = vshrl.u32 %v3355, 7
    %v3357 = vsub.s32 %v2474, %v3356
    %v3358 = vrot.slane %v2271, %v3357
    %v3359 = vsel %vm2479, %v3358, %v3354
    %v3360 = vlaneseq
    %v3361 = vshrl.u32 %v3360, 7
    %v3362 = vsub.s32 %v2481, %v3361
    %v3363 = vrot.slane %v2272, %v3362
    %v3364 = vsel %vm2486, %v3363, %v3359
    %v3365 = vlaneseq
    %v3366 = vshrl.u32 %v3365, 7
    %v3367 = vsub.s32 %v2488, %v3366
    %v3368 = vrot.slane %v2273, %v3367
    %v3369 = vsel %vm2493, %v3368, %v3364
    %v3370 = vlaneseq
    %v3371 = vshrl.u32 %v3370, 7
    %v3372 = vsub.s32 %v2495, %v3371
    %v3373 = vrot.slane %v2274, %v3372
    %v3374 = vsel %vm2500, %v3373, %v3369
    %v3375 = vlaneseq
    %v3376 = vshrl.u32 %v3375, 7
    %v3377 = vsub.s32 %v2502, %v3376
    %v3378 = vrot.slane %v2275, %v3377
    %v3379 = vsel %vm2507, %v3378, %v3374
    %v3380 = vlaneseq
    %v3381 = vshrl.u32 %v3380, 7
    %v3382 = vsub.s32 %v2509, %v3381
    %v3383 = vrot.slane %v2276, %v3382
    %v3384 = vsel %vm2514, %v3383, %v3379
    %v3385 = vlaneseq
    %v3386 = vshrl.u32 %v3385, 7
    %v3387 = vsub.s32 %v2406, %v3386
    %v3388 = vrot.slane %v2277, %v3387
    %v3389 = vlaneseq
    %v3390 = vshrl.u32 %v3389, 7
    %v3391 = vsub.s32 %v2411, %v3390
    %v3392 = vrot.slane %v2278, %v3391
    %v3393 = vsel %vm2416, %v3392, %v3388
    %v3394 = vlaneseq
    %v3395 = vshrl.u32 %v3394, 7
    %v3396 = vsub.s32 %v2418, %v3395
    %v3397 = vrot.slane %v2279, %v3396
    %v3398 = vsel %vm2423, %v3397, %v3393
    %v3399 = vlaneseq
    %v3400 = vshrl.u32 %v3399, 7
    %v3401 = vsub.s32 %v2425, %v3400
    %v3402 = vrot.slane %v2280, %v3401
    %v3403 = vsel %vm2430, %v3402, %v3398
    %v3404 = vlaneseq
    %v3405 = vshrl.u32 %v3404, 7
    %v3406 = vsub.s32 %v2432, %v3405
    %v3407 = vrot.slane %v2281, %v3406
    %v3408 = vsel %vm2437, %v3407, %v3403
    %v3409 = vlaneseq
    %v3410 = vshrl.u32 %v3409, 7
    %v3411 = vsub.s32 %v2439, %v3410
    %v3412 = vrot.slane %v2282, %v3411
    %v3413 = vsel %vm2444, %v3412, %v3408
    %v3414 = vlaneseq
    %v3415 = vshrl.u32 %v3414, 7
    %v3416 = vsub.s32 %v2446, %v3415
    %v3417 = vrot.slane %v2283, %v3416
    %v3418 = vsel %vm2451, %v3417, %v3413
    %v3419 = vlaneseq
    %v3420 = vshrl.u32 %v3419, 7
    %v3421 = vsub.s32 %v2453, %v3420
    %v3422 = vrot.slane %v2284, %v3421
    %v3423 = vsel %vm2458, %v3422, %v3418
    %v3424 = vlaneseq
    %v3425 = vshrl.u32 %v3424, 7
    %v3426 = vsub.s32 %v2460, %v3425
    %v3427 = vrot.slane %v2285, %v3426
    %v3428 = vsel %vm2465, %v3427, %v3423
    %v3429 = vlaneseq
    %v3430 = vshrl.u32 %v3429, 7
    %v3431 = vsub.s32 %v2467, %v3430
    %v3432 = vrot.slane %v2286, %v3431
    %v3433 = vsel %vm2472, %v3432, %v3428
    %v3434 = vlaneseq
    %v3435 = vshrl.u32 %v3434, 7
    %v3436 = vsub.s32 %v2474, %v3435
    %v3437 = vrot.slane %v2287, %v3436
    %v3438 = vsel %vm2479, %v3437, %v3433
    %v3439 = vlaneseq
    %v3440 = vshrl.u32 %v3439, 7
    %v3441 = vsub.s32 %v2481, %v3440
    %v3442 = vrot.slane %v2288, %v3441
    %v3443 = vsel %vm2486, %v3442, %v3438
    %v3444 = vlaneseq
    %v3445 = vshrl.u32 %v3444, 7
    %v3446 = vsub.s32 %v2488, %v3445
    %v3447 = vrot.slane %v2289, %v3446
    %v3448 = vsel %vm2493, %v3447, %v3443
    %v3449 = vlaneseq
    %v3450 = vshrl.u32 %v3449, 7
    %v3451 = vsub.s32 %v2495, %v3450
    %v3452 = vrot.slane %v2290, %v3451
    %v3453 = vsel %vm2500, %v3452, %v3448
    %v3454 = vlaneseq
    %v3455 = vshrl.u32 %v3454, 7
    %v3456 = vsub.s32 %v2502, %v3455
    %v3457 = vrot.slane %v2291, %v3456
    %v3458 = vsel %vm2507, %v3457, %v3453
    %v3459 = vlaneseq
    %v3460 = vshrl.u32 %v3459, 7
    %v3461 = vsub.s32 %v2509, %v3460
    %v3462 = vrot.slane %v2292, %v3461
    %v3463 = vsel %vm2514, %v3462, %v3458
    %v3464 = vlaneseq
    %v3465 = vshrl.u32 %v3464, 7
    %v3466 = vsub.s32 %v2406, %v3465
    %v3467 = vrot.slane %v2293, %v3466
    %v3468 = vlaneseq
    %v3469 = vshrl.u32 %v3468, 7
    %v3470 = vsub.s32 %v2411, %v3469
    %v3471 = vrot.slane %v2294, %v3470
    %v3472 = vsel %vm2416, %v3471, %v3467
    %v3473 = vlaneseq
    %v3474 = vshrl.u32 %v3473, 7
    %v3475 = vsub.s32 %v2418, %v3474
    %v3476 = vrot.slane %v2295, %v3475
    %v3477 = vsel %vm2423, %v3476, %v3472
    %v3478 = vlaneseq
    %v3479 = vshrl.u32 %v3478, 7
    %v3480 = vsub.s32 %v2425, %v3479
    %v3481 = vrot.slane %v2296, %v3480
    %v3482 = vsel %vm2430, %v3481, %v3477
    %v3483 = vlaneseq
    %v3484 = vshrl.u32 %v3483, 7
    %v3485 = vsub.s32 %v2432, %v3484
    %v3486 = vrot.slane %v2297, %v3485
    %v3487 = vsel %vm2437, %v3486, %v3482
    %v3488 = vlaneseq
    %v3489 = vshrl.u32 %v3488, 7
    %v3490 = vsub.s32 %v2439, %v3489
    %v3491 = vrot.slane %v2298, %v3490
    %v3492 = vsel %vm2444, %v3491, %v3487
    %v3493 = vlaneseq
    %v3494 = vshrl.u32 %v3493, 7
    %v3495 = vsub.s32 %v2446, %v3494
    %v3496 = vrot.slane %v2299, %v3495
    %v3497 = vsel %vm2451, %v3496, %v3492
    %v3498 = vlaneseq
    %v3499 = vshrl.u32 %v3498, 7
    %v3500 = vsub.s32 %v2453, %v3499
    %v3501 = vrot.slane %v2300, %v3500
    %v3502 = vsel %vm2458, %v3501, %v3497
    %v3503 = vlaneseq
    %v3504 = vshrl.u32 %v3503, 7
    %v3505 = vsub.s32 %v2460, %v3504
    %v3506 = vrot.slane %v2301, %v3505
    %v3507 = vsel %vm2465, %v3506, %v3502
    %v3508 = vlaneseq
    %v3509 = vshrl.u32 %v3508, 7
    %v3510 = vsub.s32 %v2467, %v3509
    %v3511 = vrot.slane %v2302, %v3510
    %v3512 = vsel %vm2472, %v3511, %v3507
    %v3513 = vlaneseq
    %v3514 = vshrl.u32 %v3513, 7
    %v3515 = vsub.s32 %v2474, %v3514
    %v3516 = vrot.slane %v2303, %v3515
    %v3517 = vsel %vm2479, %v3516, %v3512
    %v3518 = vlaneseq
    %v3519 = vshrl.u32 %v3518, 7
    %v3520 = vsub.s32 %v2481, %v3519
    %v3521 = vrot.slane %v2304, %v3520
    %v3522 = vsel %vm2486, %v3521, %v3517
    %v3523 = vlaneseq
    %v3524 = vshrl.u32 %v3523, 7
    %v3525 = vsub.s32 %v2488, %v3524
    %v3526 = vrot.slane %v2305, %v3525
    %v3527 = vsel %vm2493, %v3526, %v3522
    %v3528 = vlaneseq
    %v3529 = vshrl.u32 %v3528, 7
    %v3530 = vsub.s32 %v2495, %v3529
    %v3531 = vrot.slane %v2306, %v3530
    %v3532 = vsel %vm2500, %v3531, %v3527
    %v3533 = vlaneseq
    %v3534 = vshrl.u32 %v3533, 7
    %v3535 = vsub.s32 %v2502, %v3534
    %v3536 = vrot.slane %v2307, %v3535
    %v3537 = vsel %vm2507, %v3536, %v3532
    %v3538 = vlaneseq
    %v3539 = vshrl.u32 %v3538, 7
    %v3540 = vsub.s32 %v2509, %v3539
    %v3541 = vrot.slane %v2308, %v3540
    %v3542 = vsel %vm2514, %v3541, %v3537
    %v3543 = vlaneseq
    %v3544 = vshrl.u32 %v3543, 7
    %v3545 = vsub.s32 %v2406, %v3544
    %v3546 = vrot.slane %v2309, %v3545
    %v3547 = vlaneseq
    %v3548 = vshrl.u32 %v3547, 7
    %v3549 = vsub.s32 %v2411, %v3548
    %v3550 = vrot.slane %v2310, %v3549
    %v3551 = vsel %vm2416, %v3550, %v3546
    %v3552 = vlaneseq
    %v3553 = vshrl.u32 %v3552, 7
    %v3554 = vsub.s32 %v2418, %v3553
    %v3555 = vrot.slane %v2311, %v3554
    %v3556 = vsel %vm2423, %v3555, %v3551
    %v3557 = vlaneseq
    %v3558 = vshrl.u32 %v3557, 7
    %v3559 = vsub.s32 %v2425, %v3558
    %v3560 = vrot.slane %v2312, %v3559
    %v3561 = vsel %vm2430, %v3560, %v3556
    %v3562 = vlaneseq
    %v3563 = vshrl.u32 %v3562, 7
    %v3564 = vsub.s32 %v2432, %v3563
    %v3565 = vrot.slane %v2313, %v3564
    %v3566 = vsel %vm2437, %v3565, %v3561
    %v3567 = vlaneseq
    %v3568 = vshrl.u32 %v3567, 7
    %v3569 = vsub.s32 %v2439, %v3568
    %v3570 = vrot.slane %v2314, %v3569
    %v3571 = vsel %vm2444, %v3570, %v3566
    %v3572 = vlaneseq
    %v3573 = vshrl.u32 %v3572, 7
    %v3574 = vsub.s32 %v2446, %v3573
    %v3575 = vrot.slane %v2315, %v3574
    %v3576 = vsel %vm2451, %v3575, %v3571
    %v3577 = vlaneseq
    %v3578 = vshrl.u32 %v3577, 7
    %v3579 = vsub.s32 %v2453, %v3578
    %v3580 = vrot.slane %v2316, %v3579
    %v3581 = vsel %vm2458, %v3580, %v3576
    %v3582 = vlaneseq
    %v3583 = vshrl.u32 %v3582, 7
    %v3584 = vsub.s32 %v2460, %v3583
    %v3585 = vrot.slane %v2317, %v3584
    %v3586 = vsel %vm2465, %v3585, %v3581
    %v3587 = vlaneseq
    %v3588 = vshrl.u32 %v3587, 7
    %v3589 = vsub.s32 %v2467, %v3588
    %v3590 = vrot.slane %v2318, %v3589
    %v3591 = vsel %vm2472, %v3590, %v3586
    %v3592 = vlaneseq
    %v3593 = vshrl.u32 %v3592, 7
    %v3594 = vsub.s32 %v2474, %v3593
    %v3595 = vrot.slane %v2319, %v3594
    %v3596 = vsel %vm2479, %v3595, %v3591
    %v3597 = vlaneseq
    %v3598 = vshrl.u32 %v3597, 7
    %v3599 = vsub.s32 %v2481, %v3598
    %v3600 = vrot.slane %v2320, %v3599
    %v3601 = vsel %vm2486, %v3600, %v3596
    %v3602 = vlaneseq
    %v3603 = vshrl.u32 %v3602, 7
    %v3604 = vsub.s32 %v2488, %v3603
    %v3605 = vrot.slane %v2321, %v3604
    %v3606 = vsel %vm2493, %v3605, %v3601
    %v3607 = vlaneseq
    %v3608 = vshrl.u32 %v3607, 7
    %v3609 = vsub.s32 %v2495, %v3608
    %v3610 = vrot.slane %v2322, %v3609
    %v3611 = vsel %vm2500, %v3610, %v3606
    %v3612 = vlaneseq
    %v3613 = vshrl.u32 %v3612, 7
    %v3614 = vsub.s32 %v2502, %v3613
    %v3615 = vrot.slane %v2323, %v3614
    %v3616 = vsel %vm2507, %v3615, %v3611
    %v3617 = vlaneseq
    %v3618 = vshrl.u32 %v3617, 7
    %v3619 = vsub.s32 %v2509, %v3618
    %v3620 = vrot.slane %v2324, %v3619
    %v3621 = vsel %vm2514, %v3620, %v3616
    %v3622 = vlaneseq
    %v3623 = vshrl.u32 %v3622, 7
    %v3624 = vsub.s32 %v2406, %v3623
    %v3625 = vrot.slane %v2325, %v3624
    %v3626 = vlaneseq
    %v3627 = vshrl.u32 %v3626, 7
    %v3628 = vsub.s32 %v2411, %v3627
    %v3629 = vrot.slane %v2326, %v3628
    %v3630 = vsel %vm2416, %v3629, %v3625
    %v3631 = vlaneseq
    %v3632 = vshrl.u32 %v3631, 7
    %v3633 = vsub.s32 %v2418, %v3632
    %v3634 = vrot.slane %v2327, %v3633
    %v3635 = vsel %vm2423, %v3634, %v3630
    %v3636 = vlaneseq
    %v3637 = vshrl.u32 %v3636, 7
    %v3638 = vsub.s32 %v2425, %v3637
    %v3639 = vrot.slane %v2328, %v3638
    %v3640 = vsel %vm2430, %v3639, %v3635
    %v3641 = vlaneseq
    %v3642 = vshrl.u32 %v3641, 7
    %v3643 = vsub.s32 %v2432, %v3642
    %v3644 = vrot.slane %v2329, %v3643
    %v3645 = vsel %vm2437, %v3644, %v3640
    %v3646 = vlaneseq
    %v3647 = vshrl.u32 %v3646, 7
    %v3648 = vsub.s32 %v2439, %v3647
    %v3649 = vrot.slane %v2330, %v3648
    %v3650 = vsel %vm2444, %v3649, %v3645
    %v3651 = vlaneseq
    %v3652 = vshrl.u32 %v3651, 7
    %v3653 = vsub.s32 %v2446, %v3652
    %v3654 = vrot.slane %v2331, %v3653
    %v3655 = vsel %vm2451, %v3654, %v3650
    %v3656 = vlaneseq
    %v3657 = vshrl.u32 %v3656, 7
    %v3658 = vsub.s32 %v2453, %v3657
    %v3659 = vrot.slane %v2332, %v3658
    %v3660 = vsel %vm2458, %v3659, %v3655
    %v3661 = vlaneseq
    %v3662 = vshrl.u32 %v3661, 7
    %v3663 = vsub.s32 %v2460, %v3662
    %v3664 = vrot.slane %v2333, %v3663
    %v3665 = vsel %vm2465, %v3664, %v3660
    %v3666 = vlaneseq
    %v3667 = vshrl.u32 %v3666, 7
    %v3668 = vsub.s32 %v2467, %v3667
    %v3669 = vrot.slane %v2334, %v3668
    %v3670 = vsel %vm2472, %v3669, %v3665
    %v3671 = vlaneseq
    %v3672 = vshrl.u32 %v3671, 7
    %v3673 = vsub.s32 %v2474, %v3672
    %v3674 = vrot.slane %v2335, %v3673
    %v3675 = vsel %vm2479, %v3674, %v3670
    %v3676 = vlaneseq
    %v3677 = vshrl.u32 %v3676, 7
    %v3678 = vsub.s32 %v2481, %v3677
    %v3679 = vrot.slane %v2336, %v3678
    %v3680 = vsel %vm2486, %v3679, %v3675
    %v3681 = vlaneseq
    %v3682 = vshrl.u32 %v3681, 7
    %v3683 = vsub.s32 %v2488, %v3682
    %v3684 = vrot.slane %v2337, %v3683
    %v3685 = vsel %vm2493, %v3684, %v3680
    %v3686 = vlaneseq
    %v3687 = vshrl.u32 %v3686, 7
    %v3688 = vsub.s32 %v2495, %v3687
    %v3689 = vrot.slane %v2338, %v3688
    %v3690 = vsel %vm2500, %v3689, %v3685
    %v3691 = vlaneseq
    %v3692 = vshrl.u32 %v3691, 7
    %v3693 = vsub.s32 %v2502, %v3692
    %v3694 = vrot.slane %v2339, %v3693
    %v3695 = vsel %vm2507, %v3694, %v3690
    %v3696 = vlaneseq
    %v3697 = vshrl.u32 %v3696, 7
    %v3698 = vsub.s32 %v2509, %v3697
    %v3699 = vrot.slane %v2340, %v3698
    %v3700 = vsel %vm2514, %v3699, %v3695
    %v3701 = vlaneseq
    %v3702 = vshrl.u32 %v3701, 7
    %v3703 = vsub.s32 %v2406, %v3702
    %v3704 = vrot.slane %v2341, %v3703
    %v3705 = vlaneseq
    %v3706 = vshrl.u32 %v3705, 7
    %v3707 = vsub.s32 %v2411, %v3706
    %v3708 = vrot.slane %v2342, %v3707
    %v3709 = vsel %vm2416, %v3708, %v3704
    %v3710 = vlaneseq
    %v3711 = vshrl.u32 %v3710, 7
    %v3712 = vsub.s32 %v2418, %v3711
    %v3713 = vrot.slane %v2343, %v3712
    %v3714 = vsel %vm2423, %v3713, %v3709
    %v3715 = vlaneseq
    %v3716 = vshrl.u32 %v3715, 7
    %v3717 = vsub.s32 %v2425, %v3716
    %v3718 = vrot.slane %v2344, %v3717
    %v3719 = vsel %vm2430, %v3718, %v3714
    %v3720 = vlaneseq
    %v3721 = vshrl.u32 %v3720, 7
    %v3722 = vsub.s32 %v2432, %v3721
    %v3723 = vrot.slane %v2345, %v3722
    %v3724 = vsel %vm2437, %v3723, %v3719
    %v3725 = vlaneseq
    %v3726 = vshrl.u32 %v3725, 7
    %v3727 = vsub.s32 %v2439, %v3726
    %v3728 = vrot.slane %v2346, %v3727
    %v3729 = vsel %vm2444, %v3728, %v3724
    %v3730 = vlaneseq
    %v3731 = vshrl.u32 %v3730, 7
    %v3732 = vsub.s32 %v2446, %v3731
    %v3733 = vrot.slane %v2347, %v3732
    %v3734 = vsel %vm2451, %v3733, %v3729
    %v3735 = vlaneseq
    %v3736 = vshrl.u32 %v3735, 7
    %v3737 = vsub.s32 %v2453, %v3736
    %v3738 = vrot.slane %v2348, %v3737
    %v3739 = vsel %vm2458, %v3738, %v3734
    %v3740 = vlaneseq
    %v3741 = vshrl.u32 %v3740, 7
    %v3742 = vsub.s32 %v2460, %v3741
    %v3743 = vrot.slane %v2349, %v3742
    %v3744 = vsel %vm2465, %v3743, %v3739
    %v3745 = vlaneseq
    %v3746 = vshrl.u32 %v3745, 7
    %v3747 = vsub.s32 %v2467, %v3746
    %v3748 = vrot.slane %v2350, %v3747
    %v3749 = vsel %vm2472, %v3748, %v3744
    %v3750 = vlaneseq
    %v3751 = vshrl.u32 %v3750, 7
    %v3752 = vsub.s32 %v2474, %v3751
    %v3753 = vrot.slane %v2351, %v3752
    %v3754 = vsel %vm2479, %v3753, %v3749
    %v3755 = vlaneseq
    %v3756 = vshrl.u32 %v3755, 7
    %v3757 = vsub.s32 %v2481, %v3756
    %v3758 = vrot.slane %v2352, %v3757
    %v3759 = vsel %vm2486, %v3758, %v3754
    %v3760 = vlaneseq
    %v3761 = vshrl.u32 %v3760, 7
    %v3762 = vsub.s32 %v2488, %v3761
    %v3763 = vrot.slane %v2353, %v3762
    %v3764 = vsel %vm2493, %v3763, %v3759
    %v3765 = vlaneseq
    %v3766 = vshrl.u32 %v3765, 7
    %v3767 = vsub.s32 %v2495, %v3766
    %v3768 = vrot.slane %v2354, %v3767
    %v3769 = vsel %vm2500, %v3768, %v3764
    %v3770 = vlaneseq
    %v3771 = vshrl.u32 %v3770, 7
    %v3772 = vsub.s32 %v2502, %v3771
    %v3773 = vrot.slane %v2355, %v3772
    %v3774 = vsel %vm2507, %v3773, %v3769
    %v3775 = vlaneseq
    %v3776 = vshrl.u32 %v3775, 7
    %v3777 = vsub.s32 %v2509, %v3776
    %v3778 = vrot.slane %v2356, %v3777
    %v3779 = vsel %vm2514, %v3778, %v3774
    %v3780 = vlaneseq
    %v3781 = vshrl.u32 %v3780, 7
    %v3782 = vsub.s32 %v2406, %v3781
    %v3783 = vrot.slane %v2357, %v3782
    %v3784 = vlaneseq
    %v3785 = vshrl.u32 %v3784, 7
    %v3786 = vsub.s32 %v2411, %v3785
    %v3787 = vrot.slane %v2358, %v3786
    %v3788 = vsel %vm2416, %v3787, %v3783
    %v3789 = vlaneseq
    %v3790 = vshrl.u32 %v3789, 7
    %v3791 = vsub.s32 %v2418, %v3790
    %v3792 = vrot.slane %v2359, %v3791
    %v3793 = vsel %vm2423, %v3792, %v3788
    %v3794 = vlaneseq
    %v3795 = vshrl.u32 %v3794, 7
    %v3796 = vsub.s32 %v2425, %v3795
    %v3797 = vrot.slane %v2360, %v3796
    %v3798 = vsel %vm2430, %v3797, %v3793
    %v3799 = vlaneseq
    %v3800 = vshrl.u32 %v3799, 7
    %v3801 = vsub.s32 %v2432, %v3800
    %v3802 = vrot.slane %v2361, %v3801
    %v3803 = vsel %vm2437, %v3802, %v3798
    %v3804 = vlaneseq
    %v3805 = vshrl.u32 %v3804, 7
    %v3806 = vsub.s32 %v2439, %v3805
    %v3807 = vrot.slane %v2362, %v3806
    %v3808 = vsel %vm2444, %v3807, %v3803
    %v3809 = vlaneseq
    %v3810 = vshrl.u32 %v3809, 7
    %v3811 = vsub.s32 %v2446, %v3810
    %v3812 = vrot.slane %v2363, %v3811
    %v3813 = vsel %vm2451, %v3812, %v3808
    %v3814 = vlaneseq
    %v3815 = vshrl.u32 %v3814, 7
    %v3816 = vsub.s32 %v2453, %v3815
    %v3817 = vrot.slane %v2364, %v3816
    %v3818 = vsel %vm2458, %v3817, %v3813
    %v3819 = vlaneseq
    %v3820 = vshrl.u32 %v3819, 7
    %v3821 = vsub.s32 %v2460, %v3820
    %v3822 = vrot.slane %v2365, %v3821
    %v3823 = vsel %vm2465, %v3822, %v3818
    %v3824 = vlaneseq
    %v3825 = vshrl.u32 %v3824, 7
    %v3826 = vsub.s32 %v2467, %v3825
    %v3827 = vrot.slane %v2366, %v3826
    %v3828 = vsel %vm2472, %v3827, %v3823
    %v3829 = vlaneseq
    %v3830 = vshrl.u32 %v3829, 7
    %v3831 = vsub.s32 %v2474, %v3830
    %v3832 = vrot.slane %v2367, %v3831
    %v3833 = vsel %vm2479, %v3832, %v3828
    %v3834 = vlaneseq
    %v3835 = vshrl.u32 %v3834, 7
    %v3836 = vsub.s32 %v2481, %v3835
    %v3837 = vrot.slane %v2368, %v3836
    %v3838 = vsel %vm2486, %v3837, %v3833
    %v3839 = vlaneseq
    %v3840 = vshrl.u32 %v3839, 7
    %v3841 = vsub.s32 %v2488, %v3840
    %v3842 = vrot.slane %v2369, %v3841
    %v3843 = vsel %vm2493, %v3842, %v3838
    %v3844 = vlaneseq
    %v3845 = vshrl.u32 %v3844, 7
    %v3846 = vsub.s32 %v2495, %v3845
    %v3847 = vrot.slane %v2370, %v3846
    %v3848 = vsel %vm2500, %v3847, %v3843
    %v3849 = vlaneseq
    %v3850 = vshrl.u32 %v3849, 7
    %v3851 = vsub.s32 %v2502, %v3850
    %v3852 = vrot.slane %v2371, %v3851
    %v3853 = vsel %vm2507, %v3852, %v3848
    %v3854 = vlaneseq
    %v3855 = vshrl.u32 %v3854, 7
    %v3856 = vsub.s32 %v2509, %v3855
    %v3857 = vrot.slane %v2372, %v3856
    %v3858 = vsel %vm2514, %v3857, %v3853
    %v3859 = vlaneseq
    %v3860 = vshrl.u32 %v3859, 7
    %v3861 = vsub.s32 %v2406, %v3860
    %v3862 = vrot.slane %v2373, %v3861
    %v3863 = vlaneseq
    %v3864 = vshrl.u32 %v3863, 7
    %v3865 = vsub.s32 %v2411, %v3864
    %v3866 = vrot.slane %v2374, %v3865
    %v3867 = vsel %vm2416, %v3866, %v3862
    %v3868 = vlaneseq
    %v3869 = vshrl.u32 %v3868, 7
    %v3870 = vsub.s32 %v2418, %v3869
    %v3871 = vrot.slane %v2375, %v3870
    %v3872 = vsel %vm2423, %v3871, %v3867
    %v3873 = vlaneseq
    %v3874 = vshrl.u32 %v3873, 7
    %v3875 = vsub.s32 %v2425, %v3874
    %v3876 = vrot.slane %v2376, %v3875
    %v3877 = vsel %vm2430, %v3876, %v3872
    %v3878 = vlaneseq
    %v3879 = vshrl.u32 %v3878, 7
    %v3880 = vsub.s32 %v2432, %v3879
    %v3881 = vrot.slane %v2377, %v3880
    %v3882 = vsel %vm2437, %v3881, %v3877
    %v3883 = vlaneseq
    %v3884 = vshrl.u32 %v3883, 7
    %v3885 = vsub.s32 %v2439, %v3884
    %v3886 = vrot.slane %v2378, %v3885
    %v3887 = vsel %vm2444, %v3886, %v3882
    %v3888 = vlaneseq
    %v3889 = vshrl.u32 %v3888, 7
    %v3890 = vsub.s32 %v2446, %v3889
    %v3891 = vrot.slane %v2379, %v3890
    %v3892 = vsel %vm2451, %v3891, %v3887
    %v3893 = vlaneseq
    %v3894 = vshrl.u32 %v3893, 7
    %v3895 = vsub.s32 %v2453, %v3894
    %v3896 = vrot.slane %v2380, %v3895
    %v3897 = vsel %vm2458, %v3896, %v3892
    %v3898 = vlaneseq
    %v3899 = vshrl.u32 %v3898, 7
    %v3900 = vsub.s32 %v2460, %v3899
    %v3901 = vrot.slane %v2381, %v3900
    %v3902 = vsel %vm2465, %v3901, %v3897
    %v3903 = vlaneseq
    %v3904 = vshrl.u32 %v3903, 7
    %v3905 = vsub.s32 %v2467, %v3904
    %v3906 = vrot.slane %v2382, %v3905
    %v3907 = vsel %vm2472, %v3906, %v3902
    %v3908 = vlaneseq
    %v3909 = vshrl.u32 %v3908, 7
    %v3910 = vsub.s32 %v2474, %v3909
    %v3911 = vrot.slane %v2383, %v3910
    %v3912 = vsel %vm2479, %v3911, %v3907
    %v3913 = vlaneseq
    %v3914 = vshrl.u32 %v3913, 7
    %v3915 = vsub.s32 %v2481, %v3914
    %v3916 = vrot.slane %v2384, %v3915
    %v3917 = vsel %vm2486, %v3916, %v3912
    %v3918 = vlaneseq
    %v3919 = vshrl.u32 %v3918, 7
    %v3920 = vsub.s32 %v2488, %v3919
    %v3921 = vrot.slane %v2385, %v3920
    %v3922 = vsel %vm2493, %v3921, %v3917
    %v3923 = vlaneseq
    %v3924 = vshrl.u32 %v3923, 7
    %v3925 = vsub.s32 %v2495, %v3924
    %v3926 = vrot.slane %v2386, %v3925
    %v3927 = vsel %vm2500, %v3926, %v3922
    %v3928 = vlaneseq
    %v3929 = vshrl.u32 %v3928, 7
    %v3930 = vsub.s32 %v2502, %v3929
    %v3931 = vrot.slane %v2387, %v3930
    %v3932 = vsel %vm2507, %v3931, %v3927
    %v3933 = vlaneseq
    %v3934 = vshrl.u32 %v3933, 7
    %v3935 = vsub.s32 %v2509, %v3934
    %v3936 = vrot.slane %v2388, %v3935
    %v3937 = vsel %vm2514, %v3936, %v3932
    %v3938 = vlaneseq
    %v3939 = vshrl.u32 %v3938, 7
    %v3940 = vsub.s32 %v2406, %v3939
    %v3941 = vrot.slane %v2389, %v3940
    %v3942 = vlaneseq
    %v3943 = vshrl.u32 %v3942, 7
    %v3944 = vsub.s32 %v2411, %v3943
    %v3945 = vrot.slane %v2390, %v3944
    %v3946 = vsel %vm2416, %v3945, %v3941
    %v3947 = vlaneseq
    %v3948 = vshrl.u32 %v3947, 7
    %v3949 = vsub.s32 %v2418, %v3948
    %v3950 = vrot.slane %v2391, %v3949
    %v3951 = vsel %vm2423, %v3950, %v3946
    %v3952 = vlaneseq
    %v3953 = vshrl.u32 %v3952, 7
    %v3954 = vsub.s32 %v2425, %v3953
    %v3955 = vrot.slane %v2392, %v3954
    %v3956 = vsel %vm2430, %v3955, %v3951
    %v3957 = vlaneseq
    %v3958 = vshrl.u32 %v3957, 7
    %v3959 = vsub.s32 %v2432, %v3958
    %v3960 = vrot.slane %v2393, %v3959
    %v3961 = vsel %vm2437, %v3960, %v3956
    %v3962 = vlaneseq
    %v3963 = vshrl.u32 %v3962, 7
    %v3964 = vsub.s32 %v2439, %v3963
    %v3965 = vrot.slane %v2394, %v3964
    %v3966 = vsel %vm2444, %v3965, %v3961
    %v3967 = vlaneseq
    %v3968 = vshrl.u32 %v3967, 7
    %v3969 = vsub.s32 %v2446, %v3968
    %v3970 = vrot.slane %v2395, %v3969
    %v3971 = vsel %vm2451, %v3970, %v3966
    %v3972 = vlaneseq
    %v3973 = vshrl.u32 %v3972, 7
    %v3974 = vsub.s32 %v2453, %v3973
    %v3975 = vrot.slane %v2396, %v3974
    %v3976 = vsel %vm2458, %v3975, %v3971
    %v3977 = vlaneseq
    %v3978 = vshrl.u32 %v3977, 7
    %v3979 = vsub.s32 %v2460, %v3978
    %v3980 = vrot.slane %v2397, %v3979
    %v3981 = vsel %vm2465, %v3980, %v3976
    %v3982 = vlaneseq
    %v3983 = vshrl.u32 %v3982, 7
    %v3984 = vsub.s32 %v2467, %v3983
    %v3985 = vrot.slane %v2398, %v3984
    %v3986 = vsel %vm2472, %v3985, %v3981
    %v3987 = vlaneseq
    %v3988 = vshrl.u32 %v3987, 7
    %v3989 = vsub.s32 %v2474, %v3988
    %v3990 = vrot.slane %v2399, %v3989
    %v3991 = vsel %vm2479, %v3990, %v3986
    %v3992 = vlaneseq
    %v3993 = vshrl.u32 %v3992, 7
    %v3994 = vsub.s32 %v2481, %v3993
    %v3995 = vrot.slane %v2400, %v3994
    %v3996 = vsel %vm2486, %v3995, %v3991
    %v3997 = vlaneseq
    %v3998 = vshrl.u32 %v3997, 7
    %v3999 = vsub.s32 %v2488, %v3998
    %v4000 = vrot.slane %v2401, %v3999
    %v4001 = vsel %vm2493, %v4000, %v3996
    %v4002 = vlaneseq
    %v4003 = vshrl.u32 %v4002, 7
    %v4004 = vsub.s32 %v2495, %v4003
    %v4005 = vrot.slane %v2402, %v4004
    %v4006 = vsel %vm2500, %v4005, %v4001
    %v4007 = vlaneseq
    %v4008 = vshrl.u32 %v4007, 7
    %v4009 = vsub.s32 %v2502, %v4008
    %v4010 = vrot.slane %v2403, %v4009
    %v4011 = vsel %vm2507, %v4010, %v4006
    %v4012 = vlaneseq
    %v4013 = vshrl.u32 %v4012, 7
    %v4014 = vsub.s32 %v2509, %v4013
    %v4015 = vrot.slane %v2404, %v4014
    %v4016 = vsel %vm2514, %v4015, %v4011
    %vm4017 = vcmask 1041409
    %v4018 = vsel %vm4017, %v2910, %v2515
    %vm4019 = vcmask 1042434
    %v4020 = vsel %vm4019, %v3305, %v4018
    %vm4021 = vcmask 1043459
    %v4022 = vsel %vm4021, %v3700, %v4020
    %v4023 = vsel %vm4017, %v2989, %v2594
    %v4024 = vsel %vm4019, %v3384, %v4023
    %v4025 = vsel %vm4021, %v3779, %v4024
    %v4026 = vsel %vm4017, %v3068, %v2673
    %v4027 = vsel %vm4019, %v3463, %v4026
    %v4028 = vsel %vm4021, %v3858, %v4027
    %v4029 = vsel %vm4017, %v3147, %v2752
    %v4030 = vsel %vm4019, %v3542, %v4029
    %v4031 = vsel %vm4021, %v3937, %v4030
    %v4032 = vsel %vm4017, %v3226, %v2831
    %v4033 = vsel %vm4019, %v3621, %v4032
    %v4034 = vsel %vm4021, %v4016, %v4033
    %v4035 = vpack.c.b16 %v4022, %v4022
    %v4036 = vpack.c.b16 %v4025, %v4025
    %v4037 = vpack.c.b16 %v4028, %v4028
    %v4038 = vpack.c.b16 %v4031, %v4031
    %v4039 = vpack.c.b16 %v4034, %v4034
    %v4125 = vunpack.c.l.b16 %v1845
    %v4126 = vunpack.c.h.b16 %v1845
    %v4127 = vunpack.c.l.b16 %v1846
    %v4128 = vunpack.c.h.b16 %v1846
    %v4129 = vunpack.c.l.b16 %v1847
    %v4130 = vunpack.c.h.b16 %v1847
    %v4131 = vunpack.c.l.b16 %v1848
    %v4132 = vunpack.c.h.b16 %v1848
    %v4133 = vunpack.c.l.b16 %v1849
    %v4134 = vunpack.c.h.b16 %v1849
    %v4135 = vunpack.c.l.b16 %v1850
    %v4136 = vunpack.c.h.b16 %v1850
    %v4137 = vunpack.c.l.b16 %v1851
    %v4138 = vunpack.c.h.b16 %v1851
    %v4139 = vunpack.c.l.b16 %v1852
    %v4140 = vunpack.c.h.b16 %v1852
    %v4141 = vunpack.c.l.b16 %v1853
    %v4142 = vunpack.c.h.b16 %v1853
    %v4143 = vunpack.c.l.b16 %v1854
    %v4144 = vunpack.c.h.b16 %v1854
    %v4145 = vunpack.c.l.b16 %v1855
    %v4146 = vunpack.c.h.b16 %v1855
    %v4147 = vunpack.c.l.b16 %v1856
    %v4148 = vunpack.c.h.b16 %v1856
    %v4149 = vunpack.c.l.b16 %v1857
    %v4150 = vunpack.c.h.b16 %v1857
    %v4151 = vunpack.c.l.b16 %v1858
    %v4152 = vunpack.c.h.b16 %v1858
    %v4153 = vunpack.c.l.b16 %v1859
    %v4154 = vunpack.c.h.b16 %v1859
    %v4155 = vunpack.c.l.b16 %v1860
    %v4156 = vunpack.c.h.b16 %v1860
    %v4157 = vunpack.c.l.b16 %v1861
    %v4158 = vunpack.c.h.b16 %v1861
    %v4159 = vunpack.c.l.b16 %v1862
    %v4160 = vunpack.c.h.b16 %v1862
    %v4161 = vunpack.c.l.b16 %v1863
    %v4162 = vunpack.c.h.b16 %v1863
    %v4163 = vunpack.c.l.b16 %v1864
    %v4164 = vunpack.c.h.b16 %v1864
    %v4165 = vunpack.c.l.b16 %v1865
    %v4166 = vunpack.c.h.b16 %v1865
    %v4167 = vunpack.c.l.b16 %v1866
    %v4168 = vunpack.c.h.b16 %v1866
    %v4169 = vunpack.c.l.b16 %v1867
    %v4170 = vunpack.c.h.b16 %v1867
    %v4171 = vunpack.c.l.b16 %v1868
    %v4172 = vunpack.c.h.b16 %v1868
    %v4173 = vunpack.c.l.b16 %v1869
    %v4174 = vunpack.c.h.b16 %v1869
    %v4175 = vunpack.c.l.b16 %v1870
    %v4176 = vunpack.c.h.b16 %v1870
    %v4177 = vunpack.c.l.b16 %v1871
    %v4178 = vunpack.c.h.b16 %v1871
    %v4179 = vunpack.c.l.b16 %v1872
    %v4180 = vunpack.c.h.b16 %v1872
    %v4181 = vunpack.c.l.b16 %v1873
    %v4182 = vunpack.c.h.b16 %v1873
    %v4183 = vunpack.c.l.b16 %v1874
    %v4184 = vunpack.c.h.b16 %v1874
    %v4185 = vunpack.c.l.b16 %v1875
    %v4186 = vunpack.c.h.b16 %v1875
    %v4187 = vunpack.c.l.b16 %v1876
    %v4188 = vunpack.c.h.b16 %v1876
    %v4189 = vunpack.c.l.b16 %v1877
    %v4190 = vunpack.c.h.b16 %v1877
    %v4191 = vunpack.c.l.b16 %v1878
    %v4192 = vunpack.c.h.b16 %v1878
    %v4193 = vunpack.c.l.b16 %v1879
    %v4194 = vunpack.c.h.b16 %v1879
    %v4195 = vunpack.c.l.b16 %v1880
    %v4196 = vunpack.c.h.b16 %v1880
    %v4197 = vunpack.c.l.b16 %v1881
    %v4198 = vunpack.c.h.b16 %v1881
    %v4199 = vunpack.c.l.b16 %v1882
    %v4200 = vunpack.c.h.b16 %v1882
    %v4201 = vunpack.c.l.b16 %v1883
    %v4202 = vunpack.c.h.b16 %v1883
    %v4203 = vunpack.c.l.b16 %v1884
    %v4204 = vunpack.c.h.b16 %v1884
    %v4205 = vunpack.c.l.b16 %v1885
    %v4206 = vunpack.c.h.b16 %v1885
    %v4207 = vunpack.c.l.b16 %v1886
    %v4208 = vunpack.c.h.b16 %v1886
    %v4209 = vunpack.c.l.b16 %v1887
    %v4210 = vunpack.c.h.b16 %v1887
    %v4211 = vunpack.c.l.b16 %v1888
    %v4212 = vunpack.c.h.b16 %v1888
    %v4213 = vunpack.c.l.b16 %v1889
    %v4214 = vunpack.c.h.b16 %v1889
    %v4215 = vunpack.c.l.b16 %v1890
    %v4216 = vunpack.c.h.b16 %v1890
    %v4217 = vunpack.c.l.b16 %v1891
    %v4218 = vunpack.c.h.b16 %v1891
    %v4219 = vunpack.c.l.b16 %v1892
    %v4220 = vunpack.c.h.b16 %v1892
    %v4221 = vunpack.c.l.b16 %v1893
    %v4222 = vunpack.c.h.b16 %v1893
    %v4223 = vunpack.c.l.b16 %v1894
    %v4224 = vunpack.c.h.b16 %v1894
    %v4225 = vunpack.c.l.b16 %v1895
    %v4226 = vunpack.c.h.b16 %v1895
    %v4227 = vunpack.c.l.b16 %v1896
    %v4228 = vunpack.c.h.b16 %v1896
    %v4229 = vunpack.c.l.b16 %v1897
    %v4230 = vunpack.c.h.b16 %v1897
    %v4231 = vunpack.c.l.b16 %v1898
    %v4232 = vunpack.c.h.b16 %v1898
    %v4233 = vunpack.c.l.b16 %v1899
    %v4234 = vunpack.c.h.b16 %v1899
    %v4235 = vunpack.c.l.b16 %v1900
    %v4236 = vunpack.c.h.b16 %v1900
    %v4237 = vunpack.c.l.b16 %v1901
    %v4238 = vunpack.c.h.b16 %v1901
    %v4239 = vunpack.c.l.b16 %v1902
    %v4240 = vunpack.c.h.b16 %v1902
    %v4241 = vunpack.c.l.b16 %v1903
    %v4242 = vunpack.c.h.b16 %v1903
    %v4243 = vunpack.c.l.b16 %v1904
    %v4244 = vunpack.c.h.b16 %v1904
    %v4245 = vunpack.c.l.b16 %v1905
    %v4246 = vunpack.c.h.b16 %v1905
    %v4247 = vunpack.c.l.b16 %v1906
    %v4248 = vunpack.c.h.b16 %v1906
    %v4249 = vunpack.c.l.b16 %v1907
    %v4250 = vunpack.c.h.b16 %v1907
    %v4251 = vunpack.c.l.b16 %v1908
    %v4252 = vunpack.c.h.b16 %v1908
    %v4253 = vunpack.c.l.b16 %v1909
    %v4254 = vunpack.c.h.b16 %v1909
    %v4255 = vunpack.c.l.b16 %v1910
    %v4256 = vunpack.c.h.b16 %v1910
    %v4257 = vunpack.c.l.b16 %v1911
    %v4258 = vunpack.c.h.b16 %v1911
    %v4259 = vunpack.c.l.b16 %v1912
    %v4260 = vunpack.c.h.b16 %v1912
    %v4261 = vunpack.c.l.b16 %v1913
    %v4262 = vunpack.c.h.b16 %v1913
    %v4263 = vunpack.c.l.b16 %v1914
    %v4264 = vunpack.c.h.b16 %v1914
    %v4265 = vunpack.c.l.b16 %v1915
    %v4266 = vunpack.c.h.b16 %v1915
    %v4267 = vunpack.c.l.b16 %v1916
    %v4268 = vunpack.c.h.b16 %v1916
    %v4269 = vunpack.c.l.b16 %v1917
    %v4270 = vunpack.c.h.b16 %v1917
    %v4271 = vunpack.c.l.b16 %v1918
    %v4272 = vunpack.c.h.b16 %v1918
    %v4273 = vunpack.c.l.b16 %v1919
    %v4274 = vunpack.c.h.b16 %v1919
    %v4275 = vunpack.c.l.b16 %v1920
    %v4276 = vunpack.c.h.b16 %v1920
    %v4277 = vunpack.c.l.b16 %v1921
    %v4278 = vunpack.c.h.b16 %v1921
    %v4279 = vunpack.c.l.b16 %v1922
    %v4280 = vunpack.c.h.b16 %v1922
    %v4281 = vunpack.c.l.b16 %v1923
    %v4282 = vunpack.c.h.b16 %v1923
    %v4283 = vunpack.c.l.b16 %v1924
    %v4284 = vunpack.c.h.b16 %v1924
    %v4285 = vpack.c.b16 %v4127, %v4125
    %v4286 = vpack.c.b16 %v4128, %v4126
    %v4287 = vpack.c.b16 %v4131, %v4129
    %v4288 = vpack.c.b16 %v4132, %v4130
    %v4289 = vpack.c.b16 %v4135, %v4133
    %v4290 = vpack.c.b16 %v4136, %v4134
    %v4291 = vpack.c.b16 %v4139, %v4137
    %v4292 = vpack.c.b16 %v4140, %v4138
    %v4293 = vpack.c.b16 %v4143, %v4141
    %v4294 = vpack.c.b16 %v4144, %v4142
    %v4295 = vpack.c.b16 %v4147, %v4145
    %v4296 = vpack.c.b16 %v4148, %v4146
    %v4297 = vpack.c.b16 %v4151, %v4149
    %v4298 = vpack.c.b16 %v4152, %v4150
    %v4299 = vpack.c.b16 %v4155, %v4153
    %v4300 = vpack.c.b16 %v4156, %v4154
    %v4301 = vpack.c.b16 %v4159, %v4157
    %v4302 = vpack.c.b16 %v4160, %v4158
    %v4303 = vpack.c.b16 %v4163, %v4161
    %v4304 = vpack.c.b16 %v4164, %v4162
    %v4305 = vpack.c.b16 %v4167, %v4165
    %v4306 = vpack.c.b16 %v4168, %v4166
    %v4307 = vpack.c.b16 %v4171, %v4169
    %v4308 = vpack.c.b16 %v4172, %v4170
    %v4309 = vpack.c.b16 %v4175, %v4173
    %v4310 = vpack.c.b16 %v4176, %v4174
    %v4311 = vpack.c.b16 %v4179, %v4177
    %v4312 = vpack.c.b16 %v4180, %v4178
    %v4313 = vpack.c.b16 %v4183, %v4181
    %v4314 = vpack.c.b16 %v4184, %v4182
    %v4315 = vpack.c.b16 %v4187, %v4185
    %v4316 = vpack.c.b16 %v4188, %v4186
    %v4317 = vpack.c.b16 %v4191, %v4189
    %v4318 = vpack.c.b16 %v4192, %v4190
    %v4319 = vpack.c.b16 %v4195, %v4193
    %v4320 = vpack.c.b16 %v4196, %v4194
    %v4321 = vpack.c.b16 %v4199, %v4197
    %v4322 = vpack.c.b16 %v4200, %v4198
    %v4323 = vpack.c.b16 %v4203, %v4201
    %v4324 = vpack.c.b16 %v4204, %v4202
    %v4325 = vpack.c.b16 %v4207, %v4205
    %v4326 = vpack.c.b16 %v4208, %v4206
    %v4327 = vpack.c.b16 %v4211, %v4209
    %v4328 = vpack.c.b16 %v4212, %v4210
    %v4329 = vpack.c.b16 %v4215, %v4213
    %v4330 = vpack.c.b16 %v4216, %v4214
    %v4331 = vpack.c.b16 %v4219, %v4217
    %v4332 = vpack.c.b16 %v4220, %v4218
    %v4333 = vpack.c.b16 %v4223, %v4221
    %v4334 = vpack.c.b16 %v4224, %v4222
    %v4335 = vpack.c.b16 %v4227, %v4225
    %v4336 = vpack.c.b16 %v4228, %v4226
    %v4337 = vpack.c.b16 %v4231, %v4229
    %v4338 = vpack.c.b16 %v4232, %v4230
    %v4339 = vpack.c.b16 %v4235, %v4233
    %v4340 = vpack.c.b16 %v4236, %v4234
    %v4341 = vpack.c.b16 %v4239, %v4237
    %v4342 = vpack.c.b16 %v4240, %v4238
    %v4343 = vpack.c.b16 %v4243, %v4241
    %v4344 = vpack.c.b16 %v4244, %v4242
    %v4345 = vpack.c.b16 %v4247, %v4245
    %v4346 = vpack.c.b16 %v4248, %v4246
    %v4347 = vpack.c.b16 %v4251, %v4249
    %v4348 = vpack.c.b16 %v4252, %v4250
    %v4349 = vpack.c.b16 %v4255, %v4253
    %v4350 = vpack.c.b16 %v4256, %v4254
    %v4351 = vpack.c.b16 %v4259, %v4257
    %v4352 = vpack.c.b16 %v4260, %v4258
    %v4353 = vpack.c.b16 %v4263, %v4261
    %v4354 = vpack.c.b16 %v4264, %v4262
    %v4355 = vpack.c.b16 %v4267, %v4265
    %v4356 = vpack.c.b16 %v4268, %v4266
    %v4357 = vpack.c.b16 %v4271, %v4269
    %v4358 = vpack.c.b16 %v4272, %v4270
    %v4359 = vpack.c.b16 %v4275, %v4273
    %v4360 = vpack.c.b16 %v4276, %v4274
    %v4361 = vpack.c.b16 %v4279, %v4277
    %v4362 = vpack.c.b16 %v4280, %v4278
    %v4363 = vpack.c.b16 %v4283, %v4281
    %v4364 = vpack.c.b16 %v4284, %v4282
    %4445 = vmatprep.subr.bf16.mxu0 %v4286
    %4446 = vmatpush1.bf16.msra.mxu0 %v4285
    %4447 = vmatprep.subr.bf16.mxu0 %v4288
    %4448 = vmatpush1.bf16.msra.mxu0 %v4287
    %4449 = vmatprep.subr.bf16.mxu0 %v4290
    %4450 = vmatpush1.bf16.msra.mxu0 %v4289
    %4451 = vmatprep.subr.bf16.mxu0 %v4292
    %4452 = vmatpush1.bf16.msra.mxu0 %v4291
    %4453 = vmatprep.subr.bf16.mxu0 %v4294
    %4454 = vmatpush1.bf16.msra.mxu0 %v4293
    %4455 = vmatprep.subr.bf16.mxu0 %v4296
    %4456 = vmatpush1.bf16.msra.mxu0 %v4295
    %4457 = vmatprep.subr.bf16.mxu0 %v4298
    %4458 = vmatpush1.bf16.msra.mxu0 %v4297
    %4459 = vmatprep.subr.bf16.mxu0 %v4300
    %4460 = vmatpush1.bf16.msra.mxu0 %v4299
    %4461 = vmatprep.subr.bf16.mxu0 %v4302
    %4462 = vmatpush1.bf16.msra.mxu0 %v4301
    %4463 = vmatprep.subr.bf16.mxu0 %v4304
    %4464 = vmatpush1.bf16.msra.mxu0 %v4303
    %4465 = vmatprep.subr.bf16.mxu0 %v4306
    %4466 = vmatpush1.bf16.msra.mxu0 %v4305
    %4467 = vmatprep.subr.bf16.mxu0 %v4308
    %4468 = vmatpush1.bf16.msra.mxu0 %v4307
    %4469 = vmatprep.subr.bf16.mxu0 %v4310
    %4470 = vmatpush1.bf16.msra.mxu0 %v4309
    %4471 = vmatprep.subr.bf16.mxu0 %v4312
    %4472 = vmatpush1.bf16.msra.mxu0 %v4311
    %4473 = vmatprep.subr.bf16.mxu0 %v4314
    %4474 = vmatpush1.bf16.msra.mxu0 %v4313
    %4475 = vmatprep.subr.bf16.mxu0 %v4316
    %4476 = vmatpush1.bf16.msra.mxu0 %v4315
    %4477 = vmatprep.mubr.bf16.mxu0 %v4036
    %4478 = vmatmul.mubr.bf16.gmra.mrb[0].mxu0 %v4035
    %v4479 = vpop.f32.mrb[0].mxu0
    %v4480 = vadd.f32 0.0, %v4479
    %v4481 = vpop.f32.mrb[0].mxu0
    %v4482 = vadd.f32 0.0, %v4481
    %v4483 = vpop.f32.mrb[0].mxu0
    %v4484 = vpop.f32.mrb[0].mxu0
    %4485 = vdwg.mxu0
    %4486 = vmatprep.subr.bf16.mxu0 %v4318
    %4487 = vmatpush1.bf16.msra.mxu0 %v4317
    %4488 = vmatprep.subr.bf16.mxu0 %v4320
    %4489 = vmatpush1.bf16.msra.mxu0 %v4319
    %4490 = vmatprep.subr.bf16.mxu0 %v4322
    %4491 = vmatpush1.bf16.msra.mxu0 %v4321
    %4492 = vmatprep.subr.bf16.mxu0 %v4324
    %4493 = vmatpush1.bf16.msra.mxu0 %v4323
    %4494 = vmatprep.subr.bf16.mxu0 %v4326
    %4495 = vmatpush1.bf16.msra.mxu0 %v4325
    %4496 = vmatprep.subr.bf16.mxu0 %v4328
    %4497 = vmatpush1.bf16.msra.mxu0 %v4327
    %4498 = vmatprep.subr.bf16.mxu0 %v4330
    %4499 = vmatpush1.bf16.msra.mxu0 %v4329
    %4500 = vmatprep.subr.bf16.mxu0 %v4332
    %4501 = vmatpush1.bf16.msra.mxu0 %v4331
    %4502 = vmatprep.subr.bf16.mxu0 %v4334
    %4503 = vmatpush1.bf16.msra.mxu0 %v4333
    %4504 = vmatprep.subr.bf16.mxu0 %v4336
    %4505 = vmatpush1.bf16.msra.mxu0 %v4335
    %4506 = vmatprep.subr.bf16.mxu0 %v4338
    %4507 = vmatpush1.bf16.msra.mxu0 %v4337
    %4508 = vmatprep.subr.bf16.mxu0 %v4340
    %4509 = vmatpush1.bf16.msra.mxu0 %v4339
    %4510 = vmatprep.subr.bf16.mxu0 %v4342
    %4511 = vmatpush1.bf16.msra.mxu0 %v4341
    %4512 = vmatprep.subr.bf16.mxu0 %v4344
    %4513 = vmatpush1.bf16.msra.mxu0 %v4343
    %4514 = vmatprep.subr.bf16.mxu0 %v4346
    %4515 = vmatpush1.bf16.msra.mxu0 %v4345
    %4516 = vmatprep.subr.bf16.mxu0 %v4348
    %4517 = vmatpush1.bf16.msra.mxu0 %v4347
    %4518 = vmatprep.mubr.bf16.mxu0 %v4038
    %4519 = vmatmul.mubr.bf16.gmra.mrb[0].mxu0 %v4037
    %v4520 = vpop.f32.mrb[0].mxu0
    %v4521 = vadd.f32 %v4480, %v4520
    %v4522 = vpop.f32.mrb[0].mxu0
    %v4523 = vadd.f32 %v4482, %v4522
    %v4524 = vpop.f32.mrb[0].mxu0
    %v4525 = vpop.f32.mrb[0].mxu0
    %4526 = vdwg.mxu0
    %4527 = vmatprep.subr.bf16.mxu0 %v4350
    %4528 = vmatpush1.bf16.msra.mxu0 %v4349
    %4529 = vmatprep.subr.bf16.mxu0 %v4352
    %4530 = vmatpush1.bf16.msra.mxu0 %v4351
    %4531 = vmatprep.subr.bf16.mxu0 %v4354
    %4532 = vmatpush1.bf16.msra.mxu0 %v4353
    %4533 = vmatprep.subr.bf16.mxu0 %v4356
    %4534 = vmatpush1.bf16.msra.mxu0 %v4355
    %4535 = vmatprep.subr.bf16.mxu0 %v4358
    %4536 = vmatpush1.bf16.msra.mxu0 %v4357
    %4537 = vmatprep.subr.bf16.mxu0 %v4360
    %4538 = vmatpush1.bf16.msra.mxu0 %v4359
    %4539 = vmatprep.subr.bf16.mxu0 %v4362
    %4540 = vmatpush1.bf16.msra.mxu0 %v4361
    %4541 = vmatprep.subr.bf16.mxu0 %v4364
    %4542 = vmatpush1.bf16.msra.mxu0 %v4363
    %4543 = vmatprep.subr.bf16.mxu0 0
    %4544 = vmatpush1.bf16.msra.mxu0 0
    %4545 = vmatprep.subr.bf16.mxu0 0
    %4546 = vmatpush1.bf16.msra.mxu0 0
    %4547 = vmatprep.subr.bf16.mxu0 0
    %4548 = vmatpush1.bf16.msra.mxu0 0
    %4549 = vmatprep.subr.bf16.mxu0 0
    %4550 = vmatpush1.bf16.msra.mxu0 0
    %4551 = vmatprep.subr.bf16.mxu0 0
    %4552 = vmatpush1.bf16.msra.mxu0 0
    %4553 = vmatprep.subr.bf16.mxu0 0
    %4554 = vmatpush1.bf16.msra.mxu0 0
    %4555 = vmatprep.subr.bf16.mxu0 0
    %4556 = vmatpush1.bf16.msra.mxu0 0
    %4557 = vmatprep.subr.bf16.mxu0 0
    %4558 = vmatpush1.bf16.msra.mxu0 0
    %4559 = vmatprep.mubr.bf16.mxu0 0
    %4560 = vmatmul.mubr.bf16.gmra.mrb[0].mxu0 %v4039
    %v4561 = vpop.f32.mrb[0].mxu0
    %v4562 = vadd.f32 %v4521, %v4561
    %v4563 = vpop.f32.mrb[0].mxu0
    %v4564 = vadd.f32 %v4523, %v4563
    %v4565 = vpop.f32.mrb[0].mxu0
    %v4566 = vpop.f32.mrb[0].mxu0
    %4567 = vdwg.mxu0
    %v4569 = vlaneseq
    %v4570 = vshrl.u32 %v4569, 7
    %v4571 = vsub.s32 0, %v4570
    %v4572 = vrot.slane %v403, %v4571
    %v4573 = vlaneseq
    %v4574 = vshrl.u32 %v4573, 7
    %v4575 = vsub.s32 1, %v4574
    %v4576 = vrot.slane %v403, %v4575
    %v4579 = vadd.f32 %v4572, %v4562
    %v4580 = vadd.f32 %v4576, %v4564
    %4901 = vrot.lane.b32.xlu0 %v404, 64
    %v4902 = vpop.permute.xlu0 %4901
    %4903 = vrot.lane.b32.xlu0 %v405, 64
    %v4904 = vpop.permute.xlu0 %4903
    %4905 = vrot.lane.b32.xlu0 %v406, 64
    %v4906 = vpop.permute.xlu0 %4905
    %4907 = vrot.lane.b32.xlu0 %v407, 64
    %v4908 = vpop.permute.xlu0 %4907
    %4909 = vrot.lane.b32.xlu0 %v408, 64
    %v4910 = vpop.permute.xlu0 %4909
    %4911 = vrot.lane.b32.xlu0 %v409, 64
    %v4912 = vpop.permute.xlu0 %4911
    %4913 = vrot.lane.b32.xlu0 %v410, 64
    %v4914 = vpop.permute.xlu0 %4913
    %4915 = vrot.lane.b32.xlu0 %v411, 64
    %v4916 = vpop.permute.xlu0 %4915
    %4917 = vrot.lane.b32.xlu0 %v412, 64
    %v4918 = vpop.permute.xlu0 %4917
    %4919 = vrot.lane.b32.xlu0 %v413, 64
    %v4920 = vpop.permute.xlu0 %4919
    %4921 = vrot.lane.b32.xlu0 %v414, 64
    %v4922 = vpop.permute.xlu0 %4921
    %4923 = vrot.lane.b32.xlu0 %v415, 64
    %v4924 = vpop.permute.xlu0 %4923
    %4925 = vrot.lane.b32.xlu0 %v416, 64
    %v4926 = vpop.permute.xlu0 %4925
    %4927 = vrot.lane.b32.xlu0 %v417, 64
    %v4928 = vpop.permute.xlu0 %4927
    %4929 = vrot.lane.b32.xlu0 %v418, 64
    %v4930 = vpop.permute.xlu0 %4929
    %4931 = vrot.lane.b32.xlu0 %v419, 64
    %v4932 = vpop.permute.xlu0 %4931
    %4933 = vrot.lane.b32.xlu0 %v420, 64
    %v4934 = vpop.permute.xlu0 %4933
    %4935 = vrot.lane.b32.xlu0 %v421, 64
    %v4936 = vpop.permute.xlu0 %4935
    %4937 = vrot.lane.b32.xlu0 %v422, 64
    %v4938 = vpop.permute.xlu0 %4937
    %4939 = vrot.lane.b32.xlu0 %v423, 64
    %v4940 = vpop.permute.xlu0 %4939
    %4941 = vrot.lane.b32.xlu0 %v424, 64
    %v4942 = vpop.permute.xlu0 %4941
    %4943 = vrot.lane.b32.xlu0 %v425, 64
    %v4944 = vpop.permute.xlu0 %4943
    %4945 = vrot.lane.b32.xlu0 %v426, 64
    %v4946 = vpop.permute.xlu0 %4945
    %4947 = vrot.lane.b32.xlu0 %v427, 64
    %v4948 = vpop.permute.xlu0 %4947
    %4949 = vrot.lane.b32.xlu0 %v428, 64
    %v4950 = vpop.permute.xlu0 %4949
    %4951 = vrot.lane.b32.xlu0 %v429, 64
    %v4952 = vpop.permute.xlu0 %4951
    %4953 = vrot.lane.b32.xlu0 %v430, 64
    %v4954 = vpop.permute.xlu0 %4953
    %4955 = vrot.lane.b32.xlu0 %v431, 64
    %v4956 = vpop.permute.xlu0 %4955
    %4957 = vrot.lane.b32.xlu0 %v432, 64
    %v4958 = vpop.permute.xlu0 %4957
    %4959 = vrot.lane.b32.xlu0 %v433, 64
    %v4960 = vpop.permute.xlu0 %4959
    %4961 = vrot.lane.b32.xlu0 %v434, 64
    %v4962 = vpop.permute.xlu0 %4961
    %4963 = vrot.lane.b32.xlu0 %v435, 64
    %v4964 = vpop.permute.xlu0 %4963
    %4965 = vrot.lane.b32.xlu0 %v436, 64
    %v4966 = vpop.permute.xlu0 %4965
    %4967 = vrot.lane.b32.xlu0 %v437, 64
    %v4968 = vpop.permute.xlu0 %4967
    %4969 = vrot.lane.b32.xlu0 %v438, 64
    %v4970 = vpop.permute.xlu0 %4969
    %4971 = vrot.lane.b32.xlu0 %v439, 64
    %v4972 = vpop.permute.xlu0 %4971
    %4973 = vrot.lane.b32.xlu0 %v440, 64
    %v4974 = vpop.permute.xlu0 %4973
    %4975 = vrot.lane.b32.xlu0 %v441, 64
    %v4976 = vpop.permute.xlu0 %4975
    %4977 = vrot.lane.b32.xlu0 %v442, 64
    %v4978 = vpop.permute.xlu0 %4977
    %4979 = vrot.lane.b32.xlu0 %v443, 64
    %v4980 = vpop.permute.xlu0 %4979
    %4981 = vrot.lane.b32.xlu0 %v444, 64
    %v4982 = vpop.permute.xlu0 %4981
    %4983 = vrot.lane.b32.xlu0 %v445, 64
    %v4984 = vpop.permute.xlu0 %4983
    %4985 = vrot.lane.b32.xlu0 %v446, 64
    %v4986 = vpop.permute.xlu0 %4985
    %4987 = vrot.lane.b32.xlu0 %v447, 64
    %v4988 = vpop.permute.xlu0 %4987
    %4989 = vrot.lane.b32.xlu0 %v448, 64
    %v4990 = vpop.permute.xlu0 %4989
    %4991 = vrot.lane.b32.xlu0 %v449, 64
    %v4992 = vpop.permute.xlu0 %4991
    %4993 = vrot.lane.b32.xlu0 %v450, 64
    %v4994 = vpop.permute.xlu0 %4993
    %4995 = vrot.lane.b32.xlu0 %v451, 64
    %v4996 = vpop.permute.xlu0 %4995
    %4997 = vrot.lane.b32.xlu0 %v452, 64
    %v4998 = vpop.permute.xlu0 %4997
    %4999 = vrot.lane.b32.xlu0 %v453, 64
    %v5000 = vpop.permute.xlu0 %4999
    %5001 = vrot.lane.b32.xlu0 %v454, 64
    %v5002 = vpop.permute.xlu0 %5001
    %5003 = vrot.lane.b32.xlu0 %v455, 64
    %v5004 = vpop.permute.xlu0 %5003
    %5005 = vrot.lane.b32.xlu0 %v456, 64
    %v5006 = vpop.permute.xlu0 %5005
    %5007 = vrot.lane.b32.xlu0 %v457, 64
    %v5008 = vpop.permute.xlu0 %5007
    %5009 = vrot.lane.b32.xlu0 %v458, 64
    %v5010 = vpop.permute.xlu0 %5009
    %5011 = vrot.lane.b32.xlu0 %v459, 64
    %v5012 = vpop.permute.xlu0 %5011
    %5013 = vrot.lane.b32.xlu0 %v460, 64
    %v5014 = vpop.permute.xlu0 %5013
    %5015 = vrot.lane.b32.xlu0 %v461, 64
    %v5016 = vpop.permute.xlu0 %5015
    %5017 = vrot.lane.b32.xlu0 %v462, 64
    %v5018 = vpop.permute.xlu0 %5017
    %5019 = vrot.lane.b32.xlu0 %v463, 64
    %v5020 = vpop.permute.xlu0 %5019
    %5021 = vrot.lane.b32.xlu0 %v464, 64
    %v5022 = vpop.permute.xlu0 %5021
    %5023 = vrot.lane.b32.xlu0 %v465, 64
    %v5024 = vpop.permute.xlu0 %5023
    %5025 = vrot.lane.b32.xlu0 %v466, 64
    %v5026 = vpop.permute.xlu0 %5025
    %5027 = vrot.lane.b32.xlu0 %v467, 64
    %v5028 = vpop.permute.xlu0 %5027
    %5029 = vrot.lane.b32.xlu0 %v468, 64
    %v5030 = vpop.permute.xlu0 %5029
    %5031 = vrot.lane.b32.xlu0 %v469, 64
    %v5032 = vpop.permute.xlu0 %5031
    %5033 = vrot.lane.b32.xlu0 %v470, 64
    %v5034 = vpop.permute.xlu0 %5033
    %5035 = vrot.lane.b32.xlu0 %v471, 64
    %v5036 = vpop.permute.xlu0 %5035
    %5037 = vrot.lane.b32.xlu0 %v472, 64
    %v5038 = vpop.permute.xlu0 %5037
    %5039 = vrot.lane.b32.xlu0 %v473, 64
    %v5040 = vpop.permute.xlu0 %5039
    %5041 = vrot.lane.b32.xlu0 %v474, 64
    %v5042 = vpop.permute.xlu0 %5041
    %5043 = vrot.lane.b32.xlu0 %v475, 64
    %v5044 = vpop.permute.xlu0 %5043
    %5045 = vrot.lane.b32.xlu0 %v476, 64
    %v5046 = vpop.permute.xlu0 %5045
    %5047 = vrot.lane.b32.xlu0 %v477, 64
    %v5048 = vpop.permute.xlu0 %5047
    %5049 = vrot.lane.b32.xlu0 %v478, 64
    %v5050 = vpop.permute.xlu0 %5049
    %5051 = vrot.lane.b32.xlu0 %v479, 64
    %v5052 = vpop.permute.xlu0 %5051
    %5053 = vrot.lane.b32.xlu0 %v480, 64
    %v5054 = vpop.permute.xlu0 %5053
    %5055 = vrot.lane.b32.xlu0 %v481, 64
    %v5056 = vpop.permute.xlu0 %5055
    %5057 = vrot.lane.b32.xlu0 %v482, 64
    %v5058 = vpop.permute.xlu0 %5057
    %5059 = vrot.lane.b32.xlu0 %v483, 64
    %v5060 = vpop.permute.xlu0 %5059
    %5061 = vrot.lane.b32.xlu0 %v484, 64
    %v5062 = vpop.permute.xlu0 %5061
    %5063 = vrot.lane.b32.xlu0 %v485, 64
    %v5064 = vpop.permute.xlu0 %5063
    %5065 = vrot.lane.b32.xlu0 %v486, 64
    %v5066 = vpop.permute.xlu0 %5065
    %5067 = vrot.lane.b32.xlu0 %v487, 64
    %v5068 = vpop.permute.xlu0 %5067
    %5069 = vrot.lane.b32.xlu0 %v488, 64
    %v5070 = vpop.permute.xlu0 %5069
    %5071 = vrot.lane.b32.xlu0 %v489, 64
    %v5072 = vpop.permute.xlu0 %5071
    %5073 = vrot.lane.b32.xlu0 %v490, 64
    %v5074 = vpop.permute.xlu0 %5073
    %5075 = vrot.lane.b32.xlu0 %v491, 64
    %v5076 = vpop.permute.xlu0 %5075
    %5077 = vrot.lane.b32.xlu0 %v492, 64
    %v5078 = vpop.permute.xlu0 %5077
    %5079 = vrot.lane.b32.xlu0 %v493, 64
    %v5080 = vpop.permute.xlu0 %5079
    %5081 = vrot.lane.b32.xlu0 %v494, 64
    %v5082 = vpop.permute.xlu0 %5081
    %5083 = vrot.lane.b32.xlu0 %v495, 64
    %v5084 = vpop.permute.xlu0 %5083
    %5085 = vrot.lane.b32.xlu0 %v496, 64
    %v5086 = vpop.permute.xlu0 %5085
    %5087 = vrot.lane.b32.xlu0 %v497, 64
    %v5088 = vpop.permute.xlu0 %5087
    %5089 = vrot.lane.b32.xlu0 %v498, 64
    %v5090 = vpop.permute.xlu0 %5089
    %5091 = vrot.lane.b32.xlu0 %v499, 64
    %v5092 = vpop.permute.xlu0 %5091
    %5093 = vrot.lane.b32.xlu0 %v500, 64
    %v5094 = vpop.permute.xlu0 %5093
    %5095 = vrot.lane.b32.xlu0 %v501, 64
    %v5096 = vpop.permute.xlu0 %5095
    %5097 = vrot.lane.b32.xlu0 %v502, 64
    %v5098 = vpop.permute.xlu0 %5097
    %5099 = vrot.lane.b32.xlu0 %v503, 64
    %v5100 = vpop.permute.xlu0 %5099
    %5101 = vrot.lane.b32.xlu0 %v504, 64
    %v5102 = vpop.permute.xlu0 %5101
    %5103 = vrot.lane.b32.xlu0 %v505, 64
    %v5104 = vpop.permute.xlu0 %5103
    %5105 = vrot.lane.b32.xlu0 %v506, 64
    %v5106 = vpop.permute.xlu0 %5105
    %5107 = vrot.lane.b32.xlu0 %v507, 64
    %v5108 = vpop.permute.xlu0 %5107
    %5109 = vrot.lane.b32.xlu0 %v508, 64
    %v5110 = vpop.permute.xlu0 %5109
    %5111 = vrot.lane.b32.xlu0 %v509, 64
    %v5112 = vpop.permute.xlu0 %5111
    %5113 = vrot.lane.b32.xlu0 %v510, 64
    %v5114 = vpop.permute.xlu0 %5113
    %5115 = vrot.lane.b32.xlu0 %v511, 64
    %v5116 = vpop.permute.xlu0 %5115
    %5117 = vrot.lane.b32.xlu0 %v512, 64
    %v5118 = vpop.permute.xlu0 %5117
    %5119 = vrot.lane.b32.xlu0 %v513, 64
    %v5120 = vpop.permute.xlu0 %5119
    %5121 = vrot.lane.b32.xlu0 %v514, 64
    %v5122 = vpop.permute.xlu0 %5121
    %5123 = vrot.lane.b32.xlu0 %v515, 64
    %v5124 = vpop.permute.xlu0 %5123
    %5125 = vrot.lane.b32.xlu0 %v516, 64
    %v5126 = vpop.permute.xlu0 %5125
    %5127 = vrot.lane.b32.xlu0 %v517, 64
    %v5128 = vpop.permute.xlu0 %5127
    %5129 = vrot.lane.b32.xlu0 %v518, 64
    %v5130 = vpop.permute.xlu0 %5129
    %5131 = vrot.lane.b32.xlu0 %v519, 64
    %v5132 = vpop.permute.xlu0 %5131
    %5133 = vrot.lane.b32.xlu0 %v520, 64
    %v5134 = vpop.permute.xlu0 %5133
    %5135 = vrot.lane.b32.xlu0 %v521, 64
    %v5136 = vpop.permute.xlu0 %5135
    %5137 = vrot.lane.b32.xlu0 %v522, 64
    %v5138 = vpop.permute.xlu0 %5137
    %5139 = vrot.lane.b32.xlu0 %v523, 64
    %v5140 = vpop.permute.xlu0 %5139
    %5141 = vrot.lane.b32.xlu0 %v524, 64
    %v5142 = vpop.permute.xlu0 %5141
    %5143 = vrot.lane.b32.xlu0 %v525, 64
    %v5144 = vpop.permute.xlu0 %5143
    %5145 = vrot.lane.b32.xlu0 %v526, 64
    %v5146 = vpop.permute.xlu0 %5145
    %5147 = vrot.lane.b32.xlu0 %v527, 64
    %v5148 = vpop.permute.xlu0 %5147
    %5149 = vrot.lane.b32.xlu0 %v528, 64
    %v5150 = vpop.permute.xlu0 %5149
    %5151 = vrot.lane.b32.xlu0 %v529, 64
    %v5152 = vpop.permute.xlu0 %5151
    %5153 = vrot.lane.b32.xlu0 %v530, 64
    %v5154 = vpop.permute.xlu0 %5153
    %5155 = vrot.lane.b32.xlu0 %v531, 64
    %v5156 = vpop.permute.xlu0 %5155
    %5157 = vrot.lane.b32.xlu0 %v532, 64
    %v5158 = vpop.permute.xlu0 %5157
    %5159 = vrot.lane.b32.xlu0 %v533, 64
    %v5160 = vpop.permute.xlu0 %5159
    %5161 = vrot.lane.b32.xlu0 %v534, 64
    %v5162 = vpop.permute.xlu0 %5161
    %5163 = vrot.lane.b32.xlu0 %v535, 64
    %v5164 = vpop.permute.xlu0 %5163
    %5165 = vrot.lane.b32.xlu0 %v536, 64
    %v5166 = vpop.permute.xlu0 %5165
    %5167 = vrot.lane.b32.xlu0 %v537, 64
    %v5168 = vpop.permute.xlu0 %5167
    %5169 = vrot.lane.b32.xlu0 %v538, 64
    %v5170 = vpop.permute.xlu0 %5169
    %5171 = vrot.lane.b32.xlu0 %v539, 64
    %v5172 = vpop.permute.xlu0 %5171
    %5173 = vrot.lane.b32.xlu0 %v540, 64
    %v5174 = vpop.permute.xlu0 %5173
    %5175 = vrot.lane.b32.xlu0 %v541, 64
    %v5176 = vpop.permute.xlu0 %5175
    %5177 = vrot.lane.b32.xlu0 %v542, 64
    %v5178 = vpop.permute.xlu0 %5177
    %5179 = vrot.lane.b32.xlu0 %v543, 64
    %v5180 = vpop.permute.xlu0 %5179
    %5181 = vrot.lane.b32.xlu0 %v544, 64
    %v5182 = vpop.permute.xlu0 %5181
    %5183 = vrot.lane.b32.xlu0 %v545, 64
    %v5184 = vpop.permute.xlu0 %5183
    %5185 = vrot.lane.b32.xlu0 %v546, 64
    %v5186 = vpop.permute.xlu0 %5185
    %5187 = vrot.lane.b32.xlu0 %v547, 64
    %v5188 = vpop.permute.xlu0 %5187
    %5189 = vrot.lane.b32.xlu0 %v548, 64
    %v5190 = vpop.permute.xlu0 %5189
    %5191 = vrot.lane.b32.xlu0 %v549, 64
    %v5192 = vpop.permute.xlu0 %5191
    %5193 = vrot.lane.b32.xlu0 %v550, 64
    %v5194 = vpop.permute.xlu0 %5193
    %5195 = vrot.lane.b32.xlu0 %v551, 64
    %v5196 = vpop.permute.xlu0 %5195
    %5197 = vrot.lane.b32.xlu0 %v552, 64
    %v5198 = vpop.permute.xlu0 %5197
    %5199 = vrot.lane.b32.xlu0 %v553, 64
    %v5200 = vpop.permute.xlu0 %5199
    %5201 = vrot.lane.b32.xlu0 %v554, 64
    %v5202 = vpop.permute.xlu0 %5201
    %5203 = vrot.lane.b32.xlu0 %v555, 64
    %v5204 = vpop.permute.xlu0 %5203
    %5205 = vrot.lane.b32.xlu0 %v556, 64
    %v5206 = vpop.permute.xlu0 %5205
    %5207 = vrot.lane.b32.xlu0 %v557, 64
    %v5208 = vpop.permute.xlu0 %5207
    %5209 = vrot.lane.b32.xlu0 %v558, 64
    %v5210 = vpop.permute.xlu0 %5209
    %5211 = vrot.lane.b32.xlu0 %v559, 64
    %v5212 = vpop.permute.xlu0 %5211
    %5213 = vrot.lane.b32.xlu0 %v560, 64
    %v5214 = vpop.permute.xlu0 %5213
    %5215 = vrot.lane.b32.xlu0 %v561, 64
    %v5216 = vpop.permute.xlu0 %5215
    %5217 = vrot.lane.b32.xlu0 %v562, 64
    %v5218 = vpop.permute.xlu0 %5217
    %5219 = vrot.lane.b32.xlu0 %v563, 64
    %v5220 = vpop.permute.xlu0 %5219
    %5221 = vrot.lane.b32.xlu0 %v564, 64
    %v5222 = vpop.permute.xlu0 %5221
    %5223 = vrot.lane.b32.xlu0 %v565, 64
    %v5224 = vpop.permute.xlu0 %5223
    %5225 = vrot.lane.b32.xlu0 %v566, 64
    %v5226 = vpop.permute.xlu0 %5225
    %5227 = vrot.lane.b32.xlu0 %v567, 64
    %v5228 = vpop.permute.xlu0 %5227
    %5229 = vrot.lane.b32.xlu0 %v568, 64
    %v5230 = vpop.permute.xlu0 %5229
    %5231 = vrot.lane.b32.xlu0 %v569, 64
    %v5232 = vpop.permute.xlu0 %5231
    %5233 = vrot.lane.b32.xlu0 %v570, 64
    %v5234 = vpop.permute.xlu0 %5233
    %5235 = vrot.lane.b32.xlu0 %v571, 64
    %v5236 = vpop.permute.xlu0 %5235
    %5237 = vrot.lane.b32.xlu0 %v572, 64
    %v5238 = vpop.permute.xlu0 %5237
    %5239 = vrot.lane.b32.xlu0 %v573, 64
    %v5240 = vpop.permute.xlu0 %5239
    %5241 = vrot.lane.b32.xlu0 %v574, 64
    %v5242 = vpop.permute.xlu0 %5241
    %5243 = vrot.lane.b32.xlu0 %v575, 64
    %v5244 = vpop.permute.xlu0 %5243
    %5245 = vrot.lane.b32.xlu0 %v576, 64
    %v5246 = vpop.permute.xlu0 %5245
    %5247 = vrot.lane.b32.xlu0 %v577, 64
    %v5248 = vpop.permute.xlu0 %5247
    %5249 = vrot.lane.b32.xlu0 %v578, 64
    %v5250 = vpop.permute.xlu0 %5249
    %5251 = vrot.lane.b32.xlu0 %v579, 64
    %v5252 = vpop.permute.xlu0 %5251
    %5253 = vrot.lane.b32.xlu0 %v580, 64
    %v5254 = vpop.permute.xlu0 %5253
    %5255 = vrot.lane.b32.xlu0 %v581, 64
    %v5256 = vpop.permute.xlu0 %5255
    %5257 = vrot.lane.b32.xlu0 %v582, 64
    %v5258 = vpop.permute.xlu0 %5257
    %5259 = vrot.lane.b32.xlu0 %v583, 64
    %v5260 = vpop.permute.xlu0 %5259
    %5261 = vrot.lane.b32.xlu0 %v584, 64
    %v5262 = vpop.permute.xlu0 %5261
    %5263 = vrot.lane.b32.xlu0 %v585, 64
    %v5264 = vpop.permute.xlu0 %5263
    %5265 = vrot.lane.b32.xlu0 %v586, 64
    %v5266 = vpop.permute.xlu0 %5265
    %5267 = vrot.lane.b32.xlu0 %v587, 64
    %v5268 = vpop.permute.xlu0 %5267
    %5269 = vrot.lane.b32.xlu0 %v588, 64
    %v5270 = vpop.permute.xlu0 %5269
    %5271 = vrot.lane.b32.xlu0 %v589, 64
    %v5272 = vpop.permute.xlu0 %5271
    %5273 = vrot.lane.b32.xlu0 %v590, 64
    %v5274 = vpop.permute.xlu0 %5273
    %5275 = vrot.lane.b32.xlu0 %v591, 64
    %v5276 = vpop.permute.xlu0 %5275
    %5277 = vrot.lane.b32.xlu0 %v592, 64
    %v5278 = vpop.permute.xlu0 %5277
    %5279 = vrot.lane.b32.xlu0 %v593, 64
    %v5280 = vpop.permute.xlu0 %5279
    %5281 = vrot.lane.b32.xlu0 %v594, 64
    %v5282 = vpop.permute.xlu0 %5281
    %5283 = vrot.lane.b32.xlu0 %v595, 64
    %v5284 = vpop.permute.xlu0 %5283
    %5285 = vrot.lane.b32.xlu0 %v596, 64
    %v5286 = vpop.permute.xlu0 %5285
    %5287 = vrot.lane.b32.xlu0 %v597, 64
    %v5288 = vpop.permute.xlu0 %5287
    %5289 = vrot.lane.b32.xlu0 %v598, 64
    %v5290 = vpop.permute.xlu0 %5289
    %5291 = vrot.lane.b32.xlu0 %v599, 64
    %v5292 = vpop.permute.xlu0 %5291
    %5293 = vrot.lane.b32.xlu0 %v600, 64
    %v5294 = vpop.permute.xlu0 %5293
    %5295 = vrot.lane.b32.xlu0 %v601, 64
    %v5296 = vpop.permute.xlu0 %5295
    %5297 = vrot.lane.b32.xlu0 %v602, 64
    %v5298 = vpop.permute.xlu0 %5297
    %5299 = vrot.lane.b32.xlu0 %v603, 64
    %v5300 = vpop.permute.xlu0 %5299
    %5301 = vrot.lane.b32.xlu0 %v604, 64
    %v5302 = vpop.permute.xlu0 %5301
    %5303 = vrot.lane.b32.xlu0 %v605, 64
    %v5304 = vpop.permute.xlu0 %5303
    %5305 = vrot.lane.b32.xlu0 %v606, 64
    %v5306 = vpop.permute.xlu0 %5305
    %5307 = vrot.lane.b32.xlu0 %v607, 64
    %v5308 = vpop.permute.xlu0 %5307
    %5309 = vrot.lane.b32.xlu0 %v608, 64
    %v5310 = vpop.permute.xlu0 %5309
    %5311 = vrot.lane.b32.xlu0 %v609, 64
    %v5312 = vpop.permute.xlu0 %5311
    %5313 = vrot.lane.b32.xlu0 %v610, 64
    %v5314 = vpop.permute.xlu0 %5313
    %5315 = vrot.lane.b32.xlu0 %v611, 64
    %v5316 = vpop.permute.xlu0 %5315
    %5317 = vrot.lane.b32.xlu0 %v612, 64
    %v5318 = vpop.permute.xlu0 %5317
    %5319 = vrot.lane.b32.xlu0 %v613, 64
    %v5320 = vpop.permute.xlu0 %5319
    %5321 = vrot.lane.b32.xlu0 %v614, 64
    %v5322 = vpop.permute.xlu0 %5321
    %5323 = vrot.lane.b32.xlu0 %v615, 64
    %v5324 = vpop.permute.xlu0 %5323
    %5325 = vrot.lane.b32.xlu0 %v616, 64
    %v5326 = vpop.permute.xlu0 %5325
    %5327 = vrot.lane.b32.xlu0 %v617, 64
    %v5328 = vpop.permute.xlu0 %5327
    %5329 = vrot.lane.b32.xlu0 %v618, 64
    %v5330 = vpop.permute.xlu0 %5329
    %5331 = vrot.lane.b32.xlu0 %v619, 64
    %v5332 = vpop.permute.xlu0 %5331
    %5333 = vrot.lane.b32.xlu0 %v620, 64
    %v5334 = vpop.permute.xlu0 %5333
    %5335 = vrot.lane.b32.xlu0 %v621, 64
    %v5336 = vpop.permute.xlu0 %5335
    %5337 = vrot.lane.b32.xlu0 %v622, 64
    %v5338 = vpop.permute.xlu0 %5337
    %5339 = vrot.lane.b32.xlu0 %v623, 64
    %v5340 = vpop.permute.xlu0 %5339
    %5341 = vrot.lane.b32.xlu0 %v624, 64
    %v5342 = vpop.permute.xlu0 %5341
    %5343 = vrot.lane.b32.xlu0 %v625, 64
    %v5344 = vpop.permute.xlu0 %5343
    %5345 = vrot.lane.b32.xlu0 %v626, 64
    %v5346 = vpop.permute.xlu0 %5345
    %5347 = vrot.lane.b32.xlu0 %v627, 64
    %v5348 = vpop.permute.xlu0 %5347
    %5349 = vrot.lane.b32.xlu0 %v628, 64
    %v5350 = vpop.permute.xlu0 %5349
    %5351 = vrot.lane.b32.xlu0 %v629, 64
    %v5352 = vpop.permute.xlu0 %5351
    %5353 = vrot.lane.b32.xlu0 %v630, 64
    %v5354 = vpop.permute.xlu0 %5353
    %5355 = vrot.lane.b32.xlu0 %v631, 64
    %v5356 = vpop.permute.xlu0 %5355
    %5357 = vrot.lane.b32.xlu0 %v632, 64
    %v5358 = vpop.permute.xlu0 %5357
    %5359 = vrot.lane.b32.xlu0 %v633, 64
    %v5360 = vpop.permute.xlu0 %5359
    %5361 = vrot.lane.b32.xlu0 %v634, 64
    %v5362 = vpop.permute.xlu0 %5361
    %5363 = vrot.lane.b32.xlu0 %v635, 64
    %v5364 = vpop.permute.xlu0 %5363
    %5365 = vrot.lane.b32.xlu0 %v636, 64
    %v5366 = vpop.permute.xlu0 %5365
    %5367 = vrot.lane.b32.xlu0 %v637, 64
    %v5368 = vpop.permute.xlu0 %5367
    %5369 = vrot.lane.b32.xlu0 %v638, 64
    %v5370 = vpop.permute.xlu0 %5369
    %5371 = vrot.lane.b32.xlu0 %v639, 64
    %v5372 = vpop.permute.xlu0 %5371
    %5373 = vrot.lane.b32.xlu0 %v640, 64
    %v5374 = vpop.permute.xlu0 %5373
    %5375 = vrot.lane.b32.xlu0 %v641, 64
    %v5376 = vpop.permute.xlu0 %5375
    %5377 = vrot.lane.b32.xlu0 %v642, 64
    %v5378 = vpop.permute.xlu0 %5377
    %5379 = vrot.lane.b32.xlu0 %v643, 64
    %v5380 = vpop.permute.xlu0 %5379
    %5381 = vrot.lane.b32.xlu0 %v644, 64
    %v5382 = vpop.permute.xlu0 %5381
    %5383 = vrot.lane.b32.xlu0 %v645, 64
    %v5384 = vpop.permute.xlu0 %5383
    %5385 = vrot.lane.b32.xlu0 %v646, 64
    %v5386 = vpop.permute.xlu0 %5385
    %5387 = vrot.lane.b32.xlu0 %v647, 64
    %v5388 = vpop.permute.xlu0 %5387
    %5389 = vrot.lane.b32.xlu0 %v648, 64
    %v5390 = vpop.permute.xlu0 %5389
    %5391 = vrot.lane.b32.xlu0 %v649, 64
    %v5392 = vpop.permute.xlu0 %5391
    %5393 = vrot.lane.b32.xlu0 %v650, 64
    %v5394 = vpop.permute.xlu0 %5393
    %5395 = vrot.lane.b32.xlu0 %v651, 64
    %v5396 = vpop.permute.xlu0 %5395
    %5397 = vrot.lane.b32.xlu0 %v652, 64
    %v5398 = vpop.permute.xlu0 %5397
    %5399 = vrot.lane.b32.xlu0 %v653, 64
    %v5400 = vpop.permute.xlu0 %5399
    %5401 = vrot.lane.b32.xlu0 %v654, 64
    %v5402 = vpop.permute.xlu0 %5401
    %5403 = vrot.lane.b32.xlu0 %v655, 64
    %v5404 = vpop.permute.xlu0 %5403
    %5405 = vrot.lane.b32.xlu0 %v656, 64
    %v5406 = vpop.permute.xlu0 %5405
    %5407 = vrot.lane.b32.xlu0 %v657, 64
    %v5408 = vpop.permute.xlu0 %5407
    %5409 = vrot.lane.b32.xlu0 %v658, 64
    %v5410 = vpop.permute.xlu0 %5409
    %5411 = vrot.lane.b32.xlu0 %v659, 64
    %v5412 = vpop.permute.xlu0 %5411
    %5413 = vrot.lane.b32.xlu0 %v660, 64
    %v5414 = vpop.permute.xlu0 %5413
    %5415 = vrot.lane.b32.xlu0 %v661, 64
    %v5416 = vpop.permute.xlu0 %5415
    %5417 = vrot.lane.b32.xlu0 %v662, 64
    %v5418 = vpop.permute.xlu0 %5417
    %5419 = vrot.lane.b32.xlu0 %v663, 64
    %v5420 = vpop.permute.xlu0 %5419
    %5421 = vrot.lane.b32.xlu0 %v664, 64
    %v5422 = vpop.permute.xlu0 %5421
    %5423 = vrot.lane.b32.xlu0 %v665, 64
    %v5424 = vpop.permute.xlu0 %5423
    %5425 = vrot.lane.b32.xlu0 %v666, 64
    %v5426 = vpop.permute.xlu0 %5425
    %5427 = vrot.lane.b32.xlu0 %v667, 64
    %v5428 = vpop.permute.xlu0 %5427
    %5429 = vrot.lane.b32.xlu0 %v668, 64
    %v5430 = vpop.permute.xlu0 %5429
    %5431 = vrot.lane.b32.xlu0 %v669, 64
    %v5432 = vpop.permute.xlu0 %5431
    %5433 = vrot.lane.b32.xlu0 %v670, 64
    %v5434 = vpop.permute.xlu0 %5433
    %5435 = vrot.lane.b32.xlu0 %v671, 64
    %v5436 = vpop.permute.xlu0 %5435
    %5437 = vrot.lane.b32.xlu0 %v672, 64
    %v5438 = vpop.permute.xlu0 %5437
    %5439 = vrot.lane.b32.xlu0 %v673, 64
    %v5440 = vpop.permute.xlu0 %5439
    %5441 = vrot.lane.b32.xlu0 %v674, 64
    %v5442 = vpop.permute.xlu0 %5441
    %5443 = vrot.lane.b32.xlu0 %v675, 64
    %v5444 = vpop.permute.xlu0 %5443
    %5445 = vrot.lane.b32.xlu0 %v676, 64
    %v5446 = vpop.permute.xlu0 %5445
    %5447 = vrot.lane.b32.xlu0 %v677, 64
    %v5448 = vpop.permute.xlu0 %5447
    %5449 = vrot.lane.b32.xlu0 %v678, 64
    %v5450 = vpop.permute.xlu0 %5449
    %5451 = vrot.lane.b32.xlu0 %v679, 64
    %v5452 = vpop.permute.xlu0 %5451
    %5453 = vrot.lane.b32.xlu0 %v680, 64
    %v5454 = vpop.permute.xlu0 %5453
    %5455 = vrot.lane.b32.xlu0 %v681, 64
    %v5456 = vpop.permute.xlu0 %5455
    %5457 = vrot.lane.b32.xlu0 %v682, 64
    %v5458 = vpop.permute.xlu0 %5457
    %5459 = vrot.lane.b32.xlu0 %v683, 64
    %v5460 = vpop.permute.xlu0 %5459
    %5461 = vrot.lane.b32.xlu0 %v684, 64
    %v5462 = vpop.permute.xlu0 %5461
    %5463 = vrot.lane.b32.xlu0 %v685, 64
    %v5464 = vpop.permute.xlu0 %5463
    %5465 = vrot.lane.b32.xlu0 %v686, 64
    %v5466 = vpop.permute.xlu0 %5465
    %5467 = vrot.lane.b32.xlu0 %v687, 64
    %v5468 = vpop.permute.xlu0 %5467
    %5469 = vrot.lane.b32.xlu0 %v688, 64
    %v5470 = vpop.permute.xlu0 %5469
    %5471 = vrot.lane.b32.xlu0 %v689, 64
    %v5472 = vpop.permute.xlu0 %5471
    %5473 = vrot.lane.b32.xlu0 %v690, 64
    %v5474 = vpop.permute.xlu0 %5473
    %5475 = vrot.lane.b32.xlu0 %v691, 64
    %v5476 = vpop.permute.xlu0 %5475
    %5477 = vrot.lane.b32.xlu0 %v692, 64
    %v5478 = vpop.permute.xlu0 %5477
    %5479 = vrot.lane.b32.xlu0 %v693, 64
    %v5480 = vpop.permute.xlu0 %5479
    %5481 = vrot.lane.b32.xlu0 %v694, 64
    %v5482 = vpop.permute.xlu0 %5481
    %5483 = vrot.lane.b32.xlu0 %v695, 64
    %v5484 = vpop.permute.xlu0 %5483
    %5485 = vrot.lane.b32.xlu0 %v696, 64
    %v5486 = vpop.permute.xlu0 %5485
    %5487 = vrot.lane.b32.xlu0 %v697, 64
    %v5488 = vpop.permute.xlu0 %5487
    %5489 = vrot.lane.b32.xlu0 %v698, 64
    %v5490 = vpop.permute.xlu0 %5489
    %5491 = vrot.lane.b32.xlu0 %v699, 64
    %v5492 = vpop.permute.xlu0 %5491
    %5493 = vrot.lane.b32.xlu0 %v700, 64
    %v5494 = vpop.permute.xlu0 %5493
    %5495 = vrot.lane.b32.xlu0 %v701, 64
    %v5496 = vpop.permute.xlu0 %5495
    %5497 = vrot.lane.b32.xlu0 %v702, 64
    %v5498 = vpop.permute.xlu0 %5497
    %5499 = vrot.lane.b32.xlu0 %v703, 64
    %v5500 = vpop.permute.xlu0 %5499
    %5501 = vrot.lane.b32.xlu0 %v704, 64
    %v5502 = vpop.permute.xlu0 %5501
    %5503 = vrot.lane.b32.xlu0 %v705, 64
    %v5504 = vpop.permute.xlu0 %5503
    %5505 = vrot.lane.b32.xlu0 %v706, 64
    %v5506 = vpop.permute.xlu0 %5505
    %5507 = vrot.lane.b32.xlu0 %v707, 64
    %v5508 = vpop.permute.xlu0 %5507
    %5509 = vrot.lane.b32.xlu0 %v708, 64
    %v5510 = vpop.permute.xlu0 %5509
    %5511 = vrot.lane.b32.xlu0 %v709, 64
    %v5512 = vpop.permute.xlu0 %5511
    %5513 = vrot.lane.b32.xlu0 %v710, 64
    %v5514 = vpop.permute.xlu0 %5513
    %5515 = vrot.lane.b32.xlu0 %v711, 64
    %v5516 = vpop.permute.xlu0 %5515
    %5517 = vrot.lane.b32.xlu0 %v712, 64
    %v5518 = vpop.permute.xlu0 %5517
    %5519 = vrot.lane.b32.xlu0 %v713, 64
    %v5520 = vpop.permute.xlu0 %5519
    %5521 = vrot.lane.b32.xlu0 %v714, 64
    %v5522 = vpop.permute.xlu0 %5521
    %5523 = vrot.lane.b32.xlu0 %v715, 64
    %v5524 = vpop.permute.xlu0 %5523
    %5525 = vrot.lane.b32.xlu0 %v716, 64
    %v5526 = vpop.permute.xlu0 %5525
    %5527 = vrot.lane.b32.xlu0 %v717, 64
    %v5528 = vpop.permute.xlu0 %5527
    %5529 = vrot.lane.b32.xlu0 %v718, 64
    %v5530 = vpop.permute.xlu0 %5529
    %5531 = vrot.lane.b32.xlu0 %v719, 64
    %v5532 = vpop.permute.xlu0 %5531
    %5533 = vrot.lane.b32.xlu0 %v720, 64
    %v5534 = vpop.permute.xlu0 %5533
    %5535 = vrot.lane.b32.xlu0 %v721, 64
    %v5536 = vpop.permute.xlu0 %5535
    %5537 = vrot.lane.b32.xlu0 %v722, 64
    %v5538 = vpop.permute.xlu0 %5537
    %5539 = vrot.lane.b32.xlu0 %v723, 64
    %v5540 = vpop.permute.xlu0 %5539
    %v5861 = vsel %vm724, %v4902, 0.0
    %5862 = vadd.xlane.f32.xlu0 %v5861
    %v5863 = vpop.xlane.xlu0 %5862
    %v5864 = vsel %vm724, %v4904, 0.0
    %5865 = vadd.xlane.f32.xlu0 %v5864
    %v5866 = vpop.xlane.xlu0 %5865
    %v5867 = vsel %vm724, %v4906, 0.0
    %5868 = vadd.xlane.f32.xlu0 %v5867
    %v5869 = vpop.xlane.xlu0 %5868
    %v5870 = vsel %vm724, %v4908, 0.0
    %5871 = vadd.xlane.f32.xlu0 %v5870
    %v5872 = vpop.xlane.xlu0 %5871
    %v5873 = vsel %vm724, %v4910, 0.0
    %5874 = vadd.xlane.f32.xlu0 %v5873
    %v5875 = vpop.xlane.xlu0 %5874
    %v5876 = vsel %vm724, %v4912, 0.0
    %5877 = vadd.xlane.f32.xlu0 %v5876
    %v5878 = vpop.xlane.xlu0 %5877
    %v5879 = vsel %vm724, %v4914, 0.0
    %5880 = vadd.xlane.f32.xlu0 %v5879
    %v5881 = vpop.xlane.xlu0 %5880
    %v5882 = vsel %vm724, %v4916, 0.0
    %5883 = vadd.xlane.f32.xlu0 %v5882
    %v5884 = vpop.xlane.xlu0 %5883
    %v5885 = vsel %vm724, %v4918, 0.0
    %5886 = vadd.xlane.f32.xlu0 %v5885
    %v5887 = vpop.xlane.xlu0 %5886
    %v5888 = vsel %vm724, %v4920, 0.0
    %5889 = vadd.xlane.f32.xlu0 %v5888
    %v5890 = vpop.xlane.xlu0 %5889
    %v5891 = vsel %vm724, %v4922, 0.0
    %5892 = vadd.xlane.f32.xlu0 %v5891
    %v5893 = vpop.xlane.xlu0 %5892
    %v5894 = vsel %vm724, %v4924, 0.0
    %5895 = vadd.xlane.f32.xlu0 %v5894
    %v5896 = vpop.xlane.xlu0 %5895
    %v5897 = vsel %vm724, %v4926, 0.0
    %5898 = vadd.xlane.f32.xlu0 %v5897
    %v5899 = vpop.xlane.xlu0 %5898
    %v5900 = vsel %vm724, %v4928, 0.0
    %5901 = vadd.xlane.f32.xlu0 %v5900
    %v5902 = vpop.xlane.xlu0 %5901
    %v5903 = vsel %vm724, %v4930, 0.0
    %5904 = vadd.xlane.f32.xlu0 %v5903
    %v5905 = vpop.xlane.xlu0 %5904
    %v5906 = vsel %vm724, %v4932, 0.0
    %5907 = vadd.xlane.f32.xlu0 %v5906
    %v5908 = vpop.xlane.xlu0 %5907
    %v5909 = vsel %vm724, %v4934, 0.0
    %5910 = vadd.xlane.f32.xlu0 %v5909
    %v5911 = vpop.xlane.xlu0 %5910
    %v5912 = vsel %vm724, %v4936, 0.0
    %5913 = vadd.xlane.f32.xlu0 %v5912
    %v5914 = vpop.xlane.xlu0 %5913
    %v5915 = vsel %vm724, %v4938, 0.0
    %5916 = vadd.xlane.f32.xlu0 %v5915
    %v5917 = vpop.xlane.xlu0 %5916
    %v5918 = vsel %vm724, %v4940, 0.0
    %5919 = vadd.xlane.f32.xlu0 %v5918
    %v5920 = vpop.xlane.xlu0 %5919
    %v5921 = vsel %vm724, %v4942, 0.0
    %5922 = vadd.xlane.f32.xlu0 %v5921
    %v5923 = vpop.xlane.xlu0 %5922
    %v5924 = vsel %vm724, %v4944, 0.0
    %5925 = vadd.xlane.f32.xlu0 %v5924
    %v5926 = vpop.xlane.xlu0 %5925
    %v5927 = vsel %vm724, %v4946, 0.0
    %5928 = vadd.xlane.f32.xlu0 %v5927
    %v5929 = vpop.xlane.xlu0 %5928
    %v5930 = vsel %vm724, %v4948, 0.0
    %5931 = vadd.xlane.f32.xlu0 %v5930
    %v5932 = vpop.xlane.xlu0 %5931
    %v5933 = vsel %vm724, %v4950, 0.0
    %5934 = vadd.xlane.f32.xlu0 %v5933
    %v5935 = vpop.xlane.xlu0 %5934
    %v5936 = vsel %vm724, %v4952, 0.0
    %5937 = vadd.xlane.f32.xlu0 %v5936
    %v5938 = vpop.xlane.xlu0 %5937
    %v5939 = vsel %vm724, %v4954, 0.0
    %5940 = vadd.xlane.f32.xlu0 %v5939
    %v5941 = vpop.xlane.xlu0 %5940
    %v5942 = vsel %vm724, %v4956, 0.0
    %5943 = vadd.xlane.f32.xlu0 %v5942
    %v5944 = vpop.xlane.xlu0 %5943
    %v5945 = vsel %vm724, %v4958, 0.0
    %5946 = vadd.xlane.f32.xlu0 %v5945
    %v5947 = vpop.xlane.xlu0 %5946
    %v5948 = vsel %vm724, %v4960, 0.0
    %5949 = vadd.xlane.f32.xlu0 %v5948
    %v5950 = vpop.xlane.xlu0 %5949
    %v5951 = vsel %vm724, %v4962, 0.0
    %5952 = vadd.xlane.f32.xlu0 %v5951
    %v5953 = vpop.xlane.xlu0 %5952
    %v5954 = vsel %vm724, %v4964, 0.0
    %5955 = vadd.xlane.f32.xlu0 %v5954
    %v5956 = vpop.xlane.xlu0 %5955
    %v5957 = vsel %vm724, %v4966, 0.0
    %5958 = vadd.xlane.f32.xlu0 %v5957
    %v5959 = vpop.xlane.xlu0 %5958
    %v5960 = vsel %vm724, %v4968, 0.0
    %5961 = vadd.xlane.f32.xlu0 %v5960
    %v5962 = vpop.xlane.xlu0 %5961
    %v5963 = vsel %vm724, %v4970, 0.0
    %5964 = vadd.xlane.f32.xlu0 %v5963
    %v5965 = vpop.xlane.xlu0 %5964
    %v5966 = vsel %vm724, %v4972, 0.0
    %5967 = vadd.xlane.f32.xlu0 %v5966
    %v5968 = vpop.xlane.xlu0 %5967
    %v5969 = vsel %vm724, %v4974, 0.0
    %5970 = vadd.xlane.f32.xlu0 %v5969
    %v5971 = vpop.xlane.xlu0 %5970
    %v5972 = vsel %vm724, %v4976, 0.0
    %5973 = vadd.xlane.f32.xlu0 %v5972
    %v5974 = vpop.xlane.xlu0 %5973
    %v5975 = vsel %vm724, %v4978, 0.0
    %5976 = vadd.xlane.f32.xlu0 %v5975
    %v5977 = vpop.xlane.xlu0 %5976
    %v5978 = vsel %vm724, %v4980, 0.0
    %5979 = vadd.xlane.f32.xlu0 %v5978
    %v5980 = vpop.xlane.xlu0 %5979
    %v5981 = vsel %vm724, %v4982, 0.0
    %5982 = vadd.xlane.f32.xlu0 %v5981
    %v5983 = vpop.xlane.xlu0 %5982
    %v5984 = vsel %vm724, %v4984, 0.0
    %5985 = vadd.xlane.f32.xlu0 %v5984
    %v5986 = vpop.xlane.xlu0 %5985
    %v5987 = vsel %vm724, %v4986, 0.0
    %5988 = vadd.xlane.f32.xlu0 %v5987
    %v5989 = vpop.xlane.xlu0 %5988
    %v5990 = vsel %vm724, %v4988, 0.0
    %5991 = vadd.xlane.f32.xlu0 %v5990
    %v5992 = vpop.xlane.xlu0 %5991
    %v5993 = vsel %vm724, %v4990, 0.0
    %5994 = vadd.xlane.f32.xlu0 %v5993
    %v5995 = vpop.xlane.xlu0 %5994
    %v5996 = vsel %vm724, %v4992, 0.0
    %5997 = vadd.xlane.f32.xlu0 %v5996
    %v5998 = vpop.xlane.xlu0 %5997
    %v5999 = vsel %vm724, %v4994, 0.0
    %6000 = vadd.xlane.f32.xlu0 %v5999
    %v6001 = vpop.xlane.xlu0 %6000
    %v6002 = vsel %vm724, %v4996, 0.0
    %6003 = vadd.xlane.f32.xlu0 %v6002
    %v6004 = vpop.xlane.xlu0 %6003
    %v6005 = vsel %vm724, %v4998, 0.0
    %6006 = vadd.xlane.f32.xlu0 %v6005
    %v6007 = vpop.xlane.xlu0 %6006
    %v6008 = vsel %vm724, %v5000, 0.0
    %6009 = vadd.xlane.f32.xlu0 %v6008
    %v6010 = vpop.xlane.xlu0 %6009
    %v6011 = vsel %vm724, %v5002, 0.0
    %6012 = vadd.xlane.f32.xlu0 %v6011
    %v6013 = vpop.xlane.xlu0 %6012
    %v6014 = vsel %vm724, %v5004, 0.0
    %6015 = vadd.xlane.f32.xlu0 %v6014
    %v6016 = vpop.xlane.xlu0 %6015
    %v6017 = vsel %vm724, %v5006, 0.0
    %6018 = vadd.xlane.f32.xlu0 %v6017
    %v6019 = vpop.xlane.xlu0 %6018
    %v6020 = vsel %vm724, %v5008, 0.0
    %6021 = vadd.xlane.f32.xlu0 %v6020
    %v6022 = vpop.xlane.xlu0 %6021
    %v6023 = vsel %vm724, %v5010, 0.0
    %6024 = vadd.xlane.f32.xlu0 %v6023
    %v6025 = vpop.xlane.xlu0 %6024
    %v6026 = vsel %vm724, %v5012, 0.0
    %6027 = vadd.xlane.f32.xlu0 %v6026
    %v6028 = vpop.xlane.xlu0 %6027
    %v6029 = vsel %vm724, %v5014, 0.0
    %6030 = vadd.xlane.f32.xlu0 %v6029
    %v6031 = vpop.xlane.xlu0 %6030
    %v6032 = vsel %vm724, %v5016, 0.0
    %6033 = vadd.xlane.f32.xlu0 %v6032
    %v6034 = vpop.xlane.xlu0 %6033
    %v6035 = vsel %vm724, %v5018, 0.0
    %6036 = vadd.xlane.f32.xlu0 %v6035
    %v6037 = vpop.xlane.xlu0 %6036
    %v6038 = vsel %vm724, %v5020, 0.0
    %6039 = vadd.xlane.f32.xlu0 %v6038
    %v6040 = vpop.xlane.xlu0 %6039
    %v6041 = vsel %vm724, %v5022, 0.0
    %6042 = vadd.xlane.f32.xlu0 %v6041
    %v6043 = vpop.xlane.xlu0 %6042
    %v6044 = vsel %vm724, %v5024, 0.0
    %6045 = vadd.xlane.f32.xlu0 %v6044
    %v6046 = vpop.xlane.xlu0 %6045
    %v6047 = vsel %vm724, %v5026, 0.0
    %6048 = vadd.xlane.f32.xlu0 %v6047
    %v6049 = vpop.xlane.xlu0 %6048
    %v6050 = vsel %vm724, %v5028, 0.0
    %6051 = vadd.xlane.f32.xlu0 %v6050
    %v6052 = vpop.xlane.xlu0 %6051
    %v6053 = vsel %vm724, %v5030, 0.0
    %6054 = vadd.xlane.f32.xlu0 %v6053
    %v6055 = vpop.xlane.xlu0 %6054
    %v6056 = vsel %vm724, %v5032, 0.0
    %6057 = vadd.xlane.f32.xlu0 %v6056
    %v6058 = vpop.xlane.xlu0 %6057
    %v6059 = vsel %vm724, %v5034, 0.0
    %6060 = vadd.xlane.f32.xlu0 %v6059
    %v6061 = vpop.xlane.xlu0 %6060
    %v6062 = vsel %vm724, %v5036, 0.0
    %6063 = vadd.xlane.f32.xlu0 %v6062
    %v6064 = vpop.xlane.xlu0 %6063
    %v6065 = vsel %vm724, %v5038, 0.0
    %6066 = vadd.xlane.f32.xlu0 %v6065
    %v6067 = vpop.xlane.xlu0 %6066
    %v6068 = vsel %vm724, %v5040, 0.0
    %6069 = vadd.xlane.f32.xlu0 %v6068
    %v6070 = vpop.xlane.xlu0 %6069
    %v6071 = vsel %vm724, %v5042, 0.0
    %6072 = vadd.xlane.f32.xlu0 %v6071
    %v6073 = vpop.xlane.xlu0 %6072
    %v6074 = vsel %vm724, %v5044, 0.0
    %6075 = vadd.xlane.f32.xlu0 %v6074
    %v6076 = vpop.xlane.xlu0 %6075
    %v6077 = vsel %vm724, %v5046, 0.0
    %6078 = vadd.xlane.f32.xlu0 %v6077
    %v6079 = vpop.xlane.xlu0 %6078
    %v6080 = vsel %vm724, %v5048, 0.0
    %6081 = vadd.xlane.f32.xlu0 %v6080
    %v6082 = vpop.xlane.xlu0 %6081
    %v6083 = vsel %vm724, %v5050, 0.0
    %6084 = vadd.xlane.f32.xlu0 %v6083
    %v6085 = vpop.xlane.xlu0 %6084
    %v6086 = vsel %vm724, %v5052, 0.0
    %6087 = vadd.xlane.f32.xlu0 %v6086
    %v6088 = vpop.xlane.xlu0 %6087
    %v6089 = vsel %vm724, %v5054, 0.0
    %6090 = vadd.xlane.f32.xlu0 %v6089
    %v6091 = vpop.xlane.xlu0 %6090
    %v6092 = vsel %vm724, %v5056, 0.0
    %6093 = vadd.xlane.f32.xlu0 %v6092
    %v6094 = vpop.xlane.xlu0 %6093
    %v6095 = vsel %vm724, %v5058, 0.0
    %6096 = vadd.xlane.f32.xlu0 %v6095
    %v6097 = vpop.xlane.xlu0 %6096
    %v6098 = vsel %vm724, %v5060, 0.0
    %6099 = vadd.xlane.f32.xlu0 %v6098
    %v6100 = vpop.xlane.xlu0 %6099
    %v6101 = vsel %vm724, %v5062, 0.0
    %6102 = vadd.xlane.f32.xlu0 %v6101
    %v6103 = vpop.xlane.xlu0 %6102
    %v6104 = vsel %vm724, %v5064, 0.0
    %6105 = vadd.xlane.f32.xlu0 %v6104
    %v6106 = vpop.xlane.xlu0 %6105
    %v6107 = vsel %vm724, %v5066, 0.0
    %6108 = vadd.xlane.f32.xlu0 %v6107
    %v6109 = vpop.xlane.xlu0 %6108
    %v6110 = vsel %vm724, %v5068, 0.0
    %6111 = vadd.xlane.f32.xlu0 %v6110
    %v6112 = vpop.xlane.xlu0 %6111
    %v6113 = vsel %vm724, %v5070, 0.0
    %6114 = vadd.xlane.f32.xlu0 %v6113
    %v6115 = vpop.xlane.xlu0 %6114
    %v6116 = vsel %vm724, %v5072, 0.0
    %6117 = vadd.xlane.f32.xlu0 %v6116
    %v6118 = vpop.xlane.xlu0 %6117
    %v6119 = vsel %vm724, %v5074, 0.0
    %6120 = vadd.xlane.f32.xlu0 %v6119
    %v6121 = vpop.xlane.xlu0 %6120
    %v6122 = vsel %vm724, %v5076, 0.0
    %6123 = vadd.xlane.f32.xlu0 %v6122
    %v6124 = vpop.xlane.xlu0 %6123
    %v6125 = vsel %vm724, %v5078, 0.0
    %6126 = vadd.xlane.f32.xlu0 %v6125
    %v6127 = vpop.xlane.xlu0 %6126
    %v6128 = vsel %vm724, %v5080, 0.0
    %6129 = vadd.xlane.f32.xlu0 %v6128
    %v6130 = vpop.xlane.xlu0 %6129
    %v6131 = vsel %vm724, %v5082, 0.0
    %6132 = vadd.xlane.f32.xlu0 %v6131
    %v6133 = vpop.xlane.xlu0 %6132
    %v6134 = vsel %vm724, %v5084, 0.0
    %6135 = vadd.xlane.f32.xlu0 %v6134
    %v6136 = vpop.xlane.xlu0 %6135
    %v6137 = vsel %vm724, %v5086, 0.0
    %6138 = vadd.xlane.f32.xlu0 %v6137
    %v6139 = vpop.xlane.xlu0 %6138
    %v6140 = vsel %vm724, %v5088, 0.0
    %6141 = vadd.xlane.f32.xlu0 %v6140
    %v6142 = vpop.xlane.xlu0 %6141
    %v6143 = vsel %vm724, %v5090, 0.0
    %6144 = vadd.xlane.f32.xlu0 %v6143
    %v6145 = vpop.xlane.xlu0 %6144
    %v6146 = vsel %vm724, %v5092, 0.0
    %6147 = vadd.xlane.f32.xlu0 %v6146
    %v6148 = vpop.xlane.xlu0 %6147
    %v6149 = vsel %vm724, %v5094, 0.0
    %6150 = vadd.xlane.f32.xlu0 %v6149
    %v6151 = vpop.xlane.xlu0 %6150
    %v6152 = vsel %vm724, %v5096, 0.0
    %6153 = vadd.xlane.f32.xlu0 %v6152
    %v6154 = vpop.xlane.xlu0 %6153
    %v6155 = vsel %vm724, %v5098, 0.0
    %6156 = vadd.xlane.f32.xlu0 %v6155
    %v6157 = vpop.xlane.xlu0 %6156
    %v6158 = vsel %vm724, %v5100, 0.0
    %6159 = vadd.xlane.f32.xlu0 %v6158
    %v6160 = vpop.xlane.xlu0 %6159
    %v6161 = vsel %vm724, %v5102, 0.0
    %6162 = vadd.xlane.f32.xlu0 %v6161
    %v6163 = vpop.xlane.xlu0 %6162
    %v6164 = vsel %vm724, %v5104, 0.0
    %6165 = vadd.xlane.f32.xlu0 %v6164
    %v6166 = vpop.xlane.xlu0 %6165
    %v6167 = vsel %vm724, %v5106, 0.0
    %6168 = vadd.xlane.f32.xlu0 %v6167
    %v6169 = vpop.xlane.xlu0 %6168
    %v6170 = vsel %vm724, %v5108, 0.0
    %6171 = vadd.xlane.f32.xlu0 %v6170
    %v6172 = vpop.xlane.xlu0 %6171
    %v6173 = vsel %vm724, %v5110, 0.0
    %6174 = vadd.xlane.f32.xlu0 %v6173
    %v6175 = vpop.xlane.xlu0 %6174
    %v6176 = vsel %vm724, %v5112, 0.0
    %6177 = vadd.xlane.f32.xlu0 %v6176
    %v6178 = vpop.xlane.xlu0 %6177
    %v6179 = vsel %vm724, %v5114, 0.0
    %6180 = vadd.xlane.f32.xlu0 %v6179
    %v6181 = vpop.xlane.xlu0 %6180
    %v6182 = vsel %vm724, %v5116, 0.0
    %6183 = vadd.xlane.f32.xlu0 %v6182
    %v6184 = vpop.xlane.xlu0 %6183
    %v6185 = vsel %vm724, %v5118, 0.0
    %6186 = vadd.xlane.f32.xlu0 %v6185
    %v6187 = vpop.xlane.xlu0 %6186
    %v6188 = vsel %vm724, %v5120, 0.0
    %6189 = vadd.xlane.f32.xlu0 %v6188
    %v6190 = vpop.xlane.xlu0 %6189
    %v6191 = vsel %vm724, %v5122, 0.0
    %6192 = vadd.xlane.f32.xlu0 %v6191
    %v6193 = vpop.xlane.xlu0 %6192
    %v6194 = vsel %vm724, %v5124, 0.0
    %6195 = vadd.xlane.f32.xlu0 %v6194
    %v6196 = vpop.xlane.xlu0 %6195
    %v6197 = vsel %vm724, %v5126, 0.0
    %6198 = vadd.xlane.f32.xlu0 %v6197
    %v6199 = vpop.xlane.xlu0 %6198
    %v6200 = vsel %vm724, %v5128, 0.0
    %6201 = vadd.xlane.f32.xlu0 %v6200
    %v6202 = vpop.xlane.xlu0 %6201
    %v6203 = vsel %vm724, %v5130, 0.0
    %6204 = vadd.xlane.f32.xlu0 %v6203
    %v6205 = vpop.xlane.xlu0 %6204
    %v6206 = vsel %vm724, %v5132, 0.0
    %6207 = vadd.xlane.f32.xlu0 %v6206
    %v6208 = vpop.xlane.xlu0 %6207
    %v6209 = vsel %vm724, %v5134, 0.0
    %6210 = vadd.xlane.f32.xlu0 %v6209
    %v6211 = vpop.xlane.xlu0 %6210
    %v6212 = vsel %vm724, %v5136, 0.0
    %6213 = vadd.xlane.f32.xlu0 %v6212
    %v6214 = vpop.xlane.xlu0 %6213
    %v6215 = vsel %vm724, %v5138, 0.0
    %6216 = vadd.xlane.f32.xlu0 %v6215
    %v6217 = vpop.xlane.xlu0 %6216
    %v6218 = vsel %vm724, %v5140, 0.0
    %6219 = vadd.xlane.f32.xlu0 %v6218
    %v6220 = vpop.xlane.xlu0 %6219
    %v6221 = vsel %vm724, %v5142, 0.0
    %6222 = vadd.xlane.f32.xlu0 %v6221
    %v6223 = vpop.xlane.xlu0 %6222
    %v6224 = vsel %vm724, %v5144, 0.0
    %6225 = vadd.xlane.f32.xlu0 %v6224
    %v6226 = vpop.xlane.xlu0 %6225
    %v6227 = vsel %vm724, %v5146, 0.0
    %6228 = vadd.xlane.f32.xlu0 %v6227
    %v6229 = vpop.xlane.xlu0 %6228
    %v6230 = vsel %vm724, %v5148, 0.0
    %6231 = vadd.xlane.f32.xlu0 %v6230
    %v6232 = vpop.xlane.xlu0 %6231
    %v6233 = vsel %vm724, %v5150, 0.0
    %6234 = vadd.xlane.f32.xlu0 %v6233
    %v6235 = vpop.xlane.xlu0 %6234
    %v6236 = vsel %vm724, %v5152, 0.0
    %6237 = vadd.xlane.f32.xlu0 %v6236
    %v6238 = vpop.xlane.xlu0 %6237
    %v6239 = vsel %vm724, %v5154, 0.0
    %6240 = vadd.xlane.f32.xlu0 %v6239
    %v6241 = vpop.xlane.xlu0 %6240
    %v6242 = vsel %vm724, %v5156, 0.0
    %6243 = vadd.xlane.f32.xlu0 %v6242
    %v6244 = vpop.xlane.xlu0 %6243
    %v6245 = vsel %vm724, %v5158, 0.0
    %6246 = vadd.xlane.f32.xlu0 %v6245
    %v6247 = vpop.xlane.xlu0 %6246
    %v6248 = vsel %vm724, %v5160, 0.0
    %6249 = vadd.xlane.f32.xlu0 %v6248
    %v6250 = vpop.xlane.xlu0 %6249
    %v6251 = vsel %vm724, %v5162, 0.0
    %6252 = vadd.xlane.f32.xlu0 %v6251
    %v6253 = vpop.xlane.xlu0 %6252
    %v6254 = vsel %vm724, %v5164, 0.0
    %6255 = vadd.xlane.f32.xlu0 %v6254
    %v6256 = vpop.xlane.xlu0 %6255
    %v6257 = vsel %vm724, %v5166, 0.0
    %6258 = vadd.xlane.f32.xlu0 %v6257
    %v6259 = vpop.xlane.xlu0 %6258
    %v6260 = vsel %vm724, %v5168, 0.0
    %6261 = vadd.xlane.f32.xlu0 %v6260
    %v6262 = vpop.xlane.xlu0 %6261
    %v6263 = vsel %vm724, %v5170, 0.0
    %6264 = vadd.xlane.f32.xlu0 %v6263
    %v6265 = vpop.xlane.xlu0 %6264
    %v6266 = vsel %vm724, %v5172, 0.0
    %6267 = vadd.xlane.f32.xlu0 %v6266
    %v6268 = vpop.xlane.xlu0 %6267
    %v6269 = vsel %vm724, %v5174, 0.0
    %6270 = vadd.xlane.f32.xlu0 %v6269
    %v6271 = vpop.xlane.xlu0 %6270
    %v6272 = vsel %vm724, %v5176, 0.0
    %6273 = vadd.xlane.f32.xlu0 %v6272
    %v6274 = vpop.xlane.xlu0 %6273
    %v6275 = vsel %vm724, %v5178, 0.0
    %6276 = vadd.xlane.f32.xlu0 %v6275
    %v6277 = vpop.xlane.xlu0 %6276
    %v6278 = vsel %vm724, %v5180, 0.0
    %6279 = vadd.xlane.f32.xlu0 %v6278
    %v6280 = vpop.xlane.xlu0 %6279
    %v6281 = vsel %vm724, %v5182, 0.0
    %6282 = vadd.xlane.f32.xlu0 %v6281
    %v6283 = vpop.xlane.xlu0 %6282
    %v6284 = vsel %vm724, %v5184, 0.0
    %6285 = vadd.xlane.f32.xlu0 %v6284
    %v6286 = vpop.xlane.xlu0 %6285
    %v6287 = vsel %vm724, %v5186, 0.0
    %6288 = vadd.xlane.f32.xlu0 %v6287
    %v6289 = vpop.xlane.xlu0 %6288
    %v6290 = vsel %vm724, %v5188, 0.0
    %6291 = vadd.xlane.f32.xlu0 %v6290
    %v6292 = vpop.xlane.xlu0 %6291
    %v6293 = vsel %vm724, %v5190, 0.0
    %6294 = vadd.xlane.f32.xlu0 %v6293
    %v6295 = vpop.xlane.xlu0 %6294
    %v6296 = vsel %vm724, %v5192, 0.0
    %6297 = vadd.xlane.f32.xlu0 %v6296
    %v6298 = vpop.xlane.xlu0 %6297
    %v6299 = vsel %vm724, %v5194, 0.0
    %6300 = vadd.xlane.f32.xlu0 %v6299
    %v6301 = vpop.xlane.xlu0 %6300
    %v6302 = vsel %vm724, %v5196, 0.0
    %6303 = vadd.xlane.f32.xlu0 %v6302
    %v6304 = vpop.xlane.xlu0 %6303
    %v6305 = vsel %vm724, %v5198, 0.0
    %6306 = vadd.xlane.f32.xlu0 %v6305
    %v6307 = vpop.xlane.xlu0 %6306
    %v6308 = vsel %vm724, %v5200, 0.0
    %6309 = vadd.xlane.f32.xlu0 %v6308
    %v6310 = vpop.xlane.xlu0 %6309
    %v6311 = vsel %vm724, %v5202, 0.0
    %6312 = vadd.xlane.f32.xlu0 %v6311
    %v6313 = vpop.xlane.xlu0 %6312
    %v6314 = vsel %vm724, %v5204, 0.0
    %6315 = vadd.xlane.f32.xlu0 %v6314
    %v6316 = vpop.xlane.xlu0 %6315
    %v6317 = vsel %vm724, %v5206, 0.0
    %6318 = vadd.xlane.f32.xlu0 %v6317
    %v6319 = vpop.xlane.xlu0 %6318
    %v6320 = vsel %vm724, %v5208, 0.0
    %6321 = vadd.xlane.f32.xlu0 %v6320
    %v6322 = vpop.xlane.xlu0 %6321
    %v6323 = vsel %vm724, %v5210, 0.0
    %6324 = vadd.xlane.f32.xlu0 %v6323
    %v6325 = vpop.xlane.xlu0 %6324
    %v6326 = vsel %vm724, %v5212, 0.0
    %6327 = vadd.xlane.f32.xlu0 %v6326
    %v6328 = vpop.xlane.xlu0 %6327
    %v6329 = vsel %vm724, %v5214, 0.0
    %6330 = vadd.xlane.f32.xlu0 %v6329
    %v6331 = vpop.xlane.xlu0 %6330
    %v6332 = vsel %vm724, %v5216, 0.0
    %6333 = vadd.xlane.f32.xlu0 %v6332
    %v6334 = vpop.xlane.xlu0 %6333
    %v6335 = vsel %vm724, %v5218, 0.0
    %6336 = vadd.xlane.f32.xlu0 %v6335
    %v6337 = vpop.xlane.xlu0 %6336
    %v6338 = vsel %vm724, %v5220, 0.0
    %6339 = vadd.xlane.f32.xlu0 %v6338
    %v6340 = vpop.xlane.xlu0 %6339
    %v6341 = vsel %vm724, %v5222, 0.0
    %6342 = vadd.xlane.f32.xlu0 %v6341
    %v6343 = vpop.xlane.xlu0 %6342
    %v6344 = vsel %vm724, %v5224, 0.0
    %6345 = vadd.xlane.f32.xlu0 %v6344
    %v6346 = vpop.xlane.xlu0 %6345
    %v6347 = vsel %vm724, %v5226, 0.0
    %6348 = vadd.xlane.f32.xlu0 %v6347
    %v6349 = vpop.xlane.xlu0 %6348
    %v6350 = vsel %vm724, %v5228, 0.0
    %6351 = vadd.xlane.f32.xlu0 %v6350
    %v6352 = vpop.xlane.xlu0 %6351
    %v6353 = vsel %vm724, %v5230, 0.0
    %6354 = vadd.xlane.f32.xlu0 %v6353
    %v6355 = vpop.xlane.xlu0 %6354
    %v6356 = vsel %vm724, %v5232, 0.0
    %6357 = vadd.xlane.f32.xlu0 %v6356
    %v6358 = vpop.xlane.xlu0 %6357
    %v6359 = vsel %vm724, %v5234, 0.0
    %6360 = vadd.xlane.f32.xlu0 %v6359
    %v6361 = vpop.xlane.xlu0 %6360
    %v6362 = vsel %vm724, %v5236, 0.0
    %6363 = vadd.xlane.f32.xlu0 %v6362
    %v6364 = vpop.xlane.xlu0 %6363
    %v6365 = vsel %vm724, %v5238, 0.0
    %6366 = vadd.xlane.f32.xlu0 %v6365
    %v6367 = vpop.xlane.xlu0 %6366
    %v6368 = vsel %vm724, %v5240, 0.0
    %6369 = vadd.xlane.f32.xlu0 %v6368
    %v6370 = vpop.xlane.xlu0 %6369
    %v6371 = vsel %vm724, %v5242, 0.0
    %6372 = vadd.xlane.f32.xlu0 %v6371
    %v6373 = vpop.xlane.xlu0 %6372
    %v6374 = vsel %vm724, %v5244, 0.0
    %6375 = vadd.xlane.f32.xlu0 %v6374
    %v6376 = vpop.xlane.xlu0 %6375
    %v6377 = vsel %vm724, %v5246, 0.0
    %6378 = vadd.xlane.f32.xlu0 %v6377
    %v6379 = vpop.xlane.xlu0 %6378
    %v6380 = vsel %vm724, %v5248, 0.0
    %6381 = vadd.xlane.f32.xlu0 %v6380
    %v6382 = vpop.xlane.xlu0 %6381
    %v6383 = vsel %vm724, %v5250, 0.0
    %6384 = vadd.xlane.f32.xlu0 %v6383
    %v6385 = vpop.xlane.xlu0 %6384
    %v6386 = vsel %vm724, %v5252, 0.0
    %6387 = vadd.xlane.f32.xlu0 %v6386
    %v6388 = vpop.xlane.xlu0 %6387
    %v6389 = vsel %vm724, %v5254, 0.0
    %6390 = vadd.xlane.f32.xlu0 %v6389
    %v6391 = vpop.xlane.xlu0 %6390
    %v6392 = vsel %vm724, %v5256, 0.0
    %6393 = vadd.xlane.f32.xlu0 %v6392
    %v6394 = vpop.xlane.xlu0 %6393
    %v6395 = vsel %vm724, %v5258, 0.0
    %6396 = vadd.xlane.f32.xlu0 %v6395
    %v6397 = vpop.xlane.xlu0 %6396
    %v6398 = vsel %vm724, %v5260, 0.0
    %6399 = vadd.xlane.f32.xlu0 %v6398
    %v6400 = vpop.xlane.xlu0 %6399
    %v6401 = vsel %vm724, %v5262, 0.0
    %6402 = vadd.xlane.f32.xlu0 %v6401
    %v6403 = vpop.xlane.xlu0 %6402
    %v6404 = vsel %vm724, %v5264, 0.0
    %6405 = vadd.xlane.f32.xlu0 %v6404
    %v6406 = vpop.xlane.xlu0 %6405
    %v6407 = vsel %vm724, %v5266, 0.0
    %6408 = vadd.xlane.f32.xlu0 %v6407
    %v6409 = vpop.xlane.xlu0 %6408
    %v6410 = vsel %vm724, %v5268, 0.0
    %6411 = vadd.xlane.f32.xlu0 %v6410
    %v6412 = vpop.xlane.xlu0 %6411
    %v6413 = vsel %vm724, %v5270, 0.0
    %6414 = vadd.xlane.f32.xlu0 %v6413
    %v6415 = vpop.xlane.xlu0 %6414
    %v6416 = vsel %vm724, %v5272, 0.0
    %6417 = vadd.xlane.f32.xlu0 %v6416
    %v6418 = vpop.xlane.xlu0 %6417
    %v6419 = vsel %vm724, %v5274, 0.0
    %6420 = vadd.xlane.f32.xlu0 %v6419
    %v6421 = vpop.xlane.xlu0 %6420
    %v6422 = vsel %vm724, %v5276, 0.0
    %6423 = vadd.xlane.f32.xlu0 %v6422
    %v6424 = vpop.xlane.xlu0 %6423
    %v6425 = vsel %vm724, %v5278, 0.0
    %6426 = vadd.xlane.f32.xlu0 %v6425
    %v6427 = vpop.xlane.xlu0 %6426
    %v6428 = vsel %vm724, %v5280, 0.0
    %6429 = vadd.xlane.f32.xlu0 %v6428
    %v6430 = vpop.xlane.xlu0 %6429
    %v6431 = vsel %vm724, %v5282, 0.0
    %6432 = vadd.xlane.f32.xlu0 %v6431
    %v6433 = vpop.xlane.xlu0 %6432
    %v6434 = vsel %vm724, %v5284, 0.0
    %6435 = vadd.xlane.f32.xlu0 %v6434
    %v6436 = vpop.xlane.xlu0 %6435
    %v6437 = vsel %vm724, %v5286, 0.0
    %6438 = vadd.xlane.f32.xlu0 %v6437
    %v6439 = vpop.xlane.xlu0 %6438
    %v6440 = vsel %vm724, %v5288, 0.0
    %6441 = vadd.xlane.f32.xlu0 %v6440
    %v6442 = vpop.xlane.xlu0 %6441
    %v6443 = vsel %vm724, %v5290, 0.0
    %6444 = vadd.xlane.f32.xlu0 %v6443
    %v6445 = vpop.xlane.xlu0 %6444
    %v6446 = vsel %vm724, %v5292, 0.0
    %6447 = vadd.xlane.f32.xlu0 %v6446
    %v6448 = vpop.xlane.xlu0 %6447
    %v6449 = vsel %vm724, %v5294, 0.0
    %6450 = vadd.xlane.f32.xlu0 %v6449
    %v6451 = vpop.xlane.xlu0 %6450
    %v6452 = vsel %vm724, %v5296, 0.0
    %6453 = vadd.xlane.f32.xlu0 %v6452
    %v6454 = vpop.xlane.xlu0 %6453
    %v6455 = vsel %vm724, %v5298, 0.0
    %6456 = vadd.xlane.f32.xlu0 %v6455
    %v6457 = vpop.xlane.xlu0 %6456
    %v6458 = vsel %vm724, %v5300, 0.0
    %6459 = vadd.xlane.f32.xlu0 %v6458
    %v6460 = vpop.xlane.xlu0 %6459
    %v6461 = vsel %vm724, %v5302, 0.0
    %6462 = vadd.xlane.f32.xlu0 %v6461
    %v6463 = vpop.xlane.xlu0 %6462
    %v6464 = vsel %vm724, %v5304, 0.0
    %6465 = vadd.xlane.f32.xlu0 %v6464
    %v6466 = vpop.xlane.xlu0 %6465
    %v6467 = vsel %vm724, %v5306, 0.0
    %6468 = vadd.xlane.f32.xlu0 %v6467
    %v6469 = vpop.xlane.xlu0 %6468
    %v6470 = vsel %vm724, %v5308, 0.0
    %6471 = vadd.xlane.f32.xlu0 %v6470
    %v6472 = vpop.xlane.xlu0 %6471
    %v6473 = vsel %vm724, %v5310, 0.0
    %6474 = vadd.xlane.f32.xlu0 %v6473
    %v6475 = vpop.xlane.xlu0 %6474
    %v6476 = vsel %vm724, %v5312, 0.0
    %6477 = vadd.xlane.f32.xlu0 %v6476
    %v6478 = vpop.xlane.xlu0 %6477
    %v6479 = vsel %vm724, %v5314, 0.0
    %6480 = vadd.xlane.f32.xlu0 %v6479
    %v6481 = vpop.xlane.xlu0 %6480
    %v6482 = vsel %vm724, %v5316, 0.0
    %6483 = vadd.xlane.f32.xlu0 %v6482
    %v6484 = vpop.xlane.xlu0 %6483
    %v6485 = vsel %vm724, %v5318, 0.0
    %6486 = vadd.xlane.f32.xlu0 %v6485
    %v6487 = vpop.xlane.xlu0 %6486
    %v6488 = vsel %vm724, %v5320, 0.0
    %6489 = vadd.xlane.f32.xlu0 %v6488
    %v6490 = vpop.xlane.xlu0 %6489
    %v6491 = vsel %vm724, %v5322, 0.0
    %6492 = vadd.xlane.f32.xlu0 %v6491
    %v6493 = vpop.xlane.xlu0 %6492
    %v6494 = vsel %vm724, %v5324, 0.0
    %6495 = vadd.xlane.f32.xlu0 %v6494
    %v6496 = vpop.xlane.xlu0 %6495
    %v6497 = vsel %vm724, %v5326, 0.0
    %6498 = vadd.xlane.f32.xlu0 %v6497
    %v6499 = vpop.xlane.xlu0 %6498
    %v6500 = vsel %vm724, %v5328, 0.0
    %6501 = vadd.xlane.f32.xlu0 %v6500
    %v6502 = vpop.xlane.xlu0 %6501
    %v6503 = vsel %vm724, %v5330, 0.0
    %6504 = vadd.xlane.f32.xlu0 %v6503
    %v6505 = vpop.xlane.xlu0 %6504
    %v6506 = vsel %vm724, %v5332, 0.0
    %6507 = vadd.xlane.f32.xlu0 %v6506
    %v6508 = vpop.xlane.xlu0 %6507
    %v6509 = vsel %vm724, %v5334, 0.0
    %6510 = vadd.xlane.f32.xlu0 %v6509
    %v6511 = vpop.xlane.xlu0 %6510
    %v6512 = vsel %vm724, %v5336, 0.0
    %6513 = vadd.xlane.f32.xlu0 %v6512
    %v6514 = vpop.xlane.xlu0 %6513
    %v6515 = vsel %vm724, %v5338, 0.0
    %6516 = vadd.xlane.f32.xlu0 %v6515
    %v6517 = vpop.xlane.xlu0 %6516
    %v6518 = vsel %vm724, %v5340, 0.0
    %6519 = vadd.xlane.f32.xlu0 %v6518
    %v6520 = vpop.xlane.xlu0 %6519
    %v6521 = vsel %vm724, %v5342, 0.0
    %6522 = vadd.xlane.f32.xlu0 %v6521
    %v6523 = vpop.xlane.xlu0 %6522
    %v6524 = vsel %vm724, %v5344, 0.0
    %6525 = vadd.xlane.f32.xlu0 %v6524
    %v6526 = vpop.xlane.xlu0 %6525
    %v6527 = vsel %vm724, %v5346, 0.0
    %6528 = vadd.xlane.f32.xlu0 %v6527
    %v6529 = vpop.xlane.xlu0 %6528
    %v6530 = vsel %vm724, %v5348, 0.0
    %6531 = vadd.xlane.f32.xlu0 %v6530
    %v6532 = vpop.xlane.xlu0 %6531
    %v6533 = vsel %vm724, %v5350, 0.0
    %6534 = vadd.xlane.f32.xlu0 %v6533
    %v6535 = vpop.xlane.xlu0 %6534
    %v6536 = vsel %vm724, %v5352, 0.0
    %6537 = vadd.xlane.f32.xlu0 %v6536
    %v6538 = vpop.xlane.xlu0 %6537
    %v6539 = vsel %vm724, %v5354, 0.0
    %6540 = vadd.xlane.f32.xlu0 %v6539
    %v6541 = vpop.xlane.xlu0 %6540
    %v6542 = vsel %vm724, %v5356, 0.0
    %6543 = vadd.xlane.f32.xlu0 %v6542
    %v6544 = vpop.xlane.xlu0 %6543
    %v6545 = vsel %vm724, %v5358, 0.0
    %6546 = vadd.xlane.f32.xlu0 %v6545
    %v6547 = vpop.xlane.xlu0 %6546
    %v6548 = vsel %vm724, %v5360, 0.0
    %6549 = vadd.xlane.f32.xlu0 %v6548
    %v6550 = vpop.xlane.xlu0 %6549
    %v6551 = vsel %vm724, %v5362, 0.0
    %6552 = vadd.xlane.f32.xlu0 %v6551
    %v6553 = vpop.xlane.xlu0 %6552
    %v6554 = vsel %vm724, %v5364, 0.0
    %6555 = vadd.xlane.f32.xlu0 %v6554
    %v6556 = vpop.xlane.xlu0 %6555
    %v6557 = vsel %vm724, %v5366, 0.0
    %6558 = vadd.xlane.f32.xlu0 %v6557
    %v6559 = vpop.xlane.xlu0 %6558
    %v6560 = vsel %vm724, %v5368, 0.0
    %6561 = vadd.xlane.f32.xlu0 %v6560
    %v6562 = vpop.xlane.xlu0 %6561
    %v6563 = vsel %vm724, %v5370, 0.0
    %6564 = vadd.xlane.f32.xlu0 %v6563
    %v6565 = vpop.xlane.xlu0 %6564
    %v6566 = vsel %vm724, %v5372, 0.0
    %6567 = vadd.xlane.f32.xlu0 %v6566
    %v6568 = vpop.xlane.xlu0 %6567
    %v6569 = vsel %vm724, %v5374, 0.0
    %6570 = vadd.xlane.f32.xlu0 %v6569
    %v6571 = vpop.xlane.xlu0 %6570
    %v6572 = vsel %vm724, %v5376, 0.0
    %6573 = vadd.xlane.f32.xlu0 %v6572
    %v6574 = vpop.xlane.xlu0 %6573
    %v6575 = vsel %vm724, %v5378, 0.0
    %6576 = vadd.xlane.f32.xlu0 %v6575
    %v6577 = vpop.xlane.xlu0 %6576
    %v6578 = vsel %vm724, %v5380, 0.0
    %6579 = vadd.xlane.f32.xlu0 %v6578
    %v6580 = vpop.xlane.xlu0 %6579
    %v6581 = vsel %vm724, %v5382, 0.0
    %6582 = vadd.xlane.f32.xlu0 %v6581
    %v6583 = vpop.xlane.xlu0 %6582
    %v6584 = vsel %vm724, %v5384, 0.0
    %6585 = vadd.xlane.f32.xlu0 %v6584
    %v6586 = vpop.xlane.xlu0 %6585
    %v6587 = vsel %vm724, %v5386, 0.0
    %6588 = vadd.xlane.f32.xlu0 %v6587
    %v6589 = vpop.xlane.xlu0 %6588
    %v6590 = vsel %vm724, %v5388, 0.0
    %6591 = vadd.xlane.f32.xlu0 %v6590
    %v6592 = vpop.xlane.xlu0 %6591
    %v6593 = vsel %vm724, %v5390, 0.0
    %6594 = vadd.xlane.f32.xlu0 %v6593
    %v6595 = vpop.xlane.xlu0 %6594
    %v6596 = vsel %vm724, %v5392, 0.0
    %6597 = vadd.xlane.f32.xlu0 %v6596
    %v6598 = vpop.xlane.xlu0 %6597
    %v6599 = vsel %vm724, %v5394, 0.0
    %6600 = vadd.xlane.f32.xlu0 %v6599
    %v6601 = vpop.xlane.xlu0 %6600
    %v6602 = vsel %vm724, %v5396, 0.0
    %6603 = vadd.xlane.f32.xlu0 %v6602
    %v6604 = vpop.xlane.xlu0 %6603
    %v6605 = vsel %vm724, %v5398, 0.0
    %6606 = vadd.xlane.f32.xlu0 %v6605
    %v6607 = vpop.xlane.xlu0 %6606
    %v6608 = vsel %vm724, %v5400, 0.0
    %6609 = vadd.xlane.f32.xlu0 %v6608
    %v6610 = vpop.xlane.xlu0 %6609
    %v6611 = vsel %vm724, %v5402, 0.0
    %6612 = vadd.xlane.f32.xlu0 %v6611
    %v6613 = vpop.xlane.xlu0 %6612
    %v6614 = vsel %vm724, %v5404, 0.0
    %6615 = vadd.xlane.f32.xlu0 %v6614
    %v6616 = vpop.xlane.xlu0 %6615
    %v6617 = vsel %vm724, %v5406, 0.0
    %6618 = vadd.xlane.f32.xlu0 %v6617
    %v6619 = vpop.xlane.xlu0 %6618
    %v6620 = vsel %vm724, %v5408, 0.0
    %6621 = vadd.xlane.f32.xlu0 %v6620
    %v6622 = vpop.xlane.xlu0 %6621
    %v6623 = vsel %vm724, %v5410, 0.0
    %6624 = vadd.xlane.f32.xlu0 %v6623
    %v6625 = vpop.xlane.xlu0 %6624
    %v6626 = vsel %vm724, %v5412, 0.0
    %6627 = vadd.xlane.f32.xlu0 %v6626
    %v6628 = vpop.xlane.xlu0 %6627
    %v6629 = vsel %vm724, %v5414, 0.0
    %6630 = vadd.xlane.f32.xlu0 %v6629
    %v6631 = vpop.xlane.xlu0 %6630
    %v6632 = vsel %vm724, %v5416, 0.0
    %6633 = vadd.xlane.f32.xlu0 %v6632
    %v6634 = vpop.xlane.xlu0 %6633
    %v6635 = vsel %vm724, %v5418, 0.0
    %6636 = vadd.xlane.f32.xlu0 %v6635
    %v6637 = vpop.xlane.xlu0 %6636
    %v6638 = vsel %vm724, %v5420, 0.0
    %6639 = vadd.xlane.f32.xlu0 %v6638
    %v6640 = vpop.xlane.xlu0 %6639
    %v6641 = vsel %vm724, %v5422, 0.0
    %6642 = vadd.xlane.f32.xlu0 %v6641
    %v6643 = vpop.xlane.xlu0 %6642
    %v6644 = vsel %vm724, %v5424, 0.0
    %6645 = vadd.xlane.f32.xlu0 %v6644
    %v6646 = vpop.xlane.xlu0 %6645
    %v6647 = vsel %vm724, %v5426, 0.0
    %6648 = vadd.xlane.f32.xlu0 %v6647
    %v6649 = vpop.xlane.xlu0 %6648
    %v6650 = vsel %vm724, %v5428, 0.0
    %6651 = vadd.xlane.f32.xlu0 %v6650
    %v6652 = vpop.xlane.xlu0 %6651
    %v6653 = vsel %vm724, %v5430, 0.0
    %6654 = vadd.xlane.f32.xlu0 %v6653
    %v6655 = vpop.xlane.xlu0 %6654
    %v6656 = vsel %vm724, %v5432, 0.0
    %6657 = vadd.xlane.f32.xlu0 %v6656
    %v6658 = vpop.xlane.xlu0 %6657
    %v6659 = vsel %vm724, %v5434, 0.0
    %6660 = vadd.xlane.f32.xlu0 %v6659
    %v6661 = vpop.xlane.xlu0 %6660
    %v6662 = vsel %vm724, %v5436, 0.0
    %6663 = vadd.xlane.f32.xlu0 %v6662
    %v6664 = vpop.xlane.xlu0 %6663
    %v6665 = vsel %vm724, %v5438, 0.0
    %6666 = vadd.xlane.f32.xlu0 %v6665
    %v6667 = vpop.xlane.xlu0 %6666
    %v6668 = vsel %vm724, %v5440, 0.0
    %6669 = vadd.xlane.f32.xlu0 %v6668
    %v6670 = vpop.xlane.xlu0 %6669
    %v6671 = vsel %vm724, %v5442, 0.0
    %6672 = vadd.xlane.f32.xlu0 %v6671
    %v6673 = vpop.xlane.xlu0 %6672
    %v6674 = vsel %vm724, %v5444, 0.0
    %6675 = vadd.xlane.f32.xlu0 %v6674
    %v6676 = vpop.xlane.xlu0 %6675
    %v6677 = vsel %vm724, %v5446, 0.0
    %6678 = vadd.xlane.f32.xlu0 %v6677
    %v6679 = vpop.xlane.xlu0 %6678
    %v6680 = vsel %vm724, %v5448, 0.0
    %6681 = vadd.xlane.f32.xlu0 %v6680
    %v6682 = vpop.xlane.xlu0 %6681
    %v6683 = vsel %vm724, %v5450, 0.0
    %6684 = vadd.xlane.f32.xlu0 %v6683
    %v6685 = vpop.xlane.xlu0 %6684
    %v6686 = vsel %vm724, %v5452, 0.0
    %6687 = vadd.xlane.f32.xlu0 %v6686
    %v6688 = vpop.xlane.xlu0 %6687
    %v6689 = vsel %vm724, %v5454, 0.0
    %6690 = vadd.xlane.f32.xlu0 %v6689
    %v6691 = vpop.xlane.xlu0 %6690
    %v6692 = vsel %vm724, %v5456, 0.0
    %6693 = vadd.xlane.f32.xlu0 %v6692
    %v6694 = vpop.xlane.xlu0 %6693
    %v6695 = vsel %vm724, %v5458, 0.0
    %6696 = vadd.xlane.f32.xlu0 %v6695
    %v6697 = vpop.xlane.xlu0 %6696
    %v6698 = vsel %vm724, %v5460, 0.0
    %6699 = vadd.xlane.f32.xlu0 %v6698
    %v6700 = vpop.xlane.xlu0 %6699
    %v6701 = vsel %vm724, %v5462, 0.0
    %6702 = vadd.xlane.f32.xlu0 %v6701
    %v6703 = vpop.xlane.xlu0 %6702
    %v6704 = vsel %vm724, %v5464, 0.0
    %6705 = vadd.xlane.f32.xlu0 %v6704
    %v6706 = vpop.xlane.xlu0 %6705
    %v6707 = vsel %vm724, %v5466, 0.0
    %6708 = vadd.xlane.f32.xlu0 %v6707
    %v6709 = vpop.xlane.xlu0 %6708
    %v6710 = vsel %vm724, %v5468, 0.0
    %6711 = vadd.xlane.f32.xlu0 %v6710
    %v6712 = vpop.xlane.xlu0 %6711
    %v6713 = vsel %vm724, %v5470, 0.0
    %6714 = vadd.xlane.f32.xlu0 %v6713
    %v6715 = vpop.xlane.xlu0 %6714
    %v6716 = vsel %vm724, %v5472, 0.0
    %6717 = vadd.xlane.f32.xlu0 %v6716
    %v6718 = vpop.xlane.xlu0 %6717
    %v6719 = vsel %vm724, %v5474, 0.0
    %6720 = vadd.xlane.f32.xlu0 %v6719
    %v6721 = vpop.xlane.xlu0 %6720
    %v6722 = vsel %vm724, %v5476, 0.0
    %6723 = vadd.xlane.f32.xlu0 %v6722
    %v6724 = vpop.xlane.xlu0 %6723
    %v6725 = vsel %vm724, %v5478, 0.0
    %6726 = vadd.xlane.f32.xlu0 %v6725
    %v6727 = vpop.xlane.xlu0 %6726
    %v6728 = vsel %vm724, %v5480, 0.0
    %6729 = vadd.xlane.f32.xlu0 %v6728
    %v6730 = vpop.xlane.xlu0 %6729
    %v6731 = vsel %vm724, %v5482, 0.0
    %6732 = vadd.xlane.f32.xlu0 %v6731
    %v6733 = vpop.xlane.xlu0 %6732
    %v6734 = vsel %vm724, %v5484, 0.0
    %6735 = vadd.xlane.f32.xlu0 %v6734
    %v6736 = vpop.xlane.xlu0 %6735
    %v6737 = vsel %vm724, %v5486, 0.0
    %6738 = vadd.xlane.f32.xlu0 %v6737
    %v6739 = vpop.xlane.xlu0 %6738
    %v6740 = vsel %vm724, %v5488, 0.0
    %6741 = vadd.xlane.f32.xlu0 %v6740
    %v6742 = vpop.xlane.xlu0 %6741
    %v6743 = vsel %vm724, %v5490, 0.0
    %6744 = vadd.xlane.f32.xlu0 %v6743
    %v6745 = vpop.xlane.xlu0 %6744
    %v6746 = vsel %vm724, %v5492, 0.0
    %6747 = vadd.xlane.f32.xlu0 %v6746
    %v6748 = vpop.xlane.xlu0 %6747
    %v6749 = vsel %vm724, %v5494, 0.0
    %6750 = vadd.xlane.f32.xlu0 %v6749
    %v6751 = vpop.xlane.xlu0 %6750
    %v6752 = vsel %vm724, %v5496, 0.0
    %6753 = vadd.xlane.f32.xlu0 %v6752
    %v6754 = vpop.xlane.xlu0 %6753
    %v6755 = vsel %vm724, %v5498, 0.0
    %6756 = vadd.xlane.f32.xlu0 %v6755
    %v6757 = vpop.xlane.xlu0 %6756
    %v6758 = vsel %vm724, %v5500, 0.0
    %6759 = vadd.xlane.f32.xlu0 %v6758
    %v6760 = vpop.xlane.xlu0 %6759
    %v6761 = vsel %vm724, %v5502, 0.0
    %6762 = vadd.xlane.f32.xlu0 %v6761
    %v6763 = vpop.xlane.xlu0 %6762
    %v6764 = vsel %vm724, %v5504, 0.0
    %6765 = vadd.xlane.f32.xlu0 %v6764
    %v6766 = vpop.xlane.xlu0 %6765
    %v6767 = vsel %vm724, %v5506, 0.0
    %6768 = vadd.xlane.f32.xlu0 %v6767
    %v6769 = vpop.xlane.xlu0 %6768
    %v6770 = vsel %vm724, %v5508, 0.0
    %6771 = vadd.xlane.f32.xlu0 %v6770
    %v6772 = vpop.xlane.xlu0 %6771
    %v6773 = vsel %vm724, %v5510, 0.0
    %6774 = vadd.xlane.f32.xlu0 %v6773
    %v6775 = vpop.xlane.xlu0 %6774
    %v6776 = vsel %vm724, %v5512, 0.0
    %6777 = vadd.xlane.f32.xlu0 %v6776
    %v6778 = vpop.xlane.xlu0 %6777
    %v6779 = vsel %vm724, %v5514, 0.0
    %6780 = vadd.xlane.f32.xlu0 %v6779
    %v6781 = vpop.xlane.xlu0 %6780
    %v6782 = vsel %vm724, %v5516, 0.0
    %6783 = vadd.xlane.f32.xlu0 %v6782
    %v6784 = vpop.xlane.xlu0 %6783
    %v6785 = vsel %vm724, %v5518, 0.0
    %6786 = vadd.xlane.f32.xlu0 %v6785
    %v6787 = vpop.xlane.xlu0 %6786
    %v6788 = vsel %vm724, %v5520, 0.0
    %6789 = vadd.xlane.f32.xlu0 %v6788
    %v6790 = vpop.xlane.xlu0 %6789
    %v6791 = vsel %vm724, %v5522, 0.0
    %6792 = vadd.xlane.f32.xlu0 %v6791
    %v6793 = vpop.xlane.xlu0 %6792
    %v6794 = vsel %vm724, %v5524, 0.0
    %6795 = vadd.xlane.f32.xlu0 %v6794
    %v6796 = vpop.xlane.xlu0 %6795
    %v6797 = vsel %vm724, %v5526, 0.0
    %6798 = vadd.xlane.f32.xlu0 %v6797
    %v6799 = vpop.xlane.xlu0 %6798
    %v6800 = vsel %vm724, %v5528, 0.0
    %6801 = vadd.xlane.f32.xlu0 %v6800
    %v6802 = vpop.xlane.xlu0 %6801
    %v6803 = vsel %vm724, %v5530, 0.0
    %6804 = vadd.xlane.f32.xlu0 %v6803
    %v6805 = vpop.xlane.xlu0 %6804
    %v6806 = vsel %vm724, %v5532, 0.0
    %6807 = vadd.xlane.f32.xlu0 %v6806
    %v6808 = vpop.xlane.xlu0 %6807
    %v6809 = vsel %vm724, %v5534, 0.0
    %6810 = vadd.xlane.f32.xlu0 %v6809
    %v6811 = vpop.xlane.xlu0 %6810
    %v6812 = vsel %vm724, %v5536, 0.0
    %6813 = vadd.xlane.f32.xlu0 %v6812
    %v6814 = vpop.xlane.xlu0 %6813
    %v6815 = vsel %vm724, %v5538, 0.0
    %6816 = vadd.xlane.f32.xlu0 %v6815
    %v6817 = vpop.xlane.xlu0 %6816
    %v6818 = vsel %vm724, %v5540, 0.0
    %6819 = vadd.xlane.f32.xlu0 %v6818
    %v6820 = vpop.xlane.xlu0 %6819
    %v6821 = vpack.c.bf16 %v5866, %v5863
    %v6822 = vpack.c.bf16 %v5872, %v5869
    %v6823 = vpack.c.bf16 %v5878, %v5875
    %v6824 = vpack.c.bf16 %v5884, %v5881
    %v6825 = vpack.c.bf16 %v5890, %v5887
    %v6826 = vpack.c.bf16 %v5896, %v5893
    %v6827 = vpack.c.bf16 %v5902, %v5899
    %v6828 = vpack.c.bf16 %v5908, %v5905
    %v6829 = vpack.c.bf16 %v5914, %v5911
    %v6830 = vpack.c.bf16 %v5920, %v5917
    %v6831 = vpack.c.bf16 %v5926, %v5923
    %v6832 = vpack.c.bf16 %v5932, %v5929
    %v6833 = vpack.c.bf16 %v5938, %v5935
    %v6834 = vpack.c.bf16 %v5944, %v5941
    %v6835 = vpack.c.bf16 %v5950, %v5947
    %v6836 = vpack.c.bf16 %v5956, %v5953
    %v6837 = vpack.c.bf16 %v5962, %v5959
    %v6838 = vpack.c.bf16 %v5968, %v5965
    %v6839 = vpack.c.bf16 %v5974, %v5971
    %v6840 = vpack.c.bf16 %v5980, %v5977
    %v6841 = vpack.c.bf16 %v5986, %v5983
    %v6842 = vpack.c.bf16 %v5992, %v5989
    %v6843 = vpack.c.bf16 %v5998, %v5995
    %v6844 = vpack.c.bf16 %v6004, %v6001
    %v6845 = vpack.c.bf16 %v6010, %v6007
    %v6846 = vpack.c.bf16 %v6016, %v6013
    %v6847 = vpack.c.bf16 %v6022, %v6019
    %v6848 = vpack.c.bf16 %v6028, %v6025
    %v6849 = vpack.c.bf16 %v6034, %v6031
    %v6850 = vpack.c.bf16 %v6040, %v6037
    %v6851 = vpack.c.bf16 %v6046, %v6043
    %v6852 = vpack.c.bf16 %v6052, %v6049
    %v6853 = vpack.c.bf16 %v6058, %v6055
    %v6854 = vpack.c.bf16 %v6064, %v6061
    %v6855 = vpack.c.bf16 %v6070, %v6067
    %v6856 = vpack.c.bf16 %v6076, %v6073
    %v6857 = vpack.c.bf16 %v6082, %v6079
    %v6858 = vpack.c.bf16 %v6088, %v6085
    %v6859 = vpack.c.bf16 %v6094, %v6091
    %v6860 = vpack.c.bf16 %v6100, %v6097
    %v6861 = vpack.c.bf16 %v6106, %v6103
    %v6862 = vpack.c.bf16 %v6112, %v6109
    %v6863 = vpack.c.bf16 %v6118, %v6115
    %v6864 = vpack.c.bf16 %v6124, %v6121
    %v6865 = vpack.c.bf16 %v6130, %v6127
    %v6866 = vpack.c.bf16 %v6136, %v6133
    %v6867 = vpack.c.bf16 %v6142, %v6139
    %v6868 = vpack.c.bf16 %v6148, %v6145
    %v6869 = vpack.c.bf16 %v6154, %v6151
    %v6870 = vpack.c.bf16 %v6160, %v6157
    %v6871 = vpack.c.bf16 %v6166, %v6163
    %v6872 = vpack.c.bf16 %v6172, %v6169
    %v6873 = vpack.c.bf16 %v6178, %v6175
    %v6874 = vpack.c.bf16 %v6184, %v6181
    %v6875 = vpack.c.bf16 %v6190, %v6187
    %v6876 = vpack.c.bf16 %v6196, %v6193
    %v6877 = vpack.c.bf16 %v6202, %v6199
    %v6878 = vpack.c.bf16 %v6208, %v6205
    %v6879 = vpack.c.bf16 %v6214, %v6211
    %v6880 = vpack.c.bf16 %v6220, %v6217
    %v6881 = vpack.c.bf16 %v6226, %v6223
    %v6882 = vpack.c.bf16 %v6232, %v6229
    %v6883 = vpack.c.bf16 %v6238, %v6235
    %v6884 = vpack.c.bf16 %v6244, %v6241
    %v6885 = vpack.c.bf16 %v6250, %v6247
    %v6886 = vpack.c.bf16 %v6256, %v6253
    %v6887 = vpack.c.bf16 %v6262, %v6259
    %v6888 = vpack.c.bf16 %v6268, %v6265
    %v6889 = vpack.c.bf16 %v6274, %v6271
    %v6890 = vpack.c.bf16 %v6280, %v6277
    %v6891 = vpack.c.bf16 %v6286, %v6283
    %v6892 = vpack.c.bf16 %v6292, %v6289
    %v6893 = vpack.c.bf16 %v6298, %v6295
    %v6894 = vpack.c.bf16 %v6304, %v6301
    %v6895 = vpack.c.bf16 %v6310, %v6307
    %v6896 = vpack.c.bf16 %v6316, %v6313
    %v6897 = vpack.c.bf16 %v6322, %v6319
    %v6898 = vpack.c.bf16 %v6328, %v6325
    %v6899 = vpack.c.bf16 %v6334, %v6331
    %v6900 = vpack.c.bf16 %v6340, %v6337
    %v6901 = vpack.c.bf16 %v6346, %v6343
    %v6902 = vpack.c.bf16 %v6352, %v6349
    %v6903 = vpack.c.bf16 %v6358, %v6355
    %v6904 = vpack.c.bf16 %v6364, %v6361
    %v6905 = vpack.c.bf16 %v6370, %v6367
    %v6906 = vpack.c.bf16 %v6376, %v6373
    %v6907 = vpack.c.bf16 %v6382, %v6379
    %v6908 = vpack.c.bf16 %v6388, %v6385
    %v6909 = vpack.c.bf16 %v6394, %v6391
    %v6910 = vpack.c.bf16 %v6400, %v6397
    %v6911 = vpack.c.bf16 %v6406, %v6403
    %v6912 = vpack.c.bf16 %v6412, %v6409
    %v6913 = vpack.c.bf16 %v6418, %v6415
    %v6914 = vpack.c.bf16 %v6424, %v6421
    %v6915 = vpack.c.bf16 %v6430, %v6427
    %v6916 = vpack.c.bf16 %v6436, %v6433
    %v6917 = vpack.c.bf16 %v6442, %v6439
    %v6918 = vpack.c.bf16 %v6448, %v6445
    %v6919 = vpack.c.bf16 %v6454, %v6451
    %v6920 = vpack.c.bf16 %v6460, %v6457
    %v6921 = vpack.c.bf16 %v6466, %v6463
    %v6922 = vpack.c.bf16 %v6472, %v6469
    %v6923 = vpack.c.bf16 %v6478, %v6475
    %v6924 = vpack.c.bf16 %v6484, %v6481
    %v6925 = vpack.c.bf16 %v6490, %v6487
    %v6926 = vpack.c.bf16 %v6496, %v6493
    %v6927 = vpack.c.bf16 %v6502, %v6499
    %v6928 = vpack.c.bf16 %v6508, %v6505
    %v6929 = vpack.c.bf16 %v6514, %v6511
    %v6930 = vpack.c.bf16 %v6520, %v6517
    %v6931 = vpack.c.bf16 %v6526, %v6523
    %v6932 = vpack.c.bf16 %v6532, %v6529
    %v6933 = vpack.c.bf16 %v6538, %v6535
    %v6934 = vpack.c.bf16 %v6544, %v6541
    %v6935 = vpack.c.bf16 %v6550, %v6547
    %v6936 = vpack.c.bf16 %v6556, %v6553
    %v6937 = vpack.c.bf16 %v6562, %v6559
    %v6938 = vpack.c.bf16 %v6568, %v6565
    %v6939 = vpack.c.bf16 %v6574, %v6571
    %v6940 = vpack.c.bf16 %v6580, %v6577
    %v6941 = vpack.c.bf16 %v6586, %v6583
    %v6942 = vpack.c.bf16 %v6592, %v6589
    %v6943 = vpack.c.bf16 %v6598, %v6595
    %v6944 = vpack.c.bf16 %v6604, %v6601
    %v6945 = vpack.c.bf16 %v6610, %v6607
    %v6946 = vpack.c.bf16 %v6616, %v6613
    %v6947 = vpack.c.bf16 %v6622, %v6619
    %v6948 = vpack.c.bf16 %v6628, %v6625
    %v6949 = vpack.c.bf16 %v6634, %v6631
    %v6950 = vpack.c.bf16 %v6640, %v6637
    %v6951 = vpack.c.bf16 %v6646, %v6643
    %v6952 = vpack.c.bf16 %v6652, %v6649
    %v6953 = vpack.c.bf16 %v6658, %v6655
    %v6954 = vpack.c.bf16 %v6664, %v6661
    %v6955 = vpack.c.bf16 %v6670, %v6667
    %v6956 = vpack.c.bf16 %v6676, %v6673
    %v6957 = vpack.c.bf16 %v6682, %v6679
    %v6958 = vpack.c.bf16 %v6688, %v6685
    %v6959 = vpack.c.bf16 %v6694, %v6691
    %v6960 = vpack.c.bf16 %v6700, %v6697
    %v6961 = vpack.c.bf16 %v6706, %v6703
    %v6962 = vpack.c.bf16 %v6712, %v6709
    %v6963 = vpack.c.bf16 %v6718, %v6715
    %v6964 = vpack.c.bf16 %v6724, %v6721
    %v6965 = vpack.c.bf16 %v6730, %v6727
    %v6966 = vpack.c.bf16 %v6736, %v6733
    %v6967 = vpack.c.bf16 %v6742, %v6739
    %v6968 = vpack.c.bf16 %v6748, %v6745
    %v6969 = vpack.c.bf16 %v6754, %v6751
    %v6970 = vpack.c.bf16 %v6760, %v6757
    %v6971 = vpack.c.bf16 %v6766, %v6763
    %v6972 = vpack.c.bf16 %v6772, %v6769
    %v6973 = vpack.c.bf16 %v6778, %v6775
    %v6974 = vpack.c.bf16 %v6784, %v6781
    %v6975 = vpack.c.bf16 %v6790, %v6787
    %v6976 = vpack.c.bf16 %v6796, %v6793
    %v6977 = vpack.c.bf16 %v6802, %v6799
    %v6978 = vpack.c.bf16 %v6808, %v6805
    %v6979 = vpack.c.bf16 %v6814, %v6811
    %v6980 = vpack.c.bf16 %v6820, %v6817
    %s6981 = scalar_lea.vmem [#allocation5], 640
    %v6982 = vld [vmem:[%s6981] sm:$0xff]
    %v6983 = vld [vmem:[%s6981 + $0x8] sm:$0xff]
    %v6984 = vld [vmem:[%s6981 + $0x10] sm:$0xff]
    %v6985 = vld [vmem:[%s6981 + $0x18] sm:$0xff]
    %v6986 = vld [vmem:[%s6981 + $0x20] sm:$0xff]
    %v6987 = vld [vmem:[%s6981 + $0x28] sm:$0xff]
    %v6988 = vld [vmem:[%s6981 + $0x30] sm:$0xff]
    %v6989 = vld [vmem:[%s6981 + $0x38] sm:$0xff]
    %v6990 = vld [vmem:[%s6981 + $0x40] sm:$0xff]
    %v6991 = vld [vmem:[%s6981 + $0x48] sm:$0xff]
    %v6992 = vld [vmem:[%s6981 + $0x50] sm:$0xff]
    %v6993 = vld [vmem:[%s6981 + $0x58] sm:$0xff]
    %v6994 = vld [vmem:[%s6981 + $0x60] sm:$0xff]
    %v6995 = vld [vmem:[%s6981 + $0x68] sm:$0xff]
    %v6996 = vld [vmem:[%s6981 + $0x70] sm:$0xff]
    %v6997 = vld [vmem:[%s6981 + $0x78] sm:$0xff]
    %v6998 = vld [vmem:[%s6981 + $0x80] sm:$0xff]
    %v6999 = vld [vmem:[%s6981 + $0x88] sm:$0xff]
    %v7000 = vld [vmem:[%s6981 + $0x90] sm:$0xff]
    %v7001 = vld [vmem:[%s6981 + $0x98] sm:$0xff]
    %v7002 = vld [vmem:[%s6981 + $0xa0] sm:$0xff]
    %v7003 = vld [vmem:[%s6981 + $0xa8] sm:$0xff]
    %v7004 = vld [vmem:[%s6981 + $0xb0] sm:$0xff]
    %v7005 = vld [vmem:[%s6981 + $0xb8] sm:$0xff]
    %v7006 = vld [vmem:[%s6981 + $0xc0] sm:$0xff]
    %v7007 = vld [vmem:[%s6981 + $0xc8] sm:$0xff]
    %v7008 = vld [vmem:[%s6981 + $0xd0] sm:$0xff]
    %v7009 = vld [vmem:[%s6981 + $0xd8] sm:$0xff]
    %v7010 = vld [vmem:[%s6981 + $0xe0] sm:$0xff]
    %v7011 = vld [vmem:[%s6981 + $0xe8] sm:$0xff]
    %v7012 = vld [vmem:[%s6981 + $0xf0] sm:$0xff]
    %v7013 = vld [vmem:[%s6981 + $0xf8] sm:$0xff]
    %v7014 = vld [vmem:[%s6981 + $0x100] sm:$0xff]
    %v7015 = vld [vmem:[%s6981 + $0x108] sm:$0xff]
    %v7016 = vld [vmem:[%s6981 + $0x110] sm:$0xff]
    %v7017 = vld [vmem:[%s6981 + $0x118] sm:$0xff]
    %v7018 = vld [vmem:[%s6981 + $0x120] sm:$0xff]
    %v7019 = vld [vmem:[%s6981 + $0x128] sm:$0xff]
    %v7020 = vld [vmem:[%s6981 + $0x130] sm:$0xff]
    %v7021 = vld [vmem:[%s6981 + $0x138] sm:$0xff]
    %v7022 = vld [vmem:[%s6981 + $0x140] sm:$0xff]
    %v7023 = vld [vmem:[%s6981 + $0x148] sm:$0xff]
    %v7024 = vld [vmem:[%s6981 + $0x150] sm:$0xff]
    %v7025 = vld [vmem:[%s6981 + $0x158] sm:$0xff]
    %v7026 = vld [vmem:[%s6981 + $0x160] sm:$0xff]
    %v7027 = vld [vmem:[%s6981 + $0x168] sm:$0xff]
    %v7028 = vld [vmem:[%s6981 + $0x170] sm:$0xff]
    %v7029 = vld [vmem:[%s6981 + $0x178] sm:$0xff]
    %v7030 = vld [vmem:[%s6981 + $0x180] sm:$0xff]
    %v7031 = vld [vmem:[%s6981 + $0x188] sm:$0xff]
    %v7032 = vld [vmem:[%s6981 + $0x190] sm:$0xff]
    %v7033 = vld [vmem:[%s6981 + $0x198] sm:$0xff]
    %v7034 = vld [vmem:[%s6981 + $0x1a0] sm:$0xff]
    %v7035 = vld [vmem:[%s6981 + $0x1a8] sm:$0xff]
    %v7036 = vld [vmem:[%s6981 + $0x1b0] sm:$0xff]
    %v7037 = vld [vmem:[%s6981 + $0x1b8] sm:$0xff]
    %v7038 = vld [vmem:[%s6981 + $0x1c0] sm:$0xff]
    %v7039 = vld [vmem:[%s6981 + $0x1c8] sm:$0xff]
    %v7040 = vld [vmem:[%s6981 + $0x1d0] sm:$0xff]
    %v7041 = vld [vmem:[%s6981 + $0x1d8] sm:$0xff]
    %v7042 = vld [vmem:[%s6981 + $0x1e0] sm:$0xff]
    %v7043 = vld [vmem:[%s6981 + $0x1e8] sm:$0xff]
    %v7044 = vld [vmem:[%s6981 + $0x1f0] sm:$0xff]
    %v7045 = vld [vmem:[%s6981 + $0x1f8] sm:$0xff]
    %v7046 = vld [vmem:[%s6981 + $0x200] sm:$0xff]
    %v7047 = vld [vmem:[%s6981 + $0x208] sm:$0xff]
    %v7048 = vld [vmem:[%s6981 + $0x210] sm:$0xff]
    %v7049 = vld [vmem:[%s6981 + $0x218] sm:$0xff]
    %v7050 = vld [vmem:[%s6981 + $0x220] sm:$0xff]
    %v7051 = vld [vmem:[%s6981 + $0x228] sm:$0xff]
    %v7052 = vld [vmem:[%s6981 + $0x230] sm:$0xff]
    %v7053 = vld [vmem:[%s6981 + $0x238] sm:$0xff]
    %v7054 = vld [vmem:[%s6981 + $0x240] sm:$0xff]
    %v7055 = vld [vmem:[%s6981 + $0x248] sm:$0xff]
    %v7056 = vld [vmem:[%s6981 + $0x250] sm:$0xff]
    %v7057 = vld [vmem:[%s6981 + $0x258] sm:$0xff]
    %v7058 = vld [vmem:[%s6981 + $0x260] sm:$0xff]
    %v7059 = vld [vmem:[%s6981 + $0x268] sm:$0xff]
    %v7060 = vld [vmem:[%s6981 + $0x270] sm:$0xff]
    %v7061 = vld [vmem:[%s6981 + $0x278] sm:$0xff]
    %v7222 = vunpack.c.l.b16 %v6821
    %v7223 = vunpack.c.h.b16 %v6821
    %v7224 = vunpack.c.l.b16 %v6822
    %v7225 = vunpack.c.h.b16 %v6822
    %v7226 = vunpack.c.l.b16 %v6823
    %v7227 = vunpack.c.h.b16 %v6823
    %v7228 = vunpack.c.l.b16 %v6824
    %v7229 = vunpack.c.h.b16 %v6824
    %v7230 = vunpack.c.l.b16 %v6825
    %v7231 = vunpack.c.h.b16 %v6825
    %v7232 = vunpack.c.l.b16 %v6826
    %v7233 = vunpack.c.h.b16 %v6826
    %v7234 = vunpack.c.l.b16 %v6827
    %v7235 = vunpack.c.h.b16 %v6827
    %v7236 = vunpack.c.l.b16 %v6828
    %v7237 = vunpack.c.h.b16 %v6828
    %v7238 = vunpack.c.l.b16 %v6829
    %v7239 = vunpack.c.h.b16 %v6829
    %v7240 = vunpack.c.l.b16 %v6830
    %v7241 = vunpack.c.h.b16 %v6830
    %v7242 = vunpack.c.l.b16 %v6831
    %v7243 = vunpack.c.h.b16 %v6831
    %v7244 = vunpack.c.l.b16 %v6832
    %v7245 = vunpack.c.h.b16 %v6832
    %v7246 = vunpack.c.l.b16 %v6833
    %v7247 = vunpack.c.h.b16 %v6833
    %v7248 = vunpack.c.l.b16 %v6834
    %v7249 = vunpack.c.h.b16 %v6834
    %v7250 = vunpack.c.l.b16 %v6835
    %v7251 = vunpack.c.h.b16 %v6835
    %v7252 = vunpack.c.l.b16 %v6836
    %v7253 = vunpack.c.h.b16 %v6836
    %v7254 = vunpack.c.l.b16 %v6837
    %v7255 = vunpack.c.h.b16 %v6837
    %v7256 = vunpack.c.l.b16 %v6838
    %v7257 = vunpack.c.h.b16 %v6838
    %v7258 = vunpack.c.l.b16 %v6839
    %v7259 = vunpack.c.h.b16 %v6839
    %v7260 = vunpack.c.l.b16 %v6840
    %v7261 = vunpack.c.h.b16 %v6840
    %v7262 = vunpack.c.l.b16 %v6841
    %v7263 = vunpack.c.h.b16 %v6841
    %v7264 = vunpack.c.l.b16 %v6842
    %v7265 = vunpack.c.h.b16 %v6842
    %v7266 = vunpack.c.l.b16 %v6843
    %v7267 = vunpack.c.h.b16 %v6843
    %v7268 = vunpack.c.l.b16 %v6844
    %v7269 = vunpack.c.h.b16 %v6844
    %v7270 = vunpack.c.l.b16 %v6845
    %v7271 = vunpack.c.h.b16 %v6845
    %v7272 = vunpack.c.l.b16 %v6846
    %v7273 = vunpack.c.h.b16 %v6846
    %v7274 = vunpack.c.l.b16 %v6847
    %v7275 = vunpack.c.h.b16 %v6847
    %v7276 = vunpack.c.l.b16 %v6848
    %v7277 = vunpack.c.h.b16 %v6848
    %v7278 = vunpack.c.l.b16 %v6849
    %v7279 = vunpack.c.h.b16 %v6849
    %v7280 = vunpack.c.l.b16 %v6850
    %v7281 = vunpack.c.h.b16 %v6850
    %v7282 = vunpack.c.l.b16 %v6851
    %v7283 = vunpack.c.h.b16 %v6851
    %v7284 = vunpack.c.l.b16 %v6852
    %v7285 = vunpack.c.h.b16 %v6852
    %v7286 = vunpack.c.l.b16 %v6853
    %v7287 = vunpack.c.h.b16 %v6853
    %v7288 = vunpack.c.l.b16 %v6854
    %v7289 = vunpack.c.h.b16 %v6854
    %v7290 = vunpack.c.l.b16 %v6855
    %v7291 = vunpack.c.h.b16 %v6855
    %v7292 = vunpack.c.l.b16 %v6856
    %v7293 = vunpack.c.h.b16 %v6856
    %v7294 = vunpack.c.l.b16 %v6857
    %v7295 = vunpack.c.h.b16 %v6857
    %v7296 = vunpack.c.l.b16 %v6858
    %v7297 = vunpack.c.h.b16 %v6858
    %v7298 = vunpack.c.l.b16 %v6859
    %v7299 = vunpack.c.h.b16 %v6859
    %v7300 = vunpack.c.l.b16 %v6860
    %v7301 = vunpack.c.h.b16 %v6860
    %v7302 = vunpack.c.l.b16 %v6861
    %v7303 = vunpack.c.h.b16 %v6861
    %v7304 = vunpack.c.l.b16 %v6862
    %v7305 = vunpack.c.h.b16 %v6862
    %v7306 = vunpack.c.l.b16 %v6863
    %v7307 = vunpack.c.h.b16 %v6863
    %v7308 = vunpack.c.l.b16 %v6864
    %v7309 = vunpack.c.h.b16 %v6864
    %v7310 = vunpack.c.l.b16 %v6865
    %v7311 = vunpack.c.h.b16 %v6865
    %v7312 = vunpack.c.l.b16 %v6866
    %v7313 = vunpack.c.h.b16 %v6866
    %v7314 = vunpack.c.l.b16 %v6867
    %v7315 = vunpack.c.h.b16 %v6867
    %v7316 = vunpack.c.l.b16 %v6868
    %v7317 = vunpack.c.h.b16 %v6868
    %v7318 = vunpack.c.l.b16 %v6869
    %v7319 = vunpack.c.h.b16 %v6869
    %v7320 = vunpack.c.l.b16 %v6870
    %v7321 = vunpack.c.h.b16 %v6870
    %v7322 = vunpack.c.l.b16 %v6871
    %v7323 = vunpack.c.h.b16 %v6871
    %v7324 = vunpack.c.l.b16 %v6872
    %v7325 = vunpack.c.h.b16 %v6872
    %v7326 = vunpack.c.l.b16 %v6873
    %v7327 = vunpack.c.h.b16 %v6873
    %v7328 = vunpack.c.l.b16 %v6874
    %v7329 = vunpack.c.h.b16 %v6874
    %v7330 = vunpack.c.l.b16 %v6875
    %v7331 = vunpack.c.h.b16 %v6875
    %v7332 = vunpack.c.l.b16 %v6876
    %v7333 = vunpack.c.h.b16 %v6876
    %v7334 = vunpack.c.l.b16 %v6877
    %v7335 = vunpack.c.h.b16 %v6877
    %v7336 = vunpack.c.l.b16 %v6878
    %v7337 = vunpack.c.h.b16 %v6878
    %v7338 = vunpack.c.l.b16 %v6879
    %v7339 = vunpack.c.h.b16 %v6879
    %v7340 = vunpack.c.l.b16 %v6880
    %v7341 = vunpack.c.h.b16 %v6880
    %v7342 = vunpack.c.l.b16 %v6881
    %v7343 = vunpack.c.h.b16 %v6881
    %v7344 = vunpack.c.l.b16 %v6882
    %v7345 = vunpack.c.h.b16 %v6882
    %v7346 = vunpack.c.l.b16 %v6883
    %v7347 = vunpack.c.h.b16 %v6883
    %v7348 = vunpack.c.l.b16 %v6884
    %v7349 = vunpack.c.h.b16 %v6884
    %v7350 = vunpack.c.l.b16 %v6885
    %v7351 = vunpack.c.h.b16 %v6885
    %v7352 = vunpack.c.l.b16 %v6886
    %v7353 = vunpack.c.h.b16 %v6886
    %v7354 = vunpack.c.l.b16 %v6887
    %v7355 = vunpack.c.h.b16 %v6887
    %v7356 = vunpack.c.l.b16 %v6888
    %v7357 = vunpack.c.h.b16 %v6888
    %v7358 = vunpack.c.l.b16 %v6889
    %v7359 = vunpack.c.h.b16 %v6889
    %v7360 = vunpack.c.l.b16 %v6890
    %v7361 = vunpack.c.h.b16 %v6890
    %v7362 = vunpack.c.l.b16 %v6891
    %v7363 = vunpack.c.h.b16 %v6891
    %v7364 = vunpack.c.l.b16 %v6892
    %v7365 = vunpack.c.h.b16 %v6892
    %v7366 = vunpack.c.l.b16 %v6893
    %v7367 = vunpack.c.h.b16 %v6893
    %v7368 = vunpack.c.l.b16 %v6894
    %v7369 = vunpack.c.h.b16 %v6894
    %v7370 = vunpack.c.l.b16 %v6895
    %v7371 = vunpack.c.h.b16 %v6895
    %v7372 = vunpack.c.l.b16 %v6896
    %v7373 = vunpack.c.h.b16 %v6896
    %v7374 = vunpack.c.l.b16 %v6897
    %v7375 = vunpack.c.h.b16 %v6897
    %v7376 = vunpack.c.l.b16 %v6898
    %v7377 = vunpack.c.h.b16 %v6898
    %v7378 = vunpack.c.l.b16 %v6899
    %v7379 = vunpack.c.h.b16 %v6899
    %v7380 = vunpack.c.l.b16 %v6900
    %v7381 = vunpack.c.h.b16 %v6900
    %v7382 = vunpack.c.l.b16 %v6901
    %v7383 = vunpack.c.h.b16 %v6901
    %v7384 = vunpack.c.l.b16 %v6902
    %v7385 = vunpack.c.h.b16 %v6902
    %v7386 = vunpack.c.l.b16 %v6903
    %v7387 = vunpack.c.h.b16 %v6903
    %v7388 = vunpack.c.l.b16 %v6904
    %v7389 = vunpack.c.h.b16 %v6904
    %v7390 = vunpack.c.l.b16 %v6905
    %v7391 = vunpack.c.h.b16 %v6905
    %v7392 = vunpack.c.l.b16 %v6906
    %v7393 = vunpack.c.h.b16 %v6906
    %v7394 = vunpack.c.l.b16 %v6907
    %v7395 = vunpack.c.h.b16 %v6907
    %v7396 = vunpack.c.l.b16 %v6908
    %v7397 = vunpack.c.h.b16 %v6908
    %v7398 = vunpack.c.l.b16 %v6909
    %v7399 = vunpack.c.h.b16 %v6909
    %v7400 = vunpack.c.l.b16 %v6910
    %v7401 = vunpack.c.h.b16 %v6910
    %v7402 = vunpack.c.l.b16 %v6911
    %v7403 = vunpack.c.h.b16 %v6911
    %v7404 = vunpack.c.l.b16 %v6912
    %v7405 = vunpack.c.h.b16 %v6912
    %v7406 = vunpack.c.l.b16 %v6913
    %v7407 = vunpack.c.h.b16 %v6913
    %v7408 = vunpack.c.l.b16 %v6914
    %v7409 = vunpack.c.h.b16 %v6914
    %v7410 = vunpack.c.l.b16 %v6915
    %v7411 = vunpack.c.h.b16 %v6915
    %v7412 = vunpack.c.l.b16 %v6916
    %v7413 = vunpack.c.h.b16 %v6916
    %v7414 = vunpack.c.l.b16 %v6917
    %v7415 = vunpack.c.h.b16 %v6917
    %v7416 = vunpack.c.l.b16 %v6918
    %v7417 = vunpack.c.h.b16 %v6918
    %v7418 = vunpack.c.l.b16 %v6919
    %v7419 = vunpack.c.h.b16 %v6919
    %v7420 = vunpack.c.l.b16 %v6920
    %v7421 = vunpack.c.h.b16 %v6920
    %v7422 = vunpack.c.l.b16 %v6921
    %v7423 = vunpack.c.h.b16 %v6921
    %v7424 = vunpack.c.l.b16 %v6922
    %v7425 = vunpack.c.h.b16 %v6922
    %v7426 = vunpack.c.l.b16 %v6923
    %v7427 = vunpack.c.h.b16 %v6923
    %v7428 = vunpack.c.l.b16 %v6924
    %v7429 = vunpack.c.h.b16 %v6924
    %v7430 = vunpack.c.l.b16 %v6925
    %v7431 = vunpack.c.h.b16 %v6925
    %v7432 = vunpack.c.l.b16 %v6926
    %v7433 = vunpack.c.h.b16 %v6926
    %v7434 = vunpack.c.l.b16 %v6927
    %v7435 = vunpack.c.h.b16 %v6927
    %v7436 = vunpack.c.l.b16 %v6928
    %v7437 = vunpack.c.h.b16 %v6928
    %v7438 = vunpack.c.l.b16 %v6929
    %v7439 = vunpack.c.h.b16 %v6929
    %v7440 = vunpack.c.l.b16 %v6930
    %v7441 = vunpack.c.h.b16 %v6930
    %v7442 = vunpack.c.l.b16 %v6931
    %v7443 = vunpack.c.h.b16 %v6931
    %v7444 = vunpack.c.l.b16 %v6932
    %v7445 = vunpack.c.h.b16 %v6932
    %v7446 = vunpack.c.l.b16 %v6933
    %v7447 = vunpack.c.h.b16 %v6933
    %v7448 = vunpack.c.l.b16 %v6934
    %v7449 = vunpack.c.h.b16 %v6934
    %v7450 = vunpack.c.l.b16 %v6935
    %v7451 = vunpack.c.h.b16 %v6935
    %v7452 = vunpack.c.l.b16 %v6936
    %v7453 = vunpack.c.h.b16 %v6936
    %v7454 = vunpack.c.l.b16 %v6937
    %v7455 = vunpack.c.h.b16 %v6937
    %v7456 = vunpack.c.l.b16 %v6938
    %v7457 = vunpack.c.h.b16 %v6938
    %v7458 = vunpack.c.l.b16 %v6939
    %v7459 = vunpack.c.h.b16 %v6939
    %v7460 = vunpack.c.l.b16 %v6940
    %v7461 = vunpack.c.h.b16 %v6940
    %v7462 = vunpack.c.l.b16 %v6941
    %v7463 = vunpack.c.h.b16 %v6941
    %v7464 = vunpack.c.l.b16 %v6942
    %v7465 = vunpack.c.h.b16 %v6942
    %v7466 = vunpack.c.l.b16 %v6943
    %v7467 = vunpack.c.h.b16 %v6943
    %v7468 = vunpack.c.l.b16 %v6944
    %v7469 = vunpack.c.h.b16 %v6944
    %v7470 = vunpack.c.l.b16 %v6945
    %v7471 = vunpack.c.h.b16 %v6945
    %v7472 = vunpack.c.l.b16 %v6946
    %v7473 = vunpack.c.h.b16 %v6946
    %v7474 = vunpack.c.l.b16 %v6947
    %v7475 = vunpack.c.h.b16 %v6947
    %v7476 = vunpack.c.l.b16 %v6948
    %v7477 = vunpack.c.h.b16 %v6948
    %v7478 = vunpack.c.l.b16 %v6949
    %v7479 = vunpack.c.h.b16 %v6949
    %v7480 = vunpack.c.l.b16 %v6950
    %v7481 = vunpack.c.h.b16 %v6950
    %v7482 = vunpack.c.l.b16 %v6951
    %v7483 = vunpack.c.h.b16 %v6951
    %v7484 = vunpack.c.l.b16 %v6952
    %v7485 = vunpack.c.h.b16 %v6952
    %v7486 = vunpack.c.l.b16 %v6953
    %v7487 = vunpack.c.h.b16 %v6953
    %v7488 = vunpack.c.l.b16 %v6954
    %v7489 = vunpack.c.h.b16 %v6954
    %v7490 = vunpack.c.l.b16 %v6955
    %v7491 = vunpack.c.h.b16 %v6955
    %v7492 = vunpack.c.l.b16 %v6956
    %v7493 = vunpack.c.h.b16 %v6956
    %v7494 = vunpack.c.l.b16 %v6957
    %v7495 = vunpack.c.h.b16 %v6957
    %v7496 = vunpack.c.l.b16 %v6958
    %v7497 = vunpack.c.h.b16 %v6958
    %v7498 = vunpack.c.l.b16 %v6959
    %v7499 = vunpack.c.h.b16 %v6959
    %v7500 = vunpack.c.l.b16 %v6960
    %v7501 = vunpack.c.h.b16 %v6960
    %v7502 = vunpack.c.l.b16 %v6961
    %v7503 = vunpack.c.h.b16 %v6961
    %v7504 = vunpack.c.l.b16 %v6962
    %v7505 = vunpack.c.h.b16 %v6962
    %v7506 = vunpack.c.l.b16 %v6963
    %v7507 = vunpack.c.h.b16 %v6963
    %v7508 = vunpack.c.l.b16 %v6964
    %v7509 = vunpack.c.h.b16 %v6964
    %v7510 = vunpack.c.l.b16 %v6965
    %v7511 = vunpack.c.h.b16 %v6965
    %v7512 = vunpack.c.l.b16 %v6966
    %v7513 = vunpack.c.h.b16 %v6966
    %v7514 = vunpack.c.l.b16 %v6967
    %v7515 = vunpack.c.h.b16 %v6967
    %v7516 = vunpack.c.l.b16 %v6968
    %v7517 = vunpack.c.h.b16 %v6968
    %v7518 = vunpack.c.l.b16 %v6969
    %v7519 = vunpack.c.h.b16 %v6969
    %v7520 = vunpack.c.l.b16 %v6970
    %v7521 = vunpack.c.h.b16 %v6970
    %v7522 = vunpack.c.l.b16 %v6971
    %v7523 = vunpack.c.h.b16 %v6971
    %v7524 = vunpack.c.l.b16 %v6972
    %v7525 = vunpack.c.h.b16 %v6972
    %v7526 = vunpack.c.l.b16 %v6973
    %v7527 = vunpack.c.h.b16 %v6973
    %v7528 = vunpack.c.l.b16 %v6974
    %v7529 = vunpack.c.h.b16 %v6974
    %v7530 = vunpack.c.l.b16 %v6975
    %v7531 = vunpack.c.h.b16 %v6975
    %v7532 = vunpack.c.l.b16 %v6976
    %v7533 = vunpack.c.h.b16 %v6976
    %v7534 = vunpack.c.l.b16 %v6977
    %v7535 = vunpack.c.h.b16 %v6977
    %v7536 = vunpack.c.l.b16 %v6978
    %v7537 = vunpack.c.h.b16 %v6978
    %v7538 = vunpack.c.l.b16 %v6979
    %v7539 = vunpack.c.h.b16 %v6979
    %v7540 = vunpack.c.l.b16 %v6980
    %v7541 = vunpack.c.h.b16 %v6980
    %v7542 = vlaneseq
    %v7543 = vshrl.u32 %v7542, 7
    %v7544 = vsub.s32 %v2406, %v7543
    %v7545 = vrot.slane %v7222, %v7544
    %v7546 = vlaneseq
    %v7547 = vshrl.u32 %v7546, 7
    %v7548 = vsub.s32 %v2411, %v7547
    %v7549 = vrot.slane %v7223, %v7548
    %v7550 = vsel %vm2416, %v7549, %v7545
    %v7551 = vlaneseq
    %v7552 = vshrl.u32 %v7551, 7
    %v7553 = vsub.s32 %v2418, %v7552
    %v7554 = vrot.slane %v7224, %v7553
    %v7555 = vsel %vm2423, %v7554, %v7550
    %v7556 = vlaneseq
    %v7557 = vshrl.u32 %v7556, 7
    %v7558 = vsub.s32 %v2425, %v7557
    %v7559 = vrot.slane %v7225, %v7558
    %v7560 = vsel %vm2430, %v7559, %v7555
    %v7561 = vlaneseq
    %v7562 = vshrl.u32 %v7561, 7
    %v7563 = vsub.s32 %v2432, %v7562
    %v7564 = vrot.slane %v7226, %v7563
    %v7565 = vsel %vm2437, %v7564, %v7560
    %v7566 = vlaneseq
    %v7567 = vshrl.u32 %v7566, 7
    %v7568 = vsub.s32 %v2439, %v7567
    %v7569 = vrot.slane %v7227, %v7568
    %v7570 = vsel %vm2444, %v7569, %v7565
    %v7571 = vlaneseq
    %v7572 = vshrl.u32 %v7571, 7
    %v7573 = vsub.s32 %v2446, %v7572
    %v7574 = vrot.slane %v7228, %v7573
    %v7575 = vsel %vm2451, %v7574, %v7570
    %v7576 = vlaneseq
    %v7577 = vshrl.u32 %v7576, 7
    %v7578 = vsub.s32 %v2453, %v7577
    %v7579 = vrot.slane %v7229, %v7578
    %v7580 = vsel %vm2458, %v7579, %v7575
    %v7581 = vlaneseq
    %v7582 = vshrl.u32 %v7581, 7
    %v7583 = vsub.s32 %v2460, %v7582
    %v7584 = vrot.slane %v7230, %v7583
    %v7585 = vsel %vm2465, %v7584, %v7580
    %v7586 = vlaneseq
    %v7587 = vshrl.u32 %v7586, 7
    %v7588 = vsub.s32 %v2467, %v7587
    %v7589 = vrot.slane %v7231, %v7588
    %v7590 = vsel %vm2472, %v7589, %v7585
    %v7591 = vlaneseq
    %v7592 = vshrl.u32 %v7591, 7
    %v7593 = vsub.s32 %v2474, %v7592
    %v7594 = vrot.slane %v7232, %v7593
    %v7595 = vsel %vm2479, %v7594, %v7590
    %v7596 = vlaneseq
    %v7597 = vshrl.u32 %v7596, 7
    %v7598 = vsub.s32 %v2481, %v7597
    %v7599 = vrot.slane %v7233, %v7598
    %v7600 = vsel %vm2486, %v7599, %v7595
    %v7601 = vlaneseq
    %v7602 = vshrl.u32 %v7601, 7
    %v7603 = vsub.s32 %v2488, %v7602
    %v7604 = vrot.slane %v7234, %v7603
    %v7605 = vsel %vm2493, %v7604, %v7600
    %v7606 = vlaneseq
    %v7607 = vshrl.u32 %v7606, 7
    %v7608 = vsub.s32 %v2495, %v7607
    %v7609 = vrot.slane %v7235, %v7608
    %v7610 = vsel %vm2500, %v7609, %v7605
    %v7611 = vlaneseq
    %v7612 = vshrl.u32 %v7611, 7
    %v7613 = vsub.s32 %v2502, %v7612
    %v7614 = vrot.slane %v7236, %v7613
    %v7615 = vsel %vm2507, %v7614, %v7610
    %v7616 = vlaneseq
    %v7617 = vshrl.u32 %v7616, 7
    %v7618 = vsub.s32 %v2509, %v7617
    %v7619 = vrot.slane %v7237, %v7618
    %v7620 = vsel %vm2514, %v7619, %v7615
    %v7621 = vlaneseq
    %v7622 = vshrl.u32 %v7621, 7
    %v7623 = vsub.s32 %v2406, %v7622
    %v7624 = vrot.slane %v7238, %v7623
    %v7625 = vlaneseq
    %v7626 = vshrl.u32 %v7625, 7
    %v7627 = vsub.s32 %v2411, %v7626
    %v7628 = vrot.slane %v7239, %v7627
    %v7629 = vsel %vm2416, %v7628, %v7624
    %v7630 = vlaneseq
    %v7631 = vshrl.u32 %v7630, 7
    %v7632 = vsub.s32 %v2418, %v7631
    %v7633 = vrot.slane %v7240, %v7632
    %v7634 = vsel %vm2423, %v7633, %v7629
    %v7635 = vlaneseq
    %v7636 = vshrl.u32 %v7635, 7
    %v7637 = vsub.s32 %v2425, %v7636
    %v7638 = vrot.slane %v7241, %v7637
    %v7639 = vsel %vm2430, %v7638, %v7634
    %v7640 = vlaneseq
    %v7641 = vshrl.u32 %v7640, 7
    %v7642 = vsub.s32 %v2432, %v7641
    %v7643 = vrot.slane %v7242, %v7642
    %v7644 = vsel %vm2437, %v7643, %v7639
    %v7645 = vlaneseq
    %v7646 = vshrl.u32 %v7645, 7
    %v7647 = vsub.s32 %v2439, %v7646
    %v7648 = vrot.slane %v7243, %v7647
    %v7649 = vsel %vm2444, %v7648, %v7644
    %v7650 = vlaneseq
    %v7651 = vshrl.u32 %v7650, 7
    %v7652 = vsub.s32 %v2446, %v7651
    %v7653 = vrot.slane %v7244, %v7652
    %v7654 = vsel %vm2451, %v7653, %v7649
    %v7655 = vlaneseq
    %v7656 = vshrl.u32 %v7655, 7
    %v7657 = vsub.s32 %v2453, %v7656
    %v7658 = vrot.slane %v7245, %v7657
    %v7659 = vsel %vm2458, %v7658, %v7654
    %v7660 = vlaneseq
    %v7661 = vshrl.u32 %v7660, 7
    %v7662 = vsub.s32 %v2460, %v7661
    %v7663 = vrot.slane %v7246, %v7662
    %v7664 = vsel %vm2465, %v7663, %v7659
    %v7665 = vlaneseq
    %v7666 = vshrl.u32 %v7665, 7
    %v7667 = vsub.s32 %v2467, %v7666
    %v7668 = vrot.slane %v7247, %v7667
    %v7669 = vsel %vm2472, %v7668, %v7664
    %v7670 = vlaneseq
    %v7671 = vshrl.u32 %v7670, 7
    %v7672 = vsub.s32 %v2474, %v7671
    %v7673 = vrot.slane %v7248, %v7672
    %v7674 = vsel %vm2479, %v7673, %v7669
    %v7675 = vlaneseq
    %v7676 = vshrl.u32 %v7675, 7
    %v7677 = vsub.s32 %v2481, %v7676
    %v7678 = vrot.slane %v7249, %v7677
    %v7679 = vsel %vm2486, %v7678, %v7674
    %v7680 = vlaneseq
    %v7681 = vshrl.u32 %v7680, 7
    %v7682 = vsub.s32 %v2488, %v7681
    %v7683 = vrot.slane %v7250, %v7682
    %v7684 = vsel %vm2493, %v7683, %v7679
    %v7685 = vlaneseq
    %v7686 = vshrl.u32 %v7685, 7
    %v7687 = vsub.s32 %v2495, %v7686
    %v7688 = vrot.slane %v7251, %v7687
    %v7689 = vsel %vm2500, %v7688, %v7684
    %v7690 = vlaneseq
    %v7691 = vshrl.u32 %v7690, 7
    %v7692 = vsub.s32 %v2502, %v7691
    %v7693 = vrot.slane %v7252, %v7692
    %v7694 = vsel %vm2507, %v7693, %v7689
    %v7695 = vlaneseq
    %v7696 = vshrl.u32 %v7695, 7
    %v7697 = vsub.s32 %v2509, %v7696
    %v7698 = vrot.slane %v7253, %v7697
    %v7699 = vsel %vm2514, %v7698, %v7694
    %v7700 = vlaneseq
    %v7701 = vshrl.u32 %v7700, 7
    %v7702 = vsub.s32 %v2406, %v7701
    %v7703 = vrot.slane %v7254, %v7702
    %v7704 = vlaneseq
    %v7705 = vshrl.u32 %v7704, 7
    %v7706 = vsub.s32 %v2411, %v7705
    %v7707 = vrot.slane %v7255, %v7706
    %v7708 = vsel %vm2416, %v7707, %v7703
    %v7709 = vlaneseq
    %v7710 = vshrl.u32 %v7709, 7
    %v7711 = vsub.s32 %v2418, %v7710
    %v7712 = vrot.slane %v7256, %v7711
    %v7713 = vsel %vm2423, %v7712, %v7708
    %v7714 = vlaneseq
    %v7715 = vshrl.u32 %v7714, 7
    %v7716 = vsub.s32 %v2425, %v7715
    %v7717 = vrot.slane %v7257, %v7716
    %v7718 = vsel %vm2430, %v7717, %v7713
    %v7719 = vlaneseq
    %v7720 = vshrl.u32 %v7719, 7
    %v7721 = vsub.s32 %v2432, %v7720
    %v7722 = vrot.slane %v7258, %v7721
    %v7723 = vsel %vm2437, %v7722, %v7718
    %v7724 = vlaneseq
    %v7725 = vshrl.u32 %v7724, 7
    %v7726 = vsub.s32 %v2439, %v7725
    %v7727 = vrot.slane %v7259, %v7726
    %v7728 = vsel %vm2444, %v7727, %v7723
    %v7729 = vlaneseq
    %v7730 = vshrl.u32 %v7729, 7
    %v7731 = vsub.s32 %v2446, %v7730
    %v7732 = vrot.slane %v7260, %v7731
    %v7733 = vsel %vm2451, %v7732, %v7728
    %v7734 = vlaneseq
    %v7735 = vshrl.u32 %v7734, 7
    %v7736 = vsub.s32 %v2453, %v7735
    %v7737 = vrot.slane %v7261, %v7736
    %v7738 = vsel %vm2458, %v7737, %v7733
    %v7739 = vlaneseq
    %v7740 = vshrl.u32 %v7739, 7
    %v7741 = vsub.s32 %v2460, %v7740
    %v7742 = vrot.slane %v7262, %v7741
    %v7743 = vsel %vm2465, %v7742, %v7738
    %v7744 = vlaneseq
    %v7745 = vshrl.u32 %v7744, 7
    %v7746 = vsub.s32 %v2467, %v7745
    %v7747 = vrot.slane %v7263, %v7746
    %v7748 = vsel %vm2472, %v7747, %v7743
    %v7749 = vlaneseq
    %v7750 = vshrl.u32 %v7749, 7
    %v7751 = vsub.s32 %v2474, %v7750
    %v7752 = vrot.slane %v7264, %v7751
    %v7753 = vsel %vm2479, %v7752, %v7748
    %v7754 = vlaneseq
    %v7755 = vshrl.u32 %v7754, 7
    %v7756 = vsub.s32 %v2481, %v7755
    %v7757 = vrot.slane %v7265, %v7756
    %v7758 = vsel %vm2486, %v7757, %v7753
    %v7759 = vlaneseq
    %v7760 = vshrl.u32 %v7759, 7
    %v7761 = vsub.s32 %v2488, %v7760
    %v7762 = vrot.slane %v7266, %v7761
    %v7763 = vsel %vm2493, %v7762, %v7758
    %v7764 = vlaneseq
    %v7765 = vshrl.u32 %v7764, 7
    %v7766 = vsub.s32 %v2495, %v7765
    %v7767 = vrot.slane %v7267, %v7766
    %v7768 = vsel %vm2500, %v7767, %v7763
    %v7769 = vlaneseq
    %v7770 = vshrl.u32 %v7769, 7
    %v7771 = vsub.s32 %v2502, %v7770
    %v7772 = vrot.slane %v7268, %v7771
    %v7773 = vsel %vm2507, %v7772, %v7768
    %v7774 = vlaneseq
    %v7775 = vshrl.u32 %v7774, 7
    %v7776 = vsub.s32 %v2509, %v7775
    %v7777 = vrot.slane %v7269, %v7776
    %v7778 = vsel %vm2514, %v7777, %v7773
    %v7779 = vlaneseq
    %v7780 = vshrl.u32 %v7779, 7
    %v7781 = vsub.s32 %v2406, %v7780
    %v7782 = vrot.slane %v7270, %v7781
    %v7783 = vlaneseq
    %v7784 = vshrl.u32 %v7783, 7
    %v7785 = vsub.s32 %v2411, %v7784
    %v7786 = vrot.slane %v7271, %v7785
    %v7787 = vsel %vm2416, %v7786, %v7782
    %v7788 = vlaneseq
    %v7789 = vshrl.u32 %v7788, 7
    %v7790 = vsub.s32 %v2418, %v7789
    %v7791 = vrot.slane %v7272, %v7790
    %v7792 = vsel %vm2423, %v7791, %v7787
    %v7793 = vlaneseq
    %v7794 = vshrl.u32 %v7793, 7
    %v7795 = vsub.s32 %v2425, %v7794
    %v7796 = vrot.slane %v7273, %v7795
    %v7797 = vsel %vm2430, %v7796, %v7792
    %v7798 = vlaneseq
    %v7799 = vshrl.u32 %v7798, 7
    %v7800 = vsub.s32 %v2432, %v7799
    %v7801 = vrot.slane %v7274, %v7800
    %v7802 = vsel %vm2437, %v7801, %v7797
    %v7803 = vlaneseq
    %v7804 = vshrl.u32 %v7803, 7
    %v7805 = vsub.s32 %v2439, %v7804
    %v7806 = vrot.slane %v7275, %v7805
    %v7807 = vsel %vm2444, %v7806, %v7802
    %v7808 = vlaneseq
    %v7809 = vshrl.u32 %v7808, 7
    %v7810 = vsub.s32 %v2446, %v7809
    %v7811 = vrot.slane %v7276, %v7810
    %v7812 = vsel %vm2451, %v7811, %v7807
    %v7813 = vlaneseq
    %v7814 = vshrl.u32 %v7813, 7
    %v7815 = vsub.s32 %v2453, %v7814
    %v7816 = vrot.slane %v7277, %v7815
    %v7817 = vsel %vm2458, %v7816, %v7812
    %v7818 = vlaneseq
    %v7819 = vshrl.u32 %v7818, 7
    %v7820 = vsub.s32 %v2460, %v7819
    %v7821 = vrot.slane %v7278, %v7820
    %v7822 = vsel %vm2465, %v7821, %v7817
    %v7823 = vlaneseq
    %v7824 = vshrl.u32 %v7823, 7
    %v7825 = vsub.s32 %v2467, %v7824
    %v7826 = vrot.slane %v7279, %v7825
    %v7827 = vsel %vm2472, %v7826, %v7822
    %v7828 = vlaneseq
    %v7829 = vshrl.u32 %v7828, 7
    %v7830 = vsub.s32 %v2474, %v7829
    %v7831 = vrot.slane %v7280, %v7830
    %v7832 = vsel %vm2479, %v7831, %v7827
    %v7833 = vlaneseq
    %v7834 = vshrl.u32 %v7833, 7
    %v7835 = vsub.s32 %v2481, %v7834
    %v7836 = vrot.slane %v7281, %v7835
    %v7837 = vsel %vm2486, %v7836, %v7832
    %v7838 = vlaneseq
    %v7839 = vshrl.u32 %v7838, 7
    %v7840 = vsub.s32 %v2488, %v7839
    %v7841 = vrot.slane %v7282, %v7840
    %v7842 = vsel %vm2493, %v7841, %v7837
    %v7843 = vlaneseq
    %v7844 = vshrl.u32 %v7843, 7
    %v7845 = vsub.s32 %v2495, %v7844
    %v7846 = vrot.slane %v7283, %v7845
    %v7847 = vsel %vm2500, %v7846, %v7842
    %v7848 = vlaneseq
    %v7849 = vshrl.u32 %v7848, 7
    %v7850 = vsub.s32 %v2502, %v7849
    %v7851 = vrot.slane %v7284, %v7850
    %v7852 = vsel %vm2507, %v7851, %v7847
    %v7853 = vlaneseq
    %v7854 = vshrl.u32 %v7853, 7
    %v7855 = vsub.s32 %v2509, %v7854
    %v7856 = vrot.slane %v7285, %v7855
    %v7857 = vsel %vm2514, %v7856, %v7852
    %v7858 = vlaneseq
    %v7859 = vshrl.u32 %v7858, 7
    %v7860 = vsub.s32 %v2406, %v7859
    %v7861 = vrot.slane %v7286, %v7860
    %v7862 = vlaneseq
    %v7863 = vshrl.u32 %v7862, 7
    %v7864 = vsub.s32 %v2411, %v7863
    %v7865 = vrot.slane %v7287, %v7864
    %v7866 = vsel %vm2416, %v7865, %v7861
    %v7867 = vlaneseq
    %v7868 = vshrl.u32 %v7867, 7
    %v7869 = vsub.s32 %v2418, %v7868
    %v7870 = vrot.slane %v7288, %v7869
    %v7871 = vsel %vm2423, %v7870, %v7866
    %v7872 = vlaneseq
    %v7873 = vshrl.u32 %v7872, 7
    %v7874 = vsub.s32 %v2425, %v7873
    %v7875 = vrot.slane %v7289, %v7874
    %v7876 = vsel %vm2430, %v7875, %v7871
    %v7877 = vlaneseq
    %v7878 = vshrl.u32 %v7877, 7
    %v7879 = vsub.s32 %v2432, %v7878
    %v7880 = vrot.slane %v7290, %v7879
    %v7881 = vsel %vm2437, %v7880, %v7876
    %v7882 = vlaneseq
    %v7883 = vshrl.u32 %v7882, 7
    %v7884 = vsub.s32 %v2439, %v7883
    %v7885 = vrot.slane %v7291, %v7884
    %v7886 = vsel %vm2444, %v7885, %v7881
    %v7887 = vlaneseq
    %v7888 = vshrl.u32 %v7887, 7
    %v7889 = vsub.s32 %v2446, %v7888
    %v7890 = vrot.slane %v7292, %v7889
    %v7891 = vsel %vm2451, %v7890, %v7886
    %v7892 = vlaneseq
    %v7893 = vshrl.u32 %v7892, 7
    %v7894 = vsub.s32 %v2453, %v7893
    %v7895 = vrot.slane %v7293, %v7894
    %v7896 = vsel %vm2458, %v7895, %v7891
    %v7897 = vlaneseq
    %v7898 = vshrl.u32 %v7897, 7
    %v7899 = vsub.s32 %v2460, %v7898
    %v7900 = vrot.slane %v7294, %v7899
    %v7901 = vsel %vm2465, %v7900, %v7896
    %v7902 = vlaneseq
    %v7903 = vshrl.u32 %v7902, 7
    %v7904 = vsub.s32 %v2467, %v7903
    %v7905 = vrot.slane %v7295, %v7904
    %v7906 = vsel %vm2472, %v7905, %v7901
    %v7907 = vlaneseq
    %v7908 = vshrl.u32 %v7907, 7
    %v7909 = vsub.s32 %v2474, %v7908
    %v7910 = vrot.slane %v7296, %v7909
    %v7911 = vsel %vm2479, %v7910, %v7906
    %v7912 = vlaneseq
    %v7913 = vshrl.u32 %v7912, 7
    %v7914 = vsub.s32 %v2481, %v7913
    %v7915 = vrot.slane %v7297, %v7914
    %v7916 = vsel %vm2486, %v7915, %v7911
    %v7917 = vlaneseq
    %v7918 = vshrl.u32 %v7917, 7
    %v7919 = vsub.s32 %v2488, %v7918
    %v7920 = vrot.slane %v7298, %v7919
    %v7921 = vsel %vm2493, %v7920, %v7916
    %v7922 = vlaneseq
    %v7923 = vshrl.u32 %v7922, 7
    %v7924 = vsub.s32 %v2495, %v7923
    %v7925 = vrot.slane %v7299, %v7924
    %v7926 = vsel %vm2500, %v7925, %v7921
    %v7927 = vlaneseq
    %v7928 = vshrl.u32 %v7927, 7
    %v7929 = vsub.s32 %v2502, %v7928
    %v7930 = vrot.slane %v7300, %v7929
    %v7931 = vsel %vm2507, %v7930, %v7926
    %v7932 = vlaneseq
    %v7933 = vshrl.u32 %v7932, 7
    %v7934 = vsub.s32 %v2509, %v7933
    %v7935 = vrot.slane %v7301, %v7934
    %v7936 = vsel %vm2514, %v7935, %v7931
    %v7937 = vlaneseq
    %v7938 = vshrl.u32 %v7937, 7
    %v7939 = vsub.s32 %v2406, %v7938
    %v7940 = vrot.slane %v7302, %v7939
    %v7941 = vlaneseq
    %v7942 = vshrl.u32 %v7941, 7
    %v7943 = vsub.s32 %v2411, %v7942
    %v7944 = vrot.slane %v7303, %v7943
    %v7945 = vsel %vm2416, %v7944, %v7940
    %v7946 = vlaneseq
    %v7947 = vshrl.u32 %v7946, 7
    %v7948 = vsub.s32 %v2418, %v7947
    %v7949 = vrot.slane %v7304, %v7948
    %v7950 = vsel %vm2423, %v7949, %v7945
    %v7951 = vlaneseq
    %v7952 = vshrl.u32 %v7951, 7
    %v7953 = vsub.s32 %v2425, %v7952
    %v7954 = vrot.slane %v7305, %v7953
    %v7955 = vsel %vm2430, %v7954, %v7950
    %v7956 = vlaneseq
    %v7957 = vshrl.u32 %v7956, 7
    %v7958 = vsub.s32 %v2432, %v7957
    %v7959 = vrot.slane %v7306, %v7958
    %v7960 = vsel %vm2437, %v7959, %v7955
    %v7961 = vlaneseq
    %v7962 = vshrl.u32 %v7961, 7
    %v7963 = vsub.s32 %v2439, %v7962
    %v7964 = vrot.slane %v7307, %v7963
    %v7965 = vsel %vm2444, %v7964, %v7960
    %v7966 = vlaneseq
    %v7967 = vshrl.u32 %v7966, 7
    %v7968 = vsub.s32 %v2446, %v7967
    %v7969 = vrot.slane %v7308, %v7968
    %v7970 = vsel %vm2451, %v7969, %v7965
    %v7971 = vlaneseq
    %v7972 = vshrl.u32 %v7971, 7
    %v7973 = vsub.s32 %v2453, %v7972
    %v7974 = vrot.slane %v7309, %v7973
    %v7975 = vsel %vm2458, %v7974, %v7970
    %v7976 = vlaneseq
    %v7977 = vshrl.u32 %v7976, 7
    %v7978 = vsub.s32 %v2460, %v7977
    %v7979 = vrot.slane %v7310, %v7978
    %v7980 = vsel %vm2465, %v7979, %v7975
    %v7981 = vlaneseq
    %v7982 = vshrl.u32 %v7981, 7
    %v7983 = vsub.s32 %v2467, %v7982
    %v7984 = vrot.slane %v7311, %v7983
    %v7985 = vsel %vm2472, %v7984, %v7980
    %v7986 = vlaneseq
    %v7987 = vshrl.u32 %v7986, 7
    %v7988 = vsub.s32 %v2474, %v7987
    %v7989 = vrot.slane %v7312, %v7988
    %v7990 = vsel %vm2479, %v7989, %v7985
    %v7991 = vlaneseq
    %v7992 = vshrl.u32 %v7991, 7
    %v7993 = vsub.s32 %v2481, %v7992
    %v7994 = vrot.slane %v7313, %v7993
    %v7995 = vsel %vm2486, %v7994, %v7990
    %v7996 = vlaneseq
    %v7997 = vshrl.u32 %v7996, 7
    %v7998 = vsub.s32 %v2488, %v7997
    %v7999 = vrot.slane %v7314, %v7998
    %v8000 = vsel %vm2493, %v7999, %v7995
    %v8001 = vlaneseq
    %v8002 = vshrl.u32 %v8001, 7
    %v8003 = vsub.s32 %v2495, %v8002
    %v8004 = vrot.slane %v7315, %v8003
    %v8005 = vsel %vm2500, %v8004, %v8000
    %v8006 = vlaneseq
    %v8007 = vshrl.u32 %v8006, 7
    %v8008 = vsub.s32 %v2502, %v8007
    %v8009 = vrot.slane %v7316, %v8008
    %v8010 = vsel %vm2507, %v8009, %v8005
    %v8011 = vlaneseq
    %v8012 = vshrl.u32 %v8011, 7
    %v8013 = vsub.s32 %v2509, %v8012
    %v8014 = vrot.slane %v7317, %v8013
    %v8015 = vsel %vm2514, %v8014, %v8010
    %v8016 = vlaneseq
    %v8017 = vshrl.u32 %v8016, 7
    %v8018 = vsub.s32 %v2406, %v8017
    %v8019 = vrot.slane %v7318, %v8018
    %v8020 = vlaneseq
    %v8021 = vshrl.u32 %v8020, 7
    %v8022 = vsub.s32 %v2411, %v8021
    %v8023 = vrot.slane %v7319, %v8022
    %v8024 = vsel %vm2416, %v8023, %v8019
    %v8025 = vlaneseq
    %v8026 = vshrl.u32 %v8025, 7
    %v8027 = vsub.s32 %v2418, %v8026
    %v8028 = vrot.slane %v7320, %v8027
    %v8029 = vsel %vm2423, %v8028, %v8024
    %v8030 = vlaneseq
    %v8031 = vshrl.u32 %v8030, 7
    %v8032 = vsub.s32 %v2425, %v8031
    %v8033 = vrot.slane %v7321, %v8032
    %v8034 = vsel %vm2430, %v8033, %v8029
    %v8035 = vlaneseq
    %v8036 = vshrl.u32 %v8035, 7
    %v8037 = vsub.s32 %v2432, %v8036
    %v8038 = vrot.slane %v7322, %v8037
    %v8039 = vsel %vm2437, %v8038, %v8034
    %v8040 = vlaneseq
    %v8041 = vshrl.u32 %v8040, 7
    %v8042 = vsub.s32 %v2439, %v8041
    %v8043 = vrot.slane %v7323, %v8042
    %v8044 = vsel %vm2444, %v8043, %v8039
    %v8045 = vlaneseq
    %v8046 = vshrl.u32 %v8045, 7
    %v8047 = vsub.s32 %v2446, %v8046
    %v8048 = vrot.slane %v7324, %v8047
    %v8049 = vsel %vm2451, %v8048, %v8044
    %v8050 = vlaneseq
    %v8051 = vshrl.u32 %v8050, 7
    %v8052 = vsub.s32 %v2453, %v8051
    %v8053 = vrot.slane %v7325, %v8052
    %v8054 = vsel %vm2458, %v8053, %v8049
    %v8055 = vlaneseq
    %v8056 = vshrl.u32 %v8055, 7
    %v8057 = vsub.s32 %v2460, %v8056
    %v8058 = vrot.slane %v7326, %v8057
    %v8059 = vsel %vm2465, %v8058, %v8054
    %v8060 = vlaneseq
    %v8061 = vshrl.u32 %v8060, 7
    %v8062 = vsub.s32 %v2467, %v8061
    %v8063 = vrot.slane %v7327, %v8062
    %v8064 = vsel %vm2472, %v8063, %v8059
    %v8065 = vlaneseq
    %v8066 = vshrl.u32 %v8065, 7
    %v8067 = vsub.s32 %v2474, %v8066
    %v8068 = vrot.slane %v7328, %v8067
    %v8069 = vsel %vm2479, %v8068, %v8064
    %v8070 = vlaneseq
    %v8071 = vshrl.u32 %v8070, 7
    %v8072 = vsub.s32 %v2481, %v8071
    %v8073 = vrot.slane %v7329, %v8072
    %v8074 = vsel %vm2486, %v8073, %v8069
    %v8075 = vlaneseq
    %v8076 = vshrl.u32 %v8075, 7
    %v8077 = vsub.s32 %v2488, %v8076
    %v8078 = vrot.slane %v7330, %v8077
    %v8079 = vsel %vm2493, %v8078, %v8074
    %v8080 = vlaneseq
    %v8081 = vshrl.u32 %v8080, 7
    %v8082 = vsub.s32 %v2495, %v8081
    %v8083 = vrot.slane %v7331, %v8082
    %v8084 = vsel %vm2500, %v8083, %v8079
    %v8085 = vlaneseq
    %v8086 = vshrl.u32 %v8085, 7
    %v8087 = vsub.s32 %v2502, %v8086
    %v8088 = vrot.slane %v7332, %v8087
    %v8089 = vsel %vm2507, %v8088, %v8084
    %v8090 = vlaneseq
    %v8091 = vshrl.u32 %v8090, 7
    %v8092 = vsub.s32 %v2509, %v8091
    %v8093 = vrot.slane %v7333, %v8092
    %v8094 = vsel %vm2514, %v8093, %v8089
    %v8095 = vlaneseq
    %v8096 = vshrl.u32 %v8095, 7
    %v8097 = vsub.s32 %v2406, %v8096
    %v8098 = vrot.slane %v7334, %v8097
    %v8099 = vlaneseq
    %v8100 = vshrl.u32 %v8099, 7
    %v8101 = vsub.s32 %v2411, %v8100
    %v8102 = vrot.slane %v7335, %v8101
    %v8103 = vsel %vm2416, %v8102, %v8098
    %v8104 = vlaneseq
    %v8105 = vshrl.u32 %v8104, 7
    %v8106 = vsub.s32 %v2418, %v8105
    %v8107 = vrot.slane %v7336, %v8106
    %v8108 = vsel %vm2423, %v8107, %v8103
    %v8109 = vlaneseq
    %v8110 = vshrl.u32 %v8109, 7
    %v8111 = vsub.s32 %v2425, %v8110
    %v8112 = vrot.slane %v7337, %v8111
    %v8113 = vsel %vm2430, %v8112, %v8108
    %v8114 = vlaneseq
    %v8115 = vshrl.u32 %v8114, 7
    %v8116 = vsub.s32 %v2432, %v8115
    %v8117 = vrot.slane %v7338, %v8116
    %v8118 = vsel %vm2437, %v8117, %v8113
    %v8119 = vlaneseq
    %v8120 = vshrl.u32 %v8119, 7
    %v8121 = vsub.s32 %v2439, %v8120
    %v8122 = vrot.slane %v7339, %v8121
    %v8123 = vsel %vm2444, %v8122, %v8118
    %v8124 = vlaneseq
    %v8125 = vshrl.u32 %v8124, 7
    %v8126 = vsub.s32 %v2446, %v8125
    %v8127 = vrot.slane %v7340, %v8126
    %v8128 = vsel %vm2451, %v8127, %v8123
    %v8129 = vlaneseq
    %v8130 = vshrl.u32 %v8129, 7
    %v8131 = vsub.s32 %v2453, %v8130
    %v8132 = vrot.slane %v7341, %v8131
    %v8133 = vsel %vm2458, %v8132, %v8128
    %v8134 = vlaneseq
    %v8135 = vshrl.u32 %v8134, 7
    %v8136 = vsub.s32 %v2460, %v8135
    %v8137 = vrot.slane %v7342, %v8136
    %v8138 = vsel %vm2465, %v8137, %v8133
    %v8139 = vlaneseq
    %v8140 = vshrl.u32 %v8139, 7
    %v8141 = vsub.s32 %v2467, %v8140
    %v8142 = vrot.slane %v7343, %v8141
    %v8143 = vsel %vm2472, %v8142, %v8138
    %v8144 = vlaneseq
    %v8145 = vshrl.u32 %v8144, 7
    %v8146 = vsub.s32 %v2474, %v8145
    %v8147 = vrot.slane %v7344, %v8146
    %v8148 = vsel %vm2479, %v8147, %v8143
    %v8149 = vlaneseq
    %v8150 = vshrl.u32 %v8149, 7
    %v8151 = vsub.s32 %v2481, %v8150
    %v8152 = vrot.slane %v7345, %v8151
    %v8153 = vsel %vm2486, %v8152, %v8148
    %v8154 = vlaneseq
    %v8155 = vshrl.u32 %v8154, 7
    %v8156 = vsub.s32 %v2488, %v8155
    %v8157 = vrot.slane %v7346, %v8156
    %v8158 = vsel %vm2493, %v8157, %v8153
    %v8159 = vlaneseq
    %v8160 = vshrl.u32 %v8159, 7
    %v8161 = vsub.s32 %v2495, %v8160
    %v8162 = vrot.slane %v7347, %v8161
    %v8163 = vsel %vm2500, %v8162, %v8158
    %v8164 = vlaneseq
    %v8165 = vshrl.u32 %v8164, 7
    %v8166 = vsub.s32 %v2502, %v8165
    %v8167 = vrot.slane %v7348, %v8166
    %v8168 = vsel %vm2507, %v8167, %v8163
    %v8169 = vlaneseq
    %v8170 = vshrl.u32 %v8169, 7
    %v8171 = vsub.s32 %v2509, %v8170
    %v8172 = vrot.slane %v7349, %v8171
    %v8173 = vsel %vm2514, %v8172, %v8168
    %v8174 = vlaneseq
    %v8175 = vshrl.u32 %v8174, 7
    %v8176 = vsub.s32 %v2406, %v8175
    %v8177 = vrot.slane %v7350, %v8176
    %v8178 = vlaneseq
    %v8179 = vshrl.u32 %v8178, 7
    %v8180 = vsub.s32 %v2411, %v8179
    %v8181 = vrot.slane %v7351, %v8180
    %v8182 = vsel %vm2416, %v8181, %v8177
    %v8183 = vlaneseq
    %v8184 = vshrl.u32 %v8183, 7
    %v8185 = vsub.s32 %v2418, %v8184
    %v8186 = vrot.slane %v7352, %v8185
    %v8187 = vsel %vm2423, %v8186, %v8182
    %v8188 = vlaneseq
    %v8189 = vshrl.u32 %v8188, 7
    %v8190 = vsub.s32 %v2425, %v8189
    %v8191 = vrot.slane %v7353, %v8190
    %v8192 = vsel %vm2430, %v8191, %v8187
    %v8193 = vlaneseq
    %v8194 = vshrl.u32 %v8193, 7
    %v8195 = vsub.s32 %v2432, %v8194
    %v8196 = vrot.slane %v7354, %v8195
    %v8197 = vsel %vm2437, %v8196, %v8192
    %v8198 = vlaneseq
    %v8199 = vshrl.u32 %v8198, 7
    %v8200 = vsub.s32 %v2439, %v8199
    %v8201 = vrot.slane %v7355, %v8200
    %v8202 = vsel %vm2444, %v8201, %v8197
    %v8203 = vlaneseq
    %v8204 = vshrl.u32 %v8203, 7
    %v8205 = vsub.s32 %v2446, %v8204
    %v8206 = vrot.slane %v7356, %v8205
    %v8207 = vsel %vm2451, %v8206, %v8202
    %v8208 = vlaneseq
    %v8209 = vshrl.u32 %v8208, 7
    %v8210 = vsub.s32 %v2453, %v8209
    %v8211 = vrot.slane %v7357, %v8210
    %v8212 = vsel %vm2458, %v8211, %v8207
    %v8213 = vlaneseq
    %v8214 = vshrl.u32 %v8213, 7
    %v8215 = vsub.s32 %v2460, %v8214
    %v8216 = vrot.slane %v7358, %v8215
    %v8217 = vsel %vm2465, %v8216, %v8212
    %v8218 = vlaneseq
    %v8219 = vshrl.u32 %v8218, 7
    %v8220 = vsub.s32 %v2467, %v8219
    %v8221 = vrot.slane %v7359, %v8220
    %v8222 = vsel %vm2472, %v8221, %v8217
    %v8223 = vlaneseq
    %v8224 = vshrl.u32 %v8223, 7
    %v8225 = vsub.s32 %v2474, %v8224
    %v8226 = vrot.slane %v7360, %v8225
    %v8227 = vsel %vm2479, %v8226, %v8222
    %v8228 = vlaneseq
    %v8229 = vshrl.u32 %v8228, 7
    %v8230 = vsub.s32 %v2481, %v8229
    %v8231 = vrot.slane %v7361, %v8230
    %v8232 = vsel %vm2486, %v8231, %v8227
    %v8233 = vlaneseq
    %v8234 = vshrl.u32 %v8233, 7
    %v8235 = vsub.s32 %v2488, %v8234
    %v8236 = vrot.slane %v7362, %v8235
    %v8237 = vsel %vm2493, %v8236, %v8232
    %v8238 = vlaneseq
    %v8239 = vshrl.u32 %v8238, 7
    %v8240 = vsub.s32 %v2495, %v8239
    %v8241 = vrot.slane %v7363, %v8240
    %v8242 = vsel %vm2500, %v8241, %v8237
    %v8243 = vlaneseq
    %v8244 = vshrl.u32 %v8243, 7
    %v8245 = vsub.s32 %v2502, %v8244
    %v8246 = vrot.slane %v7364, %v8245
    %v8247 = vsel %vm2507, %v8246, %v8242
    %v8248 = vlaneseq
    %v8249 = vshrl.u32 %v8248, 7
    %v8250 = vsub.s32 %v2509, %v8249
    %v8251 = vrot.slane %v7365, %v8250
    %v8252 = vsel %vm2514, %v8251, %v8247
    %v8253 = vlaneseq
    %v8254 = vshrl.u32 %v8253, 7
    %v8255 = vsub.s32 %v2406, %v8254
    %v8256 = vrot.slane %v7366, %v8255
    %v8257 = vlaneseq
    %v8258 = vshrl.u32 %v8257, 7
    %v8259 = vsub.s32 %v2411, %v8258
    %v8260 = vrot.slane %v7367, %v8259
    %v8261 = vsel %vm2416, %v8260, %v8256
    %v8262 = vlaneseq
    %v8263 = vshrl.u32 %v8262, 7
    %v8264 = vsub.s32 %v2418, %v8263
    %v8265 = vrot.slane %v7368, %v8264
    %v8266 = vsel %vm2423, %v8265, %v8261
    %v8267 = vlaneseq
    %v8268 = vshrl.u32 %v8267, 7
    %v8269 = vsub.s32 %v2425, %v8268
    %v8270 = vrot.slane %v7369, %v8269
    %v8271 = vsel %vm2430, %v8270, %v8266
    %v8272 = vlaneseq
    %v8273 = vshrl.u32 %v8272, 7
    %v8274 = vsub.s32 %v2432, %v8273
    %v8275 = vrot.slane %v7370, %v8274
    %v8276 = vsel %vm2437, %v8275, %v8271
    %v8277 = vlaneseq
    %v8278 = vshrl.u32 %v8277, 7
    %v8279 = vsub.s32 %v2439, %v8278
    %v8280 = vrot.slane %v7371, %v8279
    %v8281 = vsel %vm2444, %v8280, %v8276
    %v8282 = vlaneseq
    %v8283 = vshrl.u32 %v8282, 7
    %v8284 = vsub.s32 %v2446, %v8283
    %v8285 = vrot.slane %v7372, %v8284
    %v8286 = vsel %vm2451, %v8285, %v8281
    %v8287 = vlaneseq
    %v8288 = vshrl.u32 %v8287, 7
    %v8289 = vsub.s32 %v2453, %v8288
    %v8290 = vrot.slane %v7373, %v8289
    %v8291 = vsel %vm2458, %v8290, %v8286
    %v8292 = vlaneseq
    %v8293 = vshrl.u32 %v8292, 7
    %v8294 = vsub.s32 %v2460, %v8293
    %v8295 = vrot.slane %v7374, %v8294
    %v8296 = vsel %vm2465, %v8295, %v8291
    %v8297 = vlaneseq
    %v8298 = vshrl.u32 %v8297, 7
    %v8299 = vsub.s32 %v2467, %v8298
    %v8300 = vrot.slane %v7375, %v8299
    %v8301 = vsel %vm2472, %v8300, %v8296
    %v8302 = vlaneseq
    %v8303 = vshrl.u32 %v8302, 7
    %v8304 = vsub.s32 %v2474, %v8303
    %v8305 = vrot.slane %v7376, %v8304
    %v8306 = vsel %vm2479, %v8305, %v8301
    %v8307 = vlaneseq
    %v8308 = vshrl.u32 %v8307, 7
    %v8309 = vsub.s32 %v2481, %v8308
    %v8310 = vrot.slane %v7377, %v8309
    %v8311 = vsel %vm2486, %v8310, %v8306
    %v8312 = vlaneseq
    %v8313 = vshrl.u32 %v8312, 7
    %v8314 = vsub.s32 %v2488, %v8313
    %v8315 = vrot.slane %v7378, %v8314
    %v8316 = vsel %vm2493, %v8315, %v8311
    %v8317 = vlaneseq
    %v8318 = vshrl.u32 %v8317, 7
    %v8319 = vsub.s32 %v2495, %v8318
    %v8320 = vrot.slane %v7379, %v8319
    %v8321 = vsel %vm2500, %v8320, %v8316
    %v8322 = vlaneseq
    %v8323 = vshrl.u32 %v8322, 7
    %v8324 = vsub.s32 %v2502, %v8323
    %v8325 = vrot.slane %v7380, %v8324
    %v8326 = vsel %vm2507, %v8325, %v8321
    %v8327 = vlaneseq
    %v8328 = vshrl.u32 %v8327, 7
    %v8329 = vsub.s32 %v2509, %v8328
    %v8330 = vrot.slane %v7381, %v8329
    %v8331 = vsel %vm2514, %v8330, %v8326
    %v8332 = vlaneseq
    %v8333 = vshrl.u32 %v8332, 7
    %v8334 = vsub.s32 %v2406, %v8333
    %v8335 = vrot.slane %v7382, %v8334
    %v8336 = vlaneseq
    %v8337 = vshrl.u32 %v8336, 7
    %v8338 = vsub.s32 %v2411, %v8337
    %v8339 = vrot.slane %v7383, %v8338
    %v8340 = vsel %vm2416, %v8339, %v8335
    %v8341 = vlaneseq
    %v8342 = vshrl.u32 %v8341, 7
    %v8343 = vsub.s32 %v2418, %v8342
    %v8344 = vrot.slane %v7384, %v8343
    %v8345 = vsel %vm2423, %v8344, %v8340
    %v8346 = vlaneseq
    %v8347 = vshrl.u32 %v8346, 7
    %v8348 = vsub.s32 %v2425, %v8347
    %v8349 = vrot.slane %v7385, %v8348
    %v8350 = vsel %vm2430, %v8349, %v8345
    %v8351 = vlaneseq
    %v8352 = vshrl.u32 %v8351, 7
    %v8353 = vsub.s32 %v2432, %v8352
    %v8354 = vrot.slane %v7386, %v8353
    %v8355 = vsel %vm2437, %v8354, %v8350
    %v8356 = vlaneseq
    %v8357 = vshrl.u32 %v8356, 7
    %v8358 = vsub.s32 %v2439, %v8357
    %v8359 = vrot.slane %v7387, %v8358
    %v8360 = vsel %vm2444, %v8359, %v8355
    %v8361 = vlaneseq
    %v8362 = vshrl.u32 %v8361, 7
    %v8363 = vsub.s32 %v2446, %v8362
    %v8364 = vrot.slane %v7388, %v8363
    %v8365 = vsel %vm2451, %v8364, %v8360
    %v8366 = vlaneseq
    %v8367 = vshrl.u32 %v8366, 7
    %v8368 = vsub.s32 %v2453, %v8367
    %v8369 = vrot.slane %v7389, %v8368
    %v8370 = vsel %vm2458, %v8369, %v8365
    %v8371 = vlaneseq
    %v8372 = vshrl.u32 %v8371, 7
    %v8373 = vsub.s32 %v2460, %v8372
    %v8374 = vrot.slane %v7390, %v8373
    %v8375 = vsel %vm2465, %v8374, %v8370
    %v8376 = vlaneseq
    %v8377 = vshrl.u32 %v8376, 7
    %v8378 = vsub.s32 %v2467, %v8377
    %v8379 = vrot.slane %v7391, %v8378
    %v8380 = vsel %vm2472, %v8379, %v8375
    %v8381 = vlaneseq
    %v8382 = vshrl.u32 %v8381, 7
    %v8383 = vsub.s32 %v2474, %v8382
    %v8384 = vrot.slane %v7392, %v8383
    %v8385 = vsel %vm2479, %v8384, %v8380
    %v8386 = vlaneseq
    %v8387 = vshrl.u32 %v8386, 7
    %v8388 = vsub.s32 %v2481, %v8387
    %v8389 = vrot.slane %v7393, %v8388
    %v8390 = vsel %vm2486, %v8389, %v8385
    %v8391 = vlaneseq
    %v8392 = vshrl.u32 %v8391, 7
    %v8393 = vsub.s32 %v2488, %v8392
    %v8394 = vrot.slane %v7394, %v8393
    %v8395 = vsel %vm2493, %v8394, %v8390
    %v8396 = vlaneseq
    %v8397 = vshrl.u32 %v8396, 7
    %v8398 = vsub.s32 %v2495, %v8397
    %v8399 = vrot.slane %v7395, %v8398
    %v8400 = vsel %vm2500, %v8399, %v8395
    %v8401 = vlaneseq
    %v8402 = vshrl.u32 %v8401, 7
    %v8403 = vsub.s32 %v2502, %v8402
    %v8404 = vrot.slane %v7396, %v8403
    %v8405 = vsel %vm2507, %v8404, %v8400
    %v8406 = vlaneseq
    %v8407 = vshrl.u32 %v8406, 7
    %v8408 = vsub.s32 %v2509, %v8407
    %v8409 = vrot.slane %v7397, %v8408
    %v8410 = vsel %vm2514, %v8409, %v8405
    %v8411 = vlaneseq
    %v8412 = vshrl.u32 %v8411, 7
    %v8413 = vsub.s32 %v2406, %v8412
    %v8414 = vrot.slane %v7398, %v8413
    %v8415 = vlaneseq
    %v8416 = vshrl.u32 %v8415, 7
    %v8417 = vsub.s32 %v2411, %v8416
    %v8418 = vrot.slane %v7399, %v8417
    %v8419 = vsel %vm2416, %v8418, %v8414
    %v8420 = vlaneseq
    %v8421 = vshrl.u32 %v8420, 7
    %v8422 = vsub.s32 %v2418, %v8421
    %v8423 = vrot.slane %v7400, %v8422
    %v8424 = vsel %vm2423, %v8423, %v8419
    %v8425 = vlaneseq
    %v8426 = vshrl.u32 %v8425, 7
    %v8427 = vsub.s32 %v2425, %v8426
    %v8428 = vrot.slane %v7401, %v8427
    %v8429 = vsel %vm2430, %v8428, %v8424
    %v8430 = vlaneseq
    %v8431 = vshrl.u32 %v8430, 7
    %v8432 = vsub.s32 %v2432, %v8431
    %v8433 = vrot.slane %v7402, %v8432
    %v8434 = vsel %vm2437, %v8433, %v8429
    %v8435 = vlaneseq
    %v8436 = vshrl.u32 %v8435, 7
    %v8437 = vsub.s32 %v2439, %v8436
    %v8438 = vrot.slane %v7403, %v8437
    %v8439 = vsel %vm2444, %v8438, %v8434
    %v8440 = vlaneseq
    %v8441 = vshrl.u32 %v8440, 7
    %v8442 = vsub.s32 %v2446, %v8441
    %v8443 = vrot.slane %v7404, %v8442
    %v8444 = vsel %vm2451, %v8443, %v8439
    %v8445 = vlaneseq
    %v8446 = vshrl.u32 %v8445, 7
    %v8447 = vsub.s32 %v2453, %v8446
    %v8448 = vrot.slane %v7405, %v8447
    %v8449 = vsel %vm2458, %v8448, %v8444
    %v8450 = vlaneseq
    %v8451 = vshrl.u32 %v8450, 7
    %v8452 = vsub.s32 %v2460, %v8451
    %v8453 = vrot.slane %v7406, %v8452
    %v8454 = vsel %vm2465, %v8453, %v8449
    %v8455 = vlaneseq
    %v8456 = vshrl.u32 %v8455, 7
    %v8457 = vsub.s32 %v2467, %v8456
    %v8458 = vrot.slane %v7407, %v8457
    %v8459 = vsel %vm2472, %v8458, %v8454
    %v8460 = vlaneseq
    %v8461 = vshrl.u32 %v8460, 7
    %v8462 = vsub.s32 %v2474, %v8461
    %v8463 = vrot.slane %v7408, %v8462
    %v8464 = vsel %vm2479, %v8463, %v8459
    %v8465 = vlaneseq
    %v8466 = vshrl.u32 %v8465, 7
    %v8467 = vsub.s32 %v2481, %v8466
    %v8468 = vrot.slane %v7409, %v8467
    %v8469 = vsel %vm2486, %v8468, %v8464
    %v8470 = vlaneseq
    %v8471 = vshrl.u32 %v8470, 7
    %v8472 = vsub.s32 %v2488, %v8471
    %v8473 = vrot.slane %v7410, %v8472
    %v8474 = vsel %vm2493, %v8473, %v8469
    %v8475 = vlaneseq
    %v8476 = vshrl.u32 %v8475, 7
    %v8477 = vsub.s32 %v2495, %v8476
    %v8478 = vrot.slane %v7411, %v8477
    %v8479 = vsel %vm2500, %v8478, %v8474
    %v8480 = vlaneseq
    %v8481 = vshrl.u32 %v8480, 7
    %v8482 = vsub.s32 %v2502, %v8481
    %v8483 = vrot.slane %v7412, %v8482
    %v8484 = vsel %vm2507, %v8483, %v8479
    %v8485 = vlaneseq
    %v8486 = vshrl.u32 %v8485, 7
    %v8487 = vsub.s32 %v2509, %v8486
    %v8488 = vrot.slane %v7413, %v8487
    %v8489 = vsel %vm2514, %v8488, %v8484
    %v8490 = vlaneseq
    %v8491 = vshrl.u32 %v8490, 7
    %v8492 = vsub.s32 %v2406, %v8491
    %v8493 = vrot.slane %v7414, %v8492
    %v8494 = vlaneseq
    %v8495 = vshrl.u32 %v8494, 7
    %v8496 = vsub.s32 %v2411, %v8495
    %v8497 = vrot.slane %v7415, %v8496
    %v8498 = vsel %vm2416, %v8497, %v8493
    %v8499 = vlaneseq
    %v8500 = vshrl.u32 %v8499, 7
    %v8501 = vsub.s32 %v2418, %v8500
    %v8502 = vrot.slane %v7416, %v8501
    %v8503 = vsel %vm2423, %v8502, %v8498
    %v8504 = vlaneseq
    %v8505 = vshrl.u32 %v8504, 7
    %v8506 = vsub.s32 %v2425, %v8505
    %v8507 = vrot.slane %v7417, %v8506
    %v8508 = vsel %vm2430, %v8507, %v8503
    %v8509 = vlaneseq
    %v8510 = vshrl.u32 %v8509, 7
    %v8511 = vsub.s32 %v2432, %v8510
    %v8512 = vrot.slane %v7418, %v8511
    %v8513 = vsel %vm2437, %v8512, %v8508
    %v8514 = vlaneseq
    %v8515 = vshrl.u32 %v8514, 7
    %v8516 = vsub.s32 %v2439, %v8515
    %v8517 = vrot.slane %v7419, %v8516
    %v8518 = vsel %vm2444, %v8517, %v8513
    %v8519 = vlaneseq
    %v8520 = vshrl.u32 %v8519, 7
    %v8521 = vsub.s32 %v2446, %v8520
    %v8522 = vrot.slane %v7420, %v8521
    %v8523 = vsel %vm2451, %v8522, %v8518
    %v8524 = vlaneseq
    %v8525 = vshrl.u32 %v8524, 7
    %v8526 = vsub.s32 %v2453, %v8525
    %v8527 = vrot.slane %v7421, %v8526
    %v8528 = vsel %vm2458, %v8527, %v8523
    %v8529 = vlaneseq
    %v8530 = vshrl.u32 %v8529, 7
    %v8531 = vsub.s32 %v2460, %v8530
    %v8532 = vrot.slane %v7422, %v8531
    %v8533 = vsel %vm2465, %v8532, %v8528
    %v8534 = vlaneseq
    %v8535 = vshrl.u32 %v8534, 7
    %v8536 = vsub.s32 %v2467, %v8535
    %v8537 = vrot.slane %v7423, %v8536
    %v8538 = vsel %vm2472, %v8537, %v8533
    %v8539 = vlaneseq
    %v8540 = vshrl.u32 %v8539, 7
    %v8541 = vsub.s32 %v2474, %v8540
    %v8542 = vrot.slane %v7424, %v8541
    %v8543 = vsel %vm2479, %v8542, %v8538
    %v8544 = vlaneseq
    %v8545 = vshrl.u32 %v8544, 7
    %v8546 = vsub.s32 %v2481, %v8545
    %v8547 = vrot.slane %v7425, %v8546
    %v8548 = vsel %vm2486, %v8547, %v8543
    %v8549 = vlaneseq
    %v8550 = vshrl.u32 %v8549, 7
    %v8551 = vsub.s32 %v2488, %v8550
    %v8552 = vrot.slane %v7426, %v8551
    %v8553 = vsel %vm2493, %v8552, %v8548
    %v8554 = vlaneseq
    %v8555 = vshrl.u32 %v8554, 7
    %v8556 = vsub.s32 %v2495, %v8555
    %v8557 = vrot.slane %v7427, %v8556
    %v8558 = vsel %vm2500, %v8557, %v8553
    %v8559 = vlaneseq
    %v8560 = vshrl.u32 %v8559, 7
    %v8561 = vsub.s32 %v2502, %v8560
    %v8562 = vrot.slane %v7428, %v8561
    %v8563 = vsel %vm2507, %v8562, %v8558
    %v8564 = vlaneseq
    %v8565 = vshrl.u32 %v8564, 7
    %v8566 = vsub.s32 %v2509, %v8565
    %v8567 = vrot.slane %v7429, %v8566
    %v8568 = vsel %vm2514, %v8567, %v8563
    %v8569 = vlaneseq
    %v8570 = vshrl.u32 %v8569, 7
    %v8571 = vsub.s32 %v2406, %v8570
    %v8572 = vrot.slane %v7430, %v8571
    %v8573 = vlaneseq
    %v8574 = vshrl.u32 %v8573, 7
    %v8575 = vsub.s32 %v2411, %v8574
    %v8576 = vrot.slane %v7431, %v8575
    %v8577 = vsel %vm2416, %v8576, %v8572
    %v8578 = vlaneseq
    %v8579 = vshrl.u32 %v8578, 7
    %v8580 = vsub.s32 %v2418, %v8579
    %v8581 = vrot.slane %v7432, %v8580
    %v8582 = vsel %vm2423, %v8581, %v8577
    %v8583 = vlaneseq
    %v8584 = vshrl.u32 %v8583, 7
    %v8585 = vsub.s32 %v2425, %v8584
    %v8586 = vrot.slane %v7433, %v8585
    %v8587 = vsel %vm2430, %v8586, %v8582
    %v8588 = vlaneseq
    %v8589 = vshrl.u32 %v8588, 7
    %v8590 = vsub.s32 %v2432, %v8589
    %v8591 = vrot.slane %v7434, %v8590
    %v8592 = vsel %vm2437, %v8591, %v8587
    %v8593 = vlaneseq
    %v8594 = vshrl.u32 %v8593, 7
    %v8595 = vsub.s32 %v2439, %v8594
    %v8596 = vrot.slane %v7435, %v8595
    %v8597 = vsel %vm2444, %v8596, %v8592
    %v8598 = vlaneseq
    %v8599 = vshrl.u32 %v8598, 7
    %v8600 = vsub.s32 %v2446, %v8599
    %v8601 = vrot.slane %v7436, %v8600
    %v8602 = vsel %vm2451, %v8601, %v8597
    %v8603 = vlaneseq
    %v8604 = vshrl.u32 %v8603, 7
    %v8605 = vsub.s32 %v2453, %v8604
    %v8606 = vrot.slane %v7437, %v8605
    %v8607 = vsel %vm2458, %v8606, %v8602
    %v8608 = vlaneseq
    %v8609 = vshrl.u32 %v8608, 7
    %v8610 = vsub.s32 %v2460, %v8609
    %v8611 = vrot.slane %v7438, %v8610
    %v8612 = vsel %vm2465, %v8611, %v8607
    %v8613 = vlaneseq
    %v8614 = vshrl.u32 %v8613, 7
    %v8615 = vsub.s32 %v2467, %v8614
    %v8616 = vrot.slane %v7439, %v8615
    %v8617 = vsel %vm2472, %v8616, %v8612
    %v8618 = vlaneseq
    %v8619 = vshrl.u32 %v8618, 7
    %v8620 = vsub.s32 %v2474, %v8619
    %v8621 = vrot.slane %v7440, %v8620
    %v8622 = vsel %vm2479, %v8621, %v8617
    %v8623 = vlaneseq
    %v8624 = vshrl.u32 %v8623, 7
    %v8625 = vsub.s32 %v2481, %v8624
    %v8626 = vrot.slane %v7441, %v8625
    %v8627 = vsel %vm2486, %v8626, %v8622
    %v8628 = vlaneseq
    %v8629 = vshrl.u32 %v8628, 7
    %v8630 = vsub.s32 %v2488, %v8629
    %v8631 = vrot.slane %v7442, %v8630
    %v8632 = vsel %vm2493, %v8631, %v8627
    %v8633 = vlaneseq
    %v8634 = vshrl.u32 %v8633, 7
    %v8635 = vsub.s32 %v2495, %v8634
    %v8636 = vrot.slane %v7443, %v8635
    %v8637 = vsel %vm2500, %v8636, %v8632
    %v8638 = vlaneseq
    %v8639 = vshrl.u32 %v8638, 7
    %v8640 = vsub.s32 %v2502, %v8639
    %v8641 = vrot.slane %v7444, %v8640
    %v8642 = vsel %vm2507, %v8641, %v8637
    %v8643 = vlaneseq
    %v8644 = vshrl.u32 %v8643, 7
    %v8645 = vsub.s32 %v2509, %v8644
    %v8646 = vrot.slane %v7445, %v8645
    %v8647 = vsel %vm2514, %v8646, %v8642
    %v8648 = vlaneseq
    %v8649 = vshrl.u32 %v8648, 7
    %v8650 = vsub.s32 %v2406, %v8649
    %v8651 = vrot.slane %v7446, %v8650
    %v8652 = vlaneseq
    %v8653 = vshrl.u32 %v8652, 7
    %v8654 = vsub.s32 %v2411, %v8653
    %v8655 = vrot.slane %v7447, %v8654
    %v8656 = vsel %vm2416, %v8655, %v8651
    %v8657 = vlaneseq
    %v8658 = vshrl.u32 %v8657, 7
    %v8659 = vsub.s32 %v2418, %v8658
    %v8660 = vrot.slane %v7448, %v8659
    %v8661 = vsel %vm2423, %v8660, %v8656
    %v8662 = vlaneseq
    %v8663 = vshrl.u32 %v8662, 7
    %v8664 = vsub.s32 %v2425, %v8663
    %v8665 = vrot.slane %v7449, %v8664
    %v8666 = vsel %vm2430, %v8665, %v8661
    %v8667 = vlaneseq
    %v8668 = vshrl.u32 %v8667, 7
    %v8669 = vsub.s32 %v2432, %v8668
    %v8670 = vrot.slane %v7450, %v8669
    %v8671 = vsel %vm2437, %v8670, %v8666
    %v8672 = vlaneseq
    %v8673 = vshrl.u32 %v8672, 7
    %v8674 = vsub.s32 %v2439, %v8673
    %v8675 = vrot.slane %v7451, %v8674
    %v8676 = vsel %vm2444, %v8675, %v8671
    %v8677 = vlaneseq
    %v8678 = vshrl.u32 %v8677, 7
    %v8679 = vsub.s32 %v2446, %v8678
    %v8680 = vrot.slane %v7452, %v8679
    %v8681 = vsel %vm2451, %v8680, %v8676
    %v8682 = vlaneseq
    %v8683 = vshrl.u32 %v8682, 7
    %v8684 = vsub.s32 %v2453, %v8683
    %v8685 = vrot.slane %v7453, %v8684
    %v8686 = vsel %vm2458, %v8685, %v8681
    %v8687 = vlaneseq
    %v8688 = vshrl.u32 %v8687, 7
    %v8689 = vsub.s32 %v2460, %v8688
    %v8690 = vrot.slane %v7454, %v8689
    %v8691 = vsel %vm2465, %v8690, %v8686
    %v8692 = vlaneseq
    %v8693 = vshrl.u32 %v8692, 7
    %v8694 = vsub.s32 %v2467, %v8693
    %v8695 = vrot.slane %v7455, %v8694
    %v8696 = vsel %vm2472, %v8695, %v8691
    %v8697 = vlaneseq
    %v8698 = vshrl.u32 %v8697, 7
    %v8699 = vsub.s32 %v2474, %v8698
    %v8700 = vrot.slane %v7456, %v8699
    %v8701 = vsel %vm2479, %v8700, %v8696
    %v8702 = vlaneseq
    %v8703 = vshrl.u32 %v8702, 7
    %v8704 = vsub.s32 %v2481, %v8703
    %v8705 = vrot.slane %v7457, %v8704
    %v8706 = vsel %vm2486, %v8705, %v8701
    %v8707 = vlaneseq
    %v8708 = vshrl.u32 %v8707, 7
    %v8709 = vsub.s32 %v2488, %v8708
    %v8710 = vrot.slane %v7458, %v8709
    %v8711 = vsel %vm2493, %v8710, %v8706
    %v8712 = vlaneseq
    %v8713 = vshrl.u32 %v8712, 7
    %v8714 = vsub.s32 %v2495, %v8713
    %v8715 = vrot.slane %v7459, %v8714
    %v8716 = vsel %vm2500, %v8715, %v8711
    %v8717 = vlaneseq
    %v8718 = vshrl.u32 %v8717, 7
    %v8719 = vsub.s32 %v2502, %v8718
    %v8720 = vrot.slane %v7460, %v8719
    %v8721 = vsel %vm2507, %v8720, %v8716
    %v8722 = vlaneseq
    %v8723 = vshrl.u32 %v8722, 7
    %v8724 = vsub.s32 %v2509, %v8723
    %v8725 = vrot.slane %v7461, %v8724
    %v8726 = vsel %vm2514, %v8725, %v8721
    %v8727 = vlaneseq
    %v8728 = vshrl.u32 %v8727, 7
    %v8729 = vsub.s32 %v2406, %v8728
    %v8730 = vrot.slane %v7462, %v8729
    %v8731 = vlaneseq
    %v8732 = vshrl.u32 %v8731, 7
    %v8733 = vsub.s32 %v2411, %v8732
    %v8734 = vrot.slane %v7463, %v8733
    %v8735 = vsel %vm2416, %v8734, %v8730
    %v8736 = vlaneseq
    %v8737 = vshrl.u32 %v8736, 7
    %v8738 = vsub.s32 %v2418, %v8737
    %v8739 = vrot.slane %v7464, %v8738
    %v8740 = vsel %vm2423, %v8739, %v8735
    %v8741 = vlaneseq
    %v8742 = vshrl.u32 %v8741, 7
    %v8743 = vsub.s32 %v2425, %v8742
    %v8744 = vrot.slane %v7465, %v8743
    %v8745 = vsel %vm2430, %v8744, %v8740
    %v8746 = vlaneseq
    %v8747 = vshrl.u32 %v8746, 7
    %v8748 = vsub.s32 %v2432, %v8747
    %v8749 = vrot.slane %v7466, %v8748
    %v8750 = vsel %vm2437, %v8749, %v8745
    %v8751 = vlaneseq
    %v8752 = vshrl.u32 %v8751, 7
    %v8753 = vsub.s32 %v2439, %v8752
    %v8754 = vrot.slane %v7467, %v8753
    %v8755 = vsel %vm2444, %v8754, %v8750
    %v8756 = vlaneseq
    %v8757 = vshrl.u32 %v8756, 7
    %v8758 = vsub.s32 %v2446, %v8757
    %v8759 = vrot.slane %v7468, %v8758
    %v8760 = vsel %vm2451, %v8759, %v8755
    %v8761 = vlaneseq
    %v8762 = vshrl.u32 %v8761, 7
    %v8763 = vsub.s32 %v2453, %v8762
    %v8764 = vrot.slane %v7469, %v8763
    %v8765 = vsel %vm2458, %v8764, %v8760
    %v8766 = vlaneseq
    %v8767 = vshrl.u32 %v8766, 7
    %v8768 = vsub.s32 %v2460, %v8767
    %v8769 = vrot.slane %v7470, %v8768
    %v8770 = vsel %vm2465, %v8769, %v8765
    %v8771 = vlaneseq
    %v8772 = vshrl.u32 %v8771, 7
    %v8773 = vsub.s32 %v2467, %v8772
    %v8774 = vrot.slane %v7471, %v8773
    %v8775 = vsel %vm2472, %v8774, %v8770
    %v8776 = vlaneseq
    %v8777 = vshrl.u32 %v8776, 7
    %v8778 = vsub.s32 %v2474, %v8777
    %v8779 = vrot.slane %v7472, %v8778
    %v8780 = vsel %vm2479, %v8779, %v8775
    %v8781 = vlaneseq
    %v8782 = vshrl.u32 %v8781, 7
    %v8783 = vsub.s32 %v2481, %v8782
    %v8784 = vrot.slane %v7473, %v8783
    %v8785 = vsel %vm2486, %v8784, %v8780
    %v8786 = vlaneseq
    %v8787 = vshrl.u32 %v8786, 7
    %v8788 = vsub.s32 %v2488, %v8787
    %v8789 = vrot.slane %v7474, %v8788
    %v8790 = vsel %vm2493, %v8789, %v8785
    %v8791 = vlaneseq
    %v8792 = vshrl.u32 %v8791, 7
    %v8793 = vsub.s32 %v2495, %v8792
    %v8794 = vrot.slane %v7475, %v8793
    %v8795 = vsel %vm2500, %v8794, %v8790
    %v8796 = vlaneseq
    %v8797 = vshrl.u32 %v8796, 7
    %v8798 = vsub.s32 %v2502, %v8797
    %v8799 = vrot.slane %v7476, %v8798
    %v8800 = vsel %vm2507, %v8799, %v8795
    %v8801 = vlaneseq
    %v8802 = vshrl.u32 %v8801, 7
    %v8803 = vsub.s32 %v2509, %v8802
    %v8804 = vrot.slane %v7477, %v8803
    %v8805 = vsel %vm2514, %v8804, %v8800
    %v8806 = vlaneseq
    %v8807 = vshrl.u32 %v8806, 7
    %v8808 = vsub.s32 %v2406, %v8807
    %v8809 = vrot.slane %v7478, %v8808
    %v8810 = vlaneseq
    %v8811 = vshrl.u32 %v8810, 7
    %v8812 = vsub.s32 %v2411, %v8811
    %v8813 = vrot.slane %v7479, %v8812
    %v8814 = vsel %vm2416, %v8813, %v8809
    %v8815 = vlaneseq
    %v8816 = vshrl.u32 %v8815, 7
    %v8817 = vsub.s32 %v2418, %v8816
    %v8818 = vrot.slane %v7480, %v8817
    %v8819 = vsel %vm2423, %v8818, %v8814
    %v8820 = vlaneseq
    %v8821 = vshrl.u32 %v8820, 7
    %v8822 = vsub.s32 %v2425, %v8821
    %v8823 = vrot.slane %v7481, %v8822
    %v8824 = vsel %vm2430, %v8823, %v8819
    %v8825 = vlaneseq
    %v8826 = vshrl.u32 %v8825, 7
    %v8827 = vsub.s32 %v2432, %v8826
    %v8828 = vrot.slane %v7482, %v8827
    %v8829 = vsel %vm2437, %v8828, %v8824
    %v8830 = vlaneseq
    %v8831 = vshrl.u32 %v8830, 7
    %v8832 = vsub.s32 %v2439, %v8831
    %v8833 = vrot.slane %v7483, %v8832
    %v8834 = vsel %vm2444, %v8833, %v8829
    %v8835 = vlaneseq
    %v8836 = vshrl.u32 %v8835, 7
    %v8837 = vsub.s32 %v2446, %v8836
    %v8838 = vrot.slane %v7484, %v8837
    %v8839 = vsel %vm2451, %v8838, %v8834
    %v8840 = vlaneseq
    %v8841 = vshrl.u32 %v8840, 7
    %v8842 = vsub.s32 %v2453, %v8841
    %v8843 = vrot.slane %v7485, %v8842
    %v8844 = vsel %vm2458, %v8843, %v8839
    %v8845 = vlaneseq
    %v8846 = vshrl.u32 %v8845, 7
    %v8847 = vsub.s32 %v2460, %v8846
    %v8848 = vrot.slane %v7486, %v8847
    %v8849 = vsel %vm2465, %v8848, %v8844
    %v8850 = vlaneseq
    %v8851 = vshrl.u32 %v8850, 7
    %v8852 = vsub.s32 %v2467, %v8851
    %v8853 = vrot.slane %v7487, %v8852
    %v8854 = vsel %vm2472, %v8853, %v8849
    %v8855 = vlaneseq
    %v8856 = vshrl.u32 %v8855, 7
    %v8857 = vsub.s32 %v2474, %v8856
    %v8858 = vrot.slane %v7488, %v8857
    %v8859 = vsel %vm2479, %v8858, %v8854
    %v8860 = vlaneseq
    %v8861 = vshrl.u32 %v8860, 7
    %v8862 = vsub.s32 %v2481, %v8861
    %v8863 = vrot.slane %v7489, %v8862
    %v8864 = vsel %vm2486, %v8863, %v8859
    %v8865 = vlaneseq
    %v8866 = vshrl.u32 %v8865, 7
    %v8867 = vsub.s32 %v2488, %v8866
    %v8868 = vrot.slane %v7490, %v8867
    %v8869 = vsel %vm2493, %v8868, %v8864
    %v8870 = vlaneseq
    %v8871 = vshrl.u32 %v8870, 7
    %v8872 = vsub.s32 %v2495, %v8871
    %v8873 = vrot.slane %v7491, %v8872
    %v8874 = vsel %vm2500, %v8873, %v8869
    %v8875 = vlaneseq
    %v8876 = vshrl.u32 %v8875, 7
    %v8877 = vsub.s32 %v2502, %v8876
    %v8878 = vrot.slane %v7492, %v8877
    %v8879 = vsel %vm2507, %v8878, %v8874
    %v8880 = vlaneseq
    %v8881 = vshrl.u32 %v8880, 7
    %v8882 = vsub.s32 %v2509, %v8881
    %v8883 = vrot.slane %v7493, %v8882
    %v8884 = vsel %vm2514, %v8883, %v8879
    %v8885 = vlaneseq
    %v8886 = vshrl.u32 %v8885, 7
    %v8887 = vsub.s32 %v2406, %v8886
    %v8888 = vrot.slane %v7494, %v8887
    %v8889 = vlaneseq
    %v8890 = vshrl.u32 %v8889, 7
    %v8891 = vsub.s32 %v2411, %v8890
    %v8892 = vrot.slane %v7495, %v8891
    %v8893 = vsel %vm2416, %v8892, %v8888
    %v8894 = vlaneseq
    %v8895 = vshrl.u32 %v8894, 7
    %v8896 = vsub.s32 %v2418, %v8895
    %v8897 = vrot.slane %v7496, %v8896
    %v8898 = vsel %vm2423, %v8897, %v8893
    %v8899 = vlaneseq
    %v8900 = vshrl.u32 %v8899, 7
    %v8901 = vsub.s32 %v2425, %v8900
    %v8902 = vrot.slane %v7497, %v8901
    %v8903 = vsel %vm2430, %v8902, %v8898
    %v8904 = vlaneseq
    %v8905 = vshrl.u32 %v8904, 7
    %v8906 = vsub.s32 %v2432, %v8905
    %v8907 = vrot.slane %v7498, %v8906
    %v8908 = vsel %vm2437, %v8907, %v8903
    %v8909 = vlaneseq
    %v8910 = vshrl.u32 %v8909, 7
    %v8911 = vsub.s32 %v2439, %v8910
    %v8912 = vrot.slane %v7499, %v8911
    %v8913 = vsel %vm2444, %v8912, %v8908
    %v8914 = vlaneseq
    %v8915 = vshrl.u32 %v8914, 7
    %v8916 = vsub.s32 %v2446, %v8915
    %v8917 = vrot.slane %v7500, %v8916
    %v8918 = vsel %vm2451, %v8917, %v8913
    %v8919 = vlaneseq
    %v8920 = vshrl.u32 %v8919, 7
    %v8921 = vsub.s32 %v2453, %v8920
    %v8922 = vrot.slane %v7501, %v8921
    %v8923 = vsel %vm2458, %v8922, %v8918
    %v8924 = vlaneseq
    %v8925 = vshrl.u32 %v8924, 7
    %v8926 = vsub.s32 %v2460, %v8925
    %v8927 = vrot.slane %v7502, %v8926
    %v8928 = vsel %vm2465, %v8927, %v8923
    %v8929 = vlaneseq
    %v8930 = vshrl.u32 %v8929, 7
    %v8931 = vsub.s32 %v2467, %v8930
    %v8932 = vrot.slane %v7503, %v8931
    %v8933 = vsel %vm2472, %v8932, %v8928
    %v8934 = vlaneseq
    %v8935 = vshrl.u32 %v8934, 7
    %v8936 = vsub.s32 %v2474, %v8935
    %v8937 = vrot.slane %v7504, %v8936
    %v8938 = vsel %vm2479, %v8937, %v8933
    %v8939 = vlaneseq
    %v8940 = vshrl.u32 %v8939, 7
    %v8941 = vsub.s32 %v2481, %v8940
    %v8942 = vrot.slane %v7505, %v8941
    %v8943 = vsel %vm2486, %v8942, %v8938
    %v8944 = vlaneseq
    %v8945 = vshrl.u32 %v8944, 7
    %v8946 = vsub.s32 %v2488, %v8945
    %v8947 = vrot.slane %v7506, %v8946
    %v8948 = vsel %vm2493, %v8947, %v8943
    %v8949 = vlaneseq
    %v8950 = vshrl.u32 %v8949, 7
    %v8951 = vsub.s32 %v2495, %v8950
    %v8952 = vrot.slane %v7507, %v8951
    %v8953 = vsel %vm2500, %v8952, %v8948
    %v8954 = vlaneseq
    %v8955 = vshrl.u32 %v8954, 7
    %v8956 = vsub.s32 %v2502, %v8955
    %v8957 = vrot.slane %v7508, %v8956
    %v8958 = vsel %vm2507, %v8957, %v8953
    %v8959 = vlaneseq
    %v8960 = vshrl.u32 %v8959, 7
    %v8961 = vsub.s32 %v2509, %v8960
    %v8962 = vrot.slane %v7509, %v8961
    %v8963 = vsel %vm2514, %v8962, %v8958
    %v8964 = vlaneseq
    %v8965 = vshrl.u32 %v8964, 7
    %v8966 = vsub.s32 %v2406, %v8965
    %v8967 = vrot.slane %v7510, %v8966
    %v8968 = vlaneseq
    %v8969 = vshrl.u32 %v8968, 7
    %v8970 = vsub.s32 %v2411, %v8969
    %v8971 = vrot.slane %v7511, %v8970
    %v8972 = vsel %vm2416, %v8971, %v8967
    %v8973 = vlaneseq
    %v8974 = vshrl.u32 %v8973, 7
    %v8975 = vsub.s32 %v2418, %v8974
    %v8976 = vrot.slane %v7512, %v8975
    %v8977 = vsel %vm2423, %v8976, %v8972
    %v8978 = vlaneseq
    %v8979 = vshrl.u32 %v8978, 7
    %v8980 = vsub.s32 %v2425, %v8979
    %v8981 = vrot.slane %v7513, %v8980
    %v8982 = vsel %vm2430, %v8981, %v8977
    %v8983 = vlaneseq
    %v8984 = vshrl.u32 %v8983, 7
    %v8985 = vsub.s32 %v2432, %v8984
    %v8986 = vrot.slane %v7514, %v8985
    %v8987 = vsel %vm2437, %v8986, %v8982
    %v8988 = vlaneseq
    %v8989 = vshrl.u32 %v8988, 7
    %v8990 = vsub.s32 %v2439, %v8989
    %v8991 = vrot.slane %v7515, %v8990
    %v8992 = vsel %vm2444, %v8991, %v8987
    %v8993 = vlaneseq
    %v8994 = vshrl.u32 %v8993, 7
    %v8995 = vsub.s32 %v2446, %v8994
    %v8996 = vrot.slane %v7516, %v8995
    %v8997 = vsel %vm2451, %v8996, %v8992
    %v8998 = vlaneseq
    %v8999 = vshrl.u32 %v8998, 7
    %v9000 = vsub.s32 %v2453, %v8999
    %v9001 = vrot.slane %v7517, %v9000
    %v9002 = vsel %vm2458, %v9001, %v8997
    %v9003 = vlaneseq
    %v9004 = vshrl.u32 %v9003, 7
    %v9005 = vsub.s32 %v2460, %v9004
    %v9006 = vrot.slane %v7518, %v9005
    %v9007 = vsel %vm2465, %v9006, %v9002
    %v9008 = vlaneseq
    %v9009 = vshrl.u32 %v9008, 7
    %v9010 = vsub.s32 %v2467, %v9009
    %v9011 = vrot.slane %v7519, %v9010
    %v9012 = vsel %vm2472, %v9011, %v9007
    %v9013 = vlaneseq
    %v9014 = vshrl.u32 %v9013, 7
    %v9015 = vsub.s32 %v2474, %v9014
    %v9016 = vrot.slane %v7520, %v9015
    %v9017 = vsel %vm2479, %v9016, %v9012
    %v9018 = vlaneseq
    %v9019 = vshrl.u32 %v9018, 7
    %v9020 = vsub.s32 %v2481, %v9019
    %v9021 = vrot.slane %v7521, %v9020
    %v9022 = vsel %vm2486, %v9021, %v9017
    %v9023 = vlaneseq
    %v9024 = vshrl.u32 %v9023, 7
    %v9025 = vsub.s32 %v2488, %v9024
    %v9026 = vrot.slane %v7522, %v9025
    %v9027 = vsel %vm2493, %v9026, %v9022
    %v9028 = vlaneseq
    %v9029 = vshrl.u32 %v9028, 7
    %v9030 = vsub.s32 %v2495, %v9029
    %v9031 = vrot.slane %v7523, %v9030
    %v9032 = vsel %vm2500, %v9031, %v9027
    %v9033 = vlaneseq
    %v9034 = vshrl.u32 %v9033, 7
    %v9035 = vsub.s32 %v2502, %v9034
    %v9036 = vrot.slane %v7524, %v9035
    %v9037 = vsel %vm2507, %v9036, %v9032
    %v9038 = vlaneseq
    %v9039 = vshrl.u32 %v9038, 7
    %v9040 = vsub.s32 %v2509, %v9039
    %v9041 = vrot.slane %v7525, %v9040
    %v9042 = vsel %vm2514, %v9041, %v9037
    %v9043 = vlaneseq
    %v9044 = vshrl.u32 %v9043, 7
    %v9045 = vsub.s32 %v2406, %v9044
    %v9046 = vrot.slane %v7526, %v9045
    %v9047 = vlaneseq
    %v9048 = vshrl.u32 %v9047, 7
    %v9049 = vsub.s32 %v2411, %v9048
    %v9050 = vrot.slane %v7527, %v9049
    %v9051 = vsel %vm2416, %v9050, %v9046
    %v9052 = vlaneseq
    %v9053 = vshrl.u32 %v9052, 7
    %v9054 = vsub.s32 %v2418, %v9053
    %v9055 = vrot.slane %v7528, %v9054
    %v9056 = vsel %vm2423, %v9055, %v9051
    %v9057 = vlaneseq
    %v9058 = vshrl.u32 %v9057, 7
    %v9059 = vsub.s32 %v2425, %v9058
    %v9060 = vrot.slane %v7529, %v9059
    %v9061 = vsel %vm2430, %v9060, %v9056
    %v9062 = vlaneseq
    %v9063 = vshrl.u32 %v9062, 7
    %v9064 = vsub.s32 %v2432, %v9063
    %v9065 = vrot.slane %v7530, %v9064
    %v9066 = vsel %vm2437, %v9065, %v9061
    %v9067 = vlaneseq
    %v9068 = vshrl.u32 %v9067, 7
    %v9069 = vsub.s32 %v2439, %v9068
    %v9070 = vrot.slane %v7531, %v9069
    %v9071 = vsel %vm2444, %v9070, %v9066
    %v9072 = vlaneseq
    %v9073 = vshrl.u32 %v9072, 7
    %v9074 = vsub.s32 %v2446, %v9073
    %v9075 = vrot.slane %v7532, %v9074
    %v9076 = vsel %vm2451, %v9075, %v9071
    %v9077 = vlaneseq
    %v9078 = vshrl.u32 %v9077, 7
    %v9079 = vsub.s32 %v2453, %v9078
    %v9080 = vrot.slane %v7533, %v9079
    %v9081 = vsel %vm2458, %v9080, %v9076
    %v9082 = vlaneseq
    %v9083 = vshrl.u32 %v9082, 7
    %v9084 = vsub.s32 %v2460, %v9083
    %v9085 = vrot.slane %v7534, %v9084
    %v9086 = vsel %vm2465, %v9085, %v9081
    %v9087 = vlaneseq
    %v9088 = vshrl.u32 %v9087, 7
    %v9089 = vsub.s32 %v2467, %v9088
    %v9090 = vrot.slane %v7535, %v9089
    %v9091 = vsel %vm2472, %v9090, %v9086
    %v9092 = vlaneseq
    %v9093 = vshrl.u32 %v9092, 7
    %v9094 = vsub.s32 %v2474, %v9093
    %v9095 = vrot.slane %v7536, %v9094
    %v9096 = vsel %vm2479, %v9095, %v9091
    %v9097 = vlaneseq
    %v9098 = vshrl.u32 %v9097, 7
    %v9099 = vsub.s32 %v2481, %v9098
    %v9100 = vrot.slane %v7537, %v9099
    %v9101 = vsel %vm2486, %v9100, %v9096
    %v9102 = vlaneseq
    %v9103 = vshrl.u32 %v9102, 7
    %v9104 = vsub.s32 %v2488, %v9103
    %v9105 = vrot.slane %v7538, %v9104
    %v9106 = vsel %vm2493, %v9105, %v9101
    %v9107 = vlaneseq
    %v9108 = vshrl.u32 %v9107, 7
    %v9109 = vsub.s32 %v2495, %v9108
    %v9110 = vrot.slane %v7539, %v9109
    %v9111 = vsel %vm2500, %v9110, %v9106
    %v9112 = vlaneseq
    %v9113 = vshrl.u32 %v9112, 7
    %v9114 = vsub.s32 %v2502, %v9113
    %v9115 = vrot.slane %v7540, %v9114
    %v9116 = vsel %vm2507, %v9115, %v9111
    %v9117 = vlaneseq
    %v9118 = vshrl.u32 %v9117, 7
    %v9119 = vsub.s32 %v2509, %v9118
    %v9120 = vrot.slane %v7541, %v9119
    %v9121 = vsel %vm2514, %v9120, %v9116
    %v9122 = vsel %vm4017, %v8015, %v7620
    %v9123 = vsel %vm4019, %v8410, %v9122
    %v9124 = vsel %vm4021, %v8805, %v9123
    %v9125 = vsel %vm4017, %v8094, %v7699
    %v9126 = vsel %vm4019, %v8489, %v9125
    %v9127 = vsel %vm4021, %v8884, %v9126
    %v9128 = vsel %vm4017, %v8173, %v7778
    %v9129 = vsel %vm4019, %v8568, %v9128
    %v9130 = vsel %vm4021, %v8963, %v9129
    %v9131 = vsel %vm4017, %v8252, %v7857
    %v9132 = vsel %vm4019, %v8647, %v9131
    %v9133 = vsel %vm4021, %v9042, %v9132
    %v9134 = vsel %vm4017, %v8331, %v7936
    %v9135 = vsel %vm4019, %v8726, %v9134
    %v9136 = vsel %vm4021, %v9121, %v9135
    %v9137 = vpack.c.b16 %v9124, %v9124
    %v9138 = vpack.c.b16 %v9127, %v9127
    %v9139 = vpack.c.b16 %v9130, %v9130
    %v9140 = vpack.c.b16 %v9133, %v9133
    %v9141 = vpack.c.b16 %v9136, %v9136
    %v9227 = vunpack.c.l.b16 %v6982
    %v9228 = vunpack.c.h.b16 %v6982
    %v9229 = vunpack.c.l.b16 %v6983
    %v9230 = vunpack.c.h.b16 %v6983
    %v9231 = vunpack.c.l.b16 %v6984
    %v9232 = vunpack.c.h.b16 %v6984
    %v9233 = vunpack.c.l.b16 %v6985
    %v9234 = vunpack.c.h.b16 %v6985
    %v9235 = vunpack.c.l.b16 %v6986
    %v9236 = vunpack.c.h.b16 %v6986
    %v9237 = vunpack.c.l.b16 %v6987
    %v9238 = vunpack.c.h.b16 %v6987
    %v9239 = vunpack.c.l.b16 %v6988
    %v9240 = vunpack.c.h.b16 %v6988
    %v9241 = vunpack.c.l.b16 %v6989
    %v9242 = vunpack.c.h.b16 %v6989
    %v9243 = vunpack.c.l.b16 %v6990
    %v9244 = vunpack.c.h.b16 %v6990
    %v9245 = vunpack.c.l.b16 %v6991
    %v9246 = vunpack.c.h.b16 %v6991
    %v9247 = vunpack.c.l.b16 %v6992
    %v9248 = vunpack.c.h.b16 %v6992
    %v9249 = vunpack.c.l.b16 %v6993
    %v9250 = vunpack.c.h.b16 %v6993
    %v9251 = vunpack.c.l.b16 %v6994
    %v9252 = vunpack.c.h.b16 %v6994
    %v9253 = vunpack.c.l.b16 %v6995
    %v9254 = vunpack.c.h.b16 %v6995
    %v9255 = vunpack.c.l.b16 %v6996
    %v9256 = vunpack.c.h.b16 %v6996
    %v9257 = vunpack.c.l.b16 %v6997
    %v9258 = vunpack.c.h.b16 %v6997
    %v9259 = vunpack.c.l.b16 %v6998
    %v9260 = vunpack.c.h.b16 %v6998
    %v9261 = vunpack.c.l.b16 %v6999
    %v9262 = vunpack.c.h.b16 %v6999
    %v9263 = vunpack.c.l.b16 %v7000
    %v9264 = vunpack.c.h.b16 %v7000
    %v9265 = vunpack.c.l.b16 %v7001
    %v9266 = vunpack.c.h.b16 %v7001
    %v9267 = vunpack.c.l.b16 %v7002
    %v9268 = vunpack.c.h.b16 %v7002
    %v9269 = vunpack.c.l.b16 %v7003
    %v9270 = vunpack.c.h.b16 %v7003
    %v9271 = vunpack.c.l.b16 %v7004
    %v9272 = vunpack.c.h.b16 %v7004
    %v9273 = vunpack.c.l.b16 %v7005
    %v9274 = vunpack.c.h.b16 %v7005
    %v9275 = vunpack.c.l.b16 %v7006
    %v9276 = vunpack.c.h.b16 %v7006
    %v9277 = vunpack.c.l.b16 %v7007
    %v9278 = vunpack.c.h.b16 %v7007
    %v9279 = vunpack.c.l.b16 %v7008
    %v9280 = vunpack.c.h.b16 %v7008
    %v9281 = vunpack.c.l.b16 %v7009
    %v9282 = vunpack.c.h.b16 %v7009
    %v9283 = vunpack.c.l.b16 %v7010
    %v9284 = vunpack.c.h.b16 %v7010
    %v9285 = vunpack.c.l.b16 %v7011
    %v9286 = vunpack.c.h.b16 %v7011
    %v9287 = vunpack.c.l.b16 %v7012
    %v9288 = vunpack.c.h.b16 %v7012
    %v9289 = vunpack.c.l.b16 %v7013
    %v9290 = vunpack.c.h.b16 %v7013
    %v9291 = vunpack.c.l.b16 %v7014
    %v9292 = vunpack.c.h.b16 %v7014
    %v9293 = vunpack.c.l.b16 %v7015
    %v9294 = vunpack.c.h.b16 %v7015
    %v9295 = vunpack.c.l.b16 %v7016
    %v9296 = vunpack.c.h.b16 %v7016
    %v9297 = vunpack.c.l.b16 %v7017
    %v9298 = vunpack.c.h.b16 %v7017
    %v9299 = vunpack.c.l.b16 %v7018
    %v9300 = vunpack.c.h.b16 %v7018
    %v9301 = vunpack.c.l.b16 %v7019
    %v9302 = vunpack.c.h.b16 %v7019
    %v9303 = vunpack.c.l.b16 %v7020
    %v9304 = vunpack.c.h.b16 %v7020
    %v9305 = vunpack.c.l.b16 %v7021
    %v9306 = vunpack.c.h.b16 %v7021
    %v9307 = vunpack.c.l.b16 %v7022
    %v9308 = vunpack.c.h.b16 %v7022
    %v9309 = vunpack.c.l.b16 %v7023
    %v9310 = vunpack.c.h.b16 %v7023
    %v9311 = vunpack.c.l.b16 %v7024
    %v9312 = vunpack.c.h.b16 %v7024
    %v9313 = vunpack.c.l.b16 %v7025
    %v9314 = vunpack.c.h.b16 %v7025
    %v9315 = vunpack.c.l.b16 %v7026
    %v9316 = vunpack.c.h.b16 %v7026
    %v9317 = vunpack.c.l.b16 %v7027
    %v9318 = vunpack.c.h.b16 %v7027
    %v9319 = vunpack.c.l.b16 %v7028
    %v9320 = vunpack.c.h.b16 %v7028
    %v9321 = vunpack.c.l.b16 %v7029
    %v9322 = vunpack.c.h.b16 %v7029
    %v9323 = vunpack.c.l.b16 %v7030
    %v9324 = vunpack.c.h.b16 %v7030
    %v9325 = vunpack.c.l.b16 %v7031
    %v9326 = vunpack.c.h.b16 %v7031
    %v9327 = vunpack.c.l.b16 %v7032
    %v9328 = vunpack.c.h.b16 %v7032
    %v9329 = vunpack.c.l.b16 %v7033
    %v9330 = vunpack.c.h.b16 %v7033
    %v9331 = vunpack.c.l.b16 %v7034
    %v9332 = vunpack.c.h.b16 %v7034
    %v9333 = vunpack.c.l.b16 %v7035
    %v9334 = vunpack.c.h.b16 %v7035
    %v9335 = vunpack.c.l.b16 %v7036
    %v9336 = vunpack.c.h.b16 %v7036
    %v9337 = vunpack.c.l.b16 %v7037
    %v9338 = vunpack.c.h.b16 %v7037
    %v9339 = vunpack.c.l.b16 %v7038
    %v9340 = vunpack.c.h.b16 %v7038
    %v9341 = vunpack.c.l.b16 %v7039
    %v9342 = vunpack.c.h.b16 %v7039
    %v9343 = vunpack.c.l.b16 %v7040
    %v9344 = vunpack.c.h.b16 %v7040
    %v9345 = vunpack.c.l.b16 %v7041
    %v9346 = vunpack.c.h.b16 %v7041
    %v9347 = vunpack.c.l.b16 %v7042
    %v9348 = vunpack.c.h.b16 %v7042
    %v9349 = vunpack.c.l.b16 %v7043
    %v9350 = vunpack.c.h.b16 %v7043
    %v9351 = vunpack.c.l.b16 %v7044
    %v9352 = vunpack.c.h.b16 %v7044
    %v9353 = vunpack.c.l.b16 %v7045
    %v9354 = vunpack.c.h.b16 %v7045
    %v9355 = vunpack.c.l.b16 %v7046
    %v9356 = vunpack.c.h.b16 %v7046
    %v9357 = vunpack.c.l.b16 %v7047
    %v9358 = vunpack.c.h.b16 %v7047
    %v9359 = vunpack.c.l.b16 %v7048
    %v9360 = vunpack.c.h.b16 %v7048
    %v9361 = vunpack.c.l.b16 %v7049
    %v9362 = vunpack.c.h.b16 %v7049
    %v9363 = vunpack.c.l.b16 %v7050
    %v9364 = vunpack.c.h.b16 %v7050
    %v9365 = vunpack.c.l.b16 %v7051
    %v9366 = vunpack.c.h.b16 %v7051
    %v9367 = vunpack.c.l.b16 %v7052
    %v9368 = vunpack.c.h.b16 %v7052
    %v9369 = vunpack.c.l.b16 %v7053
    %v9370 = vunpack.c.h.b16 %v7053
    %v9371 = vunpack.c.l.b16 %v7054
    %v9372 = vunpack.c.h.b16 %v7054
    %v9373 = vunpack.c.l.b16 %v7055
    %v9374 = vunpack.c.h.b16 %v7055
    %v9375 = vunpack.c.l.b16 %v7056
    %v9376 = vunpack.c.h.b16 %v7056
    %v9377 = vunpack.c.l.b16 %v7057
    %v9378 = vunpack.c.h.b16 %v7057
    %v9379 = vunpack.c.l.b16 %v7058
    %v9380 = vunpack.c.h.b16 %v7058
    %v9381 = vunpack.c.l.b16 %v7059
    %v9382 = vunpack.c.h.b16 %v7059
    %v9383 = vunpack.c.l.b16 %v7060
    %v9384 = vunpack.c.h.b16 %v7060
    %v9385 = vunpack.c.l.b16 %v7061
    %v9386 = vunpack.c.h.b16 %v7061
    %v9387 = vpack.c.b16 %v9229, %v9227
    %v9388 = vpack.c.b16 %v9230, %v9228
    %v9389 = vpack.c.b16 %v9233, %v9231
    %v9390 = vpack.c.b16 %v9234, %v9232
    %v9391 = vpack.c.b16 %v9237, %v9235
    %v9392 = vpack.c.b16 %v9238, %v9236
    %v9393 = vpack.c.b16 %v9241, %v9239
    %v9394 = vpack.c.b16 %v9242, %v9240
    %v9395 = vpack.c.b16 %v9245, %v9243
    %v9396 = vpack.c.b16 %v9246, %v9244
    %v9397 = vpack.c.b16 %v9249, %v9247
    %v9398 = vpack.c.b16 %v9250, %v9248
    %v9399 = vpack.c.b16 %v9253, %v9251
    %v9400 = vpack.c.b16 %v9254, %v9252
    %v9401 = vpack.c.b16 %v9257, %v9255
    %v9402 = vpack.c.b16 %v9258, %v9256
    %v9403 = vpack.c.b16 %v9261, %v9259
    %v9404 = vpack.c.b16 %v9262, %v9260
    %v9405 = vpack.c.b16 %v9265, %v9263
    %v9406 = vpack.c.b16 %v9266, %v9264
    %v9407 = vpack.c.b16 %v9269, %v9267
    %v9408 = vpack.c.b16 %v9270, %v9268
    %v9409 = vpack.c.b16 %v9273, %v9271
    %v9410 = vpack.c.b16 %v9274, %v9272
    %v9411 = vpack.c.b16 %v9277, %v9275
    %v9412 = vpack.c.b16 %v9278, %v9276
    %v9413 = vpack.c.b16 %v9281, %v9279
    %v9414 = vpack.c.b16 %v9282, %v9280
    %v9415 = vpack.c.b16 %v9285, %v9283
    %v9416 = vpack.c.b16 %v9286, %v9284
    %v9417 = vpack.c.b16 %v9289, %v9287
    %v9418 = vpack.c.b16 %v9290, %v9288
    %v9419 = vpack.c.b16 %v9293, %v9291
    %v9420 = vpack.c.b16 %v9294, %v9292
    %v9421 = vpack.c.b16 %v9297, %v9295
    %v9422 = vpack.c.b16 %v9298, %v9296
    %v9423 = vpack.c.b16 %v9301, %v9299
    %v9424 = vpack.c.b16 %v9302, %v9300
    %v9425 = vpack.c.b16 %v9305, %v9303
    %v9426 = vpack.c.b16 %v9306, %v9304
    %v9427 = vpack.c.b16 %v9309, %v9307
    %v9428 = vpack.c.b16 %v9310, %v9308
    %v9429 = vpack.c.b16 %v9313, %v9311
    %v9430 = vpack.c.b16 %v9314, %v9312
    %v9431 = vpack.c.b16 %v9317, %v9315
    %v9432 = vpack.c.b16 %v9318, %v9316
    %v9433 = vpack.c.b16 %v9321, %v9319
    %v9434 = vpack.c.b16 %v9322, %v9320
    %v9435 = vpack.c.b16 %v9325, %v9323
    %v9436 = vpack.c.b16 %v9326, %v9324
    %v9437 = vpack.c.b16 %v9329, %v9327
    %v9438 = vpack.c.b16 %v9330, %v9328
    %v9439 = vpack.c.b16 %v9333, %v9331
    %v9440 = vpack.c.b16 %v9334, %v9332
    %v9441 = vpack.c.b16 %v9337, %v9335
    %v9442 = vpack.c.b16 %v9338, %v9336
    %v9443 = vpack.c.b16 %v9341, %v9339
    %v9444 = vpack.c.b16 %v9342, %v9340
    %v9445 = vpack.c.b16 %v9345, %v9343
    %v9446 = vpack.c.b16 %v9346, %v9344
    %v9447 = vpack.c.b16 %v9349, %v9347
    %v9448 = vpack.c.b16 %v9350, %v9348
    %v9449 = vpack.c.b16 %v9353, %v9351
    %v9450 = vpack.c.b16 %v9354, %v9352
    %v9451 = vpack.c.b16 %v9357, %v9355
    %v9452 = vpack.c.b16 %v9358, %v9356
    %v9453 = vpack.c.b16 %v9361, %v9359
    %v9454 = vpack.c.b16 %v9362, %v9360
    %v9455 = vpack.c.b16 %v9365, %v9363
    %v9456 = vpack.c.b16 %v9366, %v9364
    %v9457 = vpack.c.b16 %v9369, %v9367
    %v9458 = vpack.c.b16 %v9370, %v9368
    %v9459 = vpack.c.b16 %v9373, %v9371
    %v9460 = vpack.c.b16 %v9374, %v9372
    %v9461 = vpack.c.b16 %v9377, %v9375
    %v9462 = vpack.c.b16 %v9378, %v9376
    %v9463 = vpack.c.b16 %v9381, %v9379
    %v9464 = vpack.c.b16 %v9382, %v9380
    %v9465 = vpack.c.b16 %v9385, %v9383
    %v9466 = vpack.c.b16 %v9386, %v9384
    %9547 = vmatprep.subr.bf16.mxu0 %v9388
    %9548 = vmatpush1.bf16.msra.mxu0 %v9387
    %9549 = vmatprep.subr.bf16.mxu0 %v9390
    %9550 = vmatpush1.bf16.msra.mxu0 %v9389
    %9551 = vmatprep.subr.bf16.mxu0 %v9392
    %9552 = vmatpush1.bf16.msra.mxu0 %v9391
    %9553 = vmatprep.subr.bf16.mxu0 %v9394
    %9554 = vmatpush1.bf16.msra.mxu0 %v9393
    %9555 = vmatprep.subr.bf16.mxu0 %v9396
    %9556 = vmatpush1.bf16.msra.mxu0 %v9395
    %9557 = vmatprep.subr.bf16.mxu0 %v9398
    %9558 = vmatpush1.bf16.msra.mxu0 %v9397
    %9559 = vmatprep.subr.bf16.mxu0 %v9400
    %9560 = vmatpush1.bf16.msra.mxu0 %v9399
    %9561 = vmatprep.subr.bf16.mxu0 %v9402
    %9562 = vmatpush1.bf16.msra.mxu0 %v9401
    %9563 = vmatprep.subr.bf16.mxu0 %v9404
    %9564 = vmatpush1.bf16.msra.mxu0 %v9403
    %9565 = vmatprep.subr.bf16.mxu0 %v9406
    %9566 = vmatpush1.bf16.msra.mxu0 %v9405
    %9567 = vmatprep.subr.bf16.mxu0 %v9408
    %9568 = vmatpush1.bf16.msra.mxu0 %v9407
    %9569 = vmatprep.subr.bf16.mxu0 %v9410
    %9570 = vmatpush1.bf16.msra.mxu0 %v9409
    %9571 = vmatprep.subr.bf16.mxu0 %v9412
    %9572 = vmatpush1.bf16.msra.mxu0 %v9411
    %9573 = vmatprep.subr.bf16.mxu0 %v9414
    %9574 = vmatpush1.bf16.msra.mxu0 %v9413
    %9575 = vmatprep.subr.bf16.mxu0 %v9416
    %9576 = vmatpush1.bf16.msra.mxu0 %v9415
    %9577 = vmatprep.subr.bf16.mxu0 %v9418
    %9578 = vmatpush1.bf16.msra.mxu0 %v9417
    %9579 = vmatprep.mubr.bf16.mxu0 %v9138
    %9580 = vmatmul.mubr.bf16.gmra.mrb[0].mxu0 %v9137
    %v9581 = vpop.f32.mrb[0].mxu0
    %v9582 = vadd.f32 0.0, %v9581
    %v9583 = vpop.f32.mrb[0].mxu0
    %v9584 = vadd.f32 0.0, %v9583
    %v9585 = vpop.f32.mrb[0].mxu0
    %v9586 = vpop.f32.mrb[0].mxu0
    %9587 = vdwg.mxu0
    %9588 = vmatprep.subr.bf16.mxu0 %v9420
    %9589 = vmatpush1.bf16.msra.mxu0 %v9419
    %9590 = vmatprep.subr.bf16.mxu0 %v9422
    %9591 = vmatpush1.bf16.msra.mxu0 %v9421
    %9592 = vmatprep.subr.bf16.mxu0 %v9424
    %9593 = vmatpush1.bf16.msra.mxu0 %v9423
    %9594 = vmatprep.subr.bf16.mxu0 %v9426
    %9595 = vmatpush1.bf16.msra.mxu0 %v9425
    %9596 = vmatprep.subr.bf16.mxu0 %v9428
    %9597 = vmatpush1.bf16.msra.mxu0 %v9427
    %9598 = vmatprep.subr.bf16.mxu0 %v9430
    %9599 = vmatpush1.bf16.msra.mxu0 %v9429
    %9600 = vmatprep.subr.bf16.mxu0 %v9432
    %9601 = vmatpush1.bf16.msra.mxu0 %v9431
    %9602 = vmatprep.subr.bf16.mxu0 %v9434
    %9603 = vmatpush1.bf16.msra.mxu0 %v9433
    %9604 = vmatprep.subr.bf16.mxu0 %v9436
    %9605 = vmatpush1.bf16.msra.mxu0 %v9435
    %9606 = vmatprep.subr.bf16.mxu0 %v9438
    %9607 = vmatpush1.bf16.msra.mxu0 %v9437
    %9608 = vmatprep.subr.bf16.mxu0 %v9440
    %9609 = vmatpush1.bf16.msra.mxu0 %v9439
    %9610 = vmatprep.subr.bf16.mxu0 %v9442
    %9611 = vmatpush1.bf16.msra.mxu0 %v9441
    %9612 = vmatprep.subr.bf16.mxu0 %v9444
    %9613 = vmatpush1.bf16.msra.mxu0 %v9443
    %9614 = vmatprep.subr.bf16.mxu0 %v9446
    %9615 = vmatpush1.bf16.msra.mxu0 %v9445
    %9616 = vmatprep.subr.bf16.mxu0 %v9448
    %9617 = vmatpush1.bf16.msra.mxu0 %v9447
    %9618 = vmatprep.subr.bf16.mxu0 %v9450
    %9619 = vmatpush1.bf16.msra.mxu0 %v9449
    %9620 = vmatprep.mubr.bf16.mxu0 %v9140
    %9621 = vmatmul.mubr.bf16.gmra.mrb[0].mxu0 %v9139
    %v9622 = vpop.f32.mrb[0].mxu0
    %v9623 = vadd.f32 %v9582, %v9622
    %v9624 = vpop.f32.mrb[0].mxu0
    %v9625 = vadd.f32 %v9584, %v9624
    %v9626 = vpop.f32.mrb[0].mxu0
    %v9627 = vpop.f32.mrb[0].mxu0
    %9628 = vdwg.mxu0
    %9629 = vmatprep.subr.bf16.mxu0 %v9452
    %9630 = vmatpush1.bf16.msra.mxu0 %v9451
    %9631 = vmatprep.subr.bf16.mxu0 %v9454
    %9632 = vmatpush1.bf16.msra.mxu0 %v9453
    %9633 = vmatprep.subr.bf16.mxu0 %v9456
    %9634 = vmatpush1.bf16.msra.mxu0 %v9455
    %9635 = vmatprep.subr.bf16.mxu0 %v9458
    %9636 = vmatpush1.bf16.msra.mxu0 %v9457
    %9637 = vmatprep.subr.bf16.mxu0 %v9460
    %9638 = vmatpush1.bf16.msra.mxu0 %v9459
    %9639 = vmatprep.subr.bf16.mxu0 %v9462
    %9640 = vmatpush1.bf16.msra.mxu0 %v9461
    %9641 = vmatprep.subr.bf16.mxu0 %v9464
    %9642 = vmatpush1.bf16.msra.mxu0 %v9463
    %9643 = vmatprep.subr.bf16.mxu0 %v9466
    %9644 = vmatpush1.bf16.msra.mxu0 %v9465
    %9645 = vmatprep.subr.bf16.mxu0 0
    %9646 = vmatpush1.bf16.msra.mxu0 0
    %9647 = vmatprep.subr.bf16.mxu0 0
    %9648 = vmatpush1.bf16.msra.mxu0 0
    %9649 = vmatprep.subr.bf16.mxu0 0
    %9650 = vmatpush1.bf16.msra.mxu0 0
    %9651 = vmatprep.subr.bf16.mxu0 0
    %9652 = vmatpush1.bf16.msra.mxu0 0
    %9653 = vmatprep.subr.bf16.mxu0 0
    %9654 = vmatpush1.bf16.msra.mxu0 0
    %9655 = vmatprep.subr.bf16.mxu0 0
    %9656 = vmatpush1.bf16.msra.mxu0 0
    %9657 = vmatprep.subr.bf16.mxu0 0
    %9658 = vmatpush1.bf16.msra.mxu0 0
    %9659 = vmatprep.subr.bf16.mxu0 0
    %9660 = vmatpush1.bf16.msra.mxu0 0
    %9661 = vmatprep.mubr.bf16.mxu0 0
    %9662 = vmatmul.mubr.bf16.gmra.mrb[0].mxu0 %v9141
    %v9663 = vpop.f32.mrb[0].mxu0
    %v9664 = vadd.f32 %v9623, %v9663
    %v9665 = vpop.f32.mrb[0].mxu0
    %v9666 = vadd.f32 %v9625, %v9665
    %v9667 = vpop.f32.mrb[0].mxu0
    %v9668 = vpop.f32.mrb[0].mxu0
    %9669 = vdwg.mxu0
    %v9670 = vadd.f32 %v4579, %v9664
    %v9671 = vadd.f32 %v4580, %v9666
    %v9672 = vmax.f32 %v9670, 0.0
    %v9673 = vmax.f32 %v9671, 0.0
    %v9674 = vpack.c.bf16 %v9672, %v9672
    %v9675 = vpack.c.bf16 %v9673, %v9673
    %v9676 = vld [vmem:[#allocation7] sm:$0xf]
    %v9677 = vld [vmem:[#allocation7 + $0x4] sm:$0xf]
    %v9678 = vld [vmem:[#allocation7 + $0x8] sm:$0xf]
    %v9679 = vld [vmem:[#allocation7 + $0xc] sm:$0xf]
    %v9680 = vld [vmem:[#allocation7 + $0x10] sm:$0xf]
    %v9681 = vld [vmem:[#allocation7 + $0x14] sm:$0xf]
    %v9682 = vld [vmem:[#allocation7 + $0x18] sm:$0xf]
    %v9683 = vld [vmem:[#allocation7 + $0x1c] sm:$0xf]
    %v9684 = vld [vmem:[#allocation7 + $0x20] sm:$0xf]
    %v9685 = vld [vmem:[#allocation7 + $0x24] sm:$0xf]
    %v9686 = vld [vmem:[#allocation7 + $0x28] sm:$0xf]
    %v9687 = vld [vmem:[#allocation7 + $0x2c] sm:$0xf]
    %v9688 = vld [vmem:[#allocation7 + $0x30] sm:$0xf]
    %v9689 = vld [vmem:[#allocation7 + $0x34] sm:$0xf]
    %v9690 = vld [vmem:[#allocation7 + $0x38] sm:$0xf]
    %v9691 = vld [vmem:[#allocation7 + $0x3c] sm:$0xf]
    %v9692 = vld [vmem:[#allocation7 + $0x40] sm:$0xf]
    %v9693 = vld [vmem:[#allocation7 + $0x44] sm:$0xf]
    %v9694 = vld [vmem:[#allocation7 + $0x48] sm:$0xf]
    %v9695 = vld [vmem:[#allocation7 + $0x4c] sm:$0xf]
    %v9696 = vld [vmem:[#allocation7 + $0x50] sm:$0xf]
    %v9697 = vld [vmem:[#allocation7 + $0x54] sm:$0xf]
    %v9698 = vld [vmem:[#allocation7 + $0x58] sm:$0xf]
    %v9699 = vld [vmem:[#allocation7 + $0x5c] sm:$0xf]
    %v9700 = vld [vmem:[#allocation7 + $0x60] sm:$0xf]
    %v9701 = vld [vmem:[#allocation7 + $0x64] sm:$0xf]
    %v9702 = vld [vmem:[#allocation7 + $0x68] sm:$0xf]
    %v9703 = vld [vmem:[#allocation7 + $0x6c] sm:$0xf]
    %v9704 = vld [vmem:[#allocation7 + $0x70] sm:$0xf]
    %v9705 = vld [vmem:[#allocation7 + $0x74] sm:$0xf]
    %v9706 = vld [vmem:[#allocation7 + $0x78] sm:$0xf]
    %v9707 = vld [vmem:[#allocation7 + $0x7c] sm:$0xf]
    %v9708 = vld [vmem:[%s4] sm:$0x1]
    %v9710 = vlaneseq
    %v9711 = vshrl.u32 %v9710, 7
    %v9712 = vsub.s32 0, %v9711
    %v9713 = vrot.slane %v9708, %v9712
    %v9747 = vunpack.c.l.b16 %v9676
    %v9748 = vunpack.c.l.b16 %v9677
    %v9749 = vunpack.c.l.b16 %v9678
    %v9750 = vunpack.c.l.b16 %v9679
    %v9751 = vunpack.c.l.b16 %v9680
    %v9752 = vunpack.c.l.b16 %v9681
    %v9753 = vunpack.c.l.b16 %v9682
    %v9754 = vunpack.c.l.b16 %v9683
    %v9755 = vunpack.c.l.b16 %v9684
    %v9756 = vunpack.c.l.b16 %v9685
    %v9757 = vunpack.c.l.b16 %v9686
    %v9758 = vunpack.c.l.b16 %v9687
    %v9759 = vunpack.c.l.b16 %v9688
    %v9760 = vunpack.c.l.b16 %v9689
    %v9761 = vunpack.c.l.b16 %v9690
    %v9762 = vunpack.c.l.b16 %v9691
    %v9763 = vunpack.c.l.b16 %v9692
    %v9764 = vunpack.c.l.b16 %v9693
    %v9765 = vunpack.c.l.b16 %v9694
    %v9766 = vunpack.c.l.b16 %v9695
    %v9767 = vunpack.c.l.b16 %v9696
    %v9768 = vunpack.c.l.b16 %v9697
    %v9769 = vunpack.c.l.b16 %v9698
    %v9770 = vunpack.c.l.b16 %v9699
    %v9771 = vunpack.c.l.b16 %v9700
    %v9772 = vunpack.c.l.b16 %v9701
    %v9773 = vunpack.c.l.b16 %v9702
    %v9774 = vunpack.c.l.b16 %v9703
    %v9775 = vunpack.c.l.b16 %v9704
    %v9776 = vunpack.c.l.b16 %v9705
    %v9777 = vunpack.c.l.b16 %v9706
    %v9778 = vunpack.c.l.b16 %v9707
    %v9779 = vpack.c.b16 %v9748, %v9747
    %v9780 = vpack.c.b16 %v9750, %v9749
    %v9781 = vpack.c.b16 %v9752, %v9751
    %v9782 = vpack.c.b16 %v9754, %v9753
    %v9783 = vpack.c.b16 %v9756, %v9755
    %v9784 = vpack.c.b16 %v9758, %v9757
    %v9785 = vpack.c.b16 %v9760, %v9759
    %v9786 = vpack.c.b16 %v9762, %v9761
    %v9787 = vpack.c.b16 %v9764, %v9763
    %v9788 = vpack.c.b16 %v9766, %v9765
    %v9789 = vpack.c.b16 %v9768, %v9767
    %v9790 = vpack.c.b16 %v9770, %v9769
    %v9791 = vpack.c.b16 %v9772, %v9771
    %v9792 = vpack.c.b16 %v9774, %v9773
    %v9793 = vpack.c.b16 %v9776, %v9775
    %v9794 = vpack.c.b16 %v9778, %v9777
    %9811 = vmatprep.subr.bf16.mxu0 0
    %9812 = vmatpush1.bf16.msra.mxu0 %v9779
    %9813 = vmatprep.subr.bf16.mxu0 0
    %9814 = vmatpush1.bf16.msra.mxu0 %v9780
    %9815 = vmatprep.subr.bf16.mxu0 0
    %9816 = vmatpush1.bf16.msra.mxu0 %v9781
    %9817 = vmatprep.subr.bf16.mxu0 0
    %9818 = vmatpush1.bf16.msra.mxu0 %v9782
    %9819 = vmatprep.subr.bf16.mxu0 0
    %9820 = vmatpush1.bf16.msra.mxu0 %v9783
    %9821 = vmatprep.subr.bf16.mxu0 0
    %9822 = vmatpush1.bf16.msra.mxu0 %v9784
    %9823 = vmatprep.subr.bf16.mxu0 0
    %9824 = vmatpush1.bf16.msra.mxu0 %v9785
    %9825 = vmatprep.subr.bf16.mxu0 0
    %9826 = vmatpush1.bf16.msra.mxu0 %v9786
    %9827 = vmatprep.subr.bf16.mxu0 0
    %9828 = vmatpush1.bf16.msra.mxu0 %v9787
    %9829 = vmatprep.subr.bf16.mxu0 0
    %9830 = vmatpush1.bf16.msra.mxu0 %v9788
    %9831 = vmatprep.subr.bf16.mxu0 0
    %9832 = vmatpush1.bf16.msra.mxu0 %v9789
    %9833 = vmatprep.subr.bf16.mxu0 0
    %9834 = vmatpush1.bf16.msra.mxu0 %v9790
    %9835 = vmatprep.subr.bf16.mxu0 0
    %9836 = vmatpush1.bf16.msra.mxu0 %v9791
    %9837 = vmatprep.subr.bf16.mxu0 0
    %9838 = vmatpush1.bf16.msra.mxu0 %v9792
    %9839 = vmatprep.subr.bf16.mxu0 0
    %9840 = vmatpush1.bf16.msra.mxu0 %v9793
    %9841 = vmatprep.subr.bf16.mxu0 0
    %9842 = vmatpush1.bf16.msra.mxu0 %v9794
    %9843 = vmatprep.mubr.bf16.mxu0 %v9675
    %9844 = vmatmul.mubr.bf16.gmra.mrb[0].mxu0 %v9674
    %v9845 = vpop.f32.mrb[0].mxu0
    %v9846 = vadd.f32 %v9713, %v9845
    %v9847 = vpop.f32.mrb[0].mxu0
    %v9848 = vpop.f32.mrb[0].mxu0
    %v9849 = vpop.f32.mrb[0].mxu0
    %9850 = vdwg.mxu0
    %v9851 = vmax.f32 %v9846, 0.0
    %v9852 = vpack.c.bf16 %v9851, %v9851
    %v9853 = vld [vmem:[#allocation8] sm:$0xf]
    %v9854 = vld [vmem:[#allocation8 + $0x4] sm:$0xf]
    %v9855 = vld [vmem:[#allocation8 + $0x8] sm:$0xf]
    %v9856 = vld [vmem:[#allocation8 + $0xc] sm:$0xf]
    %v9857 = vld [vmem:[#allocation8 + $0x10] sm:$0xf]
    %v9858 = vld [vmem:[#allocation8 + $0x14] sm:$0xf]
    %v9859 = vld [vmem:[#allocation8 + $0x18] sm:$0xf]
    %v9860 = vld [vmem:[#allocation8 + $0x1c] sm:$0xf]
    %v9861 = vld [vmem:[#allocation8 + $0x20] sm:$0xf]
    %v9862 = vld [vmem:[#allocation8 + $0x24] sm:$0xf]
    %v9863 = vld [vmem:[#allocation8 + $0x28] sm:$0xf]
    %v9864 = vld [vmem:[#allocation8 + $0x2c] sm:$0xf]
    %v9865 = vld [vmem:[#allocation8 + $0x30] sm:$0xf]
    %v9866 = vld [vmem:[#allocation8 + $0x34] sm:$0xf]
    %v9867 = vld [vmem:[#allocation8 + $0x38] sm:$0xf]
    %v9868 = vld [vmem:[#allocation8 + $0x3c] sm:$0xf]
    %v9869 = vld [vmem:[%s6] sm:$0x1]
    %v9871 = vlaneseq
    %v9872 = vshrl.u32 %v9871, 7
    %v9873 = vsub.s32 0, %v9872
    %v9874 = vrot.slane %v9869, %v9873
    %v9892 = vunpack.c.l.b16 %v9853
    %v9893 = vunpack.c.l.b16 %v9854
    %v9894 = vunpack.c.l.b16 %v9855
    %v9895 = vunpack.c.l.b16 %v9856
    %v9896 = vunpack.c.l.b16 %v9857
    %v9897 = vunpack.c.l.b16 %v9858
    %v9898 = vunpack.c.l.b16 %v9859
    %v9899 = vunpack.c.l.b16 %v9860
    %v9900 = vunpack.c.l.b16 %v9861
    %v9901 = vunpack.c.l.b16 %v9862
    %v9902 = vunpack.c.l.b16 %v9863
    %v9903 = vunpack.c.l.b16 %v9864
    %v9904 = vunpack.c.l.b16 %v9865
    %v9905 = vunpack.c.l.b16 %v9866
    %v9906 = vunpack.c.l.b16 %v9867
    %v9907 = vunpack.c.l.b16 %v9868
    %v9908 = vpack.c.b16 %v9893, %v9892
    %v9909 = vpack.c.b16 %v9895, %v9894
    %v9910 = vpack.c.b16 %v9897, %v9896
    %v9911 = vpack.c.b16 %v9899, %v9898
    %v9912 = vpack.c.b16 %v9901, %v9900
    %v9913 = vpack.c.b16 %v9903, %v9902
    %v9914 = vpack.c.b16 %v9905, %v9904
    %v9915 = vpack.c.b16 %v9907, %v9906
    %9924 = vmatprep.subr.bf16.mxu0 0
    %9925 = vmatpush1.bf16.msra.mxu0 %v9908
    %9926 = vmatprep.subr.bf16.mxu0 0
    %9927 = vmatpush1.bf16.msra.mxu0 %v9909
    %9928 = vmatprep.subr.bf16.mxu0 0
    %9929 = vmatpush1.bf16.msra.mxu0 %v9910
    %9930 = vmatprep.subr.bf16.mxu0 0
    %9931 = vmatpush1.bf16.msra.mxu0 %v9911
    %9932 = vmatprep.subr.bf16.mxu0 0
    %9933 = vmatpush1.bf16.msra.mxu0 %v9912
    %9934 = vmatprep.subr.bf16.mxu0 0
    %9935 = vmatpush1.bf16.msra.mxu0 %v9913
    %9936 = vmatprep.subr.bf16.mxu0 0
    %9937 = vmatpush1.bf16.msra.mxu0 %v9914
    %9938 = vmatprep.subr.bf16.mxu0 0
    %9939 = vmatpush1.bf16.msra.mxu0 %v9915
    %9940 = vmatprep.subr.bf16.mxu0 0
    %9941 = vmatpush1.bf16.msra.mxu0 0
    %9942 = vmatprep.subr.bf16.mxu0 0
    %9943 = vmatpush1.bf16.msra.mxu0 0
    %9944 = vmatprep.subr.bf16.mxu0 0
    %9945 = vmatpush1.bf16.msra.mxu0 0
    %9946 = vmatprep.subr.bf16.mxu0 0
    %9947 = vmatpush1.bf16.msra.mxu0 0
    %9948 = vmatprep.subr.bf16.mxu0 0
    %9949 = vmatpush1.bf16.msra.mxu0 0
    %9950 = vmatprep.subr.bf16.mxu0 0
    %9951 = vmatpush1.bf16.msra.mxu0 0
    %9952 = vmatprep.subr.bf16.mxu0 0
    %9953 = vmatpush1.bf16.msra.mxu0 0
    %9954 = vmatprep.subr.bf16.mxu0 0
    %9955 = vmatpush1.bf16.msra.mxu0 0
    %9956 = vmatprep.mubr.bf16.mxu0 0
    %9957 = vmatmul.mubr.bf16.gmra.mrb[0].mxu0 %v9852
    %v9958 = vpop.f32.mrb[0].mxu0
    %v9959 = vadd.f32 %v9874, %v9958
    %v9960 = vpop.f32.mrb[0].mxu0
    %v9961 = vpop.f32.mrb[0].mxu0
    %v9962 = vpop.f32.mrb[0].mxu0
    %9963 = vdwg.mxu0
    %9964 = vst [vmem:[#allocation10] sm:$0xf] %v9959
    // Predicated region
    $region46: #{tpu_custom_call.1} parent=1 // pred_check
      _
    $region47: #{tpu_custom_call.1} parent=1 // pred_check_branch
      %9966 = sbr.rel (0) target = $region49
    $region48: #{tpu_custom_call.1} parent=1 // pred_region
      %s9968 = ssub.s32 64, 64
      %9969 = vsyncadd [#allocation4], %s9968
      %s9971 = sshll.u32 [#allocation10], 4
      %s9972 = int_to_ptr.vmem [resolvable:$true] %s9971
      %9974 = dma.vmem_to_hbm [thread:$0]  %s9972, 64, %s7, [#allocation4]
    $region49: #{tpu_custom_call.1} parent=1 // pred_fallthru
      _
    // Predicated region
    $region50: #{tpu_custom_call.1} parent=1 // pred_check
      _
    $region51: #{tpu_custom_call.1} parent=1 // pred_check_branch
      %9976 = sbr.rel (0) target = $region53
    $region52: #{tpu_custom_call.1} parent=1 // pred_region
      %9977 = dma.done [#allocation4], 64
    $region53: #{tpu_custom_call.1} parent=1 // pred_fallthru
      _
    %9978 = vsyncpa [#allocation3], 1
    %9979 = vsyncpa [#allocation6], 1
    %9980 = vsyncpa [#allocation9], 1
    %9981 = vsyncpa [#allocation4], 1

</llo_original>
